<compile_context>
chip_gen: v5e
topology: v5e:2x2
jax: 0.10.0
libtpu: 0.0.40
codegen_flags: <defaults>
</compile_context>

<pallas_src>
import math

import numpy as np
import jax
import jax.numpy as jnp
from jax import lax
from jax.experimental import pallas as pl
from jax.experimental.pallas import tpu as pltpu

LANES = 128
SUBLANES = 8
_XOR_MASK = 0x7FFFFFFF          # flips ordering of negative-float bit patterns
_BISECT_STEPS = 32              # initial key span < 2^32  =>  32 halvings suffice


def _f32_order_key(v: float) -> int:
    """Monotone int32 ordering key of a float32 value (same mapping used in JAX)."""
    b = int(np.asarray(v, np.float32).view(np.int32))
    return b if b >= 0 else int(np.int32(b) ^ np.int32(_XOR_MASK))


_LO_INIT = _f32_order_key(-np.inf) - 1      # strictly below every non-NaN key
_HI_INIT = int(np.iinfo(np.int32).max)      # padding key; >= every non-NaN key


def _make_quantile_keys_kernel(targets):
    """Kernel: fused bisection for the int32 keys of several exact order statistics.

    targets[s] = rank_s + 1 (1-indexed count target).  Input: (R, 128) int32 key
    slab (one VMEM block).  Output s: (1, 1) int32 key of the targets[s]-th smallest
    element.
    """
    n_search = len(targets)

    def kernel(keys_ref, *out_refs):
        keys = keys_ref[...]                                     # (R, 128) int32, resident
        one = jnp.float32(1.0)
        zero = jnp.float32(0.0)

        lo = [jnp.full((1, 1), _LO_INIT, jnp.int32) for _ in range(n_search)]
        hi = [jnp.full((1, 1), _HI_INIT, jnp.int32) for _ in range(n_search)]
        tgt = [jnp.float32(t) for t in targets]                  # exact for t < 2**24

        # Fully unrolled fused bisection: one 32-step serial chain; the n_search
        # compares/reduces inside a step are independent and pipeline on the VPU/XLU.
        for _ in range(_BISECT_STEPS):
            for s in range(n_search):
                # Overflow-free floor((lo + hi) / 2) over the full int32 range.
                mid = (lo[s] >> 1) + (hi[s] >> 1) + (lo[s] & hi[s] & 1)
                le = jnp.where(keys <= mid, one, zero)           # (R, 128) f32 0/1
                cnt = jnp.sum(jnp.sum(le, axis=0, keepdims=True),
                              axis=1, keepdims=True)             # (1, 1)
                go_hi = cnt >= tgt[s]
                lo[s] = jnp.where(go_hi, lo[s], mid)
                hi[s] = jnp.where(go_hi, mid, hi[s])

        # At convergence hi[s] is exactly the key of the requested order statistic.
        for s in range(n_search):
            out_refs[s][...] = hi[s]

    return kernel


def _order_statistic_keys(keys2d, targets):
    """Run the fused-bisection kernel; returns a tuple of () int32 keys."""
    n_out = len(targets)
    padded = keys2d.shape[0] * keys2d.shape[1]
    full_spec = pl.BlockSpec(keys2d.shape, lambda: (0, 0))
    scalar_spec = pl.BlockSpec((1, 1), lambda: (0, 0))
    cost = pl.CostEstimate(
        flops=int(_BISECT_STEPS * n_out * 3 * padded),
        transcendentals=0,
        bytes_accessed=int(padded * 4 + n_out * 4),
    )
    outs = pl.pallas_call(
        _make_quantile_keys_kernel(targets),
        out_shape=tuple(jax.ShapeDtypeStruct((1, 1), jnp.int32) for _ in range(n_out)),
        in_specs=[full_spec],
        out_specs=tuple(scalar_spec for _ in range(n_out)),
        compiler_params=pltpu.CompilerParams(vmem_limit_bytes=32 * 1024 * 1024),
        cost_estimate=cost,
    )(keys2d)
    return tuple(o.reshape(()) for o in outs)


def _key_to_value(key_scalar):
    """Invert the monotone key bijection: int32 key -> float32 value."""
    bits = jnp.where(key_scalar >= 0, key_scalar, key_scalar ^ jnp.int32(_XOR_MASK))
    return lax.bitcast_convert_type(bits, jnp.float32)


def moments_forward(x, low, high, *, decay=0.99, max_=1.0,
                    percentile_low=0.05, percentile_high=0.95):
    """Functional Moments.forward.

    Returns ((low, invscale), (new_low, new_high)); the second pair is the updated
    buffer state (the PyTorch module mutates self.low / self.high in place).
    Inputs are assumed finite (no NaN), like DreamerV3 lambda-returns.
    """
    xf = jnp.asarray(x, jnp.float32).reshape(-1)
    n = xf.shape[0]
    if n < 1:
        raise ValueError("Moments needs at least one element")
    if n > (1 << 24):
        # f32 counts stay integer-exact only up to 2**24 (torch.quantile has the same
        # element limit); switch the kernel's counts to int32 before lifting this.
        raise NotImplementedError("n > 2**24 not supported")

    block = SUBLANES * LANES
    padded = ((n + block - 1) // block) * block
    if padded * 4 > 16 * 1024 * 1024:
        # TODO(synk): chunked HBM-resident count accumulation for inputs that do not
        # fit a single VMEM block (v7x has only 64 MiB VMEM per TensorCore).
        raise NotImplementedError("input too large for a single VMEM block")

    # Monotone int32 ordering keys (plain XLA ops; one elementwise pass).
    bits = lax.bitcast_convert_type(xf, jnp.int32)
    keys = jnp.where(bits >= 0, bits, bits ^ jnp.int32(_XOR_MASK))
    if padded != n:
        # INT32_MAX padding ranks above every real key, so order statistics for
        # ranks < n (all we use) are unchanged.
        keys = jnp.pad(keys, (0, padded - n), constant_values=_HI_INIT)
    keys2d = keys.reshape(padded // LANES, LANES)

    def q_ranks(q):
        pos = q * (n - 1)
        k_floor = int(math.floor(pos))
        k_ceil = min(int(math.ceil(pos)), n - 1)
        return k_floor, k_ceil, float(pos - k_floor)

    kl_f, kl_c, fr_l = q_ranks(percentile_low)
    kh_f, kh_c, fr_h = q_ranks(percentile_high)

    # One fused kernel launch solves all four exact order statistics.
    targets = (kl_f + 1, kl_c + 1, kh_f + 1, kh_c + 1)
    k_lf, k_lc, k_hf, k_hc = _order_statistic_keys(keys2d, targets)
    v_lf, v_lc, v_hf, v_hc = (_key_to_value(k) for k in (k_lf, k_lc, k_hf, k_hc))

    # torch.quantile 'linear' interpolation + EMA + invscale: a handful of scalar ops.
    q_low = v_lf + jnp.float32(fr_l) * (v_lc - v_lf)
    q_high = v_hf + jnp.float32(fr_h) * (v_hc - v_hf)

    low32 = jnp.asarray(low, jnp.float32)
    high32 = jnp.asarray(high, jnp.float32)
    new_low = jnp.float32(decay) * low32 + jnp.float32(1.0 - decay) * q_low
    new_high = jnp.float32(decay) * high32 + jnp.float32(1.0 - decay) * q_high
    invscale = jnp.maximum(jnp.float32(1.0 / max_), new_high - new_low)
    return (new_low, invscale), (new_low, new_high)


def moments_reference(x, low, high, *, decay=0.99, max_=1.0,
                      percentile_low=0.05, percentile_high=0.95):
    xf = jnp.asarray(x, jnp.float32).reshape(-1)
    q_low = jnp.quantile(xf, percentile_low)
    q_high = jnp.quantile(xf, percentile_high)
    new_low = decay * low + (1.0 - decay) * q_low
    new_high = decay * high + (1.0 - decay) * q_high
    invscale = jnp.maximum(1.0 / max_, new_high - new_low)
    return new_low, new_high, invscale


if __name__ == "__main__":
    key = jax.random.PRNGKey(0)
    # x: a small lambda-returns tensor (batch_length, batch_size); 784 elements,
    # deliberately not a multiple of 1024 to exercise the padding path.
    x = 3.0 * jax.random.normal(key, (16, 49), jnp.float32)

    low = jnp.float32(0.0)    # registered buffers start at zero
    high = jnp.float32(0.0)

    (low_out, invscale), (new_low, new_high) = moments_forward(x, low, high)
    jax.block_until_ready((low_out, invscale, new_low, new_high))

    ref_low, ref_high, ref_inv = moments_reference(x, low, high)
    assert jnp.allclose(low_out, ref_low, atol=1e-5, rtol=1e-5), (low_out, ref_low)
    assert jnp.allclose(new_high, ref_high, atol=1e-5, rtol=1e-5), (new_high, ref_high)
    assert jnp.allclose(invscale, ref_inv, atol=1e-5, rtol=1e-5), (invscale, ref_inv)

    # Second step to exercise EMA state chaining (the stateful buffer behavior).
    (low2, inv2), (nl2, nh2) = moments_forward(x * 0.5 + 1.0, new_low, new_high)
    jax.block_until_ready((low2, inv2, nl2, nh2))
    r_l2, r_h2, r_i2 = moments_reference(x * 0.5 + 1.0, ref_low, ref_high)
    assert jnp.allclose(low2, r_l2, atol=1e-5, rtol=1e-5), (low2, r_l2)
    assert jnp.allclose(inv2, r_i2, atol=1e-5, rtol=1e-5), (inv2, r_i2)

    print("KERNEL_OK")
</pallas_src>

<mosaic_0001>
module attributes {stable_mosaic.version = 11 : i64} {
  func.func @kernel(%arg0: memref<8x128xi32, #tpu.memory_space<vmem>>, %arg1: memref<1x1xi32, #tpu.memory_space<vmem>>, %arg2: memref<1x1xi32, #tpu.memory_space<vmem>>, %arg3: memref<1x1xi32, #tpu.memory_space<vmem>>, %arg4: memref<1x1xi32, #tpu.memory_space<vmem>>) attributes {dimension_semantics = [], scalar_prefetch = 0 : i64, scratch_operands = 0 : i64, tpu.core_type = #tpu.core_type<tc>} {
    %c0 = arith.constant 0 : index
    %c0_0 = arith.constant 0 : index
    %0 = vector.load %arg0[%c0, %c0_0] : memref<8x128xi32, #tpu.memory_space<vmem>>, vector<8x128xi32>
    %c-2139095042_i32 = arith.constant -2139095042 : i32
    %1 = vector.broadcast %c-2139095042_i32 : i32 to vector<1x1xi32>
    %c-2139095042_i32_1 = arith.constant -2139095042 : i32
    %2 = vector.broadcast %c-2139095042_i32_1 : i32 to vector<1x1xi32>
    %c-2139095042_i32_2 = arith.constant -2139095042 : i32
    %3 = vector.broadcast %c-2139095042_i32_2 : i32 to vector<1x1xi32>
    %c-2139095042_i32_3 = arith.constant -2139095042 : i32
    %4 = vector.broadcast %c-2139095042_i32_3 : i32 to vector<1x1xi32>
    %c2147483647_i32 = arith.constant 2147483647 : i32
    %5 = vector.broadcast %c2147483647_i32 : i32 to vector<1x1xi32>
    %c2147483647_i32_4 = arith.constant 2147483647 : i32
    %6 = vector.broadcast %c2147483647_i32_4 : i32 to vector<1x1xi32>
    %c2147483647_i32_5 = arith.constant 2147483647 : i32
    %7 = vector.broadcast %c2147483647_i32_5 : i32 to vector<1x1xi32>
    %c2147483647_i32_6 = arith.constant 2147483647 : i32
    %8 = vector.broadcast %c2147483647_i32_6 : i32 to vector<1x1xi32>
    %c1_i32 = arith.constant 1 : i32
    %9 = vector.broadcast %c1_i32 : i32 to vector<1x1xi32>
    %10 = arith.shrsi %1, %9 : vector<1x1xi32>
    %c1_i32_7 = arith.constant 1 : i32
    %11 = vector.broadcast %c1_i32_7 : i32 to vector<1x1xi32>
    %12 = arith.shrsi %5, %11 : vector<1x1xi32>
    %13 = arith.addi %10, %12 : vector<1x1xi32>
    %14 = arith.andi %1, %5 : vector<1x1xi32>
    %c1_i32_8 = arith.constant 1 : i32
    %15 = vector.broadcast %c1_i32_8 : i32 to vector<1x1xi32>
    %16 = arith.andi %14, %15 : vector<1x1xi32>
    %17 = arith.addi %13, %16 : vector<1x1xi32>
    %18 = vector.broadcast %17 : vector<1x1xi32> to vector<8x128xi32>
    %19 = arith.cmpi sle, %0, %18 : vector<8x128xi32>
    %cst = arith.constant 1.000000e+00 : f32
    %cst_9 = arith.constant 0.000000e+00 : f32
    %20 = vector.broadcast %cst : f32 to vector<8x128xf32>
    %21 = vector.broadcast %cst_9 : f32 to vector<8x128xf32>
    %22 = arith.select %19, %20, %21 : vector<8x128xi1>, vector<8x128xf32>
    %cst_10 = arith.constant dense<0.000000e+00> : vector<128xf32>
    %23 = vector.multi_reduction <add>, %22, %cst_10 [0] : vector<8x128xf32> to vector<128xf32>
    %24 = vector.shape_cast %23 : vector<128xf32> to vector<1x128xf32>
    %cst_11 = arith.constant dense<0.000000e+00> : vector<1xf32>
    %25 = vector.multi_reduction <add>, %24, %cst_11 [1] : vector<1x128xf32> to vector<1xf32>
    %26 = vector.shape_cast %25 : vector<1xf32> to vector<1x1xf32>
    %cst_12 = arith.constant 4.000000e+01 : f32
    %27 = vector.broadcast %cst_12 : f32 to vector<1x1xf32>
    %28 = arith.cmpf oge, %26, %27 : vector<1x1xf32>
    %29 = arith.select %28, %1, %17 : vector<1x1xi1>, vector<1x1xi32>
    %30 = arith.select %28, %17, %5 : vector<1x1xi1>, vector<1x1xi32>
    %c1_i32_13 = arith.constant 1 : i32
    %31 = vector.broadcast %c1_i32_13 : i32 to vector<1x1xi32>
    %32 = arith.shrsi %2, %31 : vector<1x1xi32>
    %c1_i32_14 = arith.constant 1 : i32
    %33 = vector.broadcast %c1_i32_14 : i32 to vector<1x1xi32>
    %34 = arith.shrsi %6, %33 : vector<1x1xi32>
    %35 = arith.addi %32, %34 : vector<1x1xi32>
    %36 = arith.andi %2, %6 : vector<1x1xi32>
    %c1_i32_15 = arith.constant 1 : i32
    %37 = vector.broadcast %c1_i32_15 : i32 to vector<1x1xi32>
    %38 = arith.andi %36, %37 : vector<1x1xi32>
    %39 = arith.addi %35, %38 : vector<1x1xi32>
    %40 = vector.broadcast %39 : vector<1x1xi32> to vector<8x128xi32>
    %41 = arith.cmpi sle, %0, %40 : vector<8x128xi32>
    %cst_16 = arith.constant 1.000000e+00 : f32
    %cst_17 = arith.constant 0.000000e+00 : f32
    %42 = vector.broadcast %cst_16 : f32 to vector<8x128xf32>
    %43 = vector.broadcast %cst_17 : f32 to vector<8x128xf32>
    %44 = arith.select %41, %42, %43 : vector<8x128xi1>, vector<8x128xf32>
    %cst_18 = arith.constant dense<0.000000e+00> : vector<128xf32>
    %45 = vector.multi_reduction <add>, %44, %cst_18 [0] : vector<8x128xf32> to vector<128xf32>
    %46 = vector.shape_cast %45 : vector<128xf32> to vector<1x128xf32>
    %cst_19 = arith.constant dense<0.000000e+00> : vector<1xf32>
    %47 = vector.multi_reduction <add>, %46, %cst_19 [1] : vector<1x128xf32> to vector<1xf32>
    %48 = vector.shape_cast %47 : vector<1xf32> to vector<1x1xf32>
    %cst_20 = arith.constant 4.100000e+01 : f32
    %49 = vector.broadcast %cst_20 : f32 to vector<1x1xf32>
    %50 = arith.cmpf oge, %48, %49 : vector<1x1xf32>
    %51 = arith.select %50, %2, %39 : vector<1x1xi1>, vector<1x1xi32>
    %52 = arith.select %50, %39, %6 : vector<1x1xi1>, vector<1x1xi32>
    %c1_i32_21 = arith.constant 1 : i32
    %53 = vector.broadcast %c1_i32_21 : i32 to vector<1x1xi32>
    %54 = arith.shrsi %3, %53 : vector<1x1xi32>
    %c1_i32_22 = arith.constant 1 : i32
    %55 = vector.broadcast %c1_i32_22 : i32 to vector<1x1xi32>
    %56 = arith.shrsi %7, %55 : vector<1x1xi32>
    %57 = arith.addi %54, %56 : vector<1x1xi32>
    %58 = arith.andi %3, %7 : vector<1x1xi32>
    %c1_i32_23 = arith.constant 1 : i32
    %59 = vector.broadcast %c1_i32_23 : i32 to vector<1x1xi32>
    %60 = arith.andi %58, %59 : vector<1x1xi32>
    %61 = arith.addi %57, %60 : vector<1x1xi32>
    %62 = vector.broadcast %61 : vector<1x1xi32> to vector<8x128xi32>
    %63 = arith.cmpi sle, %0, %62 : vector<8x128xi32>
    %cst_24 = arith.constant 1.000000e+00 : f32
    %cst_25 = arith.constant 0.000000e+00 : f32
    %64 = vector.broadcast %cst_24 : f32 to vector<8x128xf32>
    %65 = vector.broadcast %cst_25 : f32 to vector<8x128xf32>
    %66 = arith.select %63, %64, %65 : vector<8x128xi1>, vector<8x128xf32>
    %cst_26 = arith.constant dense<0.000000e+00> : vector<128xf32>
    %67 = vector.multi_reduction <add>, %66, %cst_26 [0] : vector<8x128xf32> to vector<128xf32>
    %68 = vector.shape_cast %67 : vector<128xf32> to vector<1x128xf32>
    %cst_27 = arith.constant dense<0.000000e+00> : vector<1xf32>
    %69 = vector.multi_reduction <add>, %68, %cst_27 [1] : vector<1x128xf32> to vector<1xf32>
    %70 = vector.shape_cast %69 : vector<1xf32> to vector<1x1xf32>
    %cst_28 = arith.constant 7.440000e+02 : f32
    %71 = vector.broadcast %cst_28 : f32 to vector<1x1xf32>
    %72 = arith.cmpf oge, %70, %71 : vector<1x1xf32>
    %73 = arith.select %72, %3, %61 : vector<1x1xi1>, vector<1x1xi32>
    %74 = arith.select %72, %61, %7 : vector<1x1xi1>, vector<1x1xi32>
    %c1_i32_29 = arith.constant 1 : i32
    %75 = vector.broadcast %c1_i32_29 : i32 to vector<1x1xi32>
    %76 = arith.shrsi %4, %75 : vector<1x1xi32>
    %c1_i32_30 = arith.constant 1 : i32
    %77 = vector.broadcast %c1_i32_30 : i32 to vector<1x1xi32>
    %78 = arith.shrsi %8, %77 : vector<1x1xi32>
    %79 = arith.addi %76, %78 : vector<1x1xi32>
    %80 = arith.andi %4, %8 : vector<1x1xi32>
    %c1_i32_31 = arith.constant 1 : i32
    %81 = vector.broadcast %c1_i32_31 : i32 to vector<1x1xi32>
    %82 = arith.andi %80, %81 : vector<1x1xi32>
    %83 = arith.addi %79, %82 : vector<1x1xi32>
    %84 = vector.broadcast %83 : vector<1x1xi32> to vector<8x128xi32>
    %85 = arith.cmpi sle, %0, %84 : vector<8x128xi32>
    %cst_32 = arith.constant 1.000000e+00 : f32
    %cst_33 = arith.constant 0.000000e+00 : f32
    %86 = vector.broadcast %cst_32 : f32 to vector<8x128xf32>
    %87 = vector.broadcast %cst_33 : f32 to vector<8x128xf32>
    %88 = arith.select %85, %86, %87 : vector<8x128xi1>, vector<8x128xf32>
    %cst_34 = arith.constant dense<0.000000e+00> : vector<128xf32>
    %89 = vector.multi_reduction <add>, %88, %cst_34 [0] : vector<8x128xf32> to vector<128xf32>
    %90 = vector.shape_cast %89 : vector<128xf32> to vector<1x128xf32>
    %cst_35 = arith.constant dense<0.000000e+00> : vector<1xf32>
    %91 = vector.multi_reduction <add>, %90, %cst_35 [1] : vector<1x128xf32> to vector<1xf32>
    %92 = vector.shape_cast %91 : vector<1xf32> to vector<1x1xf32>
    %cst_36 = arith.constant 7.450000e+02 : f32
    %93 = vector.broadcast %cst_36 : f32 to vector<1x1xf32>
    %94 = arith.cmpf oge, %92, %93 : vector<1x1xf32>
    %95 = arith.select %94, %4, %83 : vector<1x1xi1>, vector<1x1xi32>
    %96 = arith.select %94, %83, %8 : vector<1x1xi1>, vector<1x1xi32>
    %c1_i32_37 = arith.constant 1 : i32
    %97 = vector.broadcast %c1_i32_37 : i32 to vector<1x1xi32>
    %98 = arith.shrsi %29, %97 : vector<1x1xi32>
    %c1_i32_38 = arith.constant 1 : i32
    %99 = vector.broadcast %c1_i32_38 : i32 to vector<1x1xi32>
    %100 = arith.shrsi %30, %99 : vector<1x1xi32>
    %101 = arith.addi %98, %100 : vector<1x1xi32>
    %102 = arith.andi %29, %30 : vector<1x1xi32>
    %c1_i32_39 = arith.constant 1 : i32
    %103 = vector.broadcast %c1_i32_39 : i32 to vector<1x1xi32>
    %104 = arith.andi %102, %103 : vector<1x1xi32>
    %105 = arith.addi %101, %104 : vector<1x1xi32>
    %106 = vector.broadcast %105 : vector<1x1xi32> to vector<8x128xi32>
    %107 = arith.cmpi sle, %0, %106 : vector<8x128xi32>
    %cst_40 = arith.constant 1.000000e+00 : f32
    %cst_41 = arith.constant 0.000000e+00 : f32
    %108 = vector.broadcast %cst_40 : f32 to vector<8x128xf32>
    %109 = vector.broadcast %cst_41 : f32 to vector<8x128xf32>
    %110 = arith.select %107, %108, %109 : vector<8x128xi1>, vector<8x128xf32>
    %cst_42 = arith.constant dense<0.000000e+00> : vector<128xf32>
    %111 = vector.multi_reduction <add>, %110, %cst_42 [0] : vector<8x128xf32> to vector<128xf32>
    %112 = vector.shape_cast %111 : vector<128xf32> to vector<1x128xf32>
    %cst_43 = arith.constant dense<0.000000e+00> : vector<1xf32>
    %113 = vector.multi_reduction <add>, %112, %cst_43 [1] : vector<1x128xf32> to vector<1xf32>
    %114 = vector.shape_cast %113 : vector<1xf32> to vector<1x1xf32>
    %cst_44 = arith.constant 4.000000e+01 : f32
    %115 = vector.broadcast %cst_44 : f32 to vector<1x1xf32>
    %116 = arith.cmpf oge, %114, %115 : vector<1x1xf32>
    %117 = arith.select %116, %29, %105 : vector<1x1xi1>, vector<1x1xi32>
    %118 = arith.select %116, %105, %30 : vector<1x1xi1>, vector<1x1xi32>
    %c1_i32_45 = arith.constant 1 : i32
    %119 = vector.broadcast %c1_i32_45 : i32 to vector<1x1xi32>
    %120 = arith.shrsi %51, %119 : vector<1x1xi32>
    %c1_i32_46 = arith.constant 1 : i32
    %121 = vector.broadcast %c1_i32_46 : i32 to vector<1x1xi32>
    %122 = arith.shrsi %52, %121 : vector<1x1xi32>
    %123 = arith.addi %120, %122 : vector<1x1xi32>
    %124 = arith.andi %51, %52 : vector<1x1xi32>
    %c1_i32_47 = arith.constant 1 : i32
    %125 = vector.broadcast %c1_i32_47 : i32 to vector<1x1xi32>
    %126 = arith.andi %124, %125 : vector<1x1xi32>
    %127 = arith.addi %123, %126 : vector<1x1xi32>
    %128 = vector.broadcast %127 : vector<1x1xi32> to vector<8x128xi32>
    %129 = arith.cmpi sle, %0, %128 : vector<8x128xi32>
    %cst_48 = arith.constant 1.000000e+00 : f32
    %cst_49 = arith.constant 0.000000e+00 : f32
    %130 = vector.broadcast %cst_48 : f32 to vector<8x128xf32>
    %131 = vector.broadcast %cst_49 : f32 to vector<8x128xf32>
    %132 = arith.select %129, %130, %131 : vector<8x128xi1>, vector<8x128xf32>
    %cst_50 = arith.constant dense<0.000000e+00> : vector<128xf32>
    %133 = vector.multi_reduction <add>, %132, %cst_50 [0] : vector<8x128xf32> to vector<128xf32>
    %134 = vector.shape_cast %133 : vector<128xf32> to vector<1x128xf32>
    %cst_51 = arith.constant dense<0.000000e+00> : vector<1xf32>
    %135 = vector.multi_reduction <add>, %134, %cst_51 [1] : vector<1x128xf32> to vector<1xf32>
    %136 = vector.shape_cast %135 : vector<1xf32> to vector<1x1xf32>
    %cst_52 = arith.constant 4.100000e+01 : f32
    %137 = vector.broadcast %cst_52 : f32 to vector<1x1xf32>
    %138 = arith.cmpf oge, %136, %137 : vector<1x1xf32>
    %139 = arith.select %138, %51, %127 : vector<1x1xi1>, vector<1x1xi32>
    %140 = arith.select %138, %127, %52 : vector<1x1xi1>, vector<1x1xi32>
    %c1_i32_53 = arith.constant 1 : i32
    %141 = vector.broadcast %c1_i32_53 : i32 to vector<1x1xi32>
    %142 = arith.shrsi %73, %141 : vector<1x1xi32>
    %c1_i32_54 = arith.constant 1 : i32
    %143 = vector.broadcast %c1_i32_54 : i32 to vector<1x1xi32>
    %144 = arith.shrsi %74, %143 : vector<1x1xi32>
    %145 = arith.addi %142, %144 : vector<1x1xi32>
    %146 = arith.andi %73, %74 : vector<1x1xi32>
    %c1_i32_55 = arith.constant 1 : i32
    %147 = vector.broadcast %c1_i32_55 : i32 to vector<1x1xi32>
    %148 = arith.andi %146, %147 : vector<1x1xi32>
    %149 = arith.addi %145, %148 : vector<1x1xi32>
    %150 = vector.broadcast %149 : vector<1x1xi32> to vector<8x128xi32>
    %151 = arith.cmpi sle, %0, %150 : vector<8x128xi32>
    %cst_56 = arith.constant 1.000000e+00 : f32
    %cst_57 = arith.constant 0.000000e+00 : f32
    %152 = vector.broadcast %cst_56 : f32 to vector<8x128xf32>
    %153 = vector.broadcast %cst_57 : f32 to vector<8x128xf32>
    %154 = arith.select %151, %152, %153 : vector<8x128xi1>, vector<8x128xf32>
    %cst_58 = arith.constant dense<0.000000e+00> : vector<128xf32>
    %155 = vector.multi_reduction <add>, %154, %cst_58 [0] : vector<8x128xf32> to vector<128xf32>
    %156 = vector.shape_cast %155 : vector<128xf32> to vector<1x128xf32>
    %cst_59 = arith.constant dense<0.000000e+00> : vector<1xf32>
    %157 = vector.multi_reduction <add>, %156, %cst_59 [1] : vector<1x128xf32> to vector<1xf32>
    %158 = vector.shape_cast %157 : vector<1xf32> to vector<1x1xf32>
    %cst_60 = arith.constant 7.440000e+02 : f32
    %159 = vector.broadcast %cst_60 : f32 to vector<1x1xf32>
    %160 = arith.cmpf oge, %158, %159 : vector<1x1xf32>
    %161 = arith.select %160, %73, %149 : vector<1x1xi1>, vector<1x1xi32>
    %162 = arith.select %160, %149, %74 : vector<1x1xi1>, vector<1x1xi32>
    %c1_i32_61 = arith.constant 1 : i32
    %163 = vector.broadcast %c1_i32_61 : i32 to vector<1x1xi32>
    %164 = arith.shrsi %95, %163 : vector<1x1xi32>
    %c1_i32_62 = arith.constant 1 : i32
    %165 = vector.broadcast %c1_i32_62 : i32 to vector<1x1xi32>
    %166 = arith.shrsi %96, %165 : vector<1x1xi32>
    %167 = arith.addi %164, %166 : vector<1x1xi32>
    %168 = arith.andi %95, %96 : vector<1x1xi32>
    %c1_i32_63 = arith.constant 1 : i32
    %169 = vector.broadcast %c1_i32_63 : i32 to vector<1x1xi32>
    %170 = arith.andi %168, %169 : vector<1x1xi32>
    %171 = arith.addi %167, %170 : vector<1x1xi32>
    %172 = vector.broadcast %171 : vector<1x1xi32> to vector<8x128xi32>
    %173 = arith.cmpi sle, %0, %172 : vector<8x128xi32>
    %cst_64 = arith.constant 1.000000e+00 : f32
    %cst_65 = arith.constant 0.000000e+00 : f32
    %174 = vector.broadcast %cst_64 : f32 to vector<8x128xf32>
    %175 = vector.broadcast %cst_65 : f32 to vector<8x128xf32>
    %176 = arith.select %173, %174, %175 : vector<8x128xi1>, vector<8x128xf32>
    %cst_66 = arith.constant dense<0.000000e+00> : vector<128xf32>
    %177 = vector.multi_reduction <add>, %176, %cst_66 [0] : vector<8x128xf32> to vector<128xf32>
    %178 = vector.shape_cast %177 : vector<128xf32> to vector<1x128xf32>
    %cst_67 = arith.constant dense<0.000000e+00> : vector<1xf32>
    %179 = vector.multi_reduction <add>, %178, %cst_67 [1] : vector<1x128xf32> to vector<1xf32>
    %180 = vector.shape_cast %179 : vector<1xf32> to vector<1x1xf32>
    %cst_68 = arith.constant 7.450000e+02 : f32
    %181 = vector.broadcast %cst_68 : f32 to vector<1x1xf32>
    %182 = arith.cmpf oge, %180, %181 : vector<1x1xf32>
    %183 = arith.select %182, %95, %171 : vector<1x1xi1>, vector<1x1xi32>
    %184 = arith.select %182, %171, %96 : vector<1x1xi1>, vector<1x1xi32>
    %c1_i32_69 = arith.constant 1 : i32
    %185 = vector.broadcast %c1_i32_69 : i32 to vector<1x1xi32>
    %186 = arith.shrsi %117, %185 : vector<1x1xi32>
    %c1_i32_70 = arith.constant 1 : i32
    %187 = vector.broadcast %c1_i32_70 : i32 to vector<1x1xi32>
    %188 = arith.shrsi %118, %187 : vector<1x1xi32>
    %189 = arith.addi %186, %188 : vector<1x1xi32>
    %190 = arith.andi %117, %118 : vector<1x1xi32>
    %c1_i32_71 = arith.constant 1 : i32
    %191 = vector.broadcast %c1_i32_71 : i32 to vector<1x1xi32>
    %192 = arith.andi %190, %191 : vector<1x1xi32>
    %193 = arith.addi %189, %192 : vector<1x1xi32>
    %194 = vector.broadcast %193 : vector<1x1xi32> to vector<8x128xi32>
    %195 = arith.cmpi sle, %0, %194 : vector<8x128xi32>
    %cst_72 = arith.constant 1.000000e+00 : f32
    %cst_73 = arith.constant 0.000000e+00 : f32
    %196 = vector.broadcast %cst_72 : f32 to vector<8x128xf32>
    %197 = vector.broadcast %cst_73 : f32 to vector<8x128xf32>
    %198 = arith.select %195, %196, %197 : vector<8x128xi1>, vector<8x128xf32>
    %cst_74 = arith.constant dense<0.000000e+00> : vector<128xf32>
    %199 = vector.multi_reduction <add>, %198, %cst_74 [0] : vector<8x128xf32> to vector<128xf32>
    %200 = vector.shape_cast %199 : vector<128xf32> to vector<1x128xf32>
    %cst_75 = arith.constant dense<0.000000e+00> : vector<1xf32>
    %201 = vector.multi_reduction <add>, %200, %cst_75 [1] : vector<1x128xf32> to vector<1xf32>
    %202 = vector.shape_cast %201 : vector<1xf32> to vector<1x1xf32>
    %cst_76 = arith.constant 4.000000e+01 : f32
    %203 = vector.broadcast %cst_76 : f32 to vector<1x1xf32>
    %204 = arith.cmpf oge, %202, %203 : vector<1x1xf32>
    %205 = arith.select %204, %117, %193 : vector<1x1xi1>, vector<1x1xi32>
    %206 = arith.select %204, %193, %118 : vector<1x1xi1>, vector<1x1xi32>
    %c1_i32_77 = arith.constant 1 : i32
    %207 = vector.broadcast %c1_i32_77 : i32 to vector<1x1xi32>
    %208 = arith.shrsi %139, %207 : vector<1x1xi32>
    %c1_i32_78 = arith.constant 1 : i32
    %209 = vector.broadcast %c1_i32_78 : i32 to vector<1x1xi32>
    %210 = arith.shrsi %140, %209 : vector<1x1xi32>
    %211 = arith.addi %208, %210 : vector<1x1xi32>
    %212 = arith.andi %139, %140 : vector<1x1xi32>
    %c1_i32_79 = arith.constant 1 : i32
    %213 = vector.broadcast %c1_i32_79 : i32 to vector<1x1xi32>
    %214 = arith.andi %212, %213 : vector<1x1xi32>
    %215 = arith.addi %211, %214 : vector<1x1xi32>
    %216 = vector.broadcast %215 : vector<1x1xi32> to vector<8x128xi32>
    %217 = arith.cmpi sle, %0, %216 : vector<8x128xi32>
    %cst_80 = arith.constant 1.000000e+00 : f32
    %cst_81 = arith.constant 0.000000e+00 : f32
    %218 = vector.broadcast %cst_80 : f32 to vector<8x128xf32>
    %219 = vector.broadcast %cst_81 : f32 to vector<8x128xf32>
    %220 = arith.select %217, %218, %219 : vector<8x128xi1>, vector<8x128xf32>
    %cst_82 = arith.constant dense<0.000000e+00> : vector<128xf32>
    %221 = vector.multi_reduction <add>, %220, %cst_82 [0] : vector<8x128xf32> to vector<128xf32>
    %222 = vector.shape_cast %221 : vector<128xf32> to vector<1x128xf32>
    %cst_83 = arith.constant dense<0.000000e+00> : vector<1xf32>
    %223 = vector.multi_reduction <add>, %222, %cst_83 [1] : vector<1x128xf32> to vector<1xf32>
    %224 = vector.shape_cast %223 : vector<1xf32> to vector<1x1xf32>
    %cst_84 = arith.constant 4.100000e+01 : f32
    %225 = vector.broadcast %cst_84 : f32 to vector<1x1xf32>
    %226 = arith.cmpf oge, %224, %225 : vector<1x1xf32>
    %227 = arith.select %226, %139, %215 : vector<1x1xi1>, vector<1x1xi32>
    %228 = arith.select %226, %215, %140 : vector<1x1xi1>, vector<1x1xi32>
    %c1_i32_85 = arith.constant 1 : i32
    %229 = vector.broadcast %c1_i32_85 : i32 to vector<1x1xi32>
    %230 = arith.shrsi %161, %229 : vector<1x1xi32>
    %c1_i32_86 = arith.constant 1 : i32
    %231 = vector.broadcast %c1_i32_86 : i32 to vector<1x1xi32>
    %232 = arith.shrsi %162, %231 : vector<1x1xi32>
    %233 = arith.addi %230, %232 : vector<1x1xi32>
    %234 = arith.andi %161, %162 : vector<1x1xi32>
    %c1_i32_87 = arith.constant 1 : i32
    %235 = vector.broadcast %c1_i32_87 : i32 to vector<1x1xi32>
    %236 = arith.andi %234, %235 : vector<1x1xi32>
    %237 = arith.addi %233, %236 : vector<1x1xi32>
    %238 = vector.broadcast %237 : vector<1x1xi32> to vector<8x128xi32>
    %239 = arith.cmpi sle, %0, %238 : vector<8x128xi32>
    %cst_88 = arith.constant 1.000000e+00 : f32
    %cst_89 = arith.constant 0.000000e+00 : f32
    %240 = vector.broadcast %cst_88 : f32 to vector<8x128xf32>
    %241 = vector.broadcast %cst_89 : f32 to vector<8x128xf32>
    %242 = arith.select %239, %240, %241 : vector<8x128xi1>, vector<8x128xf32>
    %cst_90 = arith.constant dense<0.000000e+00> : vector<128xf32>
    %243 = vector.multi_reduction <add>, %242, %cst_90 [0] : vector<8x128xf32> to vector<128xf32>
    %244 = vector.shape_cast %243 : vector<128xf32> to vector<1x128xf32>
    %cst_91 = arith.constant dense<0.000000e+00> : vector<1xf32>
    %245 = vector.multi_reduction <add>, %244, %cst_91 [1] : vector<1x128xf32> to vector<1xf32>
    %246 = vector.shape_cast %245 : vector<1xf32> to vector<1x1xf32>
    %cst_92 = arith.constant 7.440000e+02 : f32
    %247 = vector.broadcast %cst_92 : f32 to vector<1x1xf32>
    %248 = arith.cmpf oge, %246, %247 : vector<1x1xf32>
    %249 = arith.select %248, %161, %237 : vector<1x1xi1>, vector<1x1xi32>
    %250 = arith.select %248, %237, %162 : vector<1x1xi1>, vector<1x1xi32>
    %c1_i32_93 = arith.constant 1 : i32
    %251 = vector.broadcast %c1_i32_93 : i32 to vector<1x1xi32>
    %252 = arith.shrsi %183, %251 : vector<1x1xi32>
    %c1_i32_94 = arith.constant 1 : i32
    %253 = vector.broadcast %c1_i32_94 : i32 to vector<1x1xi32>
    %254 = arith.shrsi %184, %253 : vector<1x1xi32>
    %255 = arith.addi %252, %254 : vector<1x1xi32>
    %256 = arith.andi %183, %184 : vector<1x1xi32>
    %c1_i32_95 = arith.constant 1 : i32
    %257 = vector.broadcast %c1_i32_95 : i32 to vector<1x1xi32>
    %258 = arith.andi %256, %257 : vector<1x1xi32>
    %259 = arith.addi %255, %258 : vector<1x1xi32>
    %260 = vector.broadcast %259 : vector<1x1xi32> to vector<8x128xi32>
    %261 = arith.cmpi sle, %0, %260 : vector<8x128xi32>
    %cst_96 = arith.constant 1.000000e+00 : f32
    %cst_97 = arith.constant 0.000000e+00 : f32
    %262 = vector.broadcast %cst_96 : f32 to vector<8x128xf32>
    %263 = vector.broadcast %cst_97 : f32 to vector<8x128xf32>
    %264 = arith.select %261, %262, %263 : vector<8x128xi1>, vector<8x128xf32>
    %cst_98 = arith.constant dense<0.000000e+00> : vector<128xf32>
    %265 = vector.multi_reduction <add>, %264, %cst_98 [0] : vector<8x128xf32> to vector<128xf32>
    %266 = vector.shape_cast %265 : vector<128xf32> to vector<1x128xf32>
    %cst_99 = arith.constant dense<0.000000e+00> : vector<1xf32>
    %267 = vector.multi_reduction <add>, %266, %cst_99 [1] : vector<1x128xf32> to vector<1xf32>
    %268 = vector.shape_cast %267 : vector<1xf32> to vector<1x1xf32>
    %cst_100 = arith.constant 7.450000e+02 : f32
    %269 = vector.broadcast %cst_100 : f32 to vector<1x1xf32>
    %270 = arith.cmpf oge, %268, %269 : vector<1x1xf32>
    %271 = arith.select %270, %183, %259 : vector<1x1xi1>, vector<1x1xi32>
    %272 = arith.select %270, %259, %184 : vector<1x1xi1>, vector<1x1xi32>
    %c1_i32_101 = arith.constant 1 : i32
    %273 = vector.broadcast %c1_i32_101 : i32 to vector<1x1xi32>
    %274 = arith.shrsi %205, %273 : vector<1x1xi32>
    %c1_i32_102 = arith.constant 1 : i32
    %275 = vector.broadcast %c1_i32_102 : i32 to vector<1x1xi32>
    %276 = arith.shrsi %206, %275 : vector<1x1xi32>
    %277 = arith.addi %274, %276 : vector<1x1xi32>
    %278 = arith.andi %205, %206 : vector<1x1xi32>
    %c1_i32_103 = arith.constant 1 : i32
    %279 = vector.broadcast %c1_i32_103 : i32 to vector<1x1xi32>
    %280 = arith.andi %278, %279 : vector<1x1xi32>
    %281 = arith.addi %277, %280 : vector<1x1xi32>
    %282 = vector.broadcast %281 : vector<1x1xi32> to vector<8x128xi32>
    %283 = arith.cmpi sle, %0, %282 : vector<8x128xi32>
    %cst_104 = arith.constant 1.000000e+00 : f32
    %cst_105 = arith.constant 0.000000e+00 : f32
    %284 = vector.broadcast %cst_104 : f32 to vector<8x128xf32>
    %285 = vector.broadcast %cst_105 : f32 to vector<8x128xf32>
    %286 = arith.select %283, %284, %285 : vector<8x128xi1>, vector<8x128xf32>
    %cst_106 = arith.constant dense<0.000000e+00> : vector<128xf32>
    %287 = vector.multi_reduction <add>, %286, %cst_106 [0] : vector<8x128xf32> to vector<128xf32>
    %288 = vector.shape_cast %287 : vector<128xf32> to vector<1x128xf32>
    %cst_107 = arith.constant dense<0.000000e+00> : vector<1xf32>
    %289 = vector.multi_reduction <add>, %288, %cst_107 [1] : vector<1x128xf32> to vector<1xf32>
    %290 = vector.shape_cast %289 : vector<1xf32> to vector<1x1xf32>
    %cst_108 = arith.constant 4.000000e+01 : f32
    %291 = vector.broadcast %cst_108 : f32 to vector<1x1xf32>
    %292 = arith.cmpf oge, %290, %291 : vector<1x1xf32>
    %293 = arith.select %292, %205, %281 : vector<1x1xi1>, vector<1x1xi32>
    %294 = arith.select %292, %281, %206 : vector<1x1xi1>, vector<1x1xi32>
    %c1_i32_109 = arith.constant 1 : i32
    %295 = vector.broadcast %c1_i32_109 : i32 to vector<1x1xi32>
    %296 = arith.shrsi %227, %295 : vector<1x1xi32>
    %c1_i32_110 = arith.constant 1 : i32
    %297 = vector.broadcast %c1_i32_110 : i32 to vector<1x1xi32>
    %298 = arith.shrsi %228, %297 : vector<1x1xi32>
    %299 = arith.addi %296, %298 : vector<1x1xi32>
    %300 = arith.andi %227, %228 : vector<1x1xi32>
    %c1_i32_111 = arith.constant 1 : i32
    %301 = vector.broadcast %c1_i32_111 : i32 to vector<1x1xi32>
    %302 = arith.andi %300, %301 : vector<1x1xi32>
    %303 = arith.addi %299, %302 : vector<1x1xi32>
    %304 = vector.broadcast %303 : vector<1x1xi32> to vector<8x128xi32>
    %305 = arith.cmpi sle, %0, %304 : vector<8x128xi32>
    %cst_112 = arith.constant 1.000000e+00 : f32
    %cst_113 = arith.constant 0.000000e+00 : f32
    %306 = vector.broadcast %cst_112 : f32 to vector<8x128xf32>
    %307 = vector.broadcast %cst_113 : f32 to vector<8x128xf32>
    %308 = arith.select %305, %306, %307 : vector<8x128xi1>, vector<8x128xf32>
    %cst_114 = arith.constant dense<0.000000e+00> : vector<128xf32>
    %309 = vector.multi_reduction <add>, %308, %cst_114 [0] : vector<8x128xf32> to vector<128xf32>
    %310 = vector.shape_cast %309 : vector<128xf32> to vector<1x128xf32>
    %cst_115 = arith.constant dense<0.000000e+00> : vector<1xf32>
    %311 = vector.multi_reduction <add>, %310, %cst_115 [1] : vector<1x128xf32> to vector<1xf32>
    %312 = vector.shape_cast %311 : vector<1xf32> to vector<1x1xf32>
    %cst_116 = arith.constant 4.100000e+01 : f32
    %313 = vector.broadcast %cst_116 : f32 to vector<1x1xf32>
    %314 = arith.cmpf oge, %312, %313 : vector<1x1xf32>
    %315 = arith.select %314, %227, %303 : vector<1x1xi1>, vector<1x1xi32>
    %316 = arith.select %314, %303, %228 : vector<1x1xi1>, vector<1x1xi32>
    %c1_i32_117 = arith.constant 1 : i32
    %317 = vector.broadcast %c1_i32_117 : i32 to vector<1x1xi32>
    %318 = arith.shrsi %249, %317 : vector<1x1xi32>
    %c1_i32_118 = arith.constant 1 : i32
    %319 = vector.broadcast %c1_i32_118 : i32 to vector<1x1xi32>
    %320 = arith.shrsi %250, %319 : vector<1x1xi32>
    %321 = arith.addi %318, %320 : vector<1x1xi32>
    %322 = arith.andi %249, %250 : vector<1x1xi32>
    %c1_i32_119 = arith.constant 1 : i32
    %323 = vector.broadcast %c1_i32_119 : i32 to vector<1x1xi32>
    %324 = arith.andi %322, %323 : vector<1x1xi32>
    %325 = arith.addi %321, %324 : vector<1x1xi32>
    %326 = vector.broadcast %325 : vector<1x1xi32> to vector<8x128xi32>
    %327 = arith.cmpi sle, %0, %326 : vector<8x128xi32>
    %cst_120 = arith.constant 1.000000e+00 : f32
    %cst_121 = arith.constant 0.000000e+00 : f32
    %328 = vector.broadcast %cst_120 : f32 to vector<8x128xf32>
    %329 = vector.broadcast %cst_121 : f32 to vector<8x128xf32>
    %330 = arith.select %327, %328, %329 : vector<8x128xi1>, vector<8x128xf32>
    %cst_122 = arith.constant dense<0.000000e+00> : vector<128xf32>
    %331 = vector.multi_reduction <add>, %330, %cst_122 [0] : vector<8x128xf32> to vector<128xf32>
    %332 = vector.shape_cast %331 : vector<128xf32> to vector<1x128xf32>
    %cst_123 = arith.constant dense<0.000000e+00> : vector<1xf32>
    %333 = vector.multi_reduction <add>, %332, %cst_123 [1] : vector<1x128xf32> to vector<1xf32>
    %334 = vector.shape_cast %333 : vector<1xf32> to vector<1x1xf32>
    %cst_124 = arith.constant 7.440000e+02 : f32
    %335 = vector.broadcast %cst_124 : f32 to vector<1x1xf32>
    %336 = arith.cmpf oge, %334, %335 : vector<1x1xf32>
    %337 = arith.select %336, %249, %325 : vector<1x1xi1>, vector<1x1xi32>
    %338 = arith.select %336, %325, %250 : vector<1x1xi1>, vector<1x1xi32>
    %c1_i32_125 = arith.constant 1 : i32
    %339 = vector.broadcast %c1_i32_125 : i32 to vector<1x1xi32>
    %340 = arith.shrsi %271, %339 : vector<1x1xi32>
    %c1_i32_126 = arith.constant 1 : i32
    %341 = vector.broadcast %c1_i32_126 : i32 to vector<1x1xi32>
    %342 = arith.shrsi %272, %341 : vector<1x1xi32>
    %343 = arith.addi %340, %342 : vector<1x1xi32>
    %344 = arith.andi %271, %272 : vector<1x1xi32>
    %c1_i32_127 = arith.constant 1 : i32
    %345 = vector.broadcast %c1_i32_127 : i32 to vector<1x1xi32>
    %346 = arith.andi %344, %345 : vector<1x1xi32>
    %347 = arith.addi %343, %346 : vector<1x1xi32>
    %348 = vector.broadcast %347 : vector<1x1xi32> to vector<8x128xi32>
    %349 = arith.cmpi sle, %0, %348 : vector<8x128xi32>
    %cst_128 = arith.constant 1.000000e+00 : f32
    %cst_129 = arith.constant 0.000000e+00 : f32
    %350 = vector.broadcast %cst_128 : f32 to vector<8x128xf32>
    %351 = vector.broadcast %cst_129 : f32 to vector<8x128xf32>
    %352 = arith.select %349, %350, %351 : vector<8x128xi1>, vector<8x128xf32>
    %cst_130 = arith.constant dense<0.000000e+00> : vector<128xf32>
    %353 = vector.multi_reduction <add>, %352, %cst_130 [0] : vector<8x128xf32> to vector<128xf32>
    %354 = vector.shape_cast %353 : vector<128xf32> to vector<1x128xf32>
    %cst_131 = arith.constant dense<0.000000e+00> : vector<1xf32>
    %355 = vector.multi_reduction <add>, %354, %cst_131 [1] : vector<1x128xf32> to vector<1xf32>
    %356 = vector.shape_cast %355 : vector<1xf32> to vector<1x1xf32>
    %cst_132 = arith.constant 7.450000e+02 : f32
    %357 = vector.broadcast %cst_132 : f32 to vector<1x1xf32>
    %358 = arith.cmpf oge, %356, %357 : vector<1x1xf32>
    %359 = arith.select %358, %271, %347 : vector<1x1xi1>, vector<1x1xi32>
    %360 = arith.select %358, %347, %272 : vector<1x1xi1>, vector<1x1xi32>
    %c1_i32_133 = arith.constant 1 : i32
    %361 = vector.broadcast %c1_i32_133 : i32 to vector<1x1xi32>
    %362 = arith.shrsi %293, %361 : vector<1x1xi32>
    %c1_i32_134 = arith.constant 1 : i32
    %363 = vector.broadcast %c1_i32_134 : i32 to vector<1x1xi32>
    %364 = arith.shrsi %294, %363 : vector<1x1xi32>
    %365 = arith.addi %362, %364 : vector<1x1xi32>
    %366 = arith.andi %293, %294 : vector<1x1xi32>
    %c1_i32_135 = arith.constant 1 : i32
    %367 = vector.broadcast %c1_i32_135 : i32 to vector<1x1xi32>
    %368 = arith.andi %366, %367 : vector<1x1xi32>
    %369 = arith.addi %365, %368 : vector<1x1xi32>
    %370 = vector.broadcast %369 : vector<1x1xi32> to vector<8x128xi32>
    %371 = arith.cmpi sle, %0, %370 : vector<8x128xi32>
    %cst_136 = arith.constant 1.000000e+00 : f32
    %cst_137 = arith.constant 0.000000e+00 : f32
    %372 = vector.broadcast %cst_136 : f32 to vector<8x128xf32>
    %373 = vector.broadcast %cst_137 : f32 to vector<8x128xf32>
    %374 = arith.select %371, %372, %373 : vector<8x128xi1>, vector<8x128xf32>
    %cst_138 = arith.constant dense<0.000000e+00> : vector<128xf32>
    %375 = vector.multi_reduction <add>, %374, %cst_138 [0] : vector<8x128xf32> to vector<128xf32>
    %376 = vector.shape_cast %375 : vector<128xf32> to vector<1x128xf32>
    %cst_139 = arith.constant dense<0.000000e+00> : vector<1xf32>
    %377 = vector.multi_reduction <add>, %376, %cst_139 [1] : vector<1x128xf32> to vector<1xf32>
    %378 = vector.shape_cast %377 : vector<1xf32> to vector<1x1xf32>
    %cst_140 = arith.constant 4.000000e+01 : f32
    %379 = vector.broadcast %cst_140 : f32 to vector<1x1xf32>
    %380 = arith.cmpf oge, %378, %379 : vector<1x1xf32>
    %381 = arith.select %380, %293, %369 : vector<1x1xi1>, vector<1x1xi32>
    %382 = arith.select %380, %369, %294 : vector<1x1xi1>, vector<1x1xi32>
    %c1_i32_141 = arith.constant 1 : i32
    %383 = vector.broadcast %c1_i32_141 : i32 to vector<1x1xi32>
    %384 = arith.shrsi %315, %383 : vector<1x1xi32>
    %c1_i32_142 = arith.constant 1 : i32
    %385 = vector.broadcast %c1_i32_142 : i32 to vector<1x1xi32>
    %386 = arith.shrsi %316, %385 : vector<1x1xi32>
    %387 = arith.addi %384, %386 : vector<1x1xi32>
    %388 = arith.andi %315, %316 : vector<1x1xi32>
    %c1_i32_143 = arith.constant 1 : i32
    %389 = vector.broadcast %c1_i32_143 : i32 to vector<1x1xi32>
    %390 = arith.andi %388, %389 : vector<1x1xi32>
    %391 = arith.addi %387, %390 : vector<1x1xi32>
    %392 = vector.broadcast %391 : vector<1x1xi32> to vector<8x128xi32>
    %393 = arith.cmpi sle, %0, %392 : vector<8x128xi32>
    %cst_144 = arith.constant 1.000000e+00 : f32
    %cst_145 = arith.constant 0.000000e+00 : f32
    %394 = vector.broadcast %cst_144 : f32 to vector<8x128xf32>
    %395 = vector.broadcast %cst_145 : f32 to vector<8x128xf32>
    %396 = arith.select %393, %394, %395 : vector<8x128xi1>, vector<8x128xf32>
    %cst_146 = arith.constant dense<0.000000e+00> : vector<128xf32>
    %397 = vector.multi_reduction <add>, %396, %cst_146 [0] : vector<8x128xf32> to vector<128xf32>
    %398 = vector.shape_cast %397 : vector<128xf32> to vector<1x128xf32>
    %cst_147 = arith.constant dense<0.000000e+00> : vector<1xf32>
    %399 = vector.multi_reduction <add>, %398, %cst_147 [1] : vector<1x128xf32> to vector<1xf32>
    %400 = vector.shape_cast %399 : vector<1xf32> to vector<1x1xf32>
    %cst_148 = arith.constant 4.100000e+01 : f32
    %401 = vector.broadcast %cst_148 : f32 to vector<1x1xf32>
    %402 = arith.cmpf oge, %400, %401 : vector<1x1xf32>
    %403 = arith.select %402, %315, %391 : vector<1x1xi1>, vector<1x1xi32>
    %404 = arith.select %402, %391, %316 : vector<1x1xi1>, vector<1x1xi32>
    %c1_i32_149 = arith.constant 1 : i32
    %405 = vector.broadcast %c1_i32_149 : i32 to vector<1x1xi32>
    %406 = arith.shrsi %337, %405 : vector<1x1xi32>
    %c1_i32_150 = arith.constant 1 : i32
    %407 = vector.broadcast %c1_i32_150 : i32 to vector<1x1xi32>
    %408 = arith.shrsi %338, %407 : vector<1x1xi32>
    %409 = arith.addi %406, %408 : vector<1x1xi32>
    %410 = arith.andi %337, %338 : vector<1x1xi32>
    %c1_i32_151 = arith.constant 1 : i32
    %411 = vector.broadcast %c1_i32_151 : i32 to vector<1x1xi32>
    %412 = arith.andi %410, %411 : vector<1x1xi32>
    %413 = arith.addi %409, %412 : vector<1x1xi32>
    %414 = vector.broadcast %413 : vector<1x1xi32> to vector<8x128xi32>
    %415 = arith.cmpi sle, %0, %414 : vector<8x128xi32>
    %cst_152 = arith.constant 1.000000e+00 : f32
    %cst_153 = arith.constant 0.000000e+00 : f32
    %416 = vector.broadcast %cst_152 : f32 to vector<8x128xf32>
    %417 = vector.broadcast %cst_153 : f32 to vector<8x128xf32>
    %418 = arith.select %415, %416, %417 : vector<8x128xi1>, vector<8x128xf32>
    %cst_154 = arith.constant dense<0.000000e+00> : vector<128xf32>
    %419 = vector.multi_reduction <add>, %418, %cst_154 [0] : vector<8x128xf32> to vector<128xf32>
    %420 = vector.shape_cast %419 : vector<128xf32> to vector<1x128xf32>
    %cst_155 = arith.constant dense<0.000000e+00> : vector<1xf32>
    %421 = vector.multi_reduction <add>, %420, %cst_155 [1] : vector<1x128xf32> to vector<1xf32>
    %422 = vector.shape_cast %421 : vector<1xf32> to vector<1x1xf32>
    %cst_156 = arith.constant 7.440000e+02 : f32
    %423 = vector.broadcast %cst_156 : f32 to vector<1x1xf32>
    %424 = arith.cmpf oge, %422, %423 : vector<1x1xf32>
    %425 = arith.select %424, %337, %413 : vector<1x1xi1>, vector<1x1xi32>
    %426 = arith.select %424, %413, %338 : vector<1x1xi1>, vector<1x1xi32>
    %c1_i32_157 = arith.constant 1 : i32
    %427 = vector.broadcast %c1_i32_157 : i32 to vector<1x1xi32>
    %428 = arith.shrsi %359, %427 : vector<1x1xi32>
    %c1_i32_158 = arith.constant 1 : i32
    %429 = vector.broadcast %c1_i32_158 : i32 to vector<1x1xi32>
    %430 = arith.shrsi %360, %429 : vector<1x1xi32>
    %431 = arith.addi %428, %430 : vector<1x1xi32>
    %432 = arith.andi %359, %360 : vector<1x1xi32>
    %c1_i32_159 = arith.constant 1 : i32
    %433 = vector.broadcast %c1_i32_159 : i32 to vector<1x1xi32>
    %434 = arith.andi %432, %433 : vector<1x1xi32>
    %435 = arith.addi %431, %434 : vector<1x1xi32>
    %436 = vector.broadcast %435 : vector<1x1xi32> to vector<8x128xi32>
    %437 = arith.cmpi sle, %0, %436 : vector<8x128xi32>
    %cst_160 = arith.constant 1.000000e+00 : f32
    %cst_161 = arith.constant 0.000000e+00 : f32
    %438 = vector.broadcast %cst_160 : f32 to vector<8x128xf32>
    %439 = vector.broadcast %cst_161 : f32 to vector<8x128xf32>
    %440 = arith.select %437, %438, %439 : vector<8x128xi1>, vector<8x128xf32>
    %cst_162 = arith.constant dense<0.000000e+00> : vector<128xf32>
    %441 = vector.multi_reduction <add>, %440, %cst_162 [0] : vector<8x128xf32> to vector<128xf32>
    %442 = vector.shape_cast %441 : vector<128xf32> to vector<1x128xf32>
    %cst_163 = arith.constant dense<0.000000e+00> : vector<1xf32>
    %443 = vector.multi_reduction <add>, %442, %cst_163 [1] : vector<1x128xf32> to vector<1xf32>
    %444 = vector.shape_cast %443 : vector<1xf32> to vector<1x1xf32>
    %cst_164 = arith.constant 7.450000e+02 : f32
    %445 = vector.broadcast %cst_164 : f32 to vector<1x1xf32>
    %446 = arith.cmpf oge, %444, %445 : vector<1x1xf32>
    %447 = arith.select %446, %359, %435 : vector<1x1xi1>, vector<1x1xi32>
    %448 = arith.select %446, %435, %360 : vector<1x1xi1>, vector<1x1xi32>
    %c1_i32_165 = arith.constant 1 : i32
    %449 = vector.broadcast %c1_i32_165 : i32 to vector<1x1xi32>
    %450 = arith.shrsi %381, %449 : vector<1x1xi32>
    %c1_i32_166 = arith.constant 1 : i32
    %451 = vector.broadcast %c1_i32_166 : i32 to vector<1x1xi32>
    %452 = arith.shrsi %382, %451 : vector<1x1xi32>
    %453 = arith.addi %450, %452 : vector<1x1xi32>
    %454 = arith.andi %381, %382 : vector<1x1xi32>
    %c1_i32_167 = arith.constant 1 : i32
    %455 = vector.broadcast %c1_i32_167 : i32 to vector<1x1xi32>
    %456 = arith.andi %454, %455 : vector<1x1xi32>
    %457 = arith.addi %453, %456 : vector<1x1xi32>
    %458 = vector.broadcast %457 : vector<1x1xi32> to vector<8x128xi32>
    %459 = arith.cmpi sle, %0, %458 : vector<8x128xi32>
    %cst_168 = arith.constant 1.000000e+00 : f32
    %cst_169 = arith.constant 0.000000e+00 : f32
    %460 = vector.broadcast %cst_168 : f32 to vector<8x128xf32>
    %461 = vector.broadcast %cst_169 : f32 to vector<8x128xf32>
    %462 = arith.select %459, %460, %461 : vector<8x128xi1>, vector<8x128xf32>
    %cst_170 = arith.constant dense<0.000000e+00> : vector<128xf32>
    %463 = vector.multi_reduction <add>, %462, %cst_170 [0] : vector<8x128xf32> to vector<128xf32>
    %464 = vector.shape_cast %463 : vector<128xf32> to vector<1x128xf32>
    %cst_171 = arith.constant dense<0.000000e+00> : vector<1xf32>
    %465 = vector.multi_reduction <add>, %464, %cst_171 [1] : vector<1x128xf32> to vector<1xf32>
    %466 = vector.shape_cast %465 : vector<1xf32> to vector<1x1xf32>
    %cst_172 = arith.constant 4.000000e+01 : f32
    %467 = vector.broadcast %cst_172 : f32 to vector<1x1xf32>
    %468 = arith.cmpf oge, %466, %467 : vector<1x1xf32>
    %469 = arith.select %468, %381, %457 : vector<1x1xi1>, vector<1x1xi32>
    %470 = arith.select %468, %457, %382 : vector<1x1xi1>, vector<1x1xi32>
    %c1_i32_173 = arith.constant 1 : i32
    %471 = vector.broadcast %c1_i32_173 : i32 to vector<1x1xi32>
    %472 = arith.shrsi %403, %471 : vector<1x1xi32>
    %c1_i32_174 = arith.constant 1 : i32
    %473 = vector.broadcast %c1_i32_174 : i32 to vector<1x1xi32>
    %474 = arith.shrsi %404, %473 : vector<1x1xi32>
    %475 = arith.addi %472, %474 : vector<1x1xi32>
    %476 = arith.andi %403, %404 : vector<1x1xi32>
    %c1_i32_175 = arith.constant 1 : i32
    %477 = vector.broadcast %c1_i32_175 : i32 to vector<1x1xi32>
    %478 = arith.andi %476, %477 : vector<1x1xi32>
    %479 = arith.addi %475, %478 : vector<1x1xi32>
    %480 = vector.broadcast %479 : vector<1x1xi32> to vector<8x128xi32>
    %481 = arith.cmpi sle, %0, %480 : vector<8x128xi32>
    %cst_176 = arith.constant 1.000000e+00 : f32
    %cst_177 = arith.constant 0.000000e+00 : f32
    %482 = vector.broadcast %cst_176 : f32 to vector<8x128xf32>
    %483 = vector.broadcast %cst_177 : f32 to vector<8x128xf32>
    %484 = arith.select %481, %482, %483 : vector<8x128xi1>, vector<8x128xf32>
    %cst_178 = arith.constant dense<0.000000e+00> : vector<128xf32>
    %485 = vector.multi_reduction <add>, %484, %cst_178 [0] : vector<8x128xf32> to vector<128xf32>
    %486 = vector.shape_cast %485 : vector<128xf32> to vector<1x128xf32>
    %cst_179 = arith.constant dense<0.000000e+00> : vector<1xf32>
    %487 = vector.multi_reduction <add>, %486, %cst_179 [1] : vector<1x128xf32> to vector<1xf32>
    %488 = vector.shape_cast %487 : vector<1xf32> to vector<1x1xf32>
    %cst_180 = arith.constant 4.100000e+01 : f32
    %489 = vector.broadcast %cst_180 : f32 to vector<1x1xf32>
    %490 = arith.cmpf oge, %488, %489 : vector<1x1xf32>
    %491 = arith.select %490, %403, %479 : vector<1x1xi1>, vector<1x1xi32>
    %492 = arith.select %490, %479, %404 : vector<1x1xi1>, vector<1x1xi32>
    %c1_i32_181 = arith.constant 1 : i32
    %493 = vector.broadcast %c1_i32_181 : i32 to vector<1x1xi32>
    %494 = arith.shrsi %425, %493 : vector<1x1xi32>
    %c1_i32_182 = arith.constant 1 : i32
    %495 = vector.broadcast %c1_i32_182 : i32 to vector<1x1xi32>
    %496 = arith.shrsi %426, %495 : vector<1x1xi32>
    %497 = arith.addi %494, %496 : vector<1x1xi32>
    %498 = arith.andi %425, %426 : vector<1x1xi32>
    %c1_i32_183 = arith.constant 1 : i32
    %499 = vector.broadcast %c1_i32_183 : i32 to vector<1x1xi32>
    %500 = arith.andi %498, %499 : vector<1x1xi32>
    %501 = arith.addi %497, %500 : vector<1x1xi32>
    %502 = vector.broadcast %501 : vector<1x1xi32> to vector<8x128xi32>
    %503 = arith.cmpi sle, %0, %502 : vector<8x128xi32>
    %cst_184 = arith.constant 1.000000e+00 : f32
    %cst_185 = arith.constant 0.000000e+00 : f32
    %504 = vector.broadcast %cst_184 : f32 to vector<8x128xf32>
    %505 = vector.broadcast %cst_185 : f32 to vector<8x128xf32>
    %506 = arith.select %503, %504, %505 : vector<8x128xi1>, vector<8x128xf32>
    %cst_186 = arith.constant dense<0.000000e+00> : vector<128xf32>
    %507 = vector.multi_reduction <add>, %506, %cst_186 [0] : vector<8x128xf32> to vector<128xf32>
    %508 = vector.shape_cast %507 : vector<128xf32> to vector<1x128xf32>
    %cst_187 = arith.constant dense<0.000000e+00> : vector<1xf32>
    %509 = vector.multi_reduction <add>, %508, %cst_187 [1] : vector<1x128xf32> to vector<1xf32>
    %510 = vector.shape_cast %509 : vector<1xf32> to vector<1x1xf32>
    %cst_188 = arith.constant 7.440000e+02 : f32
    %511 = vector.broadcast %cst_188 : f32 to vector<1x1xf32>
    %512 = arith.cmpf oge, %510, %511 : vector<1x1xf32>
    %513 = arith.select %512, %425, %501 : vector<1x1xi1>, vector<1x1xi32>
    %514 = arith.select %512, %501, %426 : vector<1x1xi1>, vector<1x1xi32>
    %c1_i32_189 = arith.constant 1 : i32
    %515 = vector.broadcast %c1_i32_189 : i32 to vector<1x1xi32>
    %516 = arith.shrsi %447, %515 : vector<1x1xi32>
    %c1_i32_190 = arith.constant 1 : i32
    %517 = vector.broadcast %c1_i32_190 : i32 to vector<1x1xi32>
    %518 = arith.shrsi %448, %517 : vector<1x1xi32>
    %519 = arith.addi %516, %518 : vector<1x1xi32>
    %520 = arith.andi %447, %448 : vector<1x1xi32>
    %c1_i32_191 = arith.constant 1 : i32
    %521 = vector.broadcast %c1_i32_191 : i32 to vector<1x1xi32>
    %522 = arith.andi %520, %521 : vector<1x1xi32>
    %523 = arith.addi %519, %522 : vector<1x1xi32>
    %524 = vector.broadcast %523 : vector<1x1xi32> to vector<8x128xi32>
    %525 = arith.cmpi sle, %0, %524 : vector<8x128xi32>
    %cst_192 = arith.constant 1.000000e+00 : f32
    %cst_193 = arith.constant 0.000000e+00 : f32
    %526 = vector.broadcast %cst_192 : f32 to vector<8x128xf32>
    %527 = vector.broadcast %cst_193 : f32 to vector<8x128xf32>
    %528 = arith.select %525, %526, %527 : vector<8x128xi1>, vector<8x128xf32>
    %cst_194 = arith.constant dense<0.000000e+00> : vector<128xf32>
    %529 = vector.multi_reduction <add>, %528, %cst_194 [0] : vector<8x128xf32> to vector<128xf32>
    %530 = vector.shape_cast %529 : vector<128xf32> to vector<1x128xf32>
    %cst_195 = arith.constant dense<0.000000e+00> : vector<1xf32>
    %531 = vector.multi_reduction <add>, %530, %cst_195 [1] : vector<1x128xf32> to vector<1xf32>
    %532 = vector.shape_cast %531 : vector<1xf32> to vector<1x1xf32>
    %cst_196 = arith.constant 7.450000e+02 : f32
    %533 = vector.broadcast %cst_196 : f32 to vector<1x1xf32>
    %534 = arith.cmpf oge, %532, %533 : vector<1x1xf32>
    %535 = arith.select %534, %447, %523 : vector<1x1xi1>, vector<1x1xi32>
    %536 = arith.select %534, %523, %448 : vector<1x1xi1>, vector<1x1xi32>
    %c1_i32_197 = arith.constant 1 : i32
    %537 = vector.broadcast %c1_i32_197 : i32 to vector<1x1xi32>
    %538 = arith.shrsi %469, %537 : vector<1x1xi32>
    %c1_i32_198 = arith.constant 1 : i32
    %539 = vector.broadcast %c1_i32_198 : i32 to vector<1x1xi32>
    %540 = arith.shrsi %470, %539 : vector<1x1xi32>
    %541 = arith.addi %538, %540 : vector<1x1xi32>
    %542 = arith.andi %469, %470 : vector<1x1xi32>
    %c1_i32_199 = arith.constant 1 : i32
    %543 = vector.broadcast %c1_i32_199 : i32 to vector<1x1xi32>
    %544 = arith.andi %542, %543 : vector<1x1xi32>
    %545 = arith.addi %541, %544 : vector<1x1xi32>
    %546 = vector.broadcast %545 : vector<1x1xi32> to vector<8x128xi32>
    %547 = arith.cmpi sle, %0, %546 : vector<8x128xi32>
    %cst_200 = arith.constant 1.000000e+00 : f32
    %cst_201 = arith.constant 0.000000e+00 : f32
    %548 = vector.broadcast %cst_200 : f32 to vector<8x128xf32>
    %549 = vector.broadcast %cst_201 : f32 to vector<8x128xf32>
    %550 = arith.select %547, %548, %549 : vector<8x128xi1>, vector<8x128xf32>
    %cst_202 = arith.constant dense<0.000000e+00> : vector<128xf32>
    %551 = vector.multi_reduction <add>, %550, %cst_202 [0] : vector<8x128xf32> to vector<128xf32>
    %552 = vector.shape_cast %551 : vector<128xf32> to vector<1x128xf32>
    %cst_203 = arith.constant dense<0.000000e+00> : vector<1xf32>
    %553 = vector.multi_reduction <add>, %552, %cst_203 [1] : vector<1x128xf32> to vector<1xf32>
    %554 = vector.shape_cast %553 : vector<1xf32> to vector<1x1xf32>
    %cst_204 = arith.constant 4.000000e+01 : f32
    %555 = vector.broadcast %cst_204 : f32 to vector<1x1xf32>
    %556 = arith.cmpf oge, %554, %555 : vector<1x1xf32>
    %557 = arith.select %556, %469, %545 : vector<1x1xi1>, vector<1x1xi32>
    %558 = arith.select %556, %545, %470 : vector<1x1xi1>, vector<1x1xi32>
    %c1_i32_205 = arith.constant 1 : i32
    %559 = vector.broadcast %c1_i32_205 : i32 to vector<1x1xi32>
    %560 = arith.shrsi %491, %559 : vector<1x1xi32>
    %c1_i32_206 = arith.constant 1 : i32
    %561 = vector.broadcast %c1_i32_206 : i32 to vector<1x1xi32>
    %562 = arith.shrsi %492, %561 : vector<1x1xi32>
    %563 = arith.addi %560, %562 : vector<1x1xi32>
    %564 = arith.andi %491, %492 : vector<1x1xi32>
    %c1_i32_207 = arith.constant 1 : i32
    %565 = vector.broadcast %c1_i32_207 : i32 to vector<1x1xi32>
    %566 = arith.andi %564, %565 : vector<1x1xi32>
    %567 = arith.addi %563, %566 : vector<1x1xi32>
    %568 = vector.broadcast %567 : vector<1x1xi32> to vector<8x128xi32>
    %569 = arith.cmpi sle, %0, %568 : vector<8x128xi32>
    %cst_208 = arith.constant 1.000000e+00 : f32
    %cst_209 = arith.constant 0.000000e+00 : f32
    %570 = vector.broadcast %cst_208 : f32 to vector<8x128xf32>
    %571 = vector.broadcast %cst_209 : f32 to vector<8x128xf32>
    %572 = arith.select %569, %570, %571 : vector<8x128xi1>, vector<8x128xf32>
    %cst_210 = arith.constant dense<0.000000e+00> : vector<128xf32>
    %573 = vector.multi_reduction <add>, %572, %cst_210 [0] : vector<8x128xf32> to vector<128xf32>
    %574 = vector.shape_cast %573 : vector<128xf32> to vector<1x128xf32>
    %cst_211 = arith.constant dense<0.000000e+00> : vector<1xf32>
    %575 = vector.multi_reduction <add>, %574, %cst_211 [1] : vector<1x128xf32> to vector<1xf32>
    %576 = vector.shape_cast %575 : vector<1xf32> to vector<1x1xf32>
    %cst_212 = arith.constant 4.100000e+01 : f32
    %577 = vector.broadcast %cst_212 : f32 to vector<1x1xf32>
    %578 = arith.cmpf oge, %576, %577 : vector<1x1xf32>
    %579 = arith.select %578, %491, %567 : vector<1x1xi1>, vector<1x1xi32>
    %580 = arith.select %578, %567, %492 : vector<1x1xi1>, vector<1x1xi32>
    %c1_i32_213 = arith.constant 1 : i32
    %581 = vector.broadcast %c1_i32_213 : i32 to vector<1x1xi32>
    %582 = arith.shrsi %513, %581 : vector<1x1xi32>
    %c1_i32_214 = arith.constant 1 : i32
    %583 = vector.broadcast %c1_i32_214 : i32 to vector<1x1xi32>
    %584 = arith.shrsi %514, %583 : vector<1x1xi32>
    %585 = arith.addi %582, %584 : vector<1x1xi32>
    %586 = arith.andi %513, %514 : vector<1x1xi32>
    %c1_i32_215 = arith.constant 1 : i32
    %587 = vector.broadcast %c1_i32_215 : i32 to vector<1x1xi32>
    %588 = arith.andi %586, %587 : vector<1x1xi32>
    %589 = arith.addi %585, %588 : vector<1x1xi32>
    %590 = vector.broadcast %589 : vector<1x1xi32> to vector<8x128xi32>
    %591 = arith.cmpi sle, %0, %590 : vector<8x128xi32>
    %cst_216 = arith.constant 1.000000e+00 : f32
    %cst_217 = arith.constant 0.000000e+00 : f32
    %592 = vector.broadcast %cst_216 : f32 to vector<8x128xf32>
    %593 = vector.broadcast %cst_217 : f32 to vector<8x128xf32>
    %594 = arith.select %591, %592, %593 : vector<8x128xi1>, vector<8x128xf32>
    %cst_218 = arith.constant dense<0.000000e+00> : vector<128xf32>
    %595 = vector.multi_reduction <add>, %594, %cst_218 [0] : vector<8x128xf32> to vector<128xf32>
    %596 = vector.shape_cast %595 : vector<128xf32> to vector<1x128xf32>
    %cst_219 = arith.constant dense<0.000000e+00> : vector<1xf32>
    %597 = vector.multi_reduction <add>, %596, %cst_219 [1] : vector<1x128xf32> to vector<1xf32>
    %598 = vector.shape_cast %597 : vector<1xf32> to vector<1x1xf32>
    %cst_220 = arith.constant 7.440000e+02 : f32
    %599 = vector.broadcast %cst_220 : f32 to vector<1x1xf32>
    %600 = arith.cmpf oge, %598, %599 : vector<1x1xf32>
    %601 = arith.select %600, %513, %589 : vector<1x1xi1>, vector<1x1xi32>
    %602 = arith.select %600, %589, %514 : vector<1x1xi1>, vector<1x1xi32>
    %c1_i32_221 = arith.constant 1 : i32
    %603 = vector.broadcast %c1_i32_221 : i32 to vector<1x1xi32>
    %604 = arith.shrsi %535, %603 : vector<1x1xi32>
    %c1_i32_222 = arith.constant 1 : i32
    %605 = vector.broadcast %c1_i32_222 : i32 to vector<1x1xi32>
    %606 = arith.shrsi %536, %605 : vector<1x1xi32>
    %607 = arith.addi %604, %606 : vector<1x1xi32>
    %608 = arith.andi %535, %536 : vector<1x1xi32>
    %c1_i32_223 = arith.constant 1 : i32
    %609 = vector.broadcast %c1_i32_223 : i32 to vector<1x1xi32>
    %610 = arith.andi %608, %609 : vector<1x1xi32>
    %611 = arith.addi %607, %610 : vector<1x1xi32>
    %612 = vector.broadcast %611 : vector<1x1xi32> to vector<8x128xi32>
    %613 = arith.cmpi sle, %0, %612 : vector<8x128xi32>
    %cst_224 = arith.constant 1.000000e+00 : f32
    %cst_225 = arith.constant 0.000000e+00 : f32
    %614 = vector.broadcast %cst_224 : f32 to vector<8x128xf32>
    %615 = vector.broadcast %cst_225 : f32 to vector<8x128xf32>
    %616 = arith.select %613, %614, %615 : vector<8x128xi1>, vector<8x128xf32>
    %cst_226 = arith.constant dense<0.000000e+00> : vector<128xf32>
    %617 = vector.multi_reduction <add>, %616, %cst_226 [0] : vector<8x128xf32> to vector<128xf32>
    %618 = vector.shape_cast %617 : vector<128xf32> to vector<1x128xf32>
    %cst_227 = arith.constant dense<0.000000e+00> : vector<1xf32>
    %619 = vector.multi_reduction <add>, %618, %cst_227 [1] : vector<1x128xf32> to vector<1xf32>
    %620 = vector.shape_cast %619 : vector<1xf32> to vector<1x1xf32>
    %cst_228 = arith.constant 7.450000e+02 : f32
    %621 = vector.broadcast %cst_228 : f32 to vector<1x1xf32>
    %622 = arith.cmpf oge, %620, %621 : vector<1x1xf32>
    %623 = arith.select %622, %535, %611 : vector<1x1xi1>, vector<1x1xi32>
    %624 = arith.select %622, %611, %536 : vector<1x1xi1>, vector<1x1xi32>
    %c1_i32_229 = arith.constant 1 : i32
    %625 = vector.broadcast %c1_i32_229 : i32 to vector<1x1xi32>
    %626 = arith.shrsi %557, %625 : vector<1x1xi32>
    %c1_i32_230 = arith.constant 1 : i32
    %627 = vector.broadcast %c1_i32_230 : i32 to vector<1x1xi32>
    %628 = arith.shrsi %558, %627 : vector<1x1xi32>
    %629 = arith.addi %626, %628 : vector<1x1xi32>
    %630 = arith.andi %557, %558 : vector<1x1xi32>
    %c1_i32_231 = arith.constant 1 : i32
    %631 = vector.broadcast %c1_i32_231 : i32 to vector<1x1xi32>
    %632 = arith.andi %630, %631 : vector<1x1xi32>
    %633 = arith.addi %629, %632 : vector<1x1xi32>
    %634 = vector.broadcast %633 : vector<1x1xi32> to vector<8x128xi32>
    %635 = arith.cmpi sle, %0, %634 : vector<8x128xi32>
    %cst_232 = arith.constant 1.000000e+00 : f32
    %cst_233 = arith.constant 0.000000e+00 : f32
    %636 = vector.broadcast %cst_232 : f32 to vector<8x128xf32>
    %637 = vector.broadcast %cst_233 : f32 to vector<8x128xf32>
    %638 = arith.select %635, %636, %637 : vector<8x128xi1>, vector<8x128xf32>
    %cst_234 = arith.constant dense<0.000000e+00> : vector<128xf32>
    %639 = vector.multi_reduction <add>, %638, %cst_234 [0] : vector<8x128xf32> to vector<128xf32>
    %640 = vector.shape_cast %639 : vector<128xf32> to vector<1x128xf32>
    %cst_235 = arith.constant dense<0.000000e+00> : vector<1xf32>
    %641 = vector.multi_reduction <add>, %640, %cst_235 [1] : vector<1x128xf32> to vector<1xf32>
    %642 = vector.shape_cast %641 : vector<1xf32> to vector<1x1xf32>
    %cst_236 = arith.constant 4.000000e+01 : f32
    %643 = vector.broadcast %cst_236 : f32 to vector<1x1xf32>
    %644 = arith.cmpf oge, %642, %643 : vector<1x1xf32>
    %645 = arith.select %644, %557, %633 : vector<1x1xi1>, vector<1x1xi32>
    %646 = arith.select %644, %633, %558 : vector<1x1xi1>, vector<1x1xi32>
    %c1_i32_237 = arith.constant 1 : i32
    %647 = vector.broadcast %c1_i32_237 : i32 to vector<1x1xi32>
    %648 = arith.shrsi %579, %647 : vector<1x1xi32>
    %c1_i32_238 = arith.constant 1 : i32
    %649 = vector.broadcast %c1_i32_238 : i32 to vector<1x1xi32>
    %650 = arith.shrsi %580, %649 : vector<1x1xi32>
    %651 = arith.addi %648, %650 : vector<1x1xi32>
    %652 = arith.andi %579, %580 : vector<1x1xi32>
    %c1_i32_239 = arith.constant 1 : i32
    %653 = vector.broadcast %c1_i32_239 : i32 to vector<1x1xi32>
    %654 = arith.andi %652, %653 : vector<1x1xi32>
    %655 = arith.addi %651, %654 : vector<1x1xi32>
    %656 = vector.broadcast %655 : vector<1x1xi32> to vector<8x128xi32>
    %657 = arith.cmpi sle, %0, %656 : vector<8x128xi32>
    %cst_240 = arith.constant 1.000000e+00 : f32
    %cst_241 = arith.constant 0.000000e+00 : f32
    %658 = vector.broadcast %cst_240 : f32 to vector<8x128xf32>
    %659 = vector.broadcast %cst_241 : f32 to vector<8x128xf32>
    %660 = arith.select %657, %658, %659 : vector<8x128xi1>, vector<8x128xf32>
    %cst_242 = arith.constant dense<0.000000e+00> : vector<128xf32>
    %661 = vector.multi_reduction <add>, %660, %cst_242 [0] : vector<8x128xf32> to vector<128xf32>
    %662 = vector.shape_cast %661 : vector<128xf32> to vector<1x128xf32>
    %cst_243 = arith.constant dense<0.000000e+00> : vector<1xf32>
    %663 = vector.multi_reduction <add>, %662, %cst_243 [1] : vector<1x128xf32> to vector<1xf32>
    %664 = vector.shape_cast %663 : vector<1xf32> to vector<1x1xf32>
    %cst_244 = arith.constant 4.100000e+01 : f32
    %665 = vector.broadcast %cst_244 : f32 to vector<1x1xf32>
    %666 = arith.cmpf oge, %664, %665 : vector<1x1xf32>
    %667 = arith.select %666, %579, %655 : vector<1x1xi1>, vector<1x1xi32>
    %668 = arith.select %666, %655, %580 : vector<1x1xi1>, vector<1x1xi32>
    %c1_i32_245 = arith.constant 1 : i32
    %669 = vector.broadcast %c1_i32_245 : i32 to vector<1x1xi32>
    %670 = arith.shrsi %601, %669 : vector<1x1xi32>
    %c1_i32_246 = arith.constant 1 : i32
    %671 = vector.broadcast %c1_i32_246 : i32 to vector<1x1xi32>
    %672 = arith.shrsi %602, %671 : vector<1x1xi32>
    %673 = arith.addi %670, %672 : vector<1x1xi32>
    %674 = arith.andi %601, %602 : vector<1x1xi32>
    %c1_i32_247 = arith.constant 1 : i32
    %675 = vector.broadcast %c1_i32_247 : i32 to vector<1x1xi32>
    %676 = arith.andi %674, %675 : vector<1x1xi32>
    %677 = arith.addi %673, %676 : vector<1x1xi32>
    %678 = vector.broadcast %677 : vector<1x1xi32> to vector<8x128xi32>
    %679 = arith.cmpi sle, %0, %678 : vector<8x128xi32>
    %cst_248 = arith.constant 1.000000e+00 : f32
    %cst_249 = arith.constant 0.000000e+00 : f32
    %680 = vector.broadcast %cst_248 : f32 to vector<8x128xf32>
    %681 = vector.broadcast %cst_249 : f32 to vector<8x128xf32>
    %682 = arith.select %679, %680, %681 : vector<8x128xi1>, vector<8x128xf32>
    %cst_250 = arith.constant dense<0.000000e+00> : vector<128xf32>
    %683 = vector.multi_reduction <add>, %682, %cst_250 [0] : vector<8x128xf32> to vector<128xf32>
    %684 = vector.shape_cast %683 : vector<128xf32> to vector<1x128xf32>
    %cst_251 = arith.constant dense<0.000000e+00> : vector<1xf32>
    %685 = vector.multi_reduction <add>, %684, %cst_251 [1] : vector<1x128xf32> to vector<1xf32>
    %686 = vector.shape_cast %685 : vector<1xf32> to vector<1x1xf32>
    %cst_252 = arith.constant 7.440000e+02 : f32
    %687 = vector.broadcast %cst_252 : f32 to vector<1x1xf32>
    %688 = arith.cmpf oge, %686, %687 : vector<1x1xf32>
    %689 = arith.select %688, %601, %677 : vector<1x1xi1>, vector<1x1xi32>
    %690 = arith.select %688, %677, %602 : vector<1x1xi1>, vector<1x1xi32>
    %c1_i32_253 = arith.constant 1 : i32
    %691 = vector.broadcast %c1_i32_253 : i32 to vector<1x1xi32>
    %692 = arith.shrsi %623, %691 : vector<1x1xi32>
    %c1_i32_254 = arith.constant 1 : i32
    %693 = vector.broadcast %c1_i32_254 : i32 to vector<1x1xi32>
    %694 = arith.shrsi %624, %693 : vector<1x1xi32>
    %695 = arith.addi %692, %694 : vector<1x1xi32>
    %696 = arith.andi %623, %624 : vector<1x1xi32>
    %c1_i32_255 = arith.constant 1 : i32
    %697 = vector.broadcast %c1_i32_255 : i32 to vector<1x1xi32>
    %698 = arith.andi %696, %697 : vector<1x1xi32>
    %699 = arith.addi %695, %698 : vector<1x1xi32>
    %700 = vector.broadcast %699 : vector<1x1xi32> to vector<8x128xi32>
    %701 = arith.cmpi sle, %0, %700 : vector<8x128xi32>
    %cst_256 = arith.constant 1.000000e+00 : f32
    %cst_257 = arith.constant 0.000000e+00 : f32
    %702 = vector.broadcast %cst_256 : f32 to vector<8x128xf32>
    %703 = vector.broadcast %cst_257 : f32 to vector<8x128xf32>
    %704 = arith.select %701, %702, %703 : vector<8x128xi1>, vector<8x128xf32>
    %cst_258 = arith.constant dense<0.000000e+00> : vector<128xf32>
    %705 = vector.multi_reduction <add>, %704, %cst_258 [0] : vector<8x128xf32> to vector<128xf32>
    %706 = vector.shape_cast %705 : vector<128xf32> to vector<1x128xf32>
    %cst_259 = arith.constant dense<0.000000e+00> : vector<1xf32>
    %707 = vector.multi_reduction <add>, %706, %cst_259 [1] : vector<1x128xf32> to vector<1xf32>
    %708 = vector.shape_cast %707 : vector<1xf32> to vector<1x1xf32>
    %cst_260 = arith.constant 7.450000e+02 : f32
    %709 = vector.broadcast %cst_260 : f32 to vector<1x1xf32>
    %710 = arith.cmpf oge, %708, %709 : vector<1x1xf32>
    %711 = arith.select %710, %623, %699 : vector<1x1xi1>, vector<1x1xi32>
    %712 = arith.select %710, %699, %624 : vector<1x1xi1>, vector<1x1xi32>
    %c1_i32_261 = arith.constant 1 : i32
    %713 = vector.broadcast %c1_i32_261 : i32 to vector<1x1xi32>
    %714 = arith.shrsi %645, %713 : vector<1x1xi32>
    %c1_i32_262 = arith.constant 1 : i32
    %715 = vector.broadcast %c1_i32_262 : i32 to vector<1x1xi32>
    %716 = arith.shrsi %646, %715 : vector<1x1xi32>
    %717 = arith.addi %714, %716 : vector<1x1xi32>
    %718 = arith.andi %645, %646 : vector<1x1xi32>
    %c1_i32_263 = arith.constant 1 : i32
    %719 = vector.broadcast %c1_i32_263 : i32 to vector<1x1xi32>
    %720 = arith.andi %718, %719 : vector<1x1xi32>
    %721 = arith.addi %717, %720 : vector<1x1xi32>
    %722 = vector.broadcast %721 : vector<1x1xi32> to vector<8x128xi32>
    %723 = arith.cmpi sle, %0, %722 : vector<8x128xi32>
    %cst_264 = arith.constant 1.000000e+00 : f32
    %cst_265 = arith.constant 0.000000e+00 : f32
    %724 = vector.broadcast %cst_264 : f32 to vector<8x128xf32>
    %725 = vector.broadcast %cst_265 : f32 to vector<8x128xf32>
    %726 = arith.select %723, %724, %725 : vector<8x128xi1>, vector<8x128xf32>
    %cst_266 = arith.constant dense<0.000000e+00> : vector<128xf32>
    %727 = vector.multi_reduction <add>, %726, %cst_266 [0] : vector<8x128xf32> to vector<128xf32>
    %728 = vector.shape_cast %727 : vector<128xf32> to vector<1x128xf32>
    %cst_267 = arith.constant dense<0.000000e+00> : vector<1xf32>
    %729 = vector.multi_reduction <add>, %728, %cst_267 [1] : vector<1x128xf32> to vector<1xf32>
    %730 = vector.shape_cast %729 : vector<1xf32> to vector<1x1xf32>
    %cst_268 = arith.constant 4.000000e+01 : f32
    %731 = vector.broadcast %cst_268 : f32 to vector<1x1xf32>
    %732 = arith.cmpf oge, %730, %731 : vector<1x1xf32>
    %733 = arith.select %732, %645, %721 : vector<1x1xi1>, vector<1x1xi32>
    %734 = arith.select %732, %721, %646 : vector<1x1xi1>, vector<1x1xi32>
    %c1_i32_269 = arith.constant 1 : i32
    %735 = vector.broadcast %c1_i32_269 : i32 to vector<1x1xi32>
    %736 = arith.shrsi %667, %735 : vector<1x1xi32>
    %c1_i32_270 = arith.constant 1 : i32
    %737 = vector.broadcast %c1_i32_270 : i32 to vector<1x1xi32>
    %738 = arith.shrsi %668, %737 : vector<1x1xi32>
    %739 = arith.addi %736, %738 : vector<1x1xi32>
    %740 = arith.andi %667, %668 : vector<1x1xi32>
    %c1_i32_271 = arith.constant 1 : i32
    %741 = vector.broadcast %c1_i32_271 : i32 to vector<1x1xi32>
    %742 = arith.andi %740, %741 : vector<1x1xi32>
    %743 = arith.addi %739, %742 : vector<1x1xi32>
    %744 = vector.broadcast %743 : vector<1x1xi32> to vector<8x128xi32>
    %745 = arith.cmpi sle, %0, %744 : vector<8x128xi32>
    %cst_272 = arith.constant 1.000000e+00 : f32
    %cst_273 = arith.constant 0.000000e+00 : f32
    %746 = vector.broadcast %cst_272 : f32 to vector<8x128xf32>
    %747 = vector.broadcast %cst_273 : f32 to vector<8x128xf32>
    %748 = arith.select %745, %746, %747 : vector<8x128xi1>, vector<8x128xf32>
    %cst_274 = arith.constant dense<0.000000e+00> : vector<128xf32>
    %749 = vector.multi_reduction <add>, %748, %cst_274 [0] : vector<8x128xf32> to vector<128xf32>
    %750 = vector.shape_cast %749 : vector<128xf32> to vector<1x128xf32>
    %cst_275 = arith.constant dense<0.000000e+00> : vector<1xf32>
    %751 = vector.multi_reduction <add>, %750, %cst_275 [1] : vector<1x128xf32> to vector<1xf32>
    %752 = vector.shape_cast %751 : vector<1xf32> to vector<1x1xf32>
    %cst_276 = arith.constant 4.100000e+01 : f32
    %753 = vector.broadcast %cst_276 : f32 to vector<1x1xf32>
    %754 = arith.cmpf oge, %752, %753 : vector<1x1xf32>
    %755 = arith.select %754, %667, %743 : vector<1x1xi1>, vector<1x1xi32>
    %756 = arith.select %754, %743, %668 : vector<1x1xi1>, vector<1x1xi32>
    %c1_i32_277 = arith.constant 1 : i32
    %757 = vector.broadcast %c1_i32_277 : i32 to vector<1x1xi32>
    %758 = arith.shrsi %689, %757 : vector<1x1xi32>
    %c1_i32_278 = arith.constant 1 : i32
    %759 = vector.broadcast %c1_i32_278 : i32 to vector<1x1xi32>
    %760 = arith.shrsi %690, %759 : vector<1x1xi32>
    %761 = arith.addi %758, %760 : vector<1x1xi32>
    %762 = arith.andi %689, %690 : vector<1x1xi32>
    %c1_i32_279 = arith.constant 1 : i32
    %763 = vector.broadcast %c1_i32_279 : i32 to vector<1x1xi32>
    %764 = arith.andi %762, %763 : vector<1x1xi32>
    %765 = arith.addi %761, %764 : vector<1x1xi32>
    %766 = vector.broadcast %765 : vector<1x1xi32> to vector<8x128xi32>
    %767 = arith.cmpi sle, %0, %766 : vector<8x128xi32>
    %cst_280 = arith.constant 1.000000e+00 : f32
    %cst_281 = arith.constant 0.000000e+00 : f32
    %768 = vector.broadcast %cst_280 : f32 to vector<8x128xf32>
    %769 = vector.broadcast %cst_281 : f32 to vector<8x128xf32>
    %770 = arith.select %767, %768, %769 : vector<8x128xi1>, vector<8x128xf32>
    %cst_282 = arith.constant dense<0.000000e+00> : vector<128xf32>
    %771 = vector.multi_reduction <add>, %770, %cst_282 [0] : vector<8x128xf32> to vector<128xf32>
    %772 = vector.shape_cast %771 : vector<128xf32> to vector<1x128xf32>
    %cst_283 = arith.constant dense<0.000000e+00> : vector<1xf32>
    %773 = vector.multi_reduction <add>, %772, %cst_283 [1] : vector<1x128xf32> to vector<1xf32>
    %774 = vector.shape_cast %773 : vector<1xf32> to vector<1x1xf32>
    %cst_284 = arith.constant 7.440000e+02 : f32
    %775 = vector.broadcast %cst_284 : f32 to vector<1x1xf32>
    %776 = arith.cmpf oge, %774, %775 : vector<1x1xf32>
    %777 = arith.select %776, %689, %765 : vector<1x1xi1>, vector<1x1xi32>
    %778 = arith.select %776, %765, %690 : vector<1x1xi1>, vector<1x1xi32>
    %c1_i32_285 = arith.constant 1 : i32
    %779 = vector.broadcast %c1_i32_285 : i32 to vector<1x1xi32>
    %780 = arith.shrsi %711, %779 : vector<1x1xi32>
    %c1_i32_286 = arith.constant 1 : i32
    %781 = vector.broadcast %c1_i32_286 : i32 to vector<1x1xi32>
    %782 = arith.shrsi %712, %781 : vector<1x1xi32>
    %783 = arith.addi %780, %782 : vector<1x1xi32>
    %784 = arith.andi %711, %712 : vector<1x1xi32>
    %c1_i32_287 = arith.constant 1 : i32
    %785 = vector.broadcast %c1_i32_287 : i32 to vector<1x1xi32>
    %786 = arith.andi %784, %785 : vector<1x1xi32>
    %787 = arith.addi %783, %786 : vector<1x1xi32>
    %788 = vector.broadcast %787 : vector<1x1xi32> to vector<8x128xi32>
    %789 = arith.cmpi sle, %0, %788 : vector<8x128xi32>
    %cst_288 = arith.constant 1.000000e+00 : f32
    %cst_289 = arith.constant 0.000000e+00 : f32
    %790 = vector.broadcast %cst_288 : f32 to vector<8x128xf32>
    %791 = vector.broadcast %cst_289 : f32 to vector<8x128xf32>
    %792 = arith.select %789, %790, %791 : vector<8x128xi1>, vector<8x128xf32>
    %cst_290 = arith.constant dense<0.000000e+00> : vector<128xf32>
    %793 = vector.multi_reduction <add>, %792, %cst_290 [0] : vector<8x128xf32> to vector<128xf32>
    %794 = vector.shape_cast %793 : vector<128xf32> to vector<1x128xf32>
    %cst_291 = arith.constant dense<0.000000e+00> : vector<1xf32>
    %795 = vector.multi_reduction <add>, %794, %cst_291 [1] : vector<1x128xf32> to vector<1xf32>
    %796 = vector.shape_cast %795 : vector<1xf32> to vector<1x1xf32>
    %cst_292 = arith.constant 7.450000e+02 : f32
    %797 = vector.broadcast %cst_292 : f32 to vector<1x1xf32>
    %798 = arith.cmpf oge, %796, %797 : vector<1x1xf32>
    %799 = arith.select %798, %711, %787 : vector<1x1xi1>, vector<1x1xi32>
    %800 = arith.select %798, %787, %712 : vector<1x1xi1>, vector<1x1xi32>
    %c1_i32_293 = arith.constant 1 : i32
    %801 = vector.broadcast %c1_i32_293 : i32 to vector<1x1xi32>
    %802 = arith.shrsi %733, %801 : vector<1x1xi32>
    %c1_i32_294 = arith.constant 1 : i32
    %803 = vector.broadcast %c1_i32_294 : i32 to vector<1x1xi32>
    %804 = arith.shrsi %734, %803 : vector<1x1xi32>
    %805 = arith.addi %802, %804 : vector<1x1xi32>
    %806 = arith.andi %733, %734 : vector<1x1xi32>
    %c1_i32_295 = arith.constant 1 : i32
    %807 = vector.broadcast %c1_i32_295 : i32 to vector<1x1xi32>
    %808 = arith.andi %806, %807 : vector<1x1xi32>
    %809 = arith.addi %805, %808 : vector<1x1xi32>
    %810 = vector.broadcast %809 : vector<1x1xi32> to vector<8x128xi32>
    %811 = arith.cmpi sle, %0, %810 : vector<8x128xi32>
    %cst_296 = arith.constant 1.000000e+00 : f32
    %cst_297 = arith.constant 0.000000e+00 : f32
    %812 = vector.broadcast %cst_296 : f32 to vector<8x128xf32>
    %813 = vector.broadcast %cst_297 : f32 to vector<8x128xf32>
    %814 = arith.select %811, %812, %813 : vector<8x128xi1>, vector<8x128xf32>
    %cst_298 = arith.constant dense<0.000000e+00> : vector<128xf32>
    %815 = vector.multi_reduction <add>, %814, %cst_298 [0] : vector<8x128xf32> to vector<128xf32>
    %816 = vector.shape_cast %815 : vector<128xf32> to vector<1x128xf32>
    %cst_299 = arith.constant dense<0.000000e+00> : vector<1xf32>
    %817 = vector.multi_reduction <add>, %816, %cst_299 [1] : vector<1x128xf32> to vector<1xf32>
    %818 = vector.shape_cast %817 : vector<1xf32> to vector<1x1xf32>
    %cst_300 = arith.constant 4.000000e+01 : f32
    %819 = vector.broadcast %cst_300 : f32 to vector<1x1xf32>
    %820 = arith.cmpf oge, %818, %819 : vector<1x1xf32>
    %821 = arith.select %820, %733, %809 : vector<1x1xi1>, vector<1x1xi32>
    %822 = arith.select %820, %809, %734 : vector<1x1xi1>, vector<1x1xi32>
    %c1_i32_301 = arith.constant 1 : i32
    %823 = vector.broadcast %c1_i32_301 : i32 to vector<1x1xi32>
    %824 = arith.shrsi %755, %823 : vector<1x1xi32>
    %c1_i32_302 = arith.constant 1 : i32
    %825 = vector.broadcast %c1_i32_302 : i32 to vector<1x1xi32>
    %826 = arith.shrsi %756, %825 : vector<1x1xi32>
    %827 = arith.addi %824, %826 : vector<1x1xi32>
    %828 = arith.andi %755, %756 : vector<1x1xi32>
    %c1_i32_303 = arith.constant 1 : i32
    %829 = vector.broadcast %c1_i32_303 : i32 to vector<1x1xi32>
    %830 = arith.andi %828, %829 : vector<1x1xi32>
    %831 = arith.addi %827, %830 : vector<1x1xi32>
    %832 = vector.broadcast %831 : vector<1x1xi32> to vector<8x128xi32>
    %833 = arith.cmpi sle, %0, %832 : vector<8x128xi32>
    %cst_304 = arith.constant 1.000000e+00 : f32
    %cst_305 = arith.constant 0.000000e+00 : f32
    %834 = vector.broadcast %cst_304 : f32 to vector<8x128xf32>
    %835 = vector.broadcast %cst_305 : f32 to vector<8x128xf32>
    %836 = arith.select %833, %834, %835 : vector<8x128xi1>, vector<8x128xf32>
    %cst_306 = arith.constant dense<0.000000e+00> : vector<128xf32>
    %837 = vector.multi_reduction <add>, %836, %cst_306 [0] : vector<8x128xf32> to vector<128xf32>
    %838 = vector.shape_cast %837 : vector<128xf32> to vector<1x128xf32>
    %cst_307 = arith.constant dense<0.000000e+00> : vector<1xf32>
    %839 = vector.multi_reduction <add>, %838, %cst_307 [1] : vector<1x128xf32> to vector<1xf32>
    %840 = vector.shape_cast %839 : vector<1xf32> to vector<1x1xf32>
    %cst_308 = arith.constant 4.100000e+01 : f32
    %841 = vector.broadcast %cst_308 : f32 to vector<1x1xf32>
    %842 = arith.cmpf oge, %840, %841 : vector<1x1xf32>
    %843 = arith.select %842, %755, %831 : vector<1x1xi1>, vector<1x1xi32>
    %844 = arith.select %842, %831, %756 : vector<1x1xi1>, vector<1x1xi32>
    %c1_i32_309 = arith.constant 1 : i32
    %845 = vector.broadcast %c1_i32_309 : i32 to vector<1x1xi32>
    %846 = arith.shrsi %777, %845 : vector<1x1xi32>
    %c1_i32_310 = arith.constant 1 : i32
    %847 = vector.broadcast %c1_i32_310 : i32 to vector<1x1xi32>
    %848 = arith.shrsi %778, %847 : vector<1x1xi32>
    %849 = arith.addi %846, %848 : vector<1x1xi32>
    %850 = arith.andi %777, %778 : vector<1x1xi32>
    %c1_i32_311 = arith.constant 1 : i32
    %851 = vector.broadcast %c1_i32_311 : i32 to vector<1x1xi32>
    %852 = arith.andi %850, %851 : vector<1x1xi32>
    %853 = arith.addi %849, %852 : vector<1x1xi32>
    %854 = vector.broadcast %853 : vector<1x1xi32> to vector<8x128xi32>
    %855 = arith.cmpi sle, %0, %854 : vector<8x128xi32>
    %cst_312 = arith.constant 1.000000e+00 : f32
    %cst_313 = arith.constant 0.000000e+00 : f32
    %856 = vector.broadcast %cst_312 : f32 to vector<8x128xf32>
    %857 = vector.broadcast %cst_313 : f32 to vector<8x128xf32>
    %858 = arith.select %855, %856, %857 : vector<8x128xi1>, vector<8x128xf32>
    %cst_314 = arith.constant dense<0.000000e+00> : vector<128xf32>
    %859 = vector.multi_reduction <add>, %858, %cst_314 [0] : vector<8x128xf32> to vector<128xf32>
    %860 = vector.shape_cast %859 : vector<128xf32> to vector<1x128xf32>
    %cst_315 = arith.constant dense<0.000000e+00> : vector<1xf32>
    %861 = vector.multi_reduction <add>, %860, %cst_315 [1] : vector<1x128xf32> to vector<1xf32>
    %862 = vector.shape_cast %861 : vector<1xf32> to vector<1x1xf32>
    %cst_316 = arith.constant 7.440000e+02 : f32
    %863 = vector.broadcast %cst_316 : f32 to vector<1x1xf32>
    %864 = arith.cmpf oge, %862, %863 : vector<1x1xf32>
    %865 = arith.select %864, %777, %853 : vector<1x1xi1>, vector<1x1xi32>
    %866 = arith.select %864, %853, %778 : vector<1x1xi1>, vector<1x1xi32>
    %c1_i32_317 = arith.constant 1 : i32
    %867 = vector.broadcast %c1_i32_317 : i32 to vector<1x1xi32>
    %868 = arith.shrsi %799, %867 : vector<1x1xi32>
    %c1_i32_318 = arith.constant 1 : i32
    %869 = vector.broadcast %c1_i32_318 : i32 to vector<1x1xi32>
    %870 = arith.shrsi %800, %869 : vector<1x1xi32>
    %871 = arith.addi %868, %870 : vector<1x1xi32>
    %872 = arith.andi %799, %800 : vector<1x1xi32>
    %c1_i32_319 = arith.constant 1 : i32
    %873 = vector.broadcast %c1_i32_319 : i32 to vector<1x1xi32>
    %874 = arith.andi %872, %873 : vector<1x1xi32>
    %875 = arith.addi %871, %874 : vector<1x1xi32>
    %876 = vector.broadcast %875 : vector<1x1xi32> to vector<8x128xi32>
    %877 = arith.cmpi sle, %0, %876 : vector<8x128xi32>
    %cst_320 = arith.constant 1.000000e+00 : f32
    %cst_321 = arith.constant 0.000000e+00 : f32
    %878 = vector.broadcast %cst_320 : f32 to vector<8x128xf32>
    %879 = vector.broadcast %cst_321 : f32 to vector<8x128xf32>
    %880 = arith.select %877, %878, %879 : vector<8x128xi1>, vector<8x128xf32>
    %cst_322 = arith.constant dense<0.000000e+00> : vector<128xf32>
    %881 = vector.multi_reduction <add>, %880, %cst_322 [0] : vector<8x128xf32> to vector<128xf32>
    %882 = vector.shape_cast %881 : vector<128xf32> to vector<1x128xf32>
    %cst_323 = arith.constant dense<0.000000e+00> : vector<1xf32>
    %883 = vector.multi_reduction <add>, %882, %cst_323 [1] : vector<1x128xf32> to vector<1xf32>
    %884 = vector.shape_cast %883 : vector<1xf32> to vector<1x1xf32>
    %cst_324 = arith.constant 7.450000e+02 : f32
    %885 = vector.broadcast %cst_324 : f32 to vector<1x1xf32>
    %886 = arith.cmpf oge, %884, %885 : vector<1x1xf32>
    %887 = arith.select %886, %799, %875 : vector<1x1xi1>, vector<1x1xi32>
    %888 = arith.select %886, %875, %800 : vector<1x1xi1>, vector<1x1xi32>
    %c1_i32_325 = arith.constant 1 : i32
    %889 = vector.broadcast %c1_i32_325 : i32 to vector<1x1xi32>
    %890 = arith.shrsi %821, %889 : vector<1x1xi32>
    %c1_i32_326 = arith.constant 1 : i32
    %891 = vector.broadcast %c1_i32_326 : i32 to vector<1x1xi32>
    %892 = arith.shrsi %822, %891 : vector<1x1xi32>
    %893 = arith.addi %890, %892 : vector<1x1xi32>
    %894 = arith.andi %821, %822 : vector<1x1xi32>
    %c1_i32_327 = arith.constant 1 : i32
    %895 = vector.broadcast %c1_i32_327 : i32 to vector<1x1xi32>
    %896 = arith.andi %894, %895 : vector<1x1xi32>
    %897 = arith.addi %893, %896 : vector<1x1xi32>
    %898 = vector.broadcast %897 : vector<1x1xi32> to vector<8x128xi32>
    %899 = arith.cmpi sle, %0, %898 : vector<8x128xi32>
    %cst_328 = arith.constant 1.000000e+00 : f32
    %cst_329 = arith.constant 0.000000e+00 : f32
    %900 = vector.broadcast %cst_328 : f32 to vector<8x128xf32>
    %901 = vector.broadcast %cst_329 : f32 to vector<8x128xf32>
    %902 = arith.select %899, %900, %901 : vector<8x128xi1>, vector<8x128xf32>
    %cst_330 = arith.constant dense<0.000000e+00> : vector<128xf32>
    %903 = vector.multi_reduction <add>, %902, %cst_330 [0] : vector<8x128xf32> to vector<128xf32>
    %904 = vector.shape_cast %903 : vector<128xf32> to vector<1x128xf32>
    %cst_331 = arith.constant dense<0.000000e+00> : vector<1xf32>
    %905 = vector.multi_reduction <add>, %904, %cst_331 [1] : vector<1x128xf32> to vector<1xf32>
    %906 = vector.shape_cast %905 : vector<1xf32> to vector<1x1xf32>
    %cst_332 = arith.constant 4.000000e+01 : f32
    %907 = vector.broadcast %cst_332 : f32 to vector<1x1xf32>
    %908 = arith.cmpf oge, %906, %907 : vector<1x1xf32>
    %909 = arith.select %908, %821, %897 : vector<1x1xi1>, vector<1x1xi32>
    %910 = arith.select %908, %897, %822 : vector<1x1xi1>, vector<1x1xi32>
    %c1_i32_333 = arith.constant 1 : i32
    %911 = vector.broadcast %c1_i32_333 : i32 to vector<1x1xi32>
    %912 = arith.shrsi %843, %911 : vector<1x1xi32>
    %c1_i32_334 = arith.constant 1 : i32
    %913 = vector.broadcast %c1_i32_334 : i32 to vector<1x1xi32>
    %914 = arith.shrsi %844, %913 : vector<1x1xi32>
    %915 = arith.addi %912, %914 : vector<1x1xi32>
    %916 = arith.andi %843, %844 : vector<1x1xi32>
    %c1_i32_335 = arith.constant 1 : i32
    %917 = vector.broadcast %c1_i32_335 : i32 to vector<1x1xi32>
    %918 = arith.andi %916, %917 : vector<1x1xi32>
    %919 = arith.addi %915, %918 : vector<1x1xi32>
    %920 = vector.broadcast %919 : vector<1x1xi32> to vector<8x128xi32>
    %921 = arith.cmpi sle, %0, %920 : vector<8x128xi32>
    %cst_336 = arith.constant 1.000000e+00 : f32
    %cst_337 = arith.constant 0.000000e+00 : f32
    %922 = vector.broadcast %cst_336 : f32 to vector<8x128xf32>
    %923 = vector.broadcast %cst_337 : f32 to vector<8x128xf32>
    %924 = arith.select %921, %922, %923 : vector<8x128xi1>, vector<8x128xf32>
    %cst_338 = arith.constant dense<0.000000e+00> : vector<128xf32>
    %925 = vector.multi_reduction <add>, %924, %cst_338 [0] : vector<8x128xf32> to vector<128xf32>
    %926 = vector.shape_cast %925 : vector<128xf32> to vector<1x128xf32>
    %cst_339 = arith.constant dense<0.000000e+00> : vector<1xf32>
    %927 = vector.multi_reduction <add>, %926, %cst_339 [1] : vector<1x128xf32> to vector<1xf32>
    %928 = vector.shape_cast %927 : vector<1xf32> to vector<1x1xf32>
    %cst_340 = arith.constant 4.100000e+01 : f32
    %929 = vector.broadcast %cst_340 : f32 to vector<1x1xf32>
    %930 = arith.cmpf oge, %928, %929 : vector<1x1xf32>
    %931 = arith.select %930, %843, %919 : vector<1x1xi1>, vector<1x1xi32>
    %932 = arith.select %930, %919, %844 : vector<1x1xi1>, vector<1x1xi32>
    %c1_i32_341 = arith.constant 1 : i32
    %933 = vector.broadcast %c1_i32_341 : i32 to vector<1x1xi32>
    %934 = arith.shrsi %865, %933 : vector<1x1xi32>
    %c1_i32_342 = arith.constant 1 : i32
    %935 = vector.broadcast %c1_i32_342 : i32 to vector<1x1xi32>
    %936 = arith.shrsi %866, %935 : vector<1x1xi32>
    %937 = arith.addi %934, %936 : vector<1x1xi32>
    %938 = arith.andi %865, %866 : vector<1x1xi32>
    %c1_i32_343 = arith.constant 1 : i32
    %939 = vector.broadcast %c1_i32_343 : i32 to vector<1x1xi32>
    %940 = arith.andi %938, %939 : vector<1x1xi32>
    %941 = arith.addi %937, %940 : vector<1x1xi32>
    %942 = vector.broadcast %941 : vector<1x1xi32> to vector<8x128xi32>
    %943 = arith.cmpi sle, %0, %942 : vector<8x128xi32>
    %cst_344 = arith.constant 1.000000e+00 : f32
    %cst_345 = arith.constant 0.000000e+00 : f32
    %944 = vector.broadcast %cst_344 : f32 to vector<8x128xf32>
    %945 = vector.broadcast %cst_345 : f32 to vector<8x128xf32>
    %946 = arith.select %943, %944, %945 : vector<8x128xi1>, vector<8x128xf32>
    %cst_346 = arith.constant dense<0.000000e+00> : vector<128xf32>
    %947 = vector.multi_reduction <add>, %946, %cst_346 [0] : vector<8x128xf32> to vector<128xf32>
    %948 = vector.shape_cast %947 : vector<128xf32> to vector<1x128xf32>
    %cst_347 = arith.constant dense<0.000000e+00> : vector<1xf32>
    %949 = vector.multi_reduction <add>, %948, %cst_347 [1] : vector<1x128xf32> to vector<1xf32>
    %950 = vector.shape_cast %949 : vector<1xf32> to vector<1x1xf32>
    %cst_348 = arith.constant 7.440000e+02 : f32
    %951 = vector.broadcast %cst_348 : f32 to vector<1x1xf32>
    %952 = arith.cmpf oge, %950, %951 : vector<1x1xf32>
    %953 = arith.select %952, %865, %941 : vector<1x1xi1>, vector<1x1xi32>
    %954 = arith.select %952, %941, %866 : vector<1x1xi1>, vector<1x1xi32>
    %c1_i32_349 = arith.constant 1 : i32
    %955 = vector.broadcast %c1_i32_349 : i32 to vector<1x1xi32>
    %956 = arith.shrsi %887, %955 : vector<1x1xi32>
    %c1_i32_350 = arith.constant 1 : i32
    %957 = vector.broadcast %c1_i32_350 : i32 to vector<1x1xi32>
    %958 = arith.shrsi %888, %957 : vector<1x1xi32>
    %959 = arith.addi %956, %958 : vector<1x1xi32>
    %960 = arith.andi %887, %888 : vector<1x1xi32>
    %c1_i32_351 = arith.constant 1 : i32
    %961 = vector.broadcast %c1_i32_351 : i32 to vector<1x1xi32>
    %962 = arith.andi %960, %961 : vector<1x1xi32>
    %963 = arith.addi %959, %962 : vector<1x1xi32>
    %964 = vector.broadcast %963 : vector<1x1xi32> to vector<8x128xi32>
    %965 = arith.cmpi sle, %0, %964 : vector<8x128xi32>
    %cst_352 = arith.constant 1.000000e+00 : f32
    %cst_353 = arith.constant 0.000000e+00 : f32
    %966 = vector.broadcast %cst_352 : f32 to vector<8x128xf32>
    %967 = vector.broadcast %cst_353 : f32 to vector<8x128xf32>
    %968 = arith.select %965, %966, %967 : vector<8x128xi1>, vector<8x128xf32>
    %cst_354 = arith.constant dense<0.000000e+00> : vector<128xf32>
    %969 = vector.multi_reduction <add>, %968, %cst_354 [0] : vector<8x128xf32> to vector<128xf32>
    %970 = vector.shape_cast %969 : vector<128xf32> to vector<1x128xf32>
    %cst_355 = arith.constant dense<0.000000e+00> : vector<1xf32>
    %971 = vector.multi_reduction <add>, %970, %cst_355 [1] : vector<1x128xf32> to vector<1xf32>
    %972 = vector.shape_cast %971 : vector<1xf32> to vector<1x1xf32>
    %cst_356 = arith.constant 7.450000e+02 : f32
    %973 = vector.broadcast %cst_356 : f32 to vector<1x1xf32>
    %974 = arith.cmpf oge, %972, %973 : vector<1x1xf32>
    %975 = arith.select %974, %887, %963 : vector<1x1xi1>, vector<1x1xi32>
    %976 = arith.select %974, %963, %888 : vector<1x1xi1>, vector<1x1xi32>
    %c1_i32_357 = arith.constant 1 : i32
    %977 = vector.broadcast %c1_i32_357 : i32 to vector<1x1xi32>
    %978 = arith.shrsi %909, %977 : vector<1x1xi32>
    %c1_i32_358 = arith.constant 1 : i32
    %979 = vector.broadcast %c1_i32_358 : i32 to vector<1x1xi32>
    %980 = arith.shrsi %910, %979 : vector<1x1xi32>
    %981 = arith.addi %978, %980 : vector<1x1xi32>
    %982 = arith.andi %909, %910 : vector<1x1xi32>
    %c1_i32_359 = arith.constant 1 : i32
    %983 = vector.broadcast %c1_i32_359 : i32 to vector<1x1xi32>
    %984 = arith.andi %982, %983 : vector<1x1xi32>
    %985 = arith.addi %981, %984 : vector<1x1xi32>
    %986 = vector.broadcast %985 : vector<1x1xi32> to vector<8x128xi32>
    %987 = arith.cmpi sle, %0, %986 : vector<8x128xi32>
    %cst_360 = arith.constant 1.000000e+00 : f32
    %cst_361 = arith.constant 0.000000e+00 : f32
    %988 = vector.broadcast %cst_360 : f32 to vector<8x128xf32>
    %989 = vector.broadcast %cst_361 : f32 to vector<8x128xf32>
    %990 = arith.select %987, %988, %989 : vector<8x128xi1>, vector<8x128xf32>
    %cst_362 = arith.constant dense<0.000000e+00> : vector<128xf32>
    %991 = vector.multi_reduction <add>, %990, %cst_362 [0] : vector<8x128xf32> to vector<128xf32>
    %992 = vector.shape_cast %991 : vector<128xf32> to vector<1x128xf32>
    %cst_363 = arith.constant dense<0.000000e+00> : vector<1xf32>
    %993 = vector.multi_reduction <add>, %992, %cst_363 [1] : vector<1x128xf32> to vector<1xf32>
    %994 = vector.shape_cast %993 : vector<1xf32> to vector<1x1xf32>
    %cst_364 = arith.constant 4.000000e+01 : f32
    %995 = vector.broadcast %cst_364 : f32 to vector<1x1xf32>
    %996 = arith.cmpf oge, %994, %995 : vector<1x1xf32>
    %997 = arith.select %996, %909, %985 : vector<1x1xi1>, vector<1x1xi32>
    %998 = arith.select %996, %985, %910 : vector<1x1xi1>, vector<1x1xi32>
    %c1_i32_365 = arith.constant 1 : i32
    %999 = vector.broadcast %c1_i32_365 : i32 to vector<1x1xi32>
    %1000 = arith.shrsi %931, %999 : vector<1x1xi32>
    %c1_i32_366 = arith.constant 1 : i32
    %1001 = vector.broadcast %c1_i32_366 : i32 to vector<1x1xi32>
    %1002 = arith.shrsi %932, %1001 : vector<1x1xi32>
    %1003 = arith.addi %1000, %1002 : vector<1x1xi32>
    %1004 = arith.andi %931, %932 : vector<1x1xi32>
    %c1_i32_367 = arith.constant 1 : i32
    %1005 = vector.broadcast %c1_i32_367 : i32 to vector<1x1xi32>
    %1006 = arith.andi %1004, %1005 : vector<1x1xi32>
    %1007 = arith.addi %1003, %1006 : vector<1x1xi32>
    %1008 = vector.broadcast %1007 : vector<1x1xi32> to vector<8x128xi32>
    %1009 = arith.cmpi sle, %0, %1008 : vector<8x128xi32>
    %cst_368 = arith.constant 1.000000e+00 : f32
    %cst_369 = arith.constant 0.000000e+00 : f32
    %1010 = vector.broadcast %cst_368 : f32 to vector<8x128xf32>
    %1011 = vector.broadcast %cst_369 : f32 to vector<8x128xf32>
    %1012 = arith.select %1009, %1010, %1011 : vector<8x128xi1>, vector<8x128xf32>
    %cst_370 = arith.constant dense<0.000000e+00> : vector<128xf32>
    %1013 = vector.multi_reduction <add>, %1012, %cst_370 [0] : vector<8x128xf32> to vector<128xf32>
    %1014 = vector.shape_cast %1013 : vector<128xf32> to vector<1x128xf32>
    %cst_371 = arith.constant dense<0.000000e+00> : vector<1xf32>
    %1015 = vector.multi_reduction <add>, %1014, %cst_371 [1] : vector<1x128xf32> to vector<1xf32>
    %1016 = vector.shape_cast %1015 : vector<1xf32> to vector<1x1xf32>
    %cst_372 = arith.constant 4.100000e+01 : f32
    %1017 = vector.broadcast %cst_372 : f32 to vector<1x1xf32>
    %1018 = arith.cmpf oge, %1016, %1017 : vector<1x1xf32>
    %1019 = arith.select %1018, %931, %1007 : vector<1x1xi1>, vector<1x1xi32>
    %1020 = arith.select %1018, %1007, %932 : vector<1x1xi1>, vector<1x1xi32>
    %c1_i32_373 = arith.constant 1 : i32
    %1021 = vector.broadcast %c1_i32_373 : i32 to vector<1x1xi32>
    %1022 = arith.shrsi %953, %1021 : vector<1x1xi32>
    %c1_i32_374 = arith.constant 1 : i32
    %1023 = vector.broadcast %c1_i32_374 : i32 to vector<1x1xi32>
    %1024 = arith.shrsi %954, %1023 : vector<1x1xi32>
    %1025 = arith.addi %1022, %1024 : vector<1x1xi32>
    %1026 = arith.andi %953, %954 : vector<1x1xi32>
    %c1_i32_375 = arith.constant 1 : i32
    %1027 = vector.broadcast %c1_i32_375 : i32 to vector<1x1xi32>
    %1028 = arith.andi %1026, %1027 : vector<1x1xi32>
    %1029 = arith.addi %1025, %1028 : vector<1x1xi32>
    %1030 = vector.broadcast %1029 : vector<1x1xi32> to vector<8x128xi32>
    %1031 = arith.cmpi sle, %0, %1030 : vector<8x128xi32>
    %cst_376 = arith.constant 1.000000e+00 : f32
    %cst_377 = arith.constant 0.000000e+00 : f32
    %1032 = vector.broadcast %cst_376 : f32 to vector<8x128xf32>
    %1033 = vector.broadcast %cst_377 : f32 to vector<8x128xf32>
    %1034 = arith.select %1031, %1032, %1033 : vector<8x128xi1>, vector<8x128xf32>
    %cst_378 = arith.constant dense<0.000000e+00> : vector<128xf32>
    %1035 = vector.multi_reduction <add>, %1034, %cst_378 [0] : vector<8x128xf32> to vector<128xf32>
    %1036 = vector.shape_cast %1035 : vector<128xf32> to vector<1x128xf32>
    %cst_379 = arith.constant dense<0.000000e+00> : vector<1xf32>
    %1037 = vector.multi_reduction <add>, %1036, %cst_379 [1] : vector<1x128xf32> to vector<1xf32>
    %1038 = vector.shape_cast %1037 : vector<1xf32> to vector<1x1xf32>
    %cst_380 = arith.constant 7.440000e+02 : f32
    %1039 = vector.broadcast %cst_380 : f32 to vector<1x1xf32>
    %1040 = arith.cmpf oge, %1038, %1039 : vector<1x1xf32>
    %1041 = arith.select %1040, %953, %1029 : vector<1x1xi1>, vector<1x1xi32>
    %1042 = arith.select %1040, %1029, %954 : vector<1x1xi1>, vector<1x1xi32>
    %c1_i32_381 = arith.constant 1 : i32
    %1043 = vector.broadcast %c1_i32_381 : i32 to vector<1x1xi32>
    %1044 = arith.shrsi %975, %1043 : vector<1x1xi32>
    %c1_i32_382 = arith.constant 1 : i32
    %1045 = vector.broadcast %c1_i32_382 : i32 to vector<1x1xi32>
    %1046 = arith.shrsi %976, %1045 : vector<1x1xi32>
    %1047 = arith.addi %1044, %1046 : vector<1x1xi32>
    %1048 = arith.andi %975, %976 : vector<1x1xi32>
    %c1_i32_383 = arith.constant 1 : i32
    %1049 = vector.broadcast %c1_i32_383 : i32 to vector<1x1xi32>
    %1050 = arith.andi %1048, %1049 : vector<1x1xi32>
    %1051 = arith.addi %1047, %1050 : vector<1x1xi32>
    %1052 = vector.broadcast %1051 : vector<1x1xi32> to vector<8x128xi32>
    %1053 = arith.cmpi sle, %0, %1052 : vector<8x128xi32>
    %cst_384 = arith.constant 1.000000e+00 : f32
    %cst_385 = arith.constant 0.000000e+00 : f32
    %1054 = vector.broadcast %cst_384 : f32 to vector<8x128xf32>
    %1055 = vector.broadcast %cst_385 : f32 to vector<8x128xf32>
    %1056 = arith.select %1053, %1054, %1055 : vector<8x128xi1>, vector<8x128xf32>
    %cst_386 = arith.constant dense<0.000000e+00> : vector<128xf32>
    %1057 = vector.multi_reduction <add>, %1056, %cst_386 [0] : vector<8x128xf32> to vector<128xf32>
    %1058 = vector.shape_cast %1057 : vector<128xf32> to vector<1x128xf32>
    %cst_387 = arith.constant dense<0.000000e+00> : vector<1xf32>
    %1059 = vector.multi_reduction <add>, %1058, %cst_387 [1] : vector<1x128xf32> to vector<1xf32>
    %1060 = vector.shape_cast %1059 : vector<1xf32> to vector<1x1xf32>
    %cst_388 = arith.constant 7.450000e+02 : f32
    %1061 = vector.broadcast %cst_388 : f32 to vector<1x1xf32>
    %1062 = arith.cmpf oge, %1060, %1061 : vector<1x1xf32>
    %1063 = arith.select %1062, %975, %1051 : vector<1x1xi1>, vector<1x1xi32>
    %1064 = arith.select %1062, %1051, %976 : vector<1x1xi1>, vector<1x1xi32>
    %c1_i32_389 = arith.constant 1 : i32
    %1065 = vector.broadcast %c1_i32_389 : i32 to vector<1x1xi32>
    %1066 = arith.shrsi %997, %1065 : vector<1x1xi32>
    %c1_i32_390 = arith.constant 1 : i32
    %1067 = vector.broadcast %c1_i32_390 : i32 to vector<1x1xi32>
    %1068 = arith.shrsi %998, %1067 : vector<1x1xi32>
    %1069 = arith.addi %1066, %1068 : vector<1x1xi32>
    %1070 = arith.andi %997, %998 : vector<1x1xi32>
    %c1_i32_391 = arith.constant 1 : i32
    %1071 = vector.broadcast %c1_i32_391 : i32 to vector<1x1xi32>
    %1072 = arith.andi %1070, %1071 : vector<1x1xi32>
    %1073 = arith.addi %1069, %1072 : vector<1x1xi32>
    %1074 = vector.broadcast %1073 : vector<1x1xi32> to vector<8x128xi32>
    %1075 = arith.cmpi sle, %0, %1074 : vector<8x128xi32>
    %cst_392 = arith.constant 1.000000e+00 : f32
    %cst_393 = arith.constant 0.000000e+00 : f32
    %1076 = vector.broadcast %cst_392 : f32 to vector<8x128xf32>
    %1077 = vector.broadcast %cst_393 : f32 to vector<8x128xf32>
    %1078 = arith.select %1075, %1076, %1077 : vector<8x128xi1>, vector<8x128xf32>
    %cst_394 = arith.constant dense<0.000000e+00> : vector<128xf32>
    %1079 = vector.multi_reduction <add>, %1078, %cst_394 [0] : vector<8x128xf32> to vector<128xf32>
    %1080 = vector.shape_cast %1079 : vector<128xf32> to vector<1x128xf32>
    %cst_395 = arith.constant dense<0.000000e+00> : vector<1xf32>
    %1081 = vector.multi_reduction <add>, %1080, %cst_395 [1] : vector<1x128xf32> to vector<1xf32>
    %1082 = vector.shape_cast %1081 : vector<1xf32> to vector<1x1xf32>
    %cst_396 = arith.constant 4.000000e+01 : f32
    %1083 = vector.broadcast %cst_396 : f32 to vector<1x1xf32>
    %1084 = arith.cmpf oge, %1082, %1083 : vector<1x1xf32>
    %1085 = arith.select %1084, %997, %1073 : vector<1x1xi1>, vector<1x1xi32>
    %1086 = arith.select %1084, %1073, %998 : vector<1x1xi1>, vector<1x1xi32>
    %c1_i32_397 = arith.constant 1 : i32
    %1087 = vector.broadcast %c1_i32_397 : i32 to vector<1x1xi32>
    %1088 = arith.shrsi %1019, %1087 : vector<1x1xi32>
    %c1_i32_398 = arith.constant 1 : i32
    %1089 = vector.broadcast %c1_i32_398 : i32 to vector<1x1xi32>
    %1090 = arith.shrsi %1020, %1089 : vector<1x1xi32>
    %1091 = arith.addi %1088, %1090 : vector<1x1xi32>
    %1092 = arith.andi %1019, %1020 : vector<1x1xi32>
    %c1_i32_399 = arith.constant 1 : i32
    %1093 = vector.broadcast %c1_i32_399 : i32 to vector<1x1xi32>
    %1094 = arith.andi %1092, %1093 : vector<1x1xi32>
    %1095 = arith.addi %1091, %1094 : vector<1x1xi32>
    %1096 = vector.broadcast %1095 : vector<1x1xi32> to vector<8x128xi32>
    %1097 = arith.cmpi sle, %0, %1096 : vector<8x128xi32>
    %cst_400 = arith.constant 1.000000e+00 : f32
    %cst_401 = arith.constant 0.000000e+00 : f32
    %1098 = vector.broadcast %cst_400 : f32 to vector<8x128xf32>
    %1099 = vector.broadcast %cst_401 : f32 to vector<8x128xf32>
    %1100 = arith.select %1097, %1098, %1099 : vector<8x128xi1>, vector<8x128xf32>
    %cst_402 = arith.constant dense<0.000000e+00> : vector<128xf32>
    %1101 = vector.multi_reduction <add>, %1100, %cst_402 [0] : vector<8x128xf32> to vector<128xf32>
    %1102 = vector.shape_cast %1101 : vector<128xf32> to vector<1x128xf32>
    %cst_403 = arith.constant dense<0.000000e+00> : vector<1xf32>
    %1103 = vector.multi_reduction <add>, %1102, %cst_403 [1] : vector<1x128xf32> to vector<1xf32>
    %1104 = vector.shape_cast %1103 : vector<1xf32> to vector<1x1xf32>
    %cst_404 = arith.constant 4.100000e+01 : f32
    %1105 = vector.broadcast %cst_404 : f32 to vector<1x1xf32>
    %1106 = arith.cmpf oge, %1104, %1105 : vector<1x1xf32>
    %1107 = arith.select %1106, %1019, %1095 : vector<1x1xi1>, vector<1x1xi32>
    %1108 = arith.select %1106, %1095, %1020 : vector<1x1xi1>, vector<1x1xi32>
    %c1_i32_405 = arith.constant 1 : i32
    %1109 = vector.broadcast %c1_i32_405 : i32 to vector<1x1xi32>
    %1110 = arith.shrsi %1041, %1109 : vector<1x1xi32>
    %c1_i32_406 = arith.constant 1 : i32
    %1111 = vector.broadcast %c1_i32_406 : i32 to vector<1x1xi32>
    %1112 = arith.shrsi %1042, %1111 : vector<1x1xi32>
    %1113 = arith.addi %1110, %1112 : vector<1x1xi32>
    %1114 = arith.andi %1041, %1042 : vector<1x1xi32>
    %c1_i32_407 = arith.constant 1 : i32
    %1115 = vector.broadcast %c1_i32_407 : i32 to vector<1x1xi32>
    %1116 = arith.andi %1114, %1115 : vector<1x1xi32>
    %1117 = arith.addi %1113, %1116 : vector<1x1xi32>
    %1118 = vector.broadcast %1117 : vector<1x1xi32> to vector<8x128xi32>
    %1119 = arith.cmpi sle, %0, %1118 : vector<8x128xi32>
    %cst_408 = arith.constant 1.000000e+00 : f32
    %cst_409 = arith.constant 0.000000e+00 : f32
    %1120 = vector.broadcast %cst_408 : f32 to vector<8x128xf32>
    %1121 = vector.broadcast %cst_409 : f32 to vector<8x128xf32>
    %1122 = arith.select %1119, %1120, %1121 : vector<8x128xi1>, vector<8x128xf32>
    %cst_410 = arith.constant dense<0.000000e+00> : vector<128xf32>
    %1123 = vector.multi_reduction <add>, %1122, %cst_410 [0] : vector<8x128xf32> to vector<128xf32>
    %1124 = vector.shape_cast %1123 : vector<128xf32> to vector<1x128xf32>
    %cst_411 = arith.constant dense<0.000000e+00> : vector<1xf32>
    %1125 = vector.multi_reduction <add>, %1124, %cst_411 [1] : vector<1x128xf32> to vector<1xf32>
    %1126 = vector.shape_cast %1125 : vector<1xf32> to vector<1x1xf32>
    %cst_412 = arith.constant 7.440000e+02 : f32
    %1127 = vector.broadcast %cst_412 : f32 to vector<1x1xf32>
    %1128 = arith.cmpf oge, %1126, %1127 : vector<1x1xf32>
    %1129 = arith.select %1128, %1041, %1117 : vector<1x1xi1>, vector<1x1xi32>
    %1130 = arith.select %1128, %1117, %1042 : vector<1x1xi1>, vector<1x1xi32>
    %c1_i32_413 = arith.constant 1 : i32
    %1131 = vector.broadcast %c1_i32_413 : i32 to vector<1x1xi32>
    %1132 = arith.shrsi %1063, %1131 : vector<1x1xi32>
    %c1_i32_414 = arith.constant 1 : i32
    %1133 = vector.broadcast %c1_i32_414 : i32 to vector<1x1xi32>
    %1134 = arith.shrsi %1064, %1133 : vector<1x1xi32>
    %1135 = arith.addi %1132, %1134 : vector<1x1xi32>
    %1136 = arith.andi %1063, %1064 : vector<1x1xi32>
    %c1_i32_415 = arith.constant 1 : i32
    %1137 = vector.broadcast %c1_i32_415 : i32 to vector<1x1xi32>
    %1138 = arith.andi %1136, %1137 : vector<1x1xi32>
    %1139 = arith.addi %1135, %1138 : vector<1x1xi32>
    %1140 = vector.broadcast %1139 : vector<1x1xi32> to vector<8x128xi32>
    %1141 = arith.cmpi sle, %0, %1140 : vector<8x128xi32>
    %cst_416 = arith.constant 1.000000e+00 : f32
    %cst_417 = arith.constant 0.000000e+00 : f32
    %1142 = vector.broadcast %cst_416 : f32 to vector<8x128xf32>
    %1143 = vector.broadcast %cst_417 : f32 to vector<8x128xf32>
    %1144 = arith.select %1141, %1142, %1143 : vector<8x128xi1>, vector<8x128xf32>
    %cst_418 = arith.constant dense<0.000000e+00> : vector<128xf32>
    %1145 = vector.multi_reduction <add>, %1144, %cst_418 [0] : vector<8x128xf32> to vector<128xf32>
    %1146 = vector.shape_cast %1145 : vector<128xf32> to vector<1x128xf32>
    %cst_419 = arith.constant dense<0.000000e+00> : vector<1xf32>
    %1147 = vector.multi_reduction <add>, %1146, %cst_419 [1] : vector<1x128xf32> to vector<1xf32>
    %1148 = vector.shape_cast %1147 : vector<1xf32> to vector<1x1xf32>
    %cst_420 = arith.constant 7.450000e+02 : f32
    %1149 = vector.broadcast %cst_420 : f32 to vector<1x1xf32>
    %1150 = arith.cmpf oge, %1148, %1149 : vector<1x1xf32>
    %1151 = arith.select %1150, %1063, %1139 : vector<1x1xi1>, vector<1x1xi32>
    %1152 = arith.select %1150, %1139, %1064 : vector<1x1xi1>, vector<1x1xi32>
    %c1_i32_421 = arith.constant 1 : i32
    %1153 = vector.broadcast %c1_i32_421 : i32 to vector<1x1xi32>
    %1154 = arith.shrsi %1085, %1153 : vector<1x1xi32>
    %c1_i32_422 = arith.constant 1 : i32
    %1155 = vector.broadcast %c1_i32_422 : i32 to vector<1x1xi32>
    %1156 = arith.shrsi %1086, %1155 : vector<1x1xi32>
    %1157 = arith.addi %1154, %1156 : vector<1x1xi32>
    %1158 = arith.andi %1085, %1086 : vector<1x1xi32>
    %c1_i32_423 = arith.constant 1 : i32
    %1159 = vector.broadcast %c1_i32_423 : i32 to vector<1x1xi32>
    %1160 = arith.andi %1158, %1159 : vector<1x1xi32>
    %1161 = arith.addi %1157, %1160 : vector<1x1xi32>
    %1162 = vector.broadcast %1161 : vector<1x1xi32> to vector<8x128xi32>
    %1163 = arith.cmpi sle, %0, %1162 : vector<8x128xi32>
    %cst_424 = arith.constant 1.000000e+00 : f32
    %cst_425 = arith.constant 0.000000e+00 : f32
    %1164 = vector.broadcast %cst_424 : f32 to vector<8x128xf32>
    %1165 = vector.broadcast %cst_425 : f32 to vector<8x128xf32>
    %1166 = arith.select %1163, %1164, %1165 : vector<8x128xi1>, vector<8x128xf32>
    %cst_426 = arith.constant dense<0.000000e+00> : vector<128xf32>
    %1167 = vector.multi_reduction <add>, %1166, %cst_426 [0] : vector<8x128xf32> to vector<128xf32>
    %1168 = vector.shape_cast %1167 : vector<128xf32> to vector<1x128xf32>
    %cst_427 = arith.constant dense<0.000000e+00> : vector<1xf32>
    %1169 = vector.multi_reduction <add>, %1168, %cst_427 [1] : vector<1x128xf32> to vector<1xf32>
    %1170 = vector.shape_cast %1169 : vector<1xf32> to vector<1x1xf32>
    %cst_428 = arith.constant 4.000000e+01 : f32
    %1171 = vector.broadcast %cst_428 : f32 to vector<1x1xf32>
    %1172 = arith.cmpf oge, %1170, %1171 : vector<1x1xf32>
    %1173 = arith.select %1172, %1085, %1161 : vector<1x1xi1>, vector<1x1xi32>
    %1174 = arith.select %1172, %1161, %1086 : vector<1x1xi1>, vector<1x1xi32>
    %c1_i32_429 = arith.constant 1 : i32
    %1175 = vector.broadcast %c1_i32_429 : i32 to vector<1x1xi32>
    %1176 = arith.shrsi %1107, %1175 : vector<1x1xi32>
    %c1_i32_430 = arith.constant 1 : i32
    %1177 = vector.broadcast %c1_i32_430 : i32 to vector<1x1xi32>
    %1178 = arith.shrsi %1108, %1177 : vector<1x1xi32>
    %1179 = arith.addi %1176, %1178 : vector<1x1xi32>
    %1180 = arith.andi %1107, %1108 : vector<1x1xi32>
    %c1_i32_431 = arith.constant 1 : i32
    %1181 = vector.broadcast %c1_i32_431 : i32 to vector<1x1xi32>
    %1182 = arith.andi %1180, %1181 : vector<1x1xi32>
    %1183 = arith.addi %1179, %1182 : vector<1x1xi32>
    %1184 = vector.broadcast %1183 : vector<1x1xi32> to vector<8x128xi32>
    %1185 = arith.cmpi sle, %0, %1184 : vector<8x128xi32>
    %cst_432 = arith.constant 1.000000e+00 : f32
    %cst_433 = arith.constant 0.000000e+00 : f32
    %1186 = vector.broadcast %cst_432 : f32 to vector<8x128xf32>
    %1187 = vector.broadcast %cst_433 : f32 to vector<8x128xf32>
    %1188 = arith.select %1185, %1186, %1187 : vector<8x128xi1>, vector<8x128xf32>
    %cst_434 = arith.constant dense<0.000000e+00> : vector<128xf32>
    %1189 = vector.multi_reduction <add>, %1188, %cst_434 [0] : vector<8x128xf32> to vector<128xf32>
    %1190 = vector.shape_cast %1189 : vector<128xf32> to vector<1x128xf32>
    %cst_435 = arith.constant dense<0.000000e+00> : vector<1xf32>
    %1191 = vector.multi_reduction <add>, %1190, %cst_435 [1] : vector<1x128xf32> to vector<1xf32>
    %1192 = vector.shape_cast %1191 : vector<1xf32> to vector<1x1xf32>
    %cst_436 = arith.constant 4.100000e+01 : f32
    %1193 = vector.broadcast %cst_436 : f32 to vector<1x1xf32>
    %1194 = arith.cmpf oge, %1192, %1193 : vector<1x1xf32>
    %1195 = arith.select %1194, %1107, %1183 : vector<1x1xi1>, vector<1x1xi32>
    %1196 = arith.select %1194, %1183, %1108 : vector<1x1xi1>, vector<1x1xi32>
    %c1_i32_437 = arith.constant 1 : i32
    %1197 = vector.broadcast %c1_i32_437 : i32 to vector<1x1xi32>
    %1198 = arith.shrsi %1129, %1197 : vector<1x1xi32>
    %c1_i32_438 = arith.constant 1 : i32
    %1199 = vector.broadcast %c1_i32_438 : i32 to vector<1x1xi32>
    %1200 = arith.shrsi %1130, %1199 : vector<1x1xi32>
    %1201 = arith.addi %1198, %1200 : vector<1x1xi32>
    %1202 = arith.andi %1129, %1130 : vector<1x1xi32>
    %c1_i32_439 = arith.constant 1 : i32
    %1203 = vector.broadcast %c1_i32_439 : i32 to vector<1x1xi32>
    %1204 = arith.andi %1202, %1203 : vector<1x1xi32>
    %1205 = arith.addi %1201, %1204 : vector<1x1xi32>
    %1206 = vector.broadcast %1205 : vector<1x1xi32> to vector<8x128xi32>
    %1207 = arith.cmpi sle, %0, %1206 : vector<8x128xi32>
    %cst_440 = arith.constant 1.000000e+00 : f32
    %cst_441 = arith.constant 0.000000e+00 : f32
    %1208 = vector.broadcast %cst_440 : f32 to vector<8x128xf32>
    %1209 = vector.broadcast %cst_441 : f32 to vector<8x128xf32>
    %1210 = arith.select %1207, %1208, %1209 : vector<8x128xi1>, vector<8x128xf32>
    %cst_442 = arith.constant dense<0.000000e+00> : vector<128xf32>
    %1211 = vector.multi_reduction <add>, %1210, %cst_442 [0] : vector<8x128xf32> to vector<128xf32>
    %1212 = vector.shape_cast %1211 : vector<128xf32> to vector<1x128xf32>
    %cst_443 = arith.constant dense<0.000000e+00> : vector<1xf32>
    %1213 = vector.multi_reduction <add>, %1212, %cst_443 [1] : vector<1x128xf32> to vector<1xf32>
    %1214 = vector.shape_cast %1213 : vector<1xf32> to vector<1x1xf32>
    %cst_444 = arith.constant 7.440000e+02 : f32
    %1215 = vector.broadcast %cst_444 : f32 to vector<1x1xf32>
    %1216 = arith.cmpf oge, %1214, %1215 : vector<1x1xf32>
    %1217 = arith.select %1216, %1129, %1205 : vector<1x1xi1>, vector<1x1xi32>
    %1218 = arith.select %1216, %1205, %1130 : vector<1x1xi1>, vector<1x1xi32>
    %c1_i32_445 = arith.constant 1 : i32
    %1219 = vector.broadcast %c1_i32_445 : i32 to vector<1x1xi32>
    %1220 = arith.shrsi %1151, %1219 : vector<1x1xi32>
    %c1_i32_446 = arith.constant 1 : i32
    %1221 = vector.broadcast %c1_i32_446 : i32 to vector<1x1xi32>
    %1222 = arith.shrsi %1152, %1221 : vector<1x1xi32>
    %1223 = arith.addi %1220, %1222 : vector<1x1xi32>
    %1224 = arith.andi %1151, %1152 : vector<1x1xi32>
    %c1_i32_447 = arith.constant 1 : i32
    %1225 = vector.broadcast %c1_i32_447 : i32 to vector<1x1xi32>
    %1226 = arith.andi %1224, %1225 : vector<1x1xi32>
    %1227 = arith.addi %1223, %1226 : vector<1x1xi32>
    %1228 = vector.broadcast %1227 : vector<1x1xi32> to vector<8x128xi32>
    %1229 = arith.cmpi sle, %0, %1228 : vector<8x128xi32>
    %cst_448 = arith.constant 1.000000e+00 : f32
    %cst_449 = arith.constant 0.000000e+00 : f32
    %1230 = vector.broadcast %cst_448 : f32 to vector<8x128xf32>
    %1231 = vector.broadcast %cst_449 : f32 to vector<8x128xf32>
    %1232 = arith.select %1229, %1230, %1231 : vector<8x128xi1>, vector<8x128xf32>
    %cst_450 = arith.constant dense<0.000000e+00> : vector<128xf32>
    %1233 = vector.multi_reduction <add>, %1232, %cst_450 [0] : vector<8x128xf32> to vector<128xf32>
    %1234 = vector.shape_cast %1233 : vector<128xf32> to vector<1x128xf32>
    %cst_451 = arith.constant dense<0.000000e+00> : vector<1xf32>
    %1235 = vector.multi_reduction <add>, %1234, %cst_451 [1] : vector<1x128xf32> to vector<1xf32>
    %1236 = vector.shape_cast %1235 : vector<1xf32> to vector<1x1xf32>
    %cst_452 = arith.constant 7.450000e+02 : f32
    %1237 = vector.broadcast %cst_452 : f32 to vector<1x1xf32>
    %1238 = arith.cmpf oge, %1236, %1237 : vector<1x1xf32>
    %1239 = arith.select %1238, %1151, %1227 : vector<1x1xi1>, vector<1x1xi32>
    %1240 = arith.select %1238, %1227, %1152 : vector<1x1xi1>, vector<1x1xi32>
    %c1_i32_453 = arith.constant 1 : i32
    %1241 = vector.broadcast %c1_i32_453 : i32 to vector<1x1xi32>
    %1242 = arith.shrsi %1173, %1241 : vector<1x1xi32>
    %c1_i32_454 = arith.constant 1 : i32
    %1243 = vector.broadcast %c1_i32_454 : i32 to vector<1x1xi32>
    %1244 = arith.shrsi %1174, %1243 : vector<1x1xi32>
    %1245 = arith.addi %1242, %1244 : vector<1x1xi32>
    %1246 = arith.andi %1173, %1174 : vector<1x1xi32>
    %c1_i32_455 = arith.constant 1 : i32
    %1247 = vector.broadcast %c1_i32_455 : i32 to vector<1x1xi32>
    %1248 = arith.andi %1246, %1247 : vector<1x1xi32>
    %1249 = arith.addi %1245, %1248 : vector<1x1xi32>
    %1250 = vector.broadcast %1249 : vector<1x1xi32> to vector<8x128xi32>
    %1251 = arith.cmpi sle, %0, %1250 : vector<8x128xi32>
    %cst_456 = arith.constant 1.000000e+00 : f32
    %cst_457 = arith.constant 0.000000e+00 : f32
    %1252 = vector.broadcast %cst_456 : f32 to vector<8x128xf32>
    %1253 = vector.broadcast %cst_457 : f32 to vector<8x128xf32>
    %1254 = arith.select %1251, %1252, %1253 : vector<8x128xi1>, vector<8x128xf32>
    %cst_458 = arith.constant dense<0.000000e+00> : vector<128xf32>
    %1255 = vector.multi_reduction <add>, %1254, %cst_458 [0] : vector<8x128xf32> to vector<128xf32>
    %1256 = vector.shape_cast %1255 : vector<128xf32> to vector<1x128xf32>
    %cst_459 = arith.constant dense<0.000000e+00> : vector<1xf32>
    %1257 = vector.multi_reduction <add>, %1256, %cst_459 [1] : vector<1x128xf32> to vector<1xf32>
    %1258 = vector.shape_cast %1257 : vector<1xf32> to vector<1x1xf32>
    %cst_460 = arith.constant 4.000000e+01 : f32
    %1259 = vector.broadcast %cst_460 : f32 to vector<1x1xf32>
    %1260 = arith.cmpf oge, %1258, %1259 : vector<1x1xf32>
    %1261 = arith.select %1260, %1173, %1249 : vector<1x1xi1>, vector<1x1xi32>
    %1262 = arith.select %1260, %1249, %1174 : vector<1x1xi1>, vector<1x1xi32>
    %c1_i32_461 = arith.constant 1 : i32
    %1263 = vector.broadcast %c1_i32_461 : i32 to vector<1x1xi32>
    %1264 = arith.shrsi %1195, %1263 : vector<1x1xi32>
    %c1_i32_462 = arith.constant 1 : i32
    %1265 = vector.broadcast %c1_i32_462 : i32 to vector<1x1xi32>
    %1266 = arith.shrsi %1196, %1265 : vector<1x1xi32>
    %1267 = arith.addi %1264, %1266 : vector<1x1xi32>
    %1268 = arith.andi %1195, %1196 : vector<1x1xi32>
    %c1_i32_463 = arith.constant 1 : i32
    %1269 = vector.broadcast %c1_i32_463 : i32 to vector<1x1xi32>
    %1270 = arith.andi %1268, %1269 : vector<1x1xi32>
    %1271 = arith.addi %1267, %1270 : vector<1x1xi32>
    %1272 = vector.broadcast %1271 : vector<1x1xi32> to vector<8x128xi32>
    %1273 = arith.cmpi sle, %0, %1272 : vector<8x128xi32>
    %cst_464 = arith.constant 1.000000e+00 : f32
    %cst_465 = arith.constant 0.000000e+00 : f32
    %1274 = vector.broadcast %cst_464 : f32 to vector<8x128xf32>
    %1275 = vector.broadcast %cst_465 : f32 to vector<8x128xf32>
    %1276 = arith.select %1273, %1274, %1275 : vector<8x128xi1>, vector<8x128xf32>
    %cst_466 = arith.constant dense<0.000000e+00> : vector<128xf32>
    %1277 = vector.multi_reduction <add>, %1276, %cst_466 [0] : vector<8x128xf32> to vector<128xf32>
    %1278 = vector.shape_cast %1277 : vector<128xf32> to vector<1x128xf32>
    %cst_467 = arith.constant dense<0.000000e+00> : vector<1xf32>
    %1279 = vector.multi_reduction <add>, %1278, %cst_467 [1] : vector<1x128xf32> to vector<1xf32>
    %1280 = vector.shape_cast %1279 : vector<1xf32> to vector<1x1xf32>
    %cst_468 = arith.constant 4.100000e+01 : f32
    %1281 = vector.broadcast %cst_468 : f32 to vector<1x1xf32>
    %1282 = arith.cmpf oge, %1280, %1281 : vector<1x1xf32>
    %1283 = arith.select %1282, %1195, %1271 : vector<1x1xi1>, vector<1x1xi32>
    %1284 = arith.select %1282, %1271, %1196 : vector<1x1xi1>, vector<1x1xi32>
    %c1_i32_469 = arith.constant 1 : i32
    %1285 = vector.broadcast %c1_i32_469 : i32 to vector<1x1xi32>
    %1286 = arith.shrsi %1217, %1285 : vector<1x1xi32>
    %c1_i32_470 = arith.constant 1 : i32
    %1287 = vector.broadcast %c1_i32_470 : i32 to vector<1x1xi32>
    %1288 = arith.shrsi %1218, %1287 : vector<1x1xi32>
    %1289 = arith.addi %1286, %1288 : vector<1x1xi32>
    %1290 = arith.andi %1217, %1218 : vector<1x1xi32>
    %c1_i32_471 = arith.constant 1 : i32
    %1291 = vector.broadcast %c1_i32_471 : i32 to vector<1x1xi32>
    %1292 = arith.andi %1290, %1291 : vector<1x1xi32>
    %1293 = arith.addi %1289, %1292 : vector<1x1xi32>
    %1294 = vector.broadcast %1293 : vector<1x1xi32> to vector<8x128xi32>
    %1295 = arith.cmpi sle, %0, %1294 : vector<8x128xi32>
    %cst_472 = arith.constant 1.000000e+00 : f32
    %cst_473 = arith.constant 0.000000e+00 : f32
    %1296 = vector.broadcast %cst_472 : f32 to vector<8x128xf32>
    %1297 = vector.broadcast %cst_473 : f32 to vector<8x128xf32>
    %1298 = arith.select %1295, %1296, %1297 : vector<8x128xi1>, vector<8x128xf32>
    %cst_474 = arith.constant dense<0.000000e+00> : vector<128xf32>
    %1299 = vector.multi_reduction <add>, %1298, %cst_474 [0] : vector<8x128xf32> to vector<128xf32>
    %1300 = vector.shape_cast %1299 : vector<128xf32> to vector<1x128xf32>
    %cst_475 = arith.constant dense<0.000000e+00> : vector<1xf32>
    %1301 = vector.multi_reduction <add>, %1300, %cst_475 [1] : vector<1x128xf32> to vector<1xf32>
    %1302 = vector.shape_cast %1301 : vector<1xf32> to vector<1x1xf32>
    %cst_476 = arith.constant 7.440000e+02 : f32
    %1303 = vector.broadcast %cst_476 : f32 to vector<1x1xf32>
    %1304 = arith.cmpf oge, %1302, %1303 : vector<1x1xf32>
    %1305 = arith.select %1304, %1217, %1293 : vector<1x1xi1>, vector<1x1xi32>
    %1306 = arith.select %1304, %1293, %1218 : vector<1x1xi1>, vector<1x1xi32>
    %c1_i32_477 = arith.constant 1 : i32
    %1307 = vector.broadcast %c1_i32_477 : i32 to vector<1x1xi32>
    %1308 = arith.shrsi %1239, %1307 : vector<1x1xi32>
    %c1_i32_478 = arith.constant 1 : i32
    %1309 = vector.broadcast %c1_i32_478 : i32 to vector<1x1xi32>
    %1310 = arith.shrsi %1240, %1309 : vector<1x1xi32>
    %1311 = arith.addi %1308, %1310 : vector<1x1xi32>
    %1312 = arith.andi %1239, %1240 : vector<1x1xi32>
    %c1_i32_479 = arith.constant 1 : i32
    %1313 = vector.broadcast %c1_i32_479 : i32 to vector<1x1xi32>
    %1314 = arith.andi %1312, %1313 : vector<1x1xi32>
    %1315 = arith.addi %1311, %1314 : vector<1x1xi32>
    %1316 = vector.broadcast %1315 : vector<1x1xi32> to vector<8x128xi32>
    %1317 = arith.cmpi sle, %0, %1316 : vector<8x128xi32>
    %cst_480 = arith.constant 1.000000e+00 : f32
    %cst_481 = arith.constant 0.000000e+00 : f32
    %1318 = vector.broadcast %cst_480 : f32 to vector<8x128xf32>
    %1319 = vector.broadcast %cst_481 : f32 to vector<8x128xf32>
    %1320 = arith.select %1317, %1318, %1319 : vector<8x128xi1>, vector<8x128xf32>
    %cst_482 = arith.constant dense<0.000000e+00> : vector<128xf32>
    %1321 = vector.multi_reduction <add>, %1320, %cst_482 [0] : vector<8x128xf32> to vector<128xf32>
    %1322 = vector.shape_cast %1321 : vector<128xf32> to vector<1x128xf32>
    %cst_483 = arith.constant dense<0.000000e+00> : vector<1xf32>
    %1323 = vector.multi_reduction <add>, %1322, %cst_483 [1] : vector<1x128xf32> to vector<1xf32>
    %1324 = vector.shape_cast %1323 : vector<1xf32> to vector<1x1xf32>
    %cst_484 = arith.constant 7.450000e+02 : f32
    %1325 = vector.broadcast %cst_484 : f32 to vector<1x1xf32>
    %1326 = arith.cmpf oge, %1324, %1325 : vector<1x1xf32>
    %1327 = arith.select %1326, %1239, %1315 : vector<1x1xi1>, vector<1x1xi32>
    %1328 = arith.select %1326, %1315, %1240 : vector<1x1xi1>, vector<1x1xi32>
    %c1_i32_485 = arith.constant 1 : i32
    %1329 = vector.broadcast %c1_i32_485 : i32 to vector<1x1xi32>
    %1330 = arith.shrsi %1261, %1329 : vector<1x1xi32>
    %c1_i32_486 = arith.constant 1 : i32
    %1331 = vector.broadcast %c1_i32_486 : i32 to vector<1x1xi32>
    %1332 = arith.shrsi %1262, %1331 : vector<1x1xi32>
    %1333 = arith.addi %1330, %1332 : vector<1x1xi32>
    %1334 = arith.andi %1261, %1262 : vector<1x1xi32>
    %c1_i32_487 = arith.constant 1 : i32
    %1335 = vector.broadcast %c1_i32_487 : i32 to vector<1x1xi32>
    %1336 = arith.andi %1334, %1335 : vector<1x1xi32>
    %1337 = arith.addi %1333, %1336 : vector<1x1xi32>
    %1338 = vector.broadcast %1337 : vector<1x1xi32> to vector<8x128xi32>
    %1339 = arith.cmpi sle, %0, %1338 : vector<8x128xi32>
    %cst_488 = arith.constant 1.000000e+00 : f32
    %cst_489 = arith.constant 0.000000e+00 : f32
    %1340 = vector.broadcast %cst_488 : f32 to vector<8x128xf32>
    %1341 = vector.broadcast %cst_489 : f32 to vector<8x128xf32>
    %1342 = arith.select %1339, %1340, %1341 : vector<8x128xi1>, vector<8x128xf32>
    %cst_490 = arith.constant dense<0.000000e+00> : vector<128xf32>
    %1343 = vector.multi_reduction <add>, %1342, %cst_490 [0] : vector<8x128xf32> to vector<128xf32>
    %1344 = vector.shape_cast %1343 : vector<128xf32> to vector<1x128xf32>
    %cst_491 = arith.constant dense<0.000000e+00> : vector<1xf32>
    %1345 = vector.multi_reduction <add>, %1344, %cst_491 [1] : vector<1x128xf32> to vector<1xf32>
    %1346 = vector.shape_cast %1345 : vector<1xf32> to vector<1x1xf32>
    %cst_492 = arith.constant 4.000000e+01 : f32
    %1347 = vector.broadcast %cst_492 : f32 to vector<1x1xf32>
    %1348 = arith.cmpf oge, %1346, %1347 : vector<1x1xf32>
    %1349 = arith.select %1348, %1261, %1337 : vector<1x1xi1>, vector<1x1xi32>
    %1350 = arith.select %1348, %1337, %1262 : vector<1x1xi1>, vector<1x1xi32>
    %c1_i32_493 = arith.constant 1 : i32
    %1351 = vector.broadcast %c1_i32_493 : i32 to vector<1x1xi32>
    %1352 = arith.shrsi %1283, %1351 : vector<1x1xi32>
    %c1_i32_494 = arith.constant 1 : i32
    %1353 = vector.broadcast %c1_i32_494 : i32 to vector<1x1xi32>
    %1354 = arith.shrsi %1284, %1353 : vector<1x1xi32>
    %1355 = arith.addi %1352, %1354 : vector<1x1xi32>
    %1356 = arith.andi %1283, %1284 : vector<1x1xi32>
    %c1_i32_495 = arith.constant 1 : i32
    %1357 = vector.broadcast %c1_i32_495 : i32 to vector<1x1xi32>
    %1358 = arith.andi %1356, %1357 : vector<1x1xi32>
    %1359 = arith.addi %1355, %1358 : vector<1x1xi32>
    %1360 = vector.broadcast %1359 : vector<1x1xi32> to vector<8x128xi32>
    %1361 = arith.cmpi sle, %0, %1360 : vector<8x128xi32>
    %cst_496 = arith.constant 1.000000e+00 : f32
    %cst_497 = arith.constant 0.000000e+00 : f32
    %1362 = vector.broadcast %cst_496 : f32 to vector<8x128xf32>
    %1363 = vector.broadcast %cst_497 : f32 to vector<8x128xf32>
    %1364 = arith.select %1361, %1362, %1363 : vector<8x128xi1>, vector<8x128xf32>
    %cst_498 = arith.constant dense<0.000000e+00> : vector<128xf32>
    %1365 = vector.multi_reduction <add>, %1364, %cst_498 [0] : vector<8x128xf32> to vector<128xf32>
    %1366 = vector.shape_cast %1365 : vector<128xf32> to vector<1x128xf32>
    %cst_499 = arith.constant dense<0.000000e+00> : vector<1xf32>
    %1367 = vector.multi_reduction <add>, %1366, %cst_499 [1] : vector<1x128xf32> to vector<1xf32>
    %1368 = vector.shape_cast %1367 : vector<1xf32> to vector<1x1xf32>
    %cst_500 = arith.constant 4.100000e+01 : f32
    %1369 = vector.broadcast %cst_500 : f32 to vector<1x1xf32>
    %1370 = arith.cmpf oge, %1368, %1369 : vector<1x1xf32>
    %1371 = arith.select %1370, %1283, %1359 : vector<1x1xi1>, vector<1x1xi32>
    %1372 = arith.select %1370, %1359, %1284 : vector<1x1xi1>, vector<1x1xi32>
    %c1_i32_501 = arith.constant 1 : i32
    %1373 = vector.broadcast %c1_i32_501 : i32 to vector<1x1xi32>
    %1374 = arith.shrsi %1305, %1373 : vector<1x1xi32>
    %c1_i32_502 = arith.constant 1 : i32
    %1375 = vector.broadcast %c1_i32_502 : i32 to vector<1x1xi32>
    %1376 = arith.shrsi %1306, %1375 : vector<1x1xi32>
    %1377 = arith.addi %1374, %1376 : vector<1x1xi32>
    %1378 = arith.andi %1305, %1306 : vector<1x1xi32>
    %c1_i32_503 = arith.constant 1 : i32
    %1379 = vector.broadcast %c1_i32_503 : i32 to vector<1x1xi32>
    %1380 = arith.andi %1378, %1379 : vector<1x1xi32>
    %1381 = arith.addi %1377, %1380 : vector<1x1xi32>
    %1382 = vector.broadcast %1381 : vector<1x1xi32> to vector<8x128xi32>
    %1383 = arith.cmpi sle, %0, %1382 : vector<8x128xi32>
    %cst_504 = arith.constant 1.000000e+00 : f32
    %cst_505 = arith.constant 0.000000e+00 : f32
    %1384 = vector.broadcast %cst_504 : f32 to vector<8x128xf32>
    %1385 = vector.broadcast %cst_505 : f32 to vector<8x128xf32>
    %1386 = arith.select %1383, %1384, %1385 : vector<8x128xi1>, vector<8x128xf32>
    %cst_506 = arith.constant dense<0.000000e+00> : vector<128xf32>
    %1387 = vector.multi_reduction <add>, %1386, %cst_506 [0] : vector<8x128xf32> to vector<128xf32>
    %1388 = vector.shape_cast %1387 : vector<128xf32> to vector<1x128xf32>
    %cst_507 = arith.constant dense<0.000000e+00> : vector<1xf32>
    %1389 = vector.multi_reduction <add>, %1388, %cst_507 [1] : vector<1x128xf32> to vector<1xf32>
    %1390 = vector.shape_cast %1389 : vector<1xf32> to vector<1x1xf32>
    %cst_508 = arith.constant 7.440000e+02 : f32
    %1391 = vector.broadcast %cst_508 : f32 to vector<1x1xf32>
    %1392 = arith.cmpf oge, %1390, %1391 : vector<1x1xf32>
    %1393 = arith.select %1392, %1305, %1381 : vector<1x1xi1>, vector<1x1xi32>
    %1394 = arith.select %1392, %1381, %1306 : vector<1x1xi1>, vector<1x1xi32>
    %c1_i32_509 = arith.constant 1 : i32
    %1395 = vector.broadcast %c1_i32_509 : i32 to vector<1x1xi32>
    %1396 = arith.shrsi %1327, %1395 : vector<1x1xi32>
    %c1_i32_510 = arith.constant 1 : i32
    %1397 = vector.broadcast %c1_i32_510 : i32 to vector<1x1xi32>
    %1398 = arith.shrsi %1328, %1397 : vector<1x1xi32>
    %1399 = arith.addi %1396, %1398 : vector<1x1xi32>
    %1400 = arith.andi %1327, %1328 : vector<1x1xi32>
    %c1_i32_511 = arith.constant 1 : i32
    %1401 = vector.broadcast %c1_i32_511 : i32 to vector<1x1xi32>
    %1402 = arith.andi %1400, %1401 : vector<1x1xi32>
    %1403 = arith.addi %1399, %1402 : vector<1x1xi32>
    %1404 = vector.broadcast %1403 : vector<1x1xi32> to vector<8x128xi32>
    %1405 = arith.cmpi sle, %0, %1404 : vector<8x128xi32>
    %cst_512 = arith.constant 1.000000e+00 : f32
    %cst_513 = arith.constant 0.000000e+00 : f32
    %1406 = vector.broadcast %cst_512 : f32 to vector<8x128xf32>
    %1407 = vector.broadcast %cst_513 : f32 to vector<8x128xf32>
    %1408 = arith.select %1405, %1406, %1407 : vector<8x128xi1>, vector<8x128xf32>
    %cst_514 = arith.constant dense<0.000000e+00> : vector<128xf32>
    %1409 = vector.multi_reduction <add>, %1408, %cst_514 [0] : vector<8x128xf32> to vector<128xf32>
    %1410 = vector.shape_cast %1409 : vector<128xf32> to vector<1x128xf32>
    %cst_515 = arith.constant dense<0.000000e+00> : vector<1xf32>
    %1411 = vector.multi_reduction <add>, %1410, %cst_515 [1] : vector<1x128xf32> to vector<1xf32>
    %1412 = vector.shape_cast %1411 : vector<1xf32> to vector<1x1xf32>
    %cst_516 = arith.constant 7.450000e+02 : f32
    %1413 = vector.broadcast %cst_516 : f32 to vector<1x1xf32>
    %1414 = arith.cmpf oge, %1412, %1413 : vector<1x1xf32>
    %1415 = arith.select %1414, %1327, %1403 : vector<1x1xi1>, vector<1x1xi32>
    %1416 = arith.select %1414, %1403, %1328 : vector<1x1xi1>, vector<1x1xi32>
    %c1_i32_517 = arith.constant 1 : i32
    %1417 = vector.broadcast %c1_i32_517 : i32 to vector<1x1xi32>
    %1418 = arith.shrsi %1349, %1417 : vector<1x1xi32>
    %c1_i32_518 = arith.constant 1 : i32
    %1419 = vector.broadcast %c1_i32_518 : i32 to vector<1x1xi32>
    %1420 = arith.shrsi %1350, %1419 : vector<1x1xi32>
    %1421 = arith.addi %1418, %1420 : vector<1x1xi32>
    %1422 = arith.andi %1349, %1350 : vector<1x1xi32>
    %c1_i32_519 = arith.constant 1 : i32
    %1423 = vector.broadcast %c1_i32_519 : i32 to vector<1x1xi32>
    %1424 = arith.andi %1422, %1423 : vector<1x1xi32>
    %1425 = arith.addi %1421, %1424 : vector<1x1xi32>
    %1426 = vector.broadcast %1425 : vector<1x1xi32> to vector<8x128xi32>
    %1427 = arith.cmpi sle, %0, %1426 : vector<8x128xi32>
    %cst_520 = arith.constant 1.000000e+00 : f32
    %cst_521 = arith.constant 0.000000e+00 : f32
    %1428 = vector.broadcast %cst_520 : f32 to vector<8x128xf32>
    %1429 = vector.broadcast %cst_521 : f32 to vector<8x128xf32>
    %1430 = arith.select %1427, %1428, %1429 : vector<8x128xi1>, vector<8x128xf32>
    %cst_522 = arith.constant dense<0.000000e+00> : vector<128xf32>
    %1431 = vector.multi_reduction <add>, %1430, %cst_522 [0] : vector<8x128xf32> to vector<128xf32>
    %1432 = vector.shape_cast %1431 : vector<128xf32> to vector<1x128xf32>
    %cst_523 = arith.constant dense<0.000000e+00> : vector<1xf32>
    %1433 = vector.multi_reduction <add>, %1432, %cst_523 [1] : vector<1x128xf32> to vector<1xf32>
    %1434 = vector.shape_cast %1433 : vector<1xf32> to vector<1x1xf32>
    %cst_524 = arith.constant 4.000000e+01 : f32
    %1435 = vector.broadcast %cst_524 : f32 to vector<1x1xf32>
    %1436 = arith.cmpf oge, %1434, %1435 : vector<1x1xf32>
    %1437 = arith.select %1436, %1349, %1425 : vector<1x1xi1>, vector<1x1xi32>
    %1438 = arith.select %1436, %1425, %1350 : vector<1x1xi1>, vector<1x1xi32>
    %c1_i32_525 = arith.constant 1 : i32
    %1439 = vector.broadcast %c1_i32_525 : i32 to vector<1x1xi32>
    %1440 = arith.shrsi %1371, %1439 : vector<1x1xi32>
    %c1_i32_526 = arith.constant 1 : i32
    %1441 = vector.broadcast %c1_i32_526 : i32 to vector<1x1xi32>
    %1442 = arith.shrsi %1372, %1441 : vector<1x1xi32>
    %1443 = arith.addi %1440, %1442 : vector<1x1xi32>
    %1444 = arith.andi %1371, %1372 : vector<1x1xi32>
    %c1_i32_527 = arith.constant 1 : i32
    %1445 = vector.broadcast %c1_i32_527 : i32 to vector<1x1xi32>
    %1446 = arith.andi %1444, %1445 : vector<1x1xi32>
    %1447 = arith.addi %1443, %1446 : vector<1x1xi32>
    %1448 = vector.broadcast %1447 : vector<1x1xi32> to vector<8x128xi32>
    %1449 = arith.cmpi sle, %0, %1448 : vector<8x128xi32>
    %cst_528 = arith.constant 1.000000e+00 : f32
    %cst_529 = arith.constant 0.000000e+00 : f32
    %1450 = vector.broadcast %cst_528 : f32 to vector<8x128xf32>
    %1451 = vector.broadcast %cst_529 : f32 to vector<8x128xf32>
    %1452 = arith.select %1449, %1450, %1451 : vector<8x128xi1>, vector<8x128xf32>
    %cst_530 = arith.constant dense<0.000000e+00> : vector<128xf32>
    %1453 = vector.multi_reduction <add>, %1452, %cst_530 [0] : vector<8x128xf32> to vector<128xf32>
    %1454 = vector.shape_cast %1453 : vector<128xf32> to vector<1x128xf32>
    %cst_531 = arith.constant dense<0.000000e+00> : vector<1xf32>
    %1455 = vector.multi_reduction <add>, %1454, %cst_531 [1] : vector<1x128xf32> to vector<1xf32>
    %1456 = vector.shape_cast %1455 : vector<1xf32> to vector<1x1xf32>
    %cst_532 = arith.constant 4.100000e+01 : f32
    %1457 = vector.broadcast %cst_532 : f32 to vector<1x1xf32>
    %1458 = arith.cmpf oge, %1456, %1457 : vector<1x1xf32>
    %1459 = arith.select %1458, %1371, %1447 : vector<1x1xi1>, vector<1x1xi32>
    %1460 = arith.select %1458, %1447, %1372 : vector<1x1xi1>, vector<1x1xi32>
    %c1_i32_533 = arith.constant 1 : i32
    %1461 = vector.broadcast %c1_i32_533 : i32 to vector<1x1xi32>
    %1462 = arith.shrsi %1393, %1461 : vector<1x1xi32>
    %c1_i32_534 = arith.constant 1 : i32
    %1463 = vector.broadcast %c1_i32_534 : i32 to vector<1x1xi32>
    %1464 = arith.shrsi %1394, %1463 : vector<1x1xi32>
    %1465 = arith.addi %1462, %1464 : vector<1x1xi32>
    %1466 = arith.andi %1393, %1394 : vector<1x1xi32>
    %c1_i32_535 = arith.constant 1 : i32
    %1467 = vector.broadcast %c1_i32_535 : i32 to vector<1x1xi32>
    %1468 = arith.andi %1466, %1467 : vector<1x1xi32>
    %1469 = arith.addi %1465, %1468 : vector<1x1xi32>
    %1470 = vector.broadcast %1469 : vector<1x1xi32> to vector<8x128xi32>
    %1471 = arith.cmpi sle, %0, %1470 : vector<8x128xi32>
    %cst_536 = arith.constant 1.000000e+00 : f32
    %cst_537 = arith.constant 0.000000e+00 : f32
    %1472 = vector.broadcast %cst_536 : f32 to vector<8x128xf32>
    %1473 = vector.broadcast %cst_537 : f32 to vector<8x128xf32>
    %1474 = arith.select %1471, %1472, %1473 : vector<8x128xi1>, vector<8x128xf32>
    %cst_538 = arith.constant dense<0.000000e+00> : vector<128xf32>
    %1475 = vector.multi_reduction <add>, %1474, %cst_538 [0] : vector<8x128xf32> to vector<128xf32>
    %1476 = vector.shape_cast %1475 : vector<128xf32> to vector<1x128xf32>
    %cst_539 = arith.constant dense<0.000000e+00> : vector<1xf32>
    %1477 = vector.multi_reduction <add>, %1476, %cst_539 [1] : vector<1x128xf32> to vector<1xf32>
    %1478 = vector.shape_cast %1477 : vector<1xf32> to vector<1x1xf32>
    %cst_540 = arith.constant 7.440000e+02 : f32
    %1479 = vector.broadcast %cst_540 : f32 to vector<1x1xf32>
    %1480 = arith.cmpf oge, %1478, %1479 : vector<1x1xf32>
    %1481 = arith.select %1480, %1393, %1469 : vector<1x1xi1>, vector<1x1xi32>
    %1482 = arith.select %1480, %1469, %1394 : vector<1x1xi1>, vector<1x1xi32>
    %c1_i32_541 = arith.constant 1 : i32
    %1483 = vector.broadcast %c1_i32_541 : i32 to vector<1x1xi32>
    %1484 = arith.shrsi %1415, %1483 : vector<1x1xi32>
    %c1_i32_542 = arith.constant 1 : i32
    %1485 = vector.broadcast %c1_i32_542 : i32 to vector<1x1xi32>
    %1486 = arith.shrsi %1416, %1485 : vector<1x1xi32>
    %1487 = arith.addi %1484, %1486 : vector<1x1xi32>
    %1488 = arith.andi %1415, %1416 : vector<1x1xi32>
    %c1_i32_543 = arith.constant 1 : i32
    %1489 = vector.broadcast %c1_i32_543 : i32 to vector<1x1xi32>
    %1490 = arith.andi %1488, %1489 : vector<1x1xi32>
    %1491 = arith.addi %1487, %1490 : vector<1x1xi32>
    %1492 = vector.broadcast %1491 : vector<1x1xi32> to vector<8x128xi32>
    %1493 = arith.cmpi sle, %0, %1492 : vector<8x128xi32>
    %cst_544 = arith.constant 1.000000e+00 : f32
    %cst_545 = arith.constant 0.000000e+00 : f32
    %1494 = vector.broadcast %cst_544 : f32 to vector<8x128xf32>
    %1495 = vector.broadcast %cst_545 : f32 to vector<8x128xf32>
    %1496 = arith.select %1493, %1494, %1495 : vector<8x128xi1>, vector<8x128xf32>
    %cst_546 = arith.constant dense<0.000000e+00> : vector<128xf32>
    %1497 = vector.multi_reduction <add>, %1496, %cst_546 [0] : vector<8x128xf32> to vector<128xf32>
    %1498 = vector.shape_cast %1497 : vector<128xf32> to vector<1x128xf32>
    %cst_547 = arith.constant dense<0.000000e+00> : vector<1xf32>
    %1499 = vector.multi_reduction <add>, %1498, %cst_547 [1] : vector<1x128xf32> to vector<1xf32>
    %1500 = vector.shape_cast %1499 : vector<1xf32> to vector<1x1xf32>
    %cst_548 = arith.constant 7.450000e+02 : f32
    %1501 = vector.broadcast %cst_548 : f32 to vector<1x1xf32>
    %1502 = arith.cmpf oge, %1500, %1501 : vector<1x1xf32>
    %1503 = arith.select %1502, %1415, %1491 : vector<1x1xi1>, vector<1x1xi32>
    %1504 = arith.select %1502, %1491, %1416 : vector<1x1xi1>, vector<1x1xi32>
    %c1_i32_549 = arith.constant 1 : i32
    %1505 = vector.broadcast %c1_i32_549 : i32 to vector<1x1xi32>
    %1506 = arith.shrsi %1437, %1505 : vector<1x1xi32>
    %c1_i32_550 = arith.constant 1 : i32
    %1507 = vector.broadcast %c1_i32_550 : i32 to vector<1x1xi32>
    %1508 = arith.shrsi %1438, %1507 : vector<1x1xi32>
    %1509 = arith.addi %1506, %1508 : vector<1x1xi32>
    %1510 = arith.andi %1437, %1438 : vector<1x1xi32>
    %c1_i32_551 = arith.constant 1 : i32
    %1511 = vector.broadcast %c1_i32_551 : i32 to vector<1x1xi32>
    %1512 = arith.andi %1510, %1511 : vector<1x1xi32>
    %1513 = arith.addi %1509, %1512 : vector<1x1xi32>
    %1514 = vector.broadcast %1513 : vector<1x1xi32> to vector<8x128xi32>
    %1515 = arith.cmpi sle, %0, %1514 : vector<8x128xi32>
    %cst_552 = arith.constant 1.000000e+00 : f32
    %cst_553 = arith.constant 0.000000e+00 : f32
    %1516 = vector.broadcast %cst_552 : f32 to vector<8x128xf32>
    %1517 = vector.broadcast %cst_553 : f32 to vector<8x128xf32>
    %1518 = arith.select %1515, %1516, %1517 : vector<8x128xi1>, vector<8x128xf32>
    %cst_554 = arith.constant dense<0.000000e+00> : vector<128xf32>
    %1519 = vector.multi_reduction <add>, %1518, %cst_554 [0] : vector<8x128xf32> to vector<128xf32>
    %1520 = vector.shape_cast %1519 : vector<128xf32> to vector<1x128xf32>
    %cst_555 = arith.constant dense<0.000000e+00> : vector<1xf32>
    %1521 = vector.multi_reduction <add>, %1520, %cst_555 [1] : vector<1x128xf32> to vector<1xf32>
    %1522 = vector.shape_cast %1521 : vector<1xf32> to vector<1x1xf32>
    %cst_556 = arith.constant 4.000000e+01 : f32
    %1523 = vector.broadcast %cst_556 : f32 to vector<1x1xf32>
    %1524 = arith.cmpf oge, %1522, %1523 : vector<1x1xf32>
    %1525 = arith.select %1524, %1437, %1513 : vector<1x1xi1>, vector<1x1xi32>
    %1526 = arith.select %1524, %1513, %1438 : vector<1x1xi1>, vector<1x1xi32>
    %c1_i32_557 = arith.constant 1 : i32
    %1527 = vector.broadcast %c1_i32_557 : i32 to vector<1x1xi32>
    %1528 = arith.shrsi %1459, %1527 : vector<1x1xi32>
    %c1_i32_558 = arith.constant 1 : i32
    %1529 = vector.broadcast %c1_i32_558 : i32 to vector<1x1xi32>
    %1530 = arith.shrsi %1460, %1529 : vector<1x1xi32>
    %1531 = arith.addi %1528, %1530 : vector<1x1xi32>
    %1532 = arith.andi %1459, %1460 : vector<1x1xi32>
    %c1_i32_559 = arith.constant 1 : i32
    %1533 = vector.broadcast %c1_i32_559 : i32 to vector<1x1xi32>
    %1534 = arith.andi %1532, %1533 : vector<1x1xi32>
    %1535 = arith.addi %1531, %1534 : vector<1x1xi32>
    %1536 = vector.broadcast %1535 : vector<1x1xi32> to vector<8x128xi32>
    %1537 = arith.cmpi sle, %0, %1536 : vector<8x128xi32>
    %cst_560 = arith.constant 1.000000e+00 : f32
    %cst_561 = arith.constant 0.000000e+00 : f32
    %1538 = vector.broadcast %cst_560 : f32 to vector<8x128xf32>
    %1539 = vector.broadcast %cst_561 : f32 to vector<8x128xf32>
    %1540 = arith.select %1537, %1538, %1539 : vector<8x128xi1>, vector<8x128xf32>
    %cst_562 = arith.constant dense<0.000000e+00> : vector<128xf32>
    %1541 = vector.multi_reduction <add>, %1540, %cst_562 [0] : vector<8x128xf32> to vector<128xf32>
    %1542 = vector.shape_cast %1541 : vector<128xf32> to vector<1x128xf32>
    %cst_563 = arith.constant dense<0.000000e+00> : vector<1xf32>
    %1543 = vector.multi_reduction <add>, %1542, %cst_563 [1] : vector<1x128xf32> to vector<1xf32>
    %1544 = vector.shape_cast %1543 : vector<1xf32> to vector<1x1xf32>
    %cst_564 = arith.constant 4.100000e+01 : f32
    %1545 = vector.broadcast %cst_564 : f32 to vector<1x1xf32>
    %1546 = arith.cmpf oge, %1544, %1545 : vector<1x1xf32>
    %1547 = arith.select %1546, %1459, %1535 : vector<1x1xi1>, vector<1x1xi32>
    %1548 = arith.select %1546, %1535, %1460 : vector<1x1xi1>, vector<1x1xi32>
    %c1_i32_565 = arith.constant 1 : i32
    %1549 = vector.broadcast %c1_i32_565 : i32 to vector<1x1xi32>
    %1550 = arith.shrsi %1481, %1549 : vector<1x1xi32>
    %c1_i32_566 = arith.constant 1 : i32
    %1551 = vector.broadcast %c1_i32_566 : i32 to vector<1x1xi32>
    %1552 = arith.shrsi %1482, %1551 : vector<1x1xi32>
    %1553 = arith.addi %1550, %1552 : vector<1x1xi32>
    %1554 = arith.andi %1481, %1482 : vector<1x1xi32>
    %c1_i32_567 = arith.constant 1 : i32
    %1555 = vector.broadcast %c1_i32_567 : i32 to vector<1x1xi32>
    %1556 = arith.andi %1554, %1555 : vector<1x1xi32>
    %1557 = arith.addi %1553, %1556 : vector<1x1xi32>
    %1558 = vector.broadcast %1557 : vector<1x1xi32> to vector<8x128xi32>
    %1559 = arith.cmpi sle, %0, %1558 : vector<8x128xi32>
    %cst_568 = arith.constant 1.000000e+00 : f32
    %cst_569 = arith.constant 0.000000e+00 : f32
    %1560 = vector.broadcast %cst_568 : f32 to vector<8x128xf32>
    %1561 = vector.broadcast %cst_569 : f32 to vector<8x128xf32>
    %1562 = arith.select %1559, %1560, %1561 : vector<8x128xi1>, vector<8x128xf32>
    %cst_570 = arith.constant dense<0.000000e+00> : vector<128xf32>
    %1563 = vector.multi_reduction <add>, %1562, %cst_570 [0] : vector<8x128xf32> to vector<128xf32>
    %1564 = vector.shape_cast %1563 : vector<128xf32> to vector<1x128xf32>
    %cst_571 = arith.constant dense<0.000000e+00> : vector<1xf32>
    %1565 = vector.multi_reduction <add>, %1564, %cst_571 [1] : vector<1x128xf32> to vector<1xf32>
    %1566 = vector.shape_cast %1565 : vector<1xf32> to vector<1x1xf32>
    %cst_572 = arith.constant 7.440000e+02 : f32
    %1567 = vector.broadcast %cst_572 : f32 to vector<1x1xf32>
    %1568 = arith.cmpf oge, %1566, %1567 : vector<1x1xf32>
    %1569 = arith.select %1568, %1481, %1557 : vector<1x1xi1>, vector<1x1xi32>
    %1570 = arith.select %1568, %1557, %1482 : vector<1x1xi1>, vector<1x1xi32>
    %c1_i32_573 = arith.constant 1 : i32
    %1571 = vector.broadcast %c1_i32_573 : i32 to vector<1x1xi32>
    %1572 = arith.shrsi %1503, %1571 : vector<1x1xi32>
    %c1_i32_574 = arith.constant 1 : i32
    %1573 = vector.broadcast %c1_i32_574 : i32 to vector<1x1xi32>
    %1574 = arith.shrsi %1504, %1573 : vector<1x1xi32>
    %1575 = arith.addi %1572, %1574 : vector<1x1xi32>
    %1576 = arith.andi %1503, %1504 : vector<1x1xi32>
    %c1_i32_575 = arith.constant 1 : i32
    %1577 = vector.broadcast %c1_i32_575 : i32 to vector<1x1xi32>
    %1578 = arith.andi %1576, %1577 : vector<1x1xi32>
    %1579 = arith.addi %1575, %1578 : vector<1x1xi32>
    %1580 = vector.broadcast %1579 : vector<1x1xi32> to vector<8x128xi32>
    %1581 = arith.cmpi sle, %0, %1580 : vector<8x128xi32>
    %cst_576 = arith.constant 1.000000e+00 : f32
    %cst_577 = arith.constant 0.000000e+00 : f32
    %1582 = vector.broadcast %cst_576 : f32 to vector<8x128xf32>
    %1583 = vector.broadcast %cst_577 : f32 to vector<8x128xf32>
    %1584 = arith.select %1581, %1582, %1583 : vector<8x128xi1>, vector<8x128xf32>
    %cst_578 = arith.constant dense<0.000000e+00> : vector<128xf32>
    %1585 = vector.multi_reduction <add>, %1584, %cst_578 [0] : vector<8x128xf32> to vector<128xf32>
    %1586 = vector.shape_cast %1585 : vector<128xf32> to vector<1x128xf32>
    %cst_579 = arith.constant dense<0.000000e+00> : vector<1xf32>
    %1587 = vector.multi_reduction <add>, %1586, %cst_579 [1] : vector<1x128xf32> to vector<1xf32>
    %1588 = vector.shape_cast %1587 : vector<1xf32> to vector<1x1xf32>
    %cst_580 = arith.constant 7.450000e+02 : f32
    %1589 = vector.broadcast %cst_580 : f32 to vector<1x1xf32>
    %1590 = arith.cmpf oge, %1588, %1589 : vector<1x1xf32>
    %1591 = arith.select %1590, %1503, %1579 : vector<1x1xi1>, vector<1x1xi32>
    %1592 = arith.select %1590, %1579, %1504 : vector<1x1xi1>, vector<1x1xi32>
    %c1_i32_581 = arith.constant 1 : i32
    %1593 = vector.broadcast %c1_i32_581 : i32 to vector<1x1xi32>
    %1594 = arith.shrsi %1525, %1593 : vector<1x1xi32>
    %c1_i32_582 = arith.constant 1 : i32
    %1595 = vector.broadcast %c1_i32_582 : i32 to vector<1x1xi32>
    %1596 = arith.shrsi %1526, %1595 : vector<1x1xi32>
    %1597 = arith.addi %1594, %1596 : vector<1x1xi32>
    %1598 = arith.andi %1525, %1526 : vector<1x1xi32>
    %c1_i32_583 = arith.constant 1 : i32
    %1599 = vector.broadcast %c1_i32_583 : i32 to vector<1x1xi32>
    %1600 = arith.andi %1598, %1599 : vector<1x1xi32>
    %1601 = arith.addi %1597, %1600 : vector<1x1xi32>
    %1602 = vector.broadcast %1601 : vector<1x1xi32> to vector<8x128xi32>
    %1603 = arith.cmpi sle, %0, %1602 : vector<8x128xi32>
    %cst_584 = arith.constant 1.000000e+00 : f32
    %cst_585 = arith.constant 0.000000e+00 : f32
    %1604 = vector.broadcast %cst_584 : f32 to vector<8x128xf32>
    %1605 = vector.broadcast %cst_585 : f32 to vector<8x128xf32>
    %1606 = arith.select %1603, %1604, %1605 : vector<8x128xi1>, vector<8x128xf32>
    %cst_586 = arith.constant dense<0.000000e+00> : vector<128xf32>
    %1607 = vector.multi_reduction <add>, %1606, %cst_586 [0] : vector<8x128xf32> to vector<128xf32>
    %1608 = vector.shape_cast %1607 : vector<128xf32> to vector<1x128xf32>
    %cst_587 = arith.constant dense<0.000000e+00> : vector<1xf32>
    %1609 = vector.multi_reduction <add>, %1608, %cst_587 [1] : vector<1x128xf32> to vector<1xf32>
    %1610 = vector.shape_cast %1609 : vector<1xf32> to vector<1x1xf32>
    %cst_588 = arith.constant 4.000000e+01 : f32
    %1611 = vector.broadcast %cst_588 : f32 to vector<1x1xf32>
    %1612 = arith.cmpf oge, %1610, %1611 : vector<1x1xf32>
    %1613 = arith.select %1612, %1525, %1601 : vector<1x1xi1>, vector<1x1xi32>
    %1614 = arith.select %1612, %1601, %1526 : vector<1x1xi1>, vector<1x1xi32>
    %c1_i32_589 = arith.constant 1 : i32
    %1615 = vector.broadcast %c1_i32_589 : i32 to vector<1x1xi32>
    %1616 = arith.shrsi %1547, %1615 : vector<1x1xi32>
    %c1_i32_590 = arith.constant 1 : i32
    %1617 = vector.broadcast %c1_i32_590 : i32 to vector<1x1xi32>
    %1618 = arith.shrsi %1548, %1617 : vector<1x1xi32>
    %1619 = arith.addi %1616, %1618 : vector<1x1xi32>
    %1620 = arith.andi %1547, %1548 : vector<1x1xi32>
    %c1_i32_591 = arith.constant 1 : i32
    %1621 = vector.broadcast %c1_i32_591 : i32 to vector<1x1xi32>
    %1622 = arith.andi %1620, %1621 : vector<1x1xi32>
    %1623 = arith.addi %1619, %1622 : vector<1x1xi32>
    %1624 = vector.broadcast %1623 : vector<1x1xi32> to vector<8x128xi32>
    %1625 = arith.cmpi sle, %0, %1624 : vector<8x128xi32>
    %cst_592 = arith.constant 1.000000e+00 : f32
    %cst_593 = arith.constant 0.000000e+00 : f32
    %1626 = vector.broadcast %cst_592 : f32 to vector<8x128xf32>
    %1627 = vector.broadcast %cst_593 : f32 to vector<8x128xf32>
    %1628 = arith.select %1625, %1626, %1627 : vector<8x128xi1>, vector<8x128xf32>
    %cst_594 = arith.constant dense<0.000000e+00> : vector<128xf32>
    %1629 = vector.multi_reduction <add>, %1628, %cst_594 [0] : vector<8x128xf32> to vector<128xf32>
    %1630 = vector.shape_cast %1629 : vector<128xf32> to vector<1x128xf32>
    %cst_595 = arith.constant dense<0.000000e+00> : vector<1xf32>
    %1631 = vector.multi_reduction <add>, %1630, %cst_595 [1] : vector<1x128xf32> to vector<1xf32>
    %1632 = vector.shape_cast %1631 : vector<1xf32> to vector<1x1xf32>
    %cst_596 = arith.constant 4.100000e+01 : f32
    %1633 = vector.broadcast %cst_596 : f32 to vector<1x1xf32>
    %1634 = arith.cmpf oge, %1632, %1633 : vector<1x1xf32>
    %1635 = arith.select %1634, %1547, %1623 : vector<1x1xi1>, vector<1x1xi32>
    %1636 = arith.select %1634, %1623, %1548 : vector<1x1xi1>, vector<1x1xi32>
    %c1_i32_597 = arith.constant 1 : i32
    %1637 = vector.broadcast %c1_i32_597 : i32 to vector<1x1xi32>
    %1638 = arith.shrsi %1569, %1637 : vector<1x1xi32>
    %c1_i32_598 = arith.constant 1 : i32
    %1639 = vector.broadcast %c1_i32_598 : i32 to vector<1x1xi32>
    %1640 = arith.shrsi %1570, %1639 : vector<1x1xi32>
    %1641 = arith.addi %1638, %1640 : vector<1x1xi32>
    %1642 = arith.andi %1569, %1570 : vector<1x1xi32>
    %c1_i32_599 = arith.constant 1 : i32
    %1643 = vector.broadcast %c1_i32_599 : i32 to vector<1x1xi32>
    %1644 = arith.andi %1642, %1643 : vector<1x1xi32>
    %1645 = arith.addi %1641, %1644 : vector<1x1xi32>
    %1646 = vector.broadcast %1645 : vector<1x1xi32> to vector<8x128xi32>
    %1647 = arith.cmpi sle, %0, %1646 : vector<8x128xi32>
    %cst_600 = arith.constant 1.000000e+00 : f32
    %cst_601 = arith.constant 0.000000e+00 : f32
    %1648 = vector.broadcast %cst_600 : f32 to vector<8x128xf32>
    %1649 = vector.broadcast %cst_601 : f32 to vector<8x128xf32>
    %1650 = arith.select %1647, %1648, %1649 : vector<8x128xi1>, vector<8x128xf32>
    %cst_602 = arith.constant dense<0.000000e+00> : vector<128xf32>
    %1651 = vector.multi_reduction <add>, %1650, %cst_602 [0] : vector<8x128xf32> to vector<128xf32>
    %1652 = vector.shape_cast %1651 : vector<128xf32> to vector<1x128xf32>
    %cst_603 = arith.constant dense<0.000000e+00> : vector<1xf32>
    %1653 = vector.multi_reduction <add>, %1652, %cst_603 [1] : vector<1x128xf32> to vector<1xf32>
    %1654 = vector.shape_cast %1653 : vector<1xf32> to vector<1x1xf32>
    %cst_604 = arith.constant 7.440000e+02 : f32
    %1655 = vector.broadcast %cst_604 : f32 to vector<1x1xf32>
    %1656 = arith.cmpf oge, %1654, %1655 : vector<1x1xf32>
    %1657 = arith.select %1656, %1569, %1645 : vector<1x1xi1>, vector<1x1xi32>
    %1658 = arith.select %1656, %1645, %1570 : vector<1x1xi1>, vector<1x1xi32>
    %c1_i32_605 = arith.constant 1 : i32
    %1659 = vector.broadcast %c1_i32_605 : i32 to vector<1x1xi32>
    %1660 = arith.shrsi %1591, %1659 : vector<1x1xi32>
    %c1_i32_606 = arith.constant 1 : i32
    %1661 = vector.broadcast %c1_i32_606 : i32 to vector<1x1xi32>
    %1662 = arith.shrsi %1592, %1661 : vector<1x1xi32>
    %1663 = arith.addi %1660, %1662 : vector<1x1xi32>
    %1664 = arith.andi %1591, %1592 : vector<1x1xi32>
    %c1_i32_607 = arith.constant 1 : i32
    %1665 = vector.broadcast %c1_i32_607 : i32 to vector<1x1xi32>
    %1666 = arith.andi %1664, %1665 : vector<1x1xi32>
    %1667 = arith.addi %1663, %1666 : vector<1x1xi32>
    %1668 = vector.broadcast %1667 : vector<1x1xi32> to vector<8x128xi32>
    %1669 = arith.cmpi sle, %0, %1668 : vector<8x128xi32>
    %cst_608 = arith.constant 1.000000e+00 : f32
    %cst_609 = arith.constant 0.000000e+00 : f32
    %1670 = vector.broadcast %cst_608 : f32 to vector<8x128xf32>
    %1671 = vector.broadcast %cst_609 : f32 to vector<8x128xf32>
    %1672 = arith.select %1669, %1670, %1671 : vector<8x128xi1>, vector<8x128xf32>
    %cst_610 = arith.constant dense<0.000000e+00> : vector<128xf32>
    %1673 = vector.multi_reduction <add>, %1672, %cst_610 [0] : vector<8x128xf32> to vector<128xf32>
    %1674 = vector.shape_cast %1673 : vector<128xf32> to vector<1x128xf32>
    %cst_611 = arith.constant dense<0.000000e+00> : vector<1xf32>
    %1675 = vector.multi_reduction <add>, %1674, %cst_611 [1] : vector<1x128xf32> to vector<1xf32>
    %1676 = vector.shape_cast %1675 : vector<1xf32> to vector<1x1xf32>
    %cst_612 = arith.constant 7.450000e+02 : f32
    %1677 = vector.broadcast %cst_612 : f32 to vector<1x1xf32>
    %1678 = arith.cmpf oge, %1676, %1677 : vector<1x1xf32>
    %1679 = arith.select %1678, %1591, %1667 : vector<1x1xi1>, vector<1x1xi32>
    %1680 = arith.select %1678, %1667, %1592 : vector<1x1xi1>, vector<1x1xi32>
    %c1_i32_613 = arith.constant 1 : i32
    %1681 = vector.broadcast %c1_i32_613 : i32 to vector<1x1xi32>
    %1682 = arith.shrsi %1613, %1681 : vector<1x1xi32>
    %c1_i32_614 = arith.constant 1 : i32
    %1683 = vector.broadcast %c1_i32_614 : i32 to vector<1x1xi32>
    %1684 = arith.shrsi %1614, %1683 : vector<1x1xi32>
    %1685 = arith.addi %1682, %1684 : vector<1x1xi32>
    %1686 = arith.andi %1613, %1614 : vector<1x1xi32>
    %c1_i32_615 = arith.constant 1 : i32
    %1687 = vector.broadcast %c1_i32_615 : i32 to vector<1x1xi32>
    %1688 = arith.andi %1686, %1687 : vector<1x1xi32>
    %1689 = arith.addi %1685, %1688 : vector<1x1xi32>
    %1690 = vector.broadcast %1689 : vector<1x1xi32> to vector<8x128xi32>
    %1691 = arith.cmpi sle, %0, %1690 : vector<8x128xi32>
    %cst_616 = arith.constant 1.000000e+00 : f32
    %cst_617 = arith.constant 0.000000e+00 : f32
    %1692 = vector.broadcast %cst_616 : f32 to vector<8x128xf32>
    %1693 = vector.broadcast %cst_617 : f32 to vector<8x128xf32>
    %1694 = arith.select %1691, %1692, %1693 : vector<8x128xi1>, vector<8x128xf32>
    %cst_618 = arith.constant dense<0.000000e+00> : vector<128xf32>
    %1695 = vector.multi_reduction <add>, %1694, %cst_618 [0] : vector<8x128xf32> to vector<128xf32>
    %1696 = vector.shape_cast %1695 : vector<128xf32> to vector<1x128xf32>
    %cst_619 = arith.constant dense<0.000000e+00> : vector<1xf32>
    %1697 = vector.multi_reduction <add>, %1696, %cst_619 [1] : vector<1x128xf32> to vector<1xf32>
    %1698 = vector.shape_cast %1697 : vector<1xf32> to vector<1x1xf32>
    %cst_620 = arith.constant 4.000000e+01 : f32
    %1699 = vector.broadcast %cst_620 : f32 to vector<1x1xf32>
    %1700 = arith.cmpf oge, %1698, %1699 : vector<1x1xf32>
    %1701 = arith.select %1700, %1613, %1689 : vector<1x1xi1>, vector<1x1xi32>
    %1702 = arith.select %1700, %1689, %1614 : vector<1x1xi1>, vector<1x1xi32>
    %c1_i32_621 = arith.constant 1 : i32
    %1703 = vector.broadcast %c1_i32_621 : i32 to vector<1x1xi32>
    %1704 = arith.shrsi %1635, %1703 : vector<1x1xi32>
    %c1_i32_622 = arith.constant 1 : i32
    %1705 = vector.broadcast %c1_i32_622 : i32 to vector<1x1xi32>
    %1706 = arith.shrsi %1636, %1705 : vector<1x1xi32>
    %1707 = arith.addi %1704, %1706 : vector<1x1xi32>
    %1708 = arith.andi %1635, %1636 : vector<1x1xi32>
    %c1_i32_623 = arith.constant 1 : i32
    %1709 = vector.broadcast %c1_i32_623 : i32 to vector<1x1xi32>
    %1710 = arith.andi %1708, %1709 : vector<1x1xi32>
    %1711 = arith.addi %1707, %1710 : vector<1x1xi32>
    %1712 = vector.broadcast %1711 : vector<1x1xi32> to vector<8x128xi32>
    %1713 = arith.cmpi sle, %0, %1712 : vector<8x128xi32>
    %cst_624 = arith.constant 1.000000e+00 : f32
    %cst_625 = arith.constant 0.000000e+00 : f32
    %1714 = vector.broadcast %cst_624 : f32 to vector<8x128xf32>
    %1715 = vector.broadcast %cst_625 : f32 to vector<8x128xf32>
    %1716 = arith.select %1713, %1714, %1715 : vector<8x128xi1>, vector<8x128xf32>
    %cst_626 = arith.constant dense<0.000000e+00> : vector<128xf32>
    %1717 = vector.multi_reduction <add>, %1716, %cst_626 [0] : vector<8x128xf32> to vector<128xf32>
    %1718 = vector.shape_cast %1717 : vector<128xf32> to vector<1x128xf32>
    %cst_627 = arith.constant dense<0.000000e+00> : vector<1xf32>
    %1719 = vector.multi_reduction <add>, %1718, %cst_627 [1] : vector<1x128xf32> to vector<1xf32>
    %1720 = vector.shape_cast %1719 : vector<1xf32> to vector<1x1xf32>
    %cst_628 = arith.constant 4.100000e+01 : f32
    %1721 = vector.broadcast %cst_628 : f32 to vector<1x1xf32>
    %1722 = arith.cmpf oge, %1720, %1721 : vector<1x1xf32>
    %1723 = arith.select %1722, %1635, %1711 : vector<1x1xi1>, vector<1x1xi32>
    %1724 = arith.select %1722, %1711, %1636 : vector<1x1xi1>, vector<1x1xi32>
    %c1_i32_629 = arith.constant 1 : i32
    %1725 = vector.broadcast %c1_i32_629 : i32 to vector<1x1xi32>
    %1726 = arith.shrsi %1657, %1725 : vector<1x1xi32>
    %c1_i32_630 = arith.constant 1 : i32
    %1727 = vector.broadcast %c1_i32_630 : i32 to vector<1x1xi32>
    %1728 = arith.shrsi %1658, %1727 : vector<1x1xi32>
    %1729 = arith.addi %1726, %1728 : vector<1x1xi32>
    %1730 = arith.andi %1657, %1658 : vector<1x1xi32>
    %c1_i32_631 = arith.constant 1 : i32
    %1731 = vector.broadcast %c1_i32_631 : i32 to vector<1x1xi32>
    %1732 = arith.andi %1730, %1731 : vector<1x1xi32>
    %1733 = arith.addi %1729, %1732 : vector<1x1xi32>
    %1734 = vector.broadcast %1733 : vector<1x1xi32> to vector<8x128xi32>
    %1735 = arith.cmpi sle, %0, %1734 : vector<8x128xi32>
    %cst_632 = arith.constant 1.000000e+00 : f32
    %cst_633 = arith.constant 0.000000e+00 : f32
    %1736 = vector.broadcast %cst_632 : f32 to vector<8x128xf32>
    %1737 = vector.broadcast %cst_633 : f32 to vector<8x128xf32>
    %1738 = arith.select %1735, %1736, %1737 : vector<8x128xi1>, vector<8x128xf32>
    %cst_634 = arith.constant dense<0.000000e+00> : vector<128xf32>
    %1739 = vector.multi_reduction <add>, %1738, %cst_634 [0] : vector<8x128xf32> to vector<128xf32>
    %1740 = vector.shape_cast %1739 : vector<128xf32> to vector<1x128xf32>
    %cst_635 = arith.constant dense<0.000000e+00> : vector<1xf32>
    %1741 = vector.multi_reduction <add>, %1740, %cst_635 [1] : vector<1x128xf32> to vector<1xf32>
    %1742 = vector.shape_cast %1741 : vector<1xf32> to vector<1x1xf32>
    %cst_636 = arith.constant 7.440000e+02 : f32
    %1743 = vector.broadcast %cst_636 : f32 to vector<1x1xf32>
    %1744 = arith.cmpf oge, %1742, %1743 : vector<1x1xf32>
    %1745 = arith.select %1744, %1657, %1733 : vector<1x1xi1>, vector<1x1xi32>
    %1746 = arith.select %1744, %1733, %1658 : vector<1x1xi1>, vector<1x1xi32>
    %c1_i32_637 = arith.constant 1 : i32
    %1747 = vector.broadcast %c1_i32_637 : i32 to vector<1x1xi32>
    %1748 = arith.shrsi %1679, %1747 : vector<1x1xi32>
    %c1_i32_638 = arith.constant 1 : i32
    %1749 = vector.broadcast %c1_i32_638 : i32 to vector<1x1xi32>
    %1750 = arith.shrsi %1680, %1749 : vector<1x1xi32>
    %1751 = arith.addi %1748, %1750 : vector<1x1xi32>
    %1752 = arith.andi %1679, %1680 : vector<1x1xi32>
    %c1_i32_639 = arith.constant 1 : i32
    %1753 = vector.broadcast %c1_i32_639 : i32 to vector<1x1xi32>
    %1754 = arith.andi %1752, %1753 : vector<1x1xi32>
    %1755 = arith.addi %1751, %1754 : vector<1x1xi32>
    %1756 = vector.broadcast %1755 : vector<1x1xi32> to vector<8x128xi32>
    %1757 = arith.cmpi sle, %0, %1756 : vector<8x128xi32>
    %cst_640 = arith.constant 1.000000e+00 : f32
    %cst_641 = arith.constant 0.000000e+00 : f32
    %1758 = vector.broadcast %cst_640 : f32 to vector<8x128xf32>
    %1759 = vector.broadcast %cst_641 : f32 to vector<8x128xf32>
    %1760 = arith.select %1757, %1758, %1759 : vector<8x128xi1>, vector<8x128xf32>
    %cst_642 = arith.constant dense<0.000000e+00> : vector<128xf32>
    %1761 = vector.multi_reduction <add>, %1760, %cst_642 [0] : vector<8x128xf32> to vector<128xf32>
    %1762 = vector.shape_cast %1761 : vector<128xf32> to vector<1x128xf32>
    %cst_643 = arith.constant dense<0.000000e+00> : vector<1xf32>
    %1763 = vector.multi_reduction <add>, %1762, %cst_643 [1] : vector<1x128xf32> to vector<1xf32>
    %1764 = vector.shape_cast %1763 : vector<1xf32> to vector<1x1xf32>
    %cst_644 = arith.constant 7.450000e+02 : f32
    %1765 = vector.broadcast %cst_644 : f32 to vector<1x1xf32>
    %1766 = arith.cmpf oge, %1764, %1765 : vector<1x1xf32>
    %1767 = arith.select %1766, %1679, %1755 : vector<1x1xi1>, vector<1x1xi32>
    %1768 = arith.select %1766, %1755, %1680 : vector<1x1xi1>, vector<1x1xi32>
    %c1_i32_645 = arith.constant 1 : i32
    %1769 = vector.broadcast %c1_i32_645 : i32 to vector<1x1xi32>
    %1770 = arith.shrsi %1701, %1769 : vector<1x1xi32>
    %c1_i32_646 = arith.constant 1 : i32
    %1771 = vector.broadcast %c1_i32_646 : i32 to vector<1x1xi32>
    %1772 = arith.shrsi %1702, %1771 : vector<1x1xi32>
    %1773 = arith.addi %1770, %1772 : vector<1x1xi32>
    %1774 = arith.andi %1701, %1702 : vector<1x1xi32>
    %c1_i32_647 = arith.constant 1 : i32
    %1775 = vector.broadcast %c1_i32_647 : i32 to vector<1x1xi32>
    %1776 = arith.andi %1774, %1775 : vector<1x1xi32>
    %1777 = arith.addi %1773, %1776 : vector<1x1xi32>
    %1778 = vector.broadcast %1777 : vector<1x1xi32> to vector<8x128xi32>
    %1779 = arith.cmpi sle, %0, %1778 : vector<8x128xi32>
    %cst_648 = arith.constant 1.000000e+00 : f32
    %cst_649 = arith.constant 0.000000e+00 : f32
    %1780 = vector.broadcast %cst_648 : f32 to vector<8x128xf32>
    %1781 = vector.broadcast %cst_649 : f32 to vector<8x128xf32>
    %1782 = arith.select %1779, %1780, %1781 : vector<8x128xi1>, vector<8x128xf32>
    %cst_650 = arith.constant dense<0.000000e+00> : vector<128xf32>
    %1783 = vector.multi_reduction <add>, %1782, %cst_650 [0] : vector<8x128xf32> to vector<128xf32>
    %1784 = vector.shape_cast %1783 : vector<128xf32> to vector<1x128xf32>
    %cst_651 = arith.constant dense<0.000000e+00> : vector<1xf32>
    %1785 = vector.multi_reduction <add>, %1784, %cst_651 [1] : vector<1x128xf32> to vector<1xf32>
    %1786 = vector.shape_cast %1785 : vector<1xf32> to vector<1x1xf32>
    %cst_652 = arith.constant 4.000000e+01 : f32
    %1787 = vector.broadcast %cst_652 : f32 to vector<1x1xf32>
    %1788 = arith.cmpf oge, %1786, %1787 : vector<1x1xf32>
    %1789 = arith.select %1788, %1701, %1777 : vector<1x1xi1>, vector<1x1xi32>
    %1790 = arith.select %1788, %1777, %1702 : vector<1x1xi1>, vector<1x1xi32>
    %c1_i32_653 = arith.constant 1 : i32
    %1791 = vector.broadcast %c1_i32_653 : i32 to vector<1x1xi32>
    %1792 = arith.shrsi %1723, %1791 : vector<1x1xi32>
    %c1_i32_654 = arith.constant 1 : i32
    %1793 = vector.broadcast %c1_i32_654 : i32 to vector<1x1xi32>
    %1794 = arith.shrsi %1724, %1793 : vector<1x1xi32>
    %1795 = arith.addi %1792, %1794 : vector<1x1xi32>
    %1796 = arith.andi %1723, %1724 : vector<1x1xi32>
    %c1_i32_655 = arith.constant 1 : i32
    %1797 = vector.broadcast %c1_i32_655 : i32 to vector<1x1xi32>
    %1798 = arith.andi %1796, %1797 : vector<1x1xi32>
    %1799 = arith.addi %1795, %1798 : vector<1x1xi32>
    %1800 = vector.broadcast %1799 : vector<1x1xi32> to vector<8x128xi32>
    %1801 = arith.cmpi sle, %0, %1800 : vector<8x128xi32>
    %cst_656 = arith.constant 1.000000e+00 : f32
    %cst_657 = arith.constant 0.000000e+00 : f32
    %1802 = vector.broadcast %cst_656 : f32 to vector<8x128xf32>
    %1803 = vector.broadcast %cst_657 : f32 to vector<8x128xf32>
    %1804 = arith.select %1801, %1802, %1803 : vector<8x128xi1>, vector<8x128xf32>
    %cst_658 = arith.constant dense<0.000000e+00> : vector<128xf32>
    %1805 = vector.multi_reduction <add>, %1804, %cst_658 [0] : vector<8x128xf32> to vector<128xf32>
    %1806 = vector.shape_cast %1805 : vector<128xf32> to vector<1x128xf32>
    %cst_659 = arith.constant dense<0.000000e+00> : vector<1xf32>
    %1807 = vector.multi_reduction <add>, %1806, %cst_659 [1] : vector<1x128xf32> to vector<1xf32>
    %1808 = vector.shape_cast %1807 : vector<1xf32> to vector<1x1xf32>
    %cst_660 = arith.constant 4.100000e+01 : f32
    %1809 = vector.broadcast %cst_660 : f32 to vector<1x1xf32>
    %1810 = arith.cmpf oge, %1808, %1809 : vector<1x1xf32>
    %1811 = arith.select %1810, %1723, %1799 : vector<1x1xi1>, vector<1x1xi32>
    %1812 = arith.select %1810, %1799, %1724 : vector<1x1xi1>, vector<1x1xi32>
    %c1_i32_661 = arith.constant 1 : i32
    %1813 = vector.broadcast %c1_i32_661 : i32 to vector<1x1xi32>
    %1814 = arith.shrsi %1745, %1813 : vector<1x1xi32>
    %c1_i32_662 = arith.constant 1 : i32
    %1815 = vector.broadcast %c1_i32_662 : i32 to vector<1x1xi32>
    %1816 = arith.shrsi %1746, %1815 : vector<1x1xi32>
    %1817 = arith.addi %1814, %1816 : vector<1x1xi32>
    %1818 = arith.andi %1745, %1746 : vector<1x1xi32>
    %c1_i32_663 = arith.constant 1 : i32
    %1819 = vector.broadcast %c1_i32_663 : i32 to vector<1x1xi32>
    %1820 = arith.andi %1818, %1819 : vector<1x1xi32>
    %1821 = arith.addi %1817, %1820 : vector<1x1xi32>
    %1822 = vector.broadcast %1821 : vector<1x1xi32> to vector<8x128xi32>
    %1823 = arith.cmpi sle, %0, %1822 : vector<8x128xi32>
    %cst_664 = arith.constant 1.000000e+00 : f32
    %cst_665 = arith.constant 0.000000e+00 : f32
    %1824 = vector.broadcast %cst_664 : f32 to vector<8x128xf32>
    %1825 = vector.broadcast %cst_665 : f32 to vector<8x128xf32>
    %1826 = arith.select %1823, %1824, %1825 : vector<8x128xi1>, vector<8x128xf32>
    %cst_666 = arith.constant dense<0.000000e+00> : vector<128xf32>
    %1827 = vector.multi_reduction <add>, %1826, %cst_666 [0] : vector<8x128xf32> to vector<128xf32>
    %1828 = vector.shape_cast %1827 : vector<128xf32> to vector<1x128xf32>
    %cst_667 = arith.constant dense<0.000000e+00> : vector<1xf32>
    %1829 = vector.multi_reduction <add>, %1828, %cst_667 [1] : vector<1x128xf32> to vector<1xf32>
    %1830 = vector.shape_cast %1829 : vector<1xf32> to vector<1x1xf32>
    %cst_668 = arith.constant 7.440000e+02 : f32
    %1831 = vector.broadcast %cst_668 : f32 to vector<1x1xf32>
    %1832 = arith.cmpf oge, %1830, %1831 : vector<1x1xf32>
    %1833 = arith.select %1832, %1745, %1821 : vector<1x1xi1>, vector<1x1xi32>
    %1834 = arith.select %1832, %1821, %1746 : vector<1x1xi1>, vector<1x1xi32>
    %c1_i32_669 = arith.constant 1 : i32
    %1835 = vector.broadcast %c1_i32_669 : i32 to vector<1x1xi32>
    %1836 = arith.shrsi %1767, %1835 : vector<1x1xi32>
    %c1_i32_670 = arith.constant 1 : i32
    %1837 = vector.broadcast %c1_i32_670 : i32 to vector<1x1xi32>
    %1838 = arith.shrsi %1768, %1837 : vector<1x1xi32>
    %1839 = arith.addi %1836, %1838 : vector<1x1xi32>
    %1840 = arith.andi %1767, %1768 : vector<1x1xi32>
    %c1_i32_671 = arith.constant 1 : i32
    %1841 = vector.broadcast %c1_i32_671 : i32 to vector<1x1xi32>
    %1842 = arith.andi %1840, %1841 : vector<1x1xi32>
    %1843 = arith.addi %1839, %1842 : vector<1x1xi32>
    %1844 = vector.broadcast %1843 : vector<1x1xi32> to vector<8x128xi32>
    %1845 = arith.cmpi sle, %0, %1844 : vector<8x128xi32>
    %cst_672 = arith.constant 1.000000e+00 : f32
    %cst_673 = arith.constant 0.000000e+00 : f32
    %1846 = vector.broadcast %cst_672 : f32 to vector<8x128xf32>
    %1847 = vector.broadcast %cst_673 : f32 to vector<8x128xf32>
    %1848 = arith.select %1845, %1846, %1847 : vector<8x128xi1>, vector<8x128xf32>
    %cst_674 = arith.constant dense<0.000000e+00> : vector<128xf32>
    %1849 = vector.multi_reduction <add>, %1848, %cst_674 [0] : vector<8x128xf32> to vector<128xf32>
    %1850 = vector.shape_cast %1849 : vector<128xf32> to vector<1x128xf32>
    %cst_675 = arith.constant dense<0.000000e+00> : vector<1xf32>
    %1851 = vector.multi_reduction <add>, %1850, %cst_675 [1] : vector<1x128xf32> to vector<1xf32>
    %1852 = vector.shape_cast %1851 : vector<1xf32> to vector<1x1xf32>
    %cst_676 = arith.constant 7.450000e+02 : f32
    %1853 = vector.broadcast %cst_676 : f32 to vector<1x1xf32>
    %1854 = arith.cmpf oge, %1852, %1853 : vector<1x1xf32>
    %1855 = arith.select %1854, %1767, %1843 : vector<1x1xi1>, vector<1x1xi32>
    %1856 = arith.select %1854, %1843, %1768 : vector<1x1xi1>, vector<1x1xi32>
    %c1_i32_677 = arith.constant 1 : i32
    %1857 = vector.broadcast %c1_i32_677 : i32 to vector<1x1xi32>
    %1858 = arith.shrsi %1789, %1857 : vector<1x1xi32>
    %c1_i32_678 = arith.constant 1 : i32
    %1859 = vector.broadcast %c1_i32_678 : i32 to vector<1x1xi32>
    %1860 = arith.shrsi %1790, %1859 : vector<1x1xi32>
    %1861 = arith.addi %1858, %1860 : vector<1x1xi32>
    %1862 = arith.andi %1789, %1790 : vector<1x1xi32>
    %c1_i32_679 = arith.constant 1 : i32
    %1863 = vector.broadcast %c1_i32_679 : i32 to vector<1x1xi32>
    %1864 = arith.andi %1862, %1863 : vector<1x1xi32>
    %1865 = arith.addi %1861, %1864 : vector<1x1xi32>
    %1866 = vector.broadcast %1865 : vector<1x1xi32> to vector<8x128xi32>
    %1867 = arith.cmpi sle, %0, %1866 : vector<8x128xi32>
    %cst_680 = arith.constant 1.000000e+00 : f32
    %cst_681 = arith.constant 0.000000e+00 : f32
    %1868 = vector.broadcast %cst_680 : f32 to vector<8x128xf32>
    %1869 = vector.broadcast %cst_681 : f32 to vector<8x128xf32>
    %1870 = arith.select %1867, %1868, %1869 : vector<8x128xi1>, vector<8x128xf32>
    %cst_682 = arith.constant dense<0.000000e+00> : vector<128xf32>
    %1871 = vector.multi_reduction <add>, %1870, %cst_682 [0] : vector<8x128xf32> to vector<128xf32>
    %1872 = vector.shape_cast %1871 : vector<128xf32> to vector<1x128xf32>
    %cst_683 = arith.constant dense<0.000000e+00> : vector<1xf32>
    %1873 = vector.multi_reduction <add>, %1872, %cst_683 [1] : vector<1x128xf32> to vector<1xf32>
    %1874 = vector.shape_cast %1873 : vector<1xf32> to vector<1x1xf32>
    %cst_684 = arith.constant 4.000000e+01 : f32
    %1875 = vector.broadcast %cst_684 : f32 to vector<1x1xf32>
    %1876 = arith.cmpf oge, %1874, %1875 : vector<1x1xf32>
    %1877 = arith.select %1876, %1789, %1865 : vector<1x1xi1>, vector<1x1xi32>
    %1878 = arith.select %1876, %1865, %1790 : vector<1x1xi1>, vector<1x1xi32>
    %c1_i32_685 = arith.constant 1 : i32
    %1879 = vector.broadcast %c1_i32_685 : i32 to vector<1x1xi32>
    %1880 = arith.shrsi %1811, %1879 : vector<1x1xi32>
    %c1_i32_686 = arith.constant 1 : i32
    %1881 = vector.broadcast %c1_i32_686 : i32 to vector<1x1xi32>
    %1882 = arith.shrsi %1812, %1881 : vector<1x1xi32>
    %1883 = arith.addi %1880, %1882 : vector<1x1xi32>
    %1884 = arith.andi %1811, %1812 : vector<1x1xi32>
    %c1_i32_687 = arith.constant 1 : i32
    %1885 = vector.broadcast %c1_i32_687 : i32 to vector<1x1xi32>
    %1886 = arith.andi %1884, %1885 : vector<1x1xi32>
    %1887 = arith.addi %1883, %1886 : vector<1x1xi32>
    %1888 = vector.broadcast %1887 : vector<1x1xi32> to vector<8x128xi32>
    %1889 = arith.cmpi sle, %0, %1888 : vector<8x128xi32>
    %cst_688 = arith.constant 1.000000e+00 : f32
    %cst_689 = arith.constant 0.000000e+00 : f32
    %1890 = vector.broadcast %cst_688 : f32 to vector<8x128xf32>
    %1891 = vector.broadcast %cst_689 : f32 to vector<8x128xf32>
    %1892 = arith.select %1889, %1890, %1891 : vector<8x128xi1>, vector<8x128xf32>
    %cst_690 = arith.constant dense<0.000000e+00> : vector<128xf32>
    %1893 = vector.multi_reduction <add>, %1892, %cst_690 [0] : vector<8x128xf32> to vector<128xf32>
    %1894 = vector.shape_cast %1893 : vector<128xf32> to vector<1x128xf32>
    %cst_691 = arith.constant dense<0.000000e+00> : vector<1xf32>
    %1895 = vector.multi_reduction <add>, %1894, %cst_691 [1] : vector<1x128xf32> to vector<1xf32>
    %1896 = vector.shape_cast %1895 : vector<1xf32> to vector<1x1xf32>
    %cst_692 = arith.constant 4.100000e+01 : f32
    %1897 = vector.broadcast %cst_692 : f32 to vector<1x1xf32>
    %1898 = arith.cmpf oge, %1896, %1897 : vector<1x1xf32>
    %1899 = arith.select %1898, %1811, %1887 : vector<1x1xi1>, vector<1x1xi32>
    %1900 = arith.select %1898, %1887, %1812 : vector<1x1xi1>, vector<1x1xi32>
    %c1_i32_693 = arith.constant 1 : i32
    %1901 = vector.broadcast %c1_i32_693 : i32 to vector<1x1xi32>
    %1902 = arith.shrsi %1833, %1901 : vector<1x1xi32>
    %c1_i32_694 = arith.constant 1 : i32
    %1903 = vector.broadcast %c1_i32_694 : i32 to vector<1x1xi32>
    %1904 = arith.shrsi %1834, %1903 : vector<1x1xi32>
    %1905 = arith.addi %1902, %1904 : vector<1x1xi32>
    %1906 = arith.andi %1833, %1834 : vector<1x1xi32>
    %c1_i32_695 = arith.constant 1 : i32
    %1907 = vector.broadcast %c1_i32_695 : i32 to vector<1x1xi32>
    %1908 = arith.andi %1906, %1907 : vector<1x1xi32>
    %1909 = arith.addi %1905, %1908 : vector<1x1xi32>
    %1910 = vector.broadcast %1909 : vector<1x1xi32> to vector<8x128xi32>
    %1911 = arith.cmpi sle, %0, %1910 : vector<8x128xi32>
    %cst_696 = arith.constant 1.000000e+00 : f32
    %cst_697 = arith.constant 0.000000e+00 : f32
    %1912 = vector.broadcast %cst_696 : f32 to vector<8x128xf32>
    %1913 = vector.broadcast %cst_697 : f32 to vector<8x128xf32>
    %1914 = arith.select %1911, %1912, %1913 : vector<8x128xi1>, vector<8x128xf32>
    %cst_698 = arith.constant dense<0.000000e+00> : vector<128xf32>
    %1915 = vector.multi_reduction <add>, %1914, %cst_698 [0] : vector<8x128xf32> to vector<128xf32>
    %1916 = vector.shape_cast %1915 : vector<128xf32> to vector<1x128xf32>
    %cst_699 = arith.constant dense<0.000000e+00> : vector<1xf32>
    %1917 = vector.multi_reduction <add>, %1916, %cst_699 [1] : vector<1x128xf32> to vector<1xf32>
    %1918 = vector.shape_cast %1917 : vector<1xf32> to vector<1x1xf32>
    %cst_700 = arith.constant 7.440000e+02 : f32
    %1919 = vector.broadcast %cst_700 : f32 to vector<1x1xf32>
    %1920 = arith.cmpf oge, %1918, %1919 : vector<1x1xf32>
    %1921 = arith.select %1920, %1833, %1909 : vector<1x1xi1>, vector<1x1xi32>
    %1922 = arith.select %1920, %1909, %1834 : vector<1x1xi1>, vector<1x1xi32>
    %c1_i32_701 = arith.constant 1 : i32
    %1923 = vector.broadcast %c1_i32_701 : i32 to vector<1x1xi32>
    %1924 = arith.shrsi %1855, %1923 : vector<1x1xi32>
    %c1_i32_702 = arith.constant 1 : i32
    %1925 = vector.broadcast %c1_i32_702 : i32 to vector<1x1xi32>
    %1926 = arith.shrsi %1856, %1925 : vector<1x1xi32>
    %1927 = arith.addi %1924, %1926 : vector<1x1xi32>
    %1928 = arith.andi %1855, %1856 : vector<1x1xi32>
    %c1_i32_703 = arith.constant 1 : i32
    %1929 = vector.broadcast %c1_i32_703 : i32 to vector<1x1xi32>
    %1930 = arith.andi %1928, %1929 : vector<1x1xi32>
    %1931 = arith.addi %1927, %1930 : vector<1x1xi32>
    %1932 = vector.broadcast %1931 : vector<1x1xi32> to vector<8x128xi32>
    %1933 = arith.cmpi sle, %0, %1932 : vector<8x128xi32>
    %cst_704 = arith.constant 1.000000e+00 : f32
    %cst_705 = arith.constant 0.000000e+00 : f32
    %1934 = vector.broadcast %cst_704 : f32 to vector<8x128xf32>
    %1935 = vector.broadcast %cst_705 : f32 to vector<8x128xf32>
    %1936 = arith.select %1933, %1934, %1935 : vector<8x128xi1>, vector<8x128xf32>
    %cst_706 = arith.constant dense<0.000000e+00> : vector<128xf32>
    %1937 = vector.multi_reduction <add>, %1936, %cst_706 [0] : vector<8x128xf32> to vector<128xf32>
    %1938 = vector.shape_cast %1937 : vector<128xf32> to vector<1x128xf32>
    %cst_707 = arith.constant dense<0.000000e+00> : vector<1xf32>
    %1939 = vector.multi_reduction <add>, %1938, %cst_707 [1] : vector<1x128xf32> to vector<1xf32>
    %1940 = vector.shape_cast %1939 : vector<1xf32> to vector<1x1xf32>
    %cst_708 = arith.constant 7.450000e+02 : f32
    %1941 = vector.broadcast %cst_708 : f32 to vector<1x1xf32>
    %1942 = arith.cmpf oge, %1940, %1941 : vector<1x1xf32>
    %1943 = arith.select %1942, %1855, %1931 : vector<1x1xi1>, vector<1x1xi32>
    %1944 = arith.select %1942, %1931, %1856 : vector<1x1xi1>, vector<1x1xi32>
    %c1_i32_709 = arith.constant 1 : i32
    %1945 = vector.broadcast %c1_i32_709 : i32 to vector<1x1xi32>
    %1946 = arith.shrsi %1877, %1945 : vector<1x1xi32>
    %c1_i32_710 = arith.constant 1 : i32
    %1947 = vector.broadcast %c1_i32_710 : i32 to vector<1x1xi32>
    %1948 = arith.shrsi %1878, %1947 : vector<1x1xi32>
    %1949 = arith.addi %1946, %1948 : vector<1x1xi32>
    %1950 = arith.andi %1877, %1878 : vector<1x1xi32>
    %c1_i32_711 = arith.constant 1 : i32
    %1951 = vector.broadcast %c1_i32_711 : i32 to vector<1x1xi32>
    %1952 = arith.andi %1950, %1951 : vector<1x1xi32>
    %1953 = arith.addi %1949, %1952 : vector<1x1xi32>
    %1954 = vector.broadcast %1953 : vector<1x1xi32> to vector<8x128xi32>
    %1955 = arith.cmpi sle, %0, %1954 : vector<8x128xi32>
    %cst_712 = arith.constant 1.000000e+00 : f32
    %cst_713 = arith.constant 0.000000e+00 : f32
    %1956 = vector.broadcast %cst_712 : f32 to vector<8x128xf32>
    %1957 = vector.broadcast %cst_713 : f32 to vector<8x128xf32>
    %1958 = arith.select %1955, %1956, %1957 : vector<8x128xi1>, vector<8x128xf32>
    %cst_714 = arith.constant dense<0.000000e+00> : vector<128xf32>
    %1959 = vector.multi_reduction <add>, %1958, %cst_714 [0] : vector<8x128xf32> to vector<128xf32>
    %1960 = vector.shape_cast %1959 : vector<128xf32> to vector<1x128xf32>
    %cst_715 = arith.constant dense<0.000000e+00> : vector<1xf32>
    %1961 = vector.multi_reduction <add>, %1960, %cst_715 [1] : vector<1x128xf32> to vector<1xf32>
    %1962 = vector.shape_cast %1961 : vector<1xf32> to vector<1x1xf32>
    %cst_716 = arith.constant 4.000000e+01 : f32
    %1963 = vector.broadcast %cst_716 : f32 to vector<1x1xf32>
    %1964 = arith.cmpf oge, %1962, %1963 : vector<1x1xf32>
    %1965 = arith.select %1964, %1877, %1953 : vector<1x1xi1>, vector<1x1xi32>
    %1966 = arith.select %1964, %1953, %1878 : vector<1x1xi1>, vector<1x1xi32>
    %c1_i32_717 = arith.constant 1 : i32
    %1967 = vector.broadcast %c1_i32_717 : i32 to vector<1x1xi32>
    %1968 = arith.shrsi %1899, %1967 : vector<1x1xi32>
    %c1_i32_718 = arith.constant 1 : i32
    %1969 = vector.broadcast %c1_i32_718 : i32 to vector<1x1xi32>
    %1970 = arith.shrsi %1900, %1969 : vector<1x1xi32>
    %1971 = arith.addi %1968, %1970 : vector<1x1xi32>
    %1972 = arith.andi %1899, %1900 : vector<1x1xi32>
    %c1_i32_719 = arith.constant 1 : i32
    %1973 = vector.broadcast %c1_i32_719 : i32 to vector<1x1xi32>
    %1974 = arith.andi %1972, %1973 : vector<1x1xi32>
    %1975 = arith.addi %1971, %1974 : vector<1x1xi32>
    %1976 = vector.broadcast %1975 : vector<1x1xi32> to vector<8x128xi32>
    %1977 = arith.cmpi sle, %0, %1976 : vector<8x128xi32>
    %cst_720 = arith.constant 1.000000e+00 : f32
    %cst_721 = arith.constant 0.000000e+00 : f32
    %1978 = vector.broadcast %cst_720 : f32 to vector<8x128xf32>
    %1979 = vector.broadcast %cst_721 : f32 to vector<8x128xf32>
    %1980 = arith.select %1977, %1978, %1979 : vector<8x128xi1>, vector<8x128xf32>
    %cst_722 = arith.constant dense<0.000000e+00> : vector<128xf32>
    %1981 = vector.multi_reduction <add>, %1980, %cst_722 [0] : vector<8x128xf32> to vector<128xf32>
    %1982 = vector.shape_cast %1981 : vector<128xf32> to vector<1x128xf32>
    %cst_723 = arith.constant dense<0.000000e+00> : vector<1xf32>
    %1983 = vector.multi_reduction <add>, %1982, %cst_723 [1] : vector<1x128xf32> to vector<1xf32>
    %1984 = vector.shape_cast %1983 : vector<1xf32> to vector<1x1xf32>
    %cst_724 = arith.constant 4.100000e+01 : f32
    %1985 = vector.broadcast %cst_724 : f32 to vector<1x1xf32>
    %1986 = arith.cmpf oge, %1984, %1985 : vector<1x1xf32>
    %1987 = arith.select %1986, %1899, %1975 : vector<1x1xi1>, vector<1x1xi32>
    %1988 = arith.select %1986, %1975, %1900 : vector<1x1xi1>, vector<1x1xi32>
    %c1_i32_725 = arith.constant 1 : i32
    %1989 = vector.broadcast %c1_i32_725 : i32 to vector<1x1xi32>
    %1990 = arith.shrsi %1921, %1989 : vector<1x1xi32>
    %c1_i32_726 = arith.constant 1 : i32
    %1991 = vector.broadcast %c1_i32_726 : i32 to vector<1x1xi32>
    %1992 = arith.shrsi %1922, %1991 : vector<1x1xi32>
    %1993 = arith.addi %1990, %1992 : vector<1x1xi32>
    %1994 = arith.andi %1921, %1922 : vector<1x1xi32>
    %c1_i32_727 = arith.constant 1 : i32
    %1995 = vector.broadcast %c1_i32_727 : i32 to vector<1x1xi32>
    %1996 = arith.andi %1994, %1995 : vector<1x1xi32>
    %1997 = arith.addi %1993, %1996 : vector<1x1xi32>
    %1998 = vector.broadcast %1997 : vector<1x1xi32> to vector<8x128xi32>
    %1999 = arith.cmpi sle, %0, %1998 : vector<8x128xi32>
    %cst_728 = arith.constant 1.000000e+00 : f32
    %cst_729 = arith.constant 0.000000e+00 : f32
    %2000 = vector.broadcast %cst_728 : f32 to vector<8x128xf32>
    %2001 = vector.broadcast %cst_729 : f32 to vector<8x128xf32>
    %2002 = arith.select %1999, %2000, %2001 : vector<8x128xi1>, vector<8x128xf32>
    %cst_730 = arith.constant dense<0.000000e+00> : vector<128xf32>
    %2003 = vector.multi_reduction <add>, %2002, %cst_730 [0] : vector<8x128xf32> to vector<128xf32>
    %2004 = vector.shape_cast %2003 : vector<128xf32> to vector<1x128xf32>
    %cst_731 = arith.constant dense<0.000000e+00> : vector<1xf32>
    %2005 = vector.multi_reduction <add>, %2004, %cst_731 [1] : vector<1x128xf32> to vector<1xf32>
    %2006 = vector.shape_cast %2005 : vector<1xf32> to vector<1x1xf32>
    %cst_732 = arith.constant 7.440000e+02 : f32
    %2007 = vector.broadcast %cst_732 : f32 to vector<1x1xf32>
    %2008 = arith.cmpf oge, %2006, %2007 : vector<1x1xf32>
    %2009 = arith.select %2008, %1921, %1997 : vector<1x1xi1>, vector<1x1xi32>
    %2010 = arith.select %2008, %1997, %1922 : vector<1x1xi1>, vector<1x1xi32>
    %c1_i32_733 = arith.constant 1 : i32
    %2011 = vector.broadcast %c1_i32_733 : i32 to vector<1x1xi32>
    %2012 = arith.shrsi %1943, %2011 : vector<1x1xi32>
    %c1_i32_734 = arith.constant 1 : i32
    %2013 = vector.broadcast %c1_i32_734 : i32 to vector<1x1xi32>
    %2014 = arith.shrsi %1944, %2013 : vector<1x1xi32>
    %2015 = arith.addi %2012, %2014 : vector<1x1xi32>
    %2016 = arith.andi %1943, %1944 : vector<1x1xi32>
    %c1_i32_735 = arith.constant 1 : i32
    %2017 = vector.broadcast %c1_i32_735 : i32 to vector<1x1xi32>
    %2018 = arith.andi %2016, %2017 : vector<1x1xi32>
    %2019 = arith.addi %2015, %2018 : vector<1x1xi32>
    %2020 = vector.broadcast %2019 : vector<1x1xi32> to vector<8x128xi32>
    %2021 = arith.cmpi sle, %0, %2020 : vector<8x128xi32>
    %cst_736 = arith.constant 1.000000e+00 : f32
    %cst_737 = arith.constant 0.000000e+00 : f32
    %2022 = vector.broadcast %cst_736 : f32 to vector<8x128xf32>
    %2023 = vector.broadcast %cst_737 : f32 to vector<8x128xf32>
    %2024 = arith.select %2021, %2022, %2023 : vector<8x128xi1>, vector<8x128xf32>
    %cst_738 = arith.constant dense<0.000000e+00> : vector<128xf32>
    %2025 = vector.multi_reduction <add>, %2024, %cst_738 [0] : vector<8x128xf32> to vector<128xf32>
    %2026 = vector.shape_cast %2025 : vector<128xf32> to vector<1x128xf32>
    %cst_739 = arith.constant dense<0.000000e+00> : vector<1xf32>
    %2027 = vector.multi_reduction <add>, %2026, %cst_739 [1] : vector<1x128xf32> to vector<1xf32>
    %2028 = vector.shape_cast %2027 : vector<1xf32> to vector<1x1xf32>
    %cst_740 = arith.constant 7.450000e+02 : f32
    %2029 = vector.broadcast %cst_740 : f32 to vector<1x1xf32>
    %2030 = arith.cmpf oge, %2028, %2029 : vector<1x1xf32>
    %2031 = arith.select %2030, %1943, %2019 : vector<1x1xi1>, vector<1x1xi32>
    %2032 = arith.select %2030, %2019, %1944 : vector<1x1xi1>, vector<1x1xi32>
    %c1_i32_741 = arith.constant 1 : i32
    %2033 = vector.broadcast %c1_i32_741 : i32 to vector<1x1xi32>
    %2034 = arith.shrsi %1965, %2033 : vector<1x1xi32>
    %c1_i32_742 = arith.constant 1 : i32
    %2035 = vector.broadcast %c1_i32_742 : i32 to vector<1x1xi32>
    %2036 = arith.shrsi %1966, %2035 : vector<1x1xi32>
    %2037 = arith.addi %2034, %2036 : vector<1x1xi32>
    %2038 = arith.andi %1965, %1966 : vector<1x1xi32>
    %c1_i32_743 = arith.constant 1 : i32
    %2039 = vector.broadcast %c1_i32_743 : i32 to vector<1x1xi32>
    %2040 = arith.andi %2038, %2039 : vector<1x1xi32>
    %2041 = arith.addi %2037, %2040 : vector<1x1xi32>
    %2042 = vector.broadcast %2041 : vector<1x1xi32> to vector<8x128xi32>
    %2043 = arith.cmpi sle, %0, %2042 : vector<8x128xi32>
    %cst_744 = arith.constant 1.000000e+00 : f32
    %cst_745 = arith.constant 0.000000e+00 : f32
    %2044 = vector.broadcast %cst_744 : f32 to vector<8x128xf32>
    %2045 = vector.broadcast %cst_745 : f32 to vector<8x128xf32>
    %2046 = arith.select %2043, %2044, %2045 : vector<8x128xi1>, vector<8x128xf32>
    %cst_746 = arith.constant dense<0.000000e+00> : vector<128xf32>
    %2047 = vector.multi_reduction <add>, %2046, %cst_746 [0] : vector<8x128xf32> to vector<128xf32>
    %2048 = vector.shape_cast %2047 : vector<128xf32> to vector<1x128xf32>
    %cst_747 = arith.constant dense<0.000000e+00> : vector<1xf32>
    %2049 = vector.multi_reduction <add>, %2048, %cst_747 [1] : vector<1x128xf32> to vector<1xf32>
    %2050 = vector.shape_cast %2049 : vector<1xf32> to vector<1x1xf32>
    %cst_748 = arith.constant 4.000000e+01 : f32
    %2051 = vector.broadcast %cst_748 : f32 to vector<1x1xf32>
    %2052 = arith.cmpf oge, %2050, %2051 : vector<1x1xf32>
    %2053 = arith.select %2052, %1965, %2041 : vector<1x1xi1>, vector<1x1xi32>
    %2054 = arith.select %2052, %2041, %1966 : vector<1x1xi1>, vector<1x1xi32>
    %c1_i32_749 = arith.constant 1 : i32
    %2055 = vector.broadcast %c1_i32_749 : i32 to vector<1x1xi32>
    %2056 = arith.shrsi %1987, %2055 : vector<1x1xi32>
    %c1_i32_750 = arith.constant 1 : i32
    %2057 = vector.broadcast %c1_i32_750 : i32 to vector<1x1xi32>
    %2058 = arith.shrsi %1988, %2057 : vector<1x1xi32>
    %2059 = arith.addi %2056, %2058 : vector<1x1xi32>
    %2060 = arith.andi %1987, %1988 : vector<1x1xi32>
    %c1_i32_751 = arith.constant 1 : i32
    %2061 = vector.broadcast %c1_i32_751 : i32 to vector<1x1xi32>
    %2062 = arith.andi %2060, %2061 : vector<1x1xi32>
    %2063 = arith.addi %2059, %2062 : vector<1x1xi32>
    %2064 = vector.broadcast %2063 : vector<1x1xi32> to vector<8x128xi32>
    %2065 = arith.cmpi sle, %0, %2064 : vector<8x128xi32>
    %cst_752 = arith.constant 1.000000e+00 : f32
    %cst_753 = arith.constant 0.000000e+00 : f32
    %2066 = vector.broadcast %cst_752 : f32 to vector<8x128xf32>
    %2067 = vector.broadcast %cst_753 : f32 to vector<8x128xf32>
    %2068 = arith.select %2065, %2066, %2067 : vector<8x128xi1>, vector<8x128xf32>
    %cst_754 = arith.constant dense<0.000000e+00> : vector<128xf32>
    %2069 = vector.multi_reduction <add>, %2068, %cst_754 [0] : vector<8x128xf32> to vector<128xf32>
    %2070 = vector.shape_cast %2069 : vector<128xf32> to vector<1x128xf32>
    %cst_755 = arith.constant dense<0.000000e+00> : vector<1xf32>
    %2071 = vector.multi_reduction <add>, %2070, %cst_755 [1] : vector<1x128xf32> to vector<1xf32>
    %2072 = vector.shape_cast %2071 : vector<1xf32> to vector<1x1xf32>
    %cst_756 = arith.constant 4.100000e+01 : f32
    %2073 = vector.broadcast %cst_756 : f32 to vector<1x1xf32>
    %2074 = arith.cmpf oge, %2072, %2073 : vector<1x1xf32>
    %2075 = arith.select %2074, %1987, %2063 : vector<1x1xi1>, vector<1x1xi32>
    %2076 = arith.select %2074, %2063, %1988 : vector<1x1xi1>, vector<1x1xi32>
    %c1_i32_757 = arith.constant 1 : i32
    %2077 = vector.broadcast %c1_i32_757 : i32 to vector<1x1xi32>
    %2078 = arith.shrsi %2009, %2077 : vector<1x1xi32>
    %c1_i32_758 = arith.constant 1 : i32
    %2079 = vector.broadcast %c1_i32_758 : i32 to vector<1x1xi32>
    %2080 = arith.shrsi %2010, %2079 : vector<1x1xi32>
    %2081 = arith.addi %2078, %2080 : vector<1x1xi32>
    %2082 = arith.andi %2009, %2010 : vector<1x1xi32>
    %c1_i32_759 = arith.constant 1 : i32
    %2083 = vector.broadcast %c1_i32_759 : i32 to vector<1x1xi32>
    %2084 = arith.andi %2082, %2083 : vector<1x1xi32>
    %2085 = arith.addi %2081, %2084 : vector<1x1xi32>
    %2086 = vector.broadcast %2085 : vector<1x1xi32> to vector<8x128xi32>
    %2087 = arith.cmpi sle, %0, %2086 : vector<8x128xi32>
    %cst_760 = arith.constant 1.000000e+00 : f32
    %cst_761 = arith.constant 0.000000e+00 : f32
    %2088 = vector.broadcast %cst_760 : f32 to vector<8x128xf32>
    %2089 = vector.broadcast %cst_761 : f32 to vector<8x128xf32>
    %2090 = arith.select %2087, %2088, %2089 : vector<8x128xi1>, vector<8x128xf32>
    %cst_762 = arith.constant dense<0.000000e+00> : vector<128xf32>
    %2091 = vector.multi_reduction <add>, %2090, %cst_762 [0] : vector<8x128xf32> to vector<128xf32>
    %2092 = vector.shape_cast %2091 : vector<128xf32> to vector<1x128xf32>
    %cst_763 = arith.constant dense<0.000000e+00> : vector<1xf32>
    %2093 = vector.multi_reduction <add>, %2092, %cst_763 [1] : vector<1x128xf32> to vector<1xf32>
    %2094 = vector.shape_cast %2093 : vector<1xf32> to vector<1x1xf32>
    %cst_764 = arith.constant 7.440000e+02 : f32
    %2095 = vector.broadcast %cst_764 : f32 to vector<1x1xf32>
    %2096 = arith.cmpf oge, %2094, %2095 : vector<1x1xf32>
    %2097 = arith.select %2096, %2009, %2085 : vector<1x1xi1>, vector<1x1xi32>
    %2098 = arith.select %2096, %2085, %2010 : vector<1x1xi1>, vector<1x1xi32>
    %c1_i32_765 = arith.constant 1 : i32
    %2099 = vector.broadcast %c1_i32_765 : i32 to vector<1x1xi32>
    %2100 = arith.shrsi %2031, %2099 : vector<1x1xi32>
    %c1_i32_766 = arith.constant 1 : i32
    %2101 = vector.broadcast %c1_i32_766 : i32 to vector<1x1xi32>
    %2102 = arith.shrsi %2032, %2101 : vector<1x1xi32>
    %2103 = arith.addi %2100, %2102 : vector<1x1xi32>
    %2104 = arith.andi %2031, %2032 : vector<1x1xi32>
    %c1_i32_767 = arith.constant 1 : i32
    %2105 = vector.broadcast %c1_i32_767 : i32 to vector<1x1xi32>
    %2106 = arith.andi %2104, %2105 : vector<1x1xi32>
    %2107 = arith.addi %2103, %2106 : vector<1x1xi32>
    %2108 = vector.broadcast %2107 : vector<1x1xi32> to vector<8x128xi32>
    %2109 = arith.cmpi sle, %0, %2108 : vector<8x128xi32>
    %cst_768 = arith.constant 1.000000e+00 : f32
    %cst_769 = arith.constant 0.000000e+00 : f32
    %2110 = vector.broadcast %cst_768 : f32 to vector<8x128xf32>
    %2111 = vector.broadcast %cst_769 : f32 to vector<8x128xf32>
    %2112 = arith.select %2109, %2110, %2111 : vector<8x128xi1>, vector<8x128xf32>
    %cst_770 = arith.constant dense<0.000000e+00> : vector<128xf32>
    %2113 = vector.multi_reduction <add>, %2112, %cst_770 [0] : vector<8x128xf32> to vector<128xf32>
    %2114 = vector.shape_cast %2113 : vector<128xf32> to vector<1x128xf32>
    %cst_771 = arith.constant dense<0.000000e+00> : vector<1xf32>
    %2115 = vector.multi_reduction <add>, %2114, %cst_771 [1] : vector<1x128xf32> to vector<1xf32>
    %2116 = vector.shape_cast %2115 : vector<1xf32> to vector<1x1xf32>
    %cst_772 = arith.constant 7.450000e+02 : f32
    %2117 = vector.broadcast %cst_772 : f32 to vector<1x1xf32>
    %2118 = arith.cmpf oge, %2116, %2117 : vector<1x1xf32>
    %2119 = arith.select %2118, %2031, %2107 : vector<1x1xi1>, vector<1x1xi32>
    %2120 = arith.select %2118, %2107, %2032 : vector<1x1xi1>, vector<1x1xi32>
    %c1_i32_773 = arith.constant 1 : i32
    %2121 = vector.broadcast %c1_i32_773 : i32 to vector<1x1xi32>
    %2122 = arith.shrsi %2053, %2121 : vector<1x1xi32>
    %c1_i32_774 = arith.constant 1 : i32
    %2123 = vector.broadcast %c1_i32_774 : i32 to vector<1x1xi32>
    %2124 = arith.shrsi %2054, %2123 : vector<1x1xi32>
    %2125 = arith.addi %2122, %2124 : vector<1x1xi32>
    %2126 = arith.andi %2053, %2054 : vector<1x1xi32>
    %c1_i32_775 = arith.constant 1 : i32
    %2127 = vector.broadcast %c1_i32_775 : i32 to vector<1x1xi32>
    %2128 = arith.andi %2126, %2127 : vector<1x1xi32>
    %2129 = arith.addi %2125, %2128 : vector<1x1xi32>
    %2130 = vector.broadcast %2129 : vector<1x1xi32> to vector<8x128xi32>
    %2131 = arith.cmpi sle, %0, %2130 : vector<8x128xi32>
    %cst_776 = arith.constant 1.000000e+00 : f32
    %cst_777 = arith.constant 0.000000e+00 : f32
    %2132 = vector.broadcast %cst_776 : f32 to vector<8x128xf32>
    %2133 = vector.broadcast %cst_777 : f32 to vector<8x128xf32>
    %2134 = arith.select %2131, %2132, %2133 : vector<8x128xi1>, vector<8x128xf32>
    %cst_778 = arith.constant dense<0.000000e+00> : vector<128xf32>
    %2135 = vector.multi_reduction <add>, %2134, %cst_778 [0] : vector<8x128xf32> to vector<128xf32>
    %2136 = vector.shape_cast %2135 : vector<128xf32> to vector<1x128xf32>
    %cst_779 = arith.constant dense<0.000000e+00> : vector<1xf32>
    %2137 = vector.multi_reduction <add>, %2136, %cst_779 [1] : vector<1x128xf32> to vector<1xf32>
    %2138 = vector.shape_cast %2137 : vector<1xf32> to vector<1x1xf32>
    %cst_780 = arith.constant 4.000000e+01 : f32
    %2139 = vector.broadcast %cst_780 : f32 to vector<1x1xf32>
    %2140 = arith.cmpf oge, %2138, %2139 : vector<1x1xf32>
    %2141 = arith.select %2140, %2053, %2129 : vector<1x1xi1>, vector<1x1xi32>
    %2142 = arith.select %2140, %2129, %2054 : vector<1x1xi1>, vector<1x1xi32>
    %c1_i32_781 = arith.constant 1 : i32
    %2143 = vector.broadcast %c1_i32_781 : i32 to vector<1x1xi32>
    %2144 = arith.shrsi %2075, %2143 : vector<1x1xi32>
    %c1_i32_782 = arith.constant 1 : i32
    %2145 = vector.broadcast %c1_i32_782 : i32 to vector<1x1xi32>
    %2146 = arith.shrsi %2076, %2145 : vector<1x1xi32>
    %2147 = arith.addi %2144, %2146 : vector<1x1xi32>
    %2148 = arith.andi %2075, %2076 : vector<1x1xi32>
    %c1_i32_783 = arith.constant 1 : i32
    %2149 = vector.broadcast %c1_i32_783 : i32 to vector<1x1xi32>
    %2150 = arith.andi %2148, %2149 : vector<1x1xi32>
    %2151 = arith.addi %2147, %2150 : vector<1x1xi32>
    %2152 = vector.broadcast %2151 : vector<1x1xi32> to vector<8x128xi32>
    %2153 = arith.cmpi sle, %0, %2152 : vector<8x128xi32>
    %cst_784 = arith.constant 1.000000e+00 : f32
    %cst_785 = arith.constant 0.000000e+00 : f32
    %2154 = vector.broadcast %cst_784 : f32 to vector<8x128xf32>
    %2155 = vector.broadcast %cst_785 : f32 to vector<8x128xf32>
    %2156 = arith.select %2153, %2154, %2155 : vector<8x128xi1>, vector<8x128xf32>
    %cst_786 = arith.constant dense<0.000000e+00> : vector<128xf32>
    %2157 = vector.multi_reduction <add>, %2156, %cst_786 [0] : vector<8x128xf32> to vector<128xf32>
    %2158 = vector.shape_cast %2157 : vector<128xf32> to vector<1x128xf32>
    %cst_787 = arith.constant dense<0.000000e+00> : vector<1xf32>
    %2159 = vector.multi_reduction <add>, %2158, %cst_787 [1] : vector<1x128xf32> to vector<1xf32>
    %2160 = vector.shape_cast %2159 : vector<1xf32> to vector<1x1xf32>
    %cst_788 = arith.constant 4.100000e+01 : f32
    %2161 = vector.broadcast %cst_788 : f32 to vector<1x1xf32>
    %2162 = arith.cmpf oge, %2160, %2161 : vector<1x1xf32>
    %2163 = arith.select %2162, %2075, %2151 : vector<1x1xi1>, vector<1x1xi32>
    %2164 = arith.select %2162, %2151, %2076 : vector<1x1xi1>, vector<1x1xi32>
    %c1_i32_789 = arith.constant 1 : i32
    %2165 = vector.broadcast %c1_i32_789 : i32 to vector<1x1xi32>
    %2166 = arith.shrsi %2097, %2165 : vector<1x1xi32>
    %c1_i32_790 = arith.constant 1 : i32
    %2167 = vector.broadcast %c1_i32_790 : i32 to vector<1x1xi32>
    %2168 = arith.shrsi %2098, %2167 : vector<1x1xi32>
    %2169 = arith.addi %2166, %2168 : vector<1x1xi32>
    %2170 = arith.andi %2097, %2098 : vector<1x1xi32>
    %c1_i32_791 = arith.constant 1 : i32
    %2171 = vector.broadcast %c1_i32_791 : i32 to vector<1x1xi32>
    %2172 = arith.andi %2170, %2171 : vector<1x1xi32>
    %2173 = arith.addi %2169, %2172 : vector<1x1xi32>
    %2174 = vector.broadcast %2173 : vector<1x1xi32> to vector<8x128xi32>
    %2175 = arith.cmpi sle, %0, %2174 : vector<8x128xi32>
    %cst_792 = arith.constant 1.000000e+00 : f32
    %cst_793 = arith.constant 0.000000e+00 : f32
    %2176 = vector.broadcast %cst_792 : f32 to vector<8x128xf32>
    %2177 = vector.broadcast %cst_793 : f32 to vector<8x128xf32>
    %2178 = arith.select %2175, %2176, %2177 : vector<8x128xi1>, vector<8x128xf32>
    %cst_794 = arith.constant dense<0.000000e+00> : vector<128xf32>
    %2179 = vector.multi_reduction <add>, %2178, %cst_794 [0] : vector<8x128xf32> to vector<128xf32>
    %2180 = vector.shape_cast %2179 : vector<128xf32> to vector<1x128xf32>
    %cst_795 = arith.constant dense<0.000000e+00> : vector<1xf32>
    %2181 = vector.multi_reduction <add>, %2180, %cst_795 [1] : vector<1x128xf32> to vector<1xf32>
    %2182 = vector.shape_cast %2181 : vector<1xf32> to vector<1x1xf32>
    %cst_796 = arith.constant 7.440000e+02 : f32
    %2183 = vector.broadcast %cst_796 : f32 to vector<1x1xf32>
    %2184 = arith.cmpf oge, %2182, %2183 : vector<1x1xf32>
    %2185 = arith.select %2184, %2097, %2173 : vector<1x1xi1>, vector<1x1xi32>
    %2186 = arith.select %2184, %2173, %2098 : vector<1x1xi1>, vector<1x1xi32>
    %c1_i32_797 = arith.constant 1 : i32
    %2187 = vector.broadcast %c1_i32_797 : i32 to vector<1x1xi32>
    %2188 = arith.shrsi %2119, %2187 : vector<1x1xi32>
    %c1_i32_798 = arith.constant 1 : i32
    %2189 = vector.broadcast %c1_i32_798 : i32 to vector<1x1xi32>
    %2190 = arith.shrsi %2120, %2189 : vector<1x1xi32>
    %2191 = arith.addi %2188, %2190 : vector<1x1xi32>
    %2192 = arith.andi %2119, %2120 : vector<1x1xi32>
    %c1_i32_799 = arith.constant 1 : i32
    %2193 = vector.broadcast %c1_i32_799 : i32 to vector<1x1xi32>
    %2194 = arith.andi %2192, %2193 : vector<1x1xi32>
    %2195 = arith.addi %2191, %2194 : vector<1x1xi32>
    %2196 = vector.broadcast %2195 : vector<1x1xi32> to vector<8x128xi32>
    %2197 = arith.cmpi sle, %0, %2196 : vector<8x128xi32>
    %cst_800 = arith.constant 1.000000e+00 : f32
    %cst_801 = arith.constant 0.000000e+00 : f32
    %2198 = vector.broadcast %cst_800 : f32 to vector<8x128xf32>
    %2199 = vector.broadcast %cst_801 : f32 to vector<8x128xf32>
    %2200 = arith.select %2197, %2198, %2199 : vector<8x128xi1>, vector<8x128xf32>
    %cst_802 = arith.constant dense<0.000000e+00> : vector<128xf32>
    %2201 = vector.multi_reduction <add>, %2200, %cst_802 [0] : vector<8x128xf32> to vector<128xf32>
    %2202 = vector.shape_cast %2201 : vector<128xf32> to vector<1x128xf32>
    %cst_803 = arith.constant dense<0.000000e+00> : vector<1xf32>
    %2203 = vector.multi_reduction <add>, %2202, %cst_803 [1] : vector<1x128xf32> to vector<1xf32>
    %2204 = vector.shape_cast %2203 : vector<1xf32> to vector<1x1xf32>
    %cst_804 = arith.constant 7.450000e+02 : f32
    %2205 = vector.broadcast %cst_804 : f32 to vector<1x1xf32>
    %2206 = arith.cmpf oge, %2204, %2205 : vector<1x1xf32>
    %2207 = arith.select %2206, %2119, %2195 : vector<1x1xi1>, vector<1x1xi32>
    %2208 = arith.select %2206, %2195, %2120 : vector<1x1xi1>, vector<1x1xi32>
    %c1_i32_805 = arith.constant 1 : i32
    %2209 = vector.broadcast %c1_i32_805 : i32 to vector<1x1xi32>
    %2210 = arith.shrsi %2141, %2209 : vector<1x1xi32>
    %c1_i32_806 = arith.constant 1 : i32
    %2211 = vector.broadcast %c1_i32_806 : i32 to vector<1x1xi32>
    %2212 = arith.shrsi %2142, %2211 : vector<1x1xi32>
    %2213 = arith.addi %2210, %2212 : vector<1x1xi32>
    %2214 = arith.andi %2141, %2142 : vector<1x1xi32>
    %c1_i32_807 = arith.constant 1 : i32
    %2215 = vector.broadcast %c1_i32_807 : i32 to vector<1x1xi32>
    %2216 = arith.andi %2214, %2215 : vector<1x1xi32>
    %2217 = arith.addi %2213, %2216 : vector<1x1xi32>
    %2218 = vector.broadcast %2217 : vector<1x1xi32> to vector<8x128xi32>
    %2219 = arith.cmpi sle, %0, %2218 : vector<8x128xi32>
    %cst_808 = arith.constant 1.000000e+00 : f32
    %cst_809 = arith.constant 0.000000e+00 : f32
    %2220 = vector.broadcast %cst_808 : f32 to vector<8x128xf32>
    %2221 = vector.broadcast %cst_809 : f32 to vector<8x128xf32>
    %2222 = arith.select %2219, %2220, %2221 : vector<8x128xi1>, vector<8x128xf32>
    %cst_810 = arith.constant dense<0.000000e+00> : vector<128xf32>
    %2223 = vector.multi_reduction <add>, %2222, %cst_810 [0] : vector<8x128xf32> to vector<128xf32>
    %2224 = vector.shape_cast %2223 : vector<128xf32> to vector<1x128xf32>
    %cst_811 = arith.constant dense<0.000000e+00> : vector<1xf32>
    %2225 = vector.multi_reduction <add>, %2224, %cst_811 [1] : vector<1x128xf32> to vector<1xf32>
    %2226 = vector.shape_cast %2225 : vector<1xf32> to vector<1x1xf32>
    %cst_812 = arith.constant 4.000000e+01 : f32
    %2227 = vector.broadcast %cst_812 : f32 to vector<1x1xf32>
    %2228 = arith.cmpf oge, %2226, %2227 : vector<1x1xf32>
    %2229 = arith.select %2228, %2141, %2217 : vector<1x1xi1>, vector<1x1xi32>
    %2230 = arith.select %2228, %2217, %2142 : vector<1x1xi1>, vector<1x1xi32>
    %c1_i32_813 = arith.constant 1 : i32
    %2231 = vector.broadcast %c1_i32_813 : i32 to vector<1x1xi32>
    %2232 = arith.shrsi %2163, %2231 : vector<1x1xi32>
    %c1_i32_814 = arith.constant 1 : i32
    %2233 = vector.broadcast %c1_i32_814 : i32 to vector<1x1xi32>
    %2234 = arith.shrsi %2164, %2233 : vector<1x1xi32>
    %2235 = arith.addi %2232, %2234 : vector<1x1xi32>
    %2236 = arith.andi %2163, %2164 : vector<1x1xi32>
    %c1_i32_815 = arith.constant 1 : i32
    %2237 = vector.broadcast %c1_i32_815 : i32 to vector<1x1xi32>
    %2238 = arith.andi %2236, %2237 : vector<1x1xi32>
    %2239 = arith.addi %2235, %2238 : vector<1x1xi32>
    %2240 = vector.broadcast %2239 : vector<1x1xi32> to vector<8x128xi32>
    %2241 = arith.cmpi sle, %0, %2240 : vector<8x128xi32>
    %cst_816 = arith.constant 1.000000e+00 : f32
    %cst_817 = arith.constant 0.000000e+00 : f32
    %2242 = vector.broadcast %cst_816 : f32 to vector<8x128xf32>
    %2243 = vector.broadcast %cst_817 : f32 to vector<8x128xf32>
    %2244 = arith.select %2241, %2242, %2243 : vector<8x128xi1>, vector<8x128xf32>
    %cst_818 = arith.constant dense<0.000000e+00> : vector<128xf32>
    %2245 = vector.multi_reduction <add>, %2244, %cst_818 [0] : vector<8x128xf32> to vector<128xf32>
    %2246 = vector.shape_cast %2245 : vector<128xf32> to vector<1x128xf32>
    %cst_819 = arith.constant dense<0.000000e+00> : vector<1xf32>
    %2247 = vector.multi_reduction <add>, %2246, %cst_819 [1] : vector<1x128xf32> to vector<1xf32>
    %2248 = vector.shape_cast %2247 : vector<1xf32> to vector<1x1xf32>
    %cst_820 = arith.constant 4.100000e+01 : f32
    %2249 = vector.broadcast %cst_820 : f32 to vector<1x1xf32>
    %2250 = arith.cmpf oge, %2248, %2249 : vector<1x1xf32>
    %2251 = arith.select %2250, %2163, %2239 : vector<1x1xi1>, vector<1x1xi32>
    %2252 = arith.select %2250, %2239, %2164 : vector<1x1xi1>, vector<1x1xi32>
    %c1_i32_821 = arith.constant 1 : i32
    %2253 = vector.broadcast %c1_i32_821 : i32 to vector<1x1xi32>
    %2254 = arith.shrsi %2185, %2253 : vector<1x1xi32>
    %c1_i32_822 = arith.constant 1 : i32
    %2255 = vector.broadcast %c1_i32_822 : i32 to vector<1x1xi32>
    %2256 = arith.shrsi %2186, %2255 : vector<1x1xi32>
    %2257 = arith.addi %2254, %2256 : vector<1x1xi32>
    %2258 = arith.andi %2185, %2186 : vector<1x1xi32>
    %c1_i32_823 = arith.constant 1 : i32
    %2259 = vector.broadcast %c1_i32_823 : i32 to vector<1x1xi32>
    %2260 = arith.andi %2258, %2259 : vector<1x1xi32>
    %2261 = arith.addi %2257, %2260 : vector<1x1xi32>
    %2262 = vector.broadcast %2261 : vector<1x1xi32> to vector<8x128xi32>
    %2263 = arith.cmpi sle, %0, %2262 : vector<8x128xi32>
    %cst_824 = arith.constant 1.000000e+00 : f32
    %cst_825 = arith.constant 0.000000e+00 : f32
    %2264 = vector.broadcast %cst_824 : f32 to vector<8x128xf32>
    %2265 = vector.broadcast %cst_825 : f32 to vector<8x128xf32>
    %2266 = arith.select %2263, %2264, %2265 : vector<8x128xi1>, vector<8x128xf32>
    %cst_826 = arith.constant dense<0.000000e+00> : vector<128xf32>
    %2267 = vector.multi_reduction <add>, %2266, %cst_826 [0] : vector<8x128xf32> to vector<128xf32>
    %2268 = vector.shape_cast %2267 : vector<128xf32> to vector<1x128xf32>
    %cst_827 = arith.constant dense<0.000000e+00> : vector<1xf32>
    %2269 = vector.multi_reduction <add>, %2268, %cst_827 [1] : vector<1x128xf32> to vector<1xf32>
    %2270 = vector.shape_cast %2269 : vector<1xf32> to vector<1x1xf32>
    %cst_828 = arith.constant 7.440000e+02 : f32
    %2271 = vector.broadcast %cst_828 : f32 to vector<1x1xf32>
    %2272 = arith.cmpf oge, %2270, %2271 : vector<1x1xf32>
    %2273 = arith.select %2272, %2185, %2261 : vector<1x1xi1>, vector<1x1xi32>
    %2274 = arith.select %2272, %2261, %2186 : vector<1x1xi1>, vector<1x1xi32>
    %c1_i32_829 = arith.constant 1 : i32
    %2275 = vector.broadcast %c1_i32_829 : i32 to vector<1x1xi32>
    %2276 = arith.shrsi %2207, %2275 : vector<1x1xi32>
    %c1_i32_830 = arith.constant 1 : i32
    %2277 = vector.broadcast %c1_i32_830 : i32 to vector<1x1xi32>
    %2278 = arith.shrsi %2208, %2277 : vector<1x1xi32>
    %2279 = arith.addi %2276, %2278 : vector<1x1xi32>
    %2280 = arith.andi %2207, %2208 : vector<1x1xi32>
    %c1_i32_831 = arith.constant 1 : i32
    %2281 = vector.broadcast %c1_i32_831 : i32 to vector<1x1xi32>
    %2282 = arith.andi %2280, %2281 : vector<1x1xi32>
    %2283 = arith.addi %2279, %2282 : vector<1x1xi32>
    %2284 = vector.broadcast %2283 : vector<1x1xi32> to vector<8x128xi32>
    %2285 = arith.cmpi sle, %0, %2284 : vector<8x128xi32>
    %cst_832 = arith.constant 1.000000e+00 : f32
    %cst_833 = arith.constant 0.000000e+00 : f32
    %2286 = vector.broadcast %cst_832 : f32 to vector<8x128xf32>
    %2287 = vector.broadcast %cst_833 : f32 to vector<8x128xf32>
    %2288 = arith.select %2285, %2286, %2287 : vector<8x128xi1>, vector<8x128xf32>
    %cst_834 = arith.constant dense<0.000000e+00> : vector<128xf32>
    %2289 = vector.multi_reduction <add>, %2288, %cst_834 [0] : vector<8x128xf32> to vector<128xf32>
    %2290 = vector.shape_cast %2289 : vector<128xf32> to vector<1x128xf32>
    %cst_835 = arith.constant dense<0.000000e+00> : vector<1xf32>
    %2291 = vector.multi_reduction <add>, %2290, %cst_835 [1] : vector<1x128xf32> to vector<1xf32>
    %2292 = vector.shape_cast %2291 : vector<1xf32> to vector<1x1xf32>
    %cst_836 = arith.constant 7.450000e+02 : f32
    %2293 = vector.broadcast %cst_836 : f32 to vector<1x1xf32>
    %2294 = arith.cmpf oge, %2292, %2293 : vector<1x1xf32>
    %2295 = arith.select %2294, %2207, %2283 : vector<1x1xi1>, vector<1x1xi32>
    %2296 = arith.select %2294, %2283, %2208 : vector<1x1xi1>, vector<1x1xi32>
    %c1_i32_837 = arith.constant 1 : i32
    %2297 = vector.broadcast %c1_i32_837 : i32 to vector<1x1xi32>
    %2298 = arith.shrsi %2229, %2297 : vector<1x1xi32>
    %c1_i32_838 = arith.constant 1 : i32
    %2299 = vector.broadcast %c1_i32_838 : i32 to vector<1x1xi32>
    %2300 = arith.shrsi %2230, %2299 : vector<1x1xi32>
    %2301 = arith.addi %2298, %2300 : vector<1x1xi32>
    %2302 = arith.andi %2229, %2230 : vector<1x1xi32>
    %c1_i32_839 = arith.constant 1 : i32
    %2303 = vector.broadcast %c1_i32_839 : i32 to vector<1x1xi32>
    %2304 = arith.andi %2302, %2303 : vector<1x1xi32>
    %2305 = arith.addi %2301, %2304 : vector<1x1xi32>
    %2306 = vector.broadcast %2305 : vector<1x1xi32> to vector<8x128xi32>
    %2307 = arith.cmpi sle, %0, %2306 : vector<8x128xi32>
    %cst_840 = arith.constant 1.000000e+00 : f32
    %cst_841 = arith.constant 0.000000e+00 : f32
    %2308 = vector.broadcast %cst_840 : f32 to vector<8x128xf32>
    %2309 = vector.broadcast %cst_841 : f32 to vector<8x128xf32>
    %2310 = arith.select %2307, %2308, %2309 : vector<8x128xi1>, vector<8x128xf32>
    %cst_842 = arith.constant dense<0.000000e+00> : vector<128xf32>
    %2311 = vector.multi_reduction <add>, %2310, %cst_842 [0] : vector<8x128xf32> to vector<128xf32>
    %2312 = vector.shape_cast %2311 : vector<128xf32> to vector<1x128xf32>
    %cst_843 = arith.constant dense<0.000000e+00> : vector<1xf32>
    %2313 = vector.multi_reduction <add>, %2312, %cst_843 [1] : vector<1x128xf32> to vector<1xf32>
    %2314 = vector.shape_cast %2313 : vector<1xf32> to vector<1x1xf32>
    %cst_844 = arith.constant 4.000000e+01 : f32
    %2315 = vector.broadcast %cst_844 : f32 to vector<1x1xf32>
    %2316 = arith.cmpf oge, %2314, %2315 : vector<1x1xf32>
    %2317 = arith.select %2316, %2229, %2305 : vector<1x1xi1>, vector<1x1xi32>
    %2318 = arith.select %2316, %2305, %2230 : vector<1x1xi1>, vector<1x1xi32>
    %c1_i32_845 = arith.constant 1 : i32
    %2319 = vector.broadcast %c1_i32_845 : i32 to vector<1x1xi32>
    %2320 = arith.shrsi %2251, %2319 : vector<1x1xi32>
    %c1_i32_846 = arith.constant 1 : i32
    %2321 = vector.broadcast %c1_i32_846 : i32 to vector<1x1xi32>
    %2322 = arith.shrsi %2252, %2321 : vector<1x1xi32>
    %2323 = arith.addi %2320, %2322 : vector<1x1xi32>
    %2324 = arith.andi %2251, %2252 : vector<1x1xi32>
    %c1_i32_847 = arith.constant 1 : i32
    %2325 = vector.broadcast %c1_i32_847 : i32 to vector<1x1xi32>
    %2326 = arith.andi %2324, %2325 : vector<1x1xi32>
    %2327 = arith.addi %2323, %2326 : vector<1x1xi32>
    %2328 = vector.broadcast %2327 : vector<1x1xi32> to vector<8x128xi32>
    %2329 = arith.cmpi sle, %0, %2328 : vector<8x128xi32>
    %cst_848 = arith.constant 1.000000e+00 : f32
    %cst_849 = arith.constant 0.000000e+00 : f32
    %2330 = vector.broadcast %cst_848 : f32 to vector<8x128xf32>
    %2331 = vector.broadcast %cst_849 : f32 to vector<8x128xf32>
    %2332 = arith.select %2329, %2330, %2331 : vector<8x128xi1>, vector<8x128xf32>
    %cst_850 = arith.constant dense<0.000000e+00> : vector<128xf32>
    %2333 = vector.multi_reduction <add>, %2332, %cst_850 [0] : vector<8x128xf32> to vector<128xf32>
    %2334 = vector.shape_cast %2333 : vector<128xf32> to vector<1x128xf32>
    %cst_851 = arith.constant dense<0.000000e+00> : vector<1xf32>
    %2335 = vector.multi_reduction <add>, %2334, %cst_851 [1] : vector<1x128xf32> to vector<1xf32>
    %2336 = vector.shape_cast %2335 : vector<1xf32> to vector<1x1xf32>
    %cst_852 = arith.constant 4.100000e+01 : f32
    %2337 = vector.broadcast %cst_852 : f32 to vector<1x1xf32>
    %2338 = arith.cmpf oge, %2336, %2337 : vector<1x1xf32>
    %2339 = arith.select %2338, %2251, %2327 : vector<1x1xi1>, vector<1x1xi32>
    %2340 = arith.select %2338, %2327, %2252 : vector<1x1xi1>, vector<1x1xi32>
    %c1_i32_853 = arith.constant 1 : i32
    %2341 = vector.broadcast %c1_i32_853 : i32 to vector<1x1xi32>
    %2342 = arith.shrsi %2273, %2341 : vector<1x1xi32>
    %c1_i32_854 = arith.constant 1 : i32
    %2343 = vector.broadcast %c1_i32_854 : i32 to vector<1x1xi32>
    %2344 = arith.shrsi %2274, %2343 : vector<1x1xi32>
    %2345 = arith.addi %2342, %2344 : vector<1x1xi32>
    %2346 = arith.andi %2273, %2274 : vector<1x1xi32>
    %c1_i32_855 = arith.constant 1 : i32
    %2347 = vector.broadcast %c1_i32_855 : i32 to vector<1x1xi32>
    %2348 = arith.andi %2346, %2347 : vector<1x1xi32>
    %2349 = arith.addi %2345, %2348 : vector<1x1xi32>
    %2350 = vector.broadcast %2349 : vector<1x1xi32> to vector<8x128xi32>
    %2351 = arith.cmpi sle, %0, %2350 : vector<8x128xi32>
    %cst_856 = arith.constant 1.000000e+00 : f32
    %cst_857 = arith.constant 0.000000e+00 : f32
    %2352 = vector.broadcast %cst_856 : f32 to vector<8x128xf32>
    %2353 = vector.broadcast %cst_857 : f32 to vector<8x128xf32>
    %2354 = arith.select %2351, %2352, %2353 : vector<8x128xi1>, vector<8x128xf32>
    %cst_858 = arith.constant dense<0.000000e+00> : vector<128xf32>
    %2355 = vector.multi_reduction <add>, %2354, %cst_858 [0] : vector<8x128xf32> to vector<128xf32>
    %2356 = vector.shape_cast %2355 : vector<128xf32> to vector<1x128xf32>
    %cst_859 = arith.constant dense<0.000000e+00> : vector<1xf32>
    %2357 = vector.multi_reduction <add>, %2356, %cst_859 [1] : vector<1x128xf32> to vector<1xf32>
    %2358 = vector.shape_cast %2357 : vector<1xf32> to vector<1x1xf32>
    %cst_860 = arith.constant 7.440000e+02 : f32
    %2359 = vector.broadcast %cst_860 : f32 to vector<1x1xf32>
    %2360 = arith.cmpf oge, %2358, %2359 : vector<1x1xf32>
    %2361 = arith.select %2360, %2273, %2349 : vector<1x1xi1>, vector<1x1xi32>
    %2362 = arith.select %2360, %2349, %2274 : vector<1x1xi1>, vector<1x1xi32>
    %c1_i32_861 = arith.constant 1 : i32
    %2363 = vector.broadcast %c1_i32_861 : i32 to vector<1x1xi32>
    %2364 = arith.shrsi %2295, %2363 : vector<1x1xi32>
    %c1_i32_862 = arith.constant 1 : i32
    %2365 = vector.broadcast %c1_i32_862 : i32 to vector<1x1xi32>
    %2366 = arith.shrsi %2296, %2365 : vector<1x1xi32>
    %2367 = arith.addi %2364, %2366 : vector<1x1xi32>
    %2368 = arith.andi %2295, %2296 : vector<1x1xi32>
    %c1_i32_863 = arith.constant 1 : i32
    %2369 = vector.broadcast %c1_i32_863 : i32 to vector<1x1xi32>
    %2370 = arith.andi %2368, %2369 : vector<1x1xi32>
    %2371 = arith.addi %2367, %2370 : vector<1x1xi32>
    %2372 = vector.broadcast %2371 : vector<1x1xi32> to vector<8x128xi32>
    %2373 = arith.cmpi sle, %0, %2372 : vector<8x128xi32>
    %cst_864 = arith.constant 1.000000e+00 : f32
    %cst_865 = arith.constant 0.000000e+00 : f32
    %2374 = vector.broadcast %cst_864 : f32 to vector<8x128xf32>
    %2375 = vector.broadcast %cst_865 : f32 to vector<8x128xf32>
    %2376 = arith.select %2373, %2374, %2375 : vector<8x128xi1>, vector<8x128xf32>
    %cst_866 = arith.constant dense<0.000000e+00> : vector<128xf32>
    %2377 = vector.multi_reduction <add>, %2376, %cst_866 [0] : vector<8x128xf32> to vector<128xf32>
    %2378 = vector.shape_cast %2377 : vector<128xf32> to vector<1x128xf32>
    %cst_867 = arith.constant dense<0.000000e+00> : vector<1xf32>
    %2379 = vector.multi_reduction <add>, %2378, %cst_867 [1] : vector<1x128xf32> to vector<1xf32>
    %2380 = vector.shape_cast %2379 : vector<1xf32> to vector<1x1xf32>
    %cst_868 = arith.constant 7.450000e+02 : f32
    %2381 = vector.broadcast %cst_868 : f32 to vector<1x1xf32>
    %2382 = arith.cmpf oge, %2380, %2381 : vector<1x1xf32>
    %2383 = arith.select %2382, %2295, %2371 : vector<1x1xi1>, vector<1x1xi32>
    %2384 = arith.select %2382, %2371, %2296 : vector<1x1xi1>, vector<1x1xi32>
    %c1_i32_869 = arith.constant 1 : i32
    %2385 = vector.broadcast %c1_i32_869 : i32 to vector<1x1xi32>
    %2386 = arith.shrsi %2317, %2385 : vector<1x1xi32>
    %c1_i32_870 = arith.constant 1 : i32
    %2387 = vector.broadcast %c1_i32_870 : i32 to vector<1x1xi32>
    %2388 = arith.shrsi %2318, %2387 : vector<1x1xi32>
    %2389 = arith.addi %2386, %2388 : vector<1x1xi32>
    %2390 = arith.andi %2317, %2318 : vector<1x1xi32>
    %c1_i32_871 = arith.constant 1 : i32
    %2391 = vector.broadcast %c1_i32_871 : i32 to vector<1x1xi32>
    %2392 = arith.andi %2390, %2391 : vector<1x1xi32>
    %2393 = arith.addi %2389, %2392 : vector<1x1xi32>
    %2394 = vector.broadcast %2393 : vector<1x1xi32> to vector<8x128xi32>
    %2395 = arith.cmpi sle, %0, %2394 : vector<8x128xi32>
    %cst_872 = arith.constant 1.000000e+00 : f32
    %cst_873 = arith.constant 0.000000e+00 : f32
    %2396 = vector.broadcast %cst_872 : f32 to vector<8x128xf32>
    %2397 = vector.broadcast %cst_873 : f32 to vector<8x128xf32>
    %2398 = arith.select %2395, %2396, %2397 : vector<8x128xi1>, vector<8x128xf32>
    %cst_874 = arith.constant dense<0.000000e+00> : vector<128xf32>
    %2399 = vector.multi_reduction <add>, %2398, %cst_874 [0] : vector<8x128xf32> to vector<128xf32>
    %2400 = vector.shape_cast %2399 : vector<128xf32> to vector<1x128xf32>
    %cst_875 = arith.constant dense<0.000000e+00> : vector<1xf32>
    %2401 = vector.multi_reduction <add>, %2400, %cst_875 [1] : vector<1x128xf32> to vector<1xf32>
    %2402 = vector.shape_cast %2401 : vector<1xf32> to vector<1x1xf32>
    %cst_876 = arith.constant 4.000000e+01 : f32
    %2403 = vector.broadcast %cst_876 : f32 to vector<1x1xf32>
    %2404 = arith.cmpf oge, %2402, %2403 : vector<1x1xf32>
    %2405 = arith.select %2404, %2317, %2393 : vector<1x1xi1>, vector<1x1xi32>
    %2406 = arith.select %2404, %2393, %2318 : vector<1x1xi1>, vector<1x1xi32>
    %c1_i32_877 = arith.constant 1 : i32
    %2407 = vector.broadcast %c1_i32_877 : i32 to vector<1x1xi32>
    %2408 = arith.shrsi %2339, %2407 : vector<1x1xi32>
    %c1_i32_878 = arith.constant 1 : i32
    %2409 = vector.broadcast %c1_i32_878 : i32 to vector<1x1xi32>
    %2410 = arith.shrsi %2340, %2409 : vector<1x1xi32>
    %2411 = arith.addi %2408, %2410 : vector<1x1xi32>
    %2412 = arith.andi %2339, %2340 : vector<1x1xi32>
    %c1_i32_879 = arith.constant 1 : i32
    %2413 = vector.broadcast %c1_i32_879 : i32 to vector<1x1xi32>
    %2414 = arith.andi %2412, %2413 : vector<1x1xi32>
    %2415 = arith.addi %2411, %2414 : vector<1x1xi32>
    %2416 = vector.broadcast %2415 : vector<1x1xi32> to vector<8x128xi32>
    %2417 = arith.cmpi sle, %0, %2416 : vector<8x128xi32>
    %cst_880 = arith.constant 1.000000e+00 : f32
    %cst_881 = arith.constant 0.000000e+00 : f32
    %2418 = vector.broadcast %cst_880 : f32 to vector<8x128xf32>
    %2419 = vector.broadcast %cst_881 : f32 to vector<8x128xf32>
    %2420 = arith.select %2417, %2418, %2419 : vector<8x128xi1>, vector<8x128xf32>
    %cst_882 = arith.constant dense<0.000000e+00> : vector<128xf32>
    %2421 = vector.multi_reduction <add>, %2420, %cst_882 [0] : vector<8x128xf32> to vector<128xf32>
    %2422 = vector.shape_cast %2421 : vector<128xf32> to vector<1x128xf32>
    %cst_883 = arith.constant dense<0.000000e+00> : vector<1xf32>
    %2423 = vector.multi_reduction <add>, %2422, %cst_883 [1] : vector<1x128xf32> to vector<1xf32>
    %2424 = vector.shape_cast %2423 : vector<1xf32> to vector<1x1xf32>
    %cst_884 = arith.constant 4.100000e+01 : f32
    %2425 = vector.broadcast %cst_884 : f32 to vector<1x1xf32>
    %2426 = arith.cmpf oge, %2424, %2425 : vector<1x1xf32>
    %2427 = arith.select %2426, %2339, %2415 : vector<1x1xi1>, vector<1x1xi32>
    %2428 = arith.select %2426, %2415, %2340 : vector<1x1xi1>, vector<1x1xi32>
    %c1_i32_885 = arith.constant 1 : i32
    %2429 = vector.broadcast %c1_i32_885 : i32 to vector<1x1xi32>
    %2430 = arith.shrsi %2361, %2429 : vector<1x1xi32>
    %c1_i32_886 = arith.constant 1 : i32
    %2431 = vector.broadcast %c1_i32_886 : i32 to vector<1x1xi32>
    %2432 = arith.shrsi %2362, %2431 : vector<1x1xi32>
    %2433 = arith.addi %2430, %2432 : vector<1x1xi32>
    %2434 = arith.andi %2361, %2362 : vector<1x1xi32>
    %c1_i32_887 = arith.constant 1 : i32
    %2435 = vector.broadcast %c1_i32_887 : i32 to vector<1x1xi32>
    %2436 = arith.andi %2434, %2435 : vector<1x1xi32>
    %2437 = arith.addi %2433, %2436 : vector<1x1xi32>
    %2438 = vector.broadcast %2437 : vector<1x1xi32> to vector<8x128xi32>
    %2439 = arith.cmpi sle, %0, %2438 : vector<8x128xi32>
    %cst_888 = arith.constant 1.000000e+00 : f32
    %cst_889 = arith.constant 0.000000e+00 : f32
    %2440 = vector.broadcast %cst_888 : f32 to vector<8x128xf32>
    %2441 = vector.broadcast %cst_889 : f32 to vector<8x128xf32>
    %2442 = arith.select %2439, %2440, %2441 : vector<8x128xi1>, vector<8x128xf32>
    %cst_890 = arith.constant dense<0.000000e+00> : vector<128xf32>
    %2443 = vector.multi_reduction <add>, %2442, %cst_890 [0] : vector<8x128xf32> to vector<128xf32>
    %2444 = vector.shape_cast %2443 : vector<128xf32> to vector<1x128xf32>
    %cst_891 = arith.constant dense<0.000000e+00> : vector<1xf32>
    %2445 = vector.multi_reduction <add>, %2444, %cst_891 [1] : vector<1x128xf32> to vector<1xf32>
    %2446 = vector.shape_cast %2445 : vector<1xf32> to vector<1x1xf32>
    %cst_892 = arith.constant 7.440000e+02 : f32
    %2447 = vector.broadcast %cst_892 : f32 to vector<1x1xf32>
    %2448 = arith.cmpf oge, %2446, %2447 : vector<1x1xf32>
    %2449 = arith.select %2448, %2361, %2437 : vector<1x1xi1>, vector<1x1xi32>
    %2450 = arith.select %2448, %2437, %2362 : vector<1x1xi1>, vector<1x1xi32>
    %c1_i32_893 = arith.constant 1 : i32
    %2451 = vector.broadcast %c1_i32_893 : i32 to vector<1x1xi32>
    %2452 = arith.shrsi %2383, %2451 : vector<1x1xi32>
    %c1_i32_894 = arith.constant 1 : i32
    %2453 = vector.broadcast %c1_i32_894 : i32 to vector<1x1xi32>
    %2454 = arith.shrsi %2384, %2453 : vector<1x1xi32>
    %2455 = arith.addi %2452, %2454 : vector<1x1xi32>
    %2456 = arith.andi %2383, %2384 : vector<1x1xi32>
    %c1_i32_895 = arith.constant 1 : i32
    %2457 = vector.broadcast %c1_i32_895 : i32 to vector<1x1xi32>
    %2458 = arith.andi %2456, %2457 : vector<1x1xi32>
    %2459 = arith.addi %2455, %2458 : vector<1x1xi32>
    %2460 = vector.broadcast %2459 : vector<1x1xi32> to vector<8x128xi32>
    %2461 = arith.cmpi sle, %0, %2460 : vector<8x128xi32>
    %cst_896 = arith.constant 1.000000e+00 : f32
    %cst_897 = arith.constant 0.000000e+00 : f32
    %2462 = vector.broadcast %cst_896 : f32 to vector<8x128xf32>
    %2463 = vector.broadcast %cst_897 : f32 to vector<8x128xf32>
    %2464 = arith.select %2461, %2462, %2463 : vector<8x128xi1>, vector<8x128xf32>
    %cst_898 = arith.constant dense<0.000000e+00> : vector<128xf32>
    %2465 = vector.multi_reduction <add>, %2464, %cst_898 [0] : vector<8x128xf32> to vector<128xf32>
    %2466 = vector.shape_cast %2465 : vector<128xf32> to vector<1x128xf32>
    %cst_899 = arith.constant dense<0.000000e+00> : vector<1xf32>
    %2467 = vector.multi_reduction <add>, %2466, %cst_899 [1] : vector<1x128xf32> to vector<1xf32>
    %2468 = vector.shape_cast %2467 : vector<1xf32> to vector<1x1xf32>
    %cst_900 = arith.constant 7.450000e+02 : f32
    %2469 = vector.broadcast %cst_900 : f32 to vector<1x1xf32>
    %2470 = arith.cmpf oge, %2468, %2469 : vector<1x1xf32>
    %2471 = arith.select %2470, %2383, %2459 : vector<1x1xi1>, vector<1x1xi32>
    %2472 = arith.select %2470, %2459, %2384 : vector<1x1xi1>, vector<1x1xi32>
    %c1_i32_901 = arith.constant 1 : i32
    %2473 = vector.broadcast %c1_i32_901 : i32 to vector<1x1xi32>
    %2474 = arith.shrsi %2405, %2473 : vector<1x1xi32>
    %c1_i32_902 = arith.constant 1 : i32
    %2475 = vector.broadcast %c1_i32_902 : i32 to vector<1x1xi32>
    %2476 = arith.shrsi %2406, %2475 : vector<1x1xi32>
    %2477 = arith.addi %2474, %2476 : vector<1x1xi32>
    %2478 = arith.andi %2405, %2406 : vector<1x1xi32>
    %c1_i32_903 = arith.constant 1 : i32
    %2479 = vector.broadcast %c1_i32_903 : i32 to vector<1x1xi32>
    %2480 = arith.andi %2478, %2479 : vector<1x1xi32>
    %2481 = arith.addi %2477, %2480 : vector<1x1xi32>
    %2482 = vector.broadcast %2481 : vector<1x1xi32> to vector<8x128xi32>
    %2483 = arith.cmpi sle, %0, %2482 : vector<8x128xi32>
    %cst_904 = arith.constant 1.000000e+00 : f32
    %cst_905 = arith.constant 0.000000e+00 : f32
    %2484 = vector.broadcast %cst_904 : f32 to vector<8x128xf32>
    %2485 = vector.broadcast %cst_905 : f32 to vector<8x128xf32>
    %2486 = arith.select %2483, %2484, %2485 : vector<8x128xi1>, vector<8x128xf32>
    %cst_906 = arith.constant dense<0.000000e+00> : vector<128xf32>
    %2487 = vector.multi_reduction <add>, %2486, %cst_906 [0] : vector<8x128xf32> to vector<128xf32>
    %2488 = vector.shape_cast %2487 : vector<128xf32> to vector<1x128xf32>
    %cst_907 = arith.constant dense<0.000000e+00> : vector<1xf32>
    %2489 = vector.multi_reduction <add>, %2488, %cst_907 [1] : vector<1x128xf32> to vector<1xf32>
    %2490 = vector.shape_cast %2489 : vector<1xf32> to vector<1x1xf32>
    %cst_908 = arith.constant 4.000000e+01 : f32
    %2491 = vector.broadcast %cst_908 : f32 to vector<1x1xf32>
    %2492 = arith.cmpf oge, %2490, %2491 : vector<1x1xf32>
    %2493 = arith.select %2492, %2405, %2481 : vector<1x1xi1>, vector<1x1xi32>
    %2494 = arith.select %2492, %2481, %2406 : vector<1x1xi1>, vector<1x1xi32>
    %c1_i32_909 = arith.constant 1 : i32
    %2495 = vector.broadcast %c1_i32_909 : i32 to vector<1x1xi32>
    %2496 = arith.shrsi %2427, %2495 : vector<1x1xi32>
    %c1_i32_910 = arith.constant 1 : i32
    %2497 = vector.broadcast %c1_i32_910 : i32 to vector<1x1xi32>
    %2498 = arith.shrsi %2428, %2497 : vector<1x1xi32>
    %2499 = arith.addi %2496, %2498 : vector<1x1xi32>
    %2500 = arith.andi %2427, %2428 : vector<1x1xi32>
    %c1_i32_911 = arith.constant 1 : i32
    %2501 = vector.broadcast %c1_i32_911 : i32 to vector<1x1xi32>
    %2502 = arith.andi %2500, %2501 : vector<1x1xi32>
    %2503 = arith.addi %2499, %2502 : vector<1x1xi32>
    %2504 = vector.broadcast %2503 : vector<1x1xi32> to vector<8x128xi32>
    %2505 = arith.cmpi sle, %0, %2504 : vector<8x128xi32>
    %cst_912 = arith.constant 1.000000e+00 : f32
    %cst_913 = arith.constant 0.000000e+00 : f32
    %2506 = vector.broadcast %cst_912 : f32 to vector<8x128xf32>
    %2507 = vector.broadcast %cst_913 : f32 to vector<8x128xf32>
    %2508 = arith.select %2505, %2506, %2507 : vector<8x128xi1>, vector<8x128xf32>
    %cst_914 = arith.constant dense<0.000000e+00> : vector<128xf32>
    %2509 = vector.multi_reduction <add>, %2508, %cst_914 [0] : vector<8x128xf32> to vector<128xf32>
    %2510 = vector.shape_cast %2509 : vector<128xf32> to vector<1x128xf32>
    %cst_915 = arith.constant dense<0.000000e+00> : vector<1xf32>
    %2511 = vector.multi_reduction <add>, %2510, %cst_915 [1] : vector<1x128xf32> to vector<1xf32>
    %2512 = vector.shape_cast %2511 : vector<1xf32> to vector<1x1xf32>
    %cst_916 = arith.constant 4.100000e+01 : f32
    %2513 = vector.broadcast %cst_916 : f32 to vector<1x1xf32>
    %2514 = arith.cmpf oge, %2512, %2513 : vector<1x1xf32>
    %2515 = arith.select %2514, %2427, %2503 : vector<1x1xi1>, vector<1x1xi32>
    %2516 = arith.select %2514, %2503, %2428 : vector<1x1xi1>, vector<1x1xi32>
    %c1_i32_917 = arith.constant 1 : i32
    %2517 = vector.broadcast %c1_i32_917 : i32 to vector<1x1xi32>
    %2518 = arith.shrsi %2449, %2517 : vector<1x1xi32>
    %c1_i32_918 = arith.constant 1 : i32
    %2519 = vector.broadcast %c1_i32_918 : i32 to vector<1x1xi32>
    %2520 = arith.shrsi %2450, %2519 : vector<1x1xi32>
    %2521 = arith.addi %2518, %2520 : vector<1x1xi32>
    %2522 = arith.andi %2449, %2450 : vector<1x1xi32>
    %c1_i32_919 = arith.constant 1 : i32
    %2523 = vector.broadcast %c1_i32_919 : i32 to vector<1x1xi32>
    %2524 = arith.andi %2522, %2523 : vector<1x1xi32>
    %2525 = arith.addi %2521, %2524 : vector<1x1xi32>
    %2526 = vector.broadcast %2525 : vector<1x1xi32> to vector<8x128xi32>
    %2527 = arith.cmpi sle, %0, %2526 : vector<8x128xi32>
    %cst_920 = arith.constant 1.000000e+00 : f32
    %cst_921 = arith.constant 0.000000e+00 : f32
    %2528 = vector.broadcast %cst_920 : f32 to vector<8x128xf32>
    %2529 = vector.broadcast %cst_921 : f32 to vector<8x128xf32>
    %2530 = arith.select %2527, %2528, %2529 : vector<8x128xi1>, vector<8x128xf32>
    %cst_922 = arith.constant dense<0.000000e+00> : vector<128xf32>
    %2531 = vector.multi_reduction <add>, %2530, %cst_922 [0] : vector<8x128xf32> to vector<128xf32>
    %2532 = vector.shape_cast %2531 : vector<128xf32> to vector<1x128xf32>
    %cst_923 = arith.constant dense<0.000000e+00> : vector<1xf32>
    %2533 = vector.multi_reduction <add>, %2532, %cst_923 [1] : vector<1x128xf32> to vector<1xf32>
    %2534 = vector.shape_cast %2533 : vector<1xf32> to vector<1x1xf32>
    %cst_924 = arith.constant 7.440000e+02 : f32
    %2535 = vector.broadcast %cst_924 : f32 to vector<1x1xf32>
    %2536 = arith.cmpf oge, %2534, %2535 : vector<1x1xf32>
    %2537 = arith.select %2536, %2449, %2525 : vector<1x1xi1>, vector<1x1xi32>
    %2538 = arith.select %2536, %2525, %2450 : vector<1x1xi1>, vector<1x1xi32>
    %c1_i32_925 = arith.constant 1 : i32
    %2539 = vector.broadcast %c1_i32_925 : i32 to vector<1x1xi32>
    %2540 = arith.shrsi %2471, %2539 : vector<1x1xi32>
    %c1_i32_926 = arith.constant 1 : i32
    %2541 = vector.broadcast %c1_i32_926 : i32 to vector<1x1xi32>
    %2542 = arith.shrsi %2472, %2541 : vector<1x1xi32>
    %2543 = arith.addi %2540, %2542 : vector<1x1xi32>
    %2544 = arith.andi %2471, %2472 : vector<1x1xi32>
    %c1_i32_927 = arith.constant 1 : i32
    %2545 = vector.broadcast %c1_i32_927 : i32 to vector<1x1xi32>
    %2546 = arith.andi %2544, %2545 : vector<1x1xi32>
    %2547 = arith.addi %2543, %2546 : vector<1x1xi32>
    %2548 = vector.broadcast %2547 : vector<1x1xi32> to vector<8x128xi32>
    %2549 = arith.cmpi sle, %0, %2548 : vector<8x128xi32>
    %cst_928 = arith.constant 1.000000e+00 : f32
    %cst_929 = arith.constant 0.000000e+00 : f32
    %2550 = vector.broadcast %cst_928 : f32 to vector<8x128xf32>
    %2551 = vector.broadcast %cst_929 : f32 to vector<8x128xf32>
    %2552 = arith.select %2549, %2550, %2551 : vector<8x128xi1>, vector<8x128xf32>
    %cst_930 = arith.constant dense<0.000000e+00> : vector<128xf32>
    %2553 = vector.multi_reduction <add>, %2552, %cst_930 [0] : vector<8x128xf32> to vector<128xf32>
    %2554 = vector.shape_cast %2553 : vector<128xf32> to vector<1x128xf32>
    %cst_931 = arith.constant dense<0.000000e+00> : vector<1xf32>
    %2555 = vector.multi_reduction <add>, %2554, %cst_931 [1] : vector<1x128xf32> to vector<1xf32>
    %2556 = vector.shape_cast %2555 : vector<1xf32> to vector<1x1xf32>
    %cst_932 = arith.constant 7.450000e+02 : f32
    %2557 = vector.broadcast %cst_932 : f32 to vector<1x1xf32>
    %2558 = arith.cmpf oge, %2556, %2557 : vector<1x1xf32>
    %2559 = arith.select %2558, %2471, %2547 : vector<1x1xi1>, vector<1x1xi32>
    %2560 = arith.select %2558, %2547, %2472 : vector<1x1xi1>, vector<1x1xi32>
    %c1_i32_933 = arith.constant 1 : i32
    %2561 = vector.broadcast %c1_i32_933 : i32 to vector<1x1xi32>
    %2562 = arith.shrsi %2493, %2561 : vector<1x1xi32>
    %c1_i32_934 = arith.constant 1 : i32
    %2563 = vector.broadcast %c1_i32_934 : i32 to vector<1x1xi32>
    %2564 = arith.shrsi %2494, %2563 : vector<1x1xi32>
    %2565 = arith.addi %2562, %2564 : vector<1x1xi32>
    %2566 = arith.andi %2493, %2494 : vector<1x1xi32>
    %c1_i32_935 = arith.constant 1 : i32
    %2567 = vector.broadcast %c1_i32_935 : i32 to vector<1x1xi32>
    %2568 = arith.andi %2566, %2567 : vector<1x1xi32>
    %2569 = arith.addi %2565, %2568 : vector<1x1xi32>
    %2570 = vector.broadcast %2569 : vector<1x1xi32> to vector<8x128xi32>
    %2571 = arith.cmpi sle, %0, %2570 : vector<8x128xi32>
    %cst_936 = arith.constant 1.000000e+00 : f32
    %cst_937 = arith.constant 0.000000e+00 : f32
    %2572 = vector.broadcast %cst_936 : f32 to vector<8x128xf32>
    %2573 = vector.broadcast %cst_937 : f32 to vector<8x128xf32>
    %2574 = arith.select %2571, %2572, %2573 : vector<8x128xi1>, vector<8x128xf32>
    %cst_938 = arith.constant dense<0.000000e+00> : vector<128xf32>
    %2575 = vector.multi_reduction <add>, %2574, %cst_938 [0] : vector<8x128xf32> to vector<128xf32>
    %2576 = vector.shape_cast %2575 : vector<128xf32> to vector<1x128xf32>
    %cst_939 = arith.constant dense<0.000000e+00> : vector<1xf32>
    %2577 = vector.multi_reduction <add>, %2576, %cst_939 [1] : vector<1x128xf32> to vector<1xf32>
    %2578 = vector.shape_cast %2577 : vector<1xf32> to vector<1x1xf32>
    %cst_940 = arith.constant 4.000000e+01 : f32
    %2579 = vector.broadcast %cst_940 : f32 to vector<1x1xf32>
    %2580 = arith.cmpf oge, %2578, %2579 : vector<1x1xf32>
    %2581 = arith.select %2580, %2493, %2569 : vector<1x1xi1>, vector<1x1xi32>
    %2582 = arith.select %2580, %2569, %2494 : vector<1x1xi1>, vector<1x1xi32>
    %c1_i32_941 = arith.constant 1 : i32
    %2583 = vector.broadcast %c1_i32_941 : i32 to vector<1x1xi32>
    %2584 = arith.shrsi %2515, %2583 : vector<1x1xi32>
    %c1_i32_942 = arith.constant 1 : i32
    %2585 = vector.broadcast %c1_i32_942 : i32 to vector<1x1xi32>
    %2586 = arith.shrsi %2516, %2585 : vector<1x1xi32>
    %2587 = arith.addi %2584, %2586 : vector<1x1xi32>
    %2588 = arith.andi %2515, %2516 : vector<1x1xi32>
    %c1_i32_943 = arith.constant 1 : i32
    %2589 = vector.broadcast %c1_i32_943 : i32 to vector<1x1xi32>
    %2590 = arith.andi %2588, %2589 : vector<1x1xi32>
    %2591 = arith.addi %2587, %2590 : vector<1x1xi32>
    %2592 = vector.broadcast %2591 : vector<1x1xi32> to vector<8x128xi32>
    %2593 = arith.cmpi sle, %0, %2592 : vector<8x128xi32>
    %cst_944 = arith.constant 1.000000e+00 : f32
    %cst_945 = arith.constant 0.000000e+00 : f32
    %2594 = vector.broadcast %cst_944 : f32 to vector<8x128xf32>
    %2595 = vector.broadcast %cst_945 : f32 to vector<8x128xf32>
    %2596 = arith.select %2593, %2594, %2595 : vector<8x128xi1>, vector<8x128xf32>
    %cst_946 = arith.constant dense<0.000000e+00> : vector<128xf32>
    %2597 = vector.multi_reduction <add>, %2596, %cst_946 [0] : vector<8x128xf32> to vector<128xf32>
    %2598 = vector.shape_cast %2597 : vector<128xf32> to vector<1x128xf32>
    %cst_947 = arith.constant dense<0.000000e+00> : vector<1xf32>
    %2599 = vector.multi_reduction <add>, %2598, %cst_947 [1] : vector<1x128xf32> to vector<1xf32>
    %2600 = vector.shape_cast %2599 : vector<1xf32> to vector<1x1xf32>
    %cst_948 = arith.constant 4.100000e+01 : f32
    %2601 = vector.broadcast %cst_948 : f32 to vector<1x1xf32>
    %2602 = arith.cmpf oge, %2600, %2601 : vector<1x1xf32>
    %2603 = arith.select %2602, %2515, %2591 : vector<1x1xi1>, vector<1x1xi32>
    %2604 = arith.select %2602, %2591, %2516 : vector<1x1xi1>, vector<1x1xi32>
    %c1_i32_949 = arith.constant 1 : i32
    %2605 = vector.broadcast %c1_i32_949 : i32 to vector<1x1xi32>
    %2606 = arith.shrsi %2537, %2605 : vector<1x1xi32>
    %c1_i32_950 = arith.constant 1 : i32
    %2607 = vector.broadcast %c1_i32_950 : i32 to vector<1x1xi32>
    %2608 = arith.shrsi %2538, %2607 : vector<1x1xi32>
    %2609 = arith.addi %2606, %2608 : vector<1x1xi32>
    %2610 = arith.andi %2537, %2538 : vector<1x1xi32>
    %c1_i32_951 = arith.constant 1 : i32
    %2611 = vector.broadcast %c1_i32_951 : i32 to vector<1x1xi32>
    %2612 = arith.andi %2610, %2611 : vector<1x1xi32>
    %2613 = arith.addi %2609, %2612 : vector<1x1xi32>
    %2614 = vector.broadcast %2613 : vector<1x1xi32> to vector<8x128xi32>
    %2615 = arith.cmpi sle, %0, %2614 : vector<8x128xi32>
    %cst_952 = arith.constant 1.000000e+00 : f32
    %cst_953 = arith.constant 0.000000e+00 : f32
    %2616 = vector.broadcast %cst_952 : f32 to vector<8x128xf32>
    %2617 = vector.broadcast %cst_953 : f32 to vector<8x128xf32>
    %2618 = arith.select %2615, %2616, %2617 : vector<8x128xi1>, vector<8x128xf32>
    %cst_954 = arith.constant dense<0.000000e+00> : vector<128xf32>
    %2619 = vector.multi_reduction <add>, %2618, %cst_954 [0] : vector<8x128xf32> to vector<128xf32>
    %2620 = vector.shape_cast %2619 : vector<128xf32> to vector<1x128xf32>
    %cst_955 = arith.constant dense<0.000000e+00> : vector<1xf32>
    %2621 = vector.multi_reduction <add>, %2620, %cst_955 [1] : vector<1x128xf32> to vector<1xf32>
    %2622 = vector.shape_cast %2621 : vector<1xf32> to vector<1x1xf32>
    %cst_956 = arith.constant 7.440000e+02 : f32
    %2623 = vector.broadcast %cst_956 : f32 to vector<1x1xf32>
    %2624 = arith.cmpf oge, %2622, %2623 : vector<1x1xf32>
    %2625 = arith.select %2624, %2537, %2613 : vector<1x1xi1>, vector<1x1xi32>
    %2626 = arith.select %2624, %2613, %2538 : vector<1x1xi1>, vector<1x1xi32>
    %c1_i32_957 = arith.constant 1 : i32
    %2627 = vector.broadcast %c1_i32_957 : i32 to vector<1x1xi32>
    %2628 = arith.shrsi %2559, %2627 : vector<1x1xi32>
    %c1_i32_958 = arith.constant 1 : i32
    %2629 = vector.broadcast %c1_i32_958 : i32 to vector<1x1xi32>
    %2630 = arith.shrsi %2560, %2629 : vector<1x1xi32>
    %2631 = arith.addi %2628, %2630 : vector<1x1xi32>
    %2632 = arith.andi %2559, %2560 : vector<1x1xi32>
    %c1_i32_959 = arith.constant 1 : i32
    %2633 = vector.broadcast %c1_i32_959 : i32 to vector<1x1xi32>
    %2634 = arith.andi %2632, %2633 : vector<1x1xi32>
    %2635 = arith.addi %2631, %2634 : vector<1x1xi32>
    %2636 = vector.broadcast %2635 : vector<1x1xi32> to vector<8x128xi32>
    %2637 = arith.cmpi sle, %0, %2636 : vector<8x128xi32>
    %cst_960 = arith.constant 1.000000e+00 : f32
    %cst_961 = arith.constant 0.000000e+00 : f32
    %2638 = vector.broadcast %cst_960 : f32 to vector<8x128xf32>
    %2639 = vector.broadcast %cst_961 : f32 to vector<8x128xf32>
    %2640 = arith.select %2637, %2638, %2639 : vector<8x128xi1>, vector<8x128xf32>
    %cst_962 = arith.constant dense<0.000000e+00> : vector<128xf32>
    %2641 = vector.multi_reduction <add>, %2640, %cst_962 [0] : vector<8x128xf32> to vector<128xf32>
    %2642 = vector.shape_cast %2641 : vector<128xf32> to vector<1x128xf32>
    %cst_963 = arith.constant dense<0.000000e+00> : vector<1xf32>
    %2643 = vector.multi_reduction <add>, %2642, %cst_963 [1] : vector<1x128xf32> to vector<1xf32>
    %2644 = vector.shape_cast %2643 : vector<1xf32> to vector<1x1xf32>
    %cst_964 = arith.constant 7.450000e+02 : f32
    %2645 = vector.broadcast %cst_964 : f32 to vector<1x1xf32>
    %2646 = arith.cmpf oge, %2644, %2645 : vector<1x1xf32>
    %2647 = arith.select %2646, %2559, %2635 : vector<1x1xi1>, vector<1x1xi32>
    %2648 = arith.select %2646, %2635, %2560 : vector<1x1xi1>, vector<1x1xi32>
    %c1_i32_965 = arith.constant 1 : i32
    %2649 = vector.broadcast %c1_i32_965 : i32 to vector<1x1xi32>
    %2650 = arith.shrsi %2581, %2649 : vector<1x1xi32>
    %c1_i32_966 = arith.constant 1 : i32
    %2651 = vector.broadcast %c1_i32_966 : i32 to vector<1x1xi32>
    %2652 = arith.shrsi %2582, %2651 : vector<1x1xi32>
    %2653 = arith.addi %2650, %2652 : vector<1x1xi32>
    %2654 = arith.andi %2581, %2582 : vector<1x1xi32>
    %c1_i32_967 = arith.constant 1 : i32
    %2655 = vector.broadcast %c1_i32_967 : i32 to vector<1x1xi32>
    %2656 = arith.andi %2654, %2655 : vector<1x1xi32>
    %2657 = arith.addi %2653, %2656 : vector<1x1xi32>
    %2658 = vector.broadcast %2657 : vector<1x1xi32> to vector<8x128xi32>
    %2659 = arith.cmpi sle, %0, %2658 : vector<8x128xi32>
    %cst_968 = arith.constant 1.000000e+00 : f32
    %cst_969 = arith.constant 0.000000e+00 : f32
    %2660 = vector.broadcast %cst_968 : f32 to vector<8x128xf32>
    %2661 = vector.broadcast %cst_969 : f32 to vector<8x128xf32>
    %2662 = arith.select %2659, %2660, %2661 : vector<8x128xi1>, vector<8x128xf32>
    %cst_970 = arith.constant dense<0.000000e+00> : vector<128xf32>
    %2663 = vector.multi_reduction <add>, %2662, %cst_970 [0] : vector<8x128xf32> to vector<128xf32>
    %2664 = vector.shape_cast %2663 : vector<128xf32> to vector<1x128xf32>
    %cst_971 = arith.constant dense<0.000000e+00> : vector<1xf32>
    %2665 = vector.multi_reduction <add>, %2664, %cst_971 [1] : vector<1x128xf32> to vector<1xf32>
    %2666 = vector.shape_cast %2665 : vector<1xf32> to vector<1x1xf32>
    %cst_972 = arith.constant 4.000000e+01 : f32
    %2667 = vector.broadcast %cst_972 : f32 to vector<1x1xf32>
    %2668 = arith.cmpf oge, %2666, %2667 : vector<1x1xf32>
    %2669 = arith.select %2668, %2581, %2657 : vector<1x1xi1>, vector<1x1xi32>
    %2670 = arith.select %2668, %2657, %2582 : vector<1x1xi1>, vector<1x1xi32>
    %c1_i32_973 = arith.constant 1 : i32
    %2671 = vector.broadcast %c1_i32_973 : i32 to vector<1x1xi32>
    %2672 = arith.shrsi %2603, %2671 : vector<1x1xi32>
    %c1_i32_974 = arith.constant 1 : i32
    %2673 = vector.broadcast %c1_i32_974 : i32 to vector<1x1xi32>
    %2674 = arith.shrsi %2604, %2673 : vector<1x1xi32>
    %2675 = arith.addi %2672, %2674 : vector<1x1xi32>
    %2676 = arith.andi %2603, %2604 : vector<1x1xi32>
    %c1_i32_975 = arith.constant 1 : i32
    %2677 = vector.broadcast %c1_i32_975 : i32 to vector<1x1xi32>
    %2678 = arith.andi %2676, %2677 : vector<1x1xi32>
    %2679 = arith.addi %2675, %2678 : vector<1x1xi32>
    %2680 = vector.broadcast %2679 : vector<1x1xi32> to vector<8x128xi32>
    %2681 = arith.cmpi sle, %0, %2680 : vector<8x128xi32>
    %cst_976 = arith.constant 1.000000e+00 : f32
    %cst_977 = arith.constant 0.000000e+00 : f32
    %2682 = vector.broadcast %cst_976 : f32 to vector<8x128xf32>
    %2683 = vector.broadcast %cst_977 : f32 to vector<8x128xf32>
    %2684 = arith.select %2681, %2682, %2683 : vector<8x128xi1>, vector<8x128xf32>
    %cst_978 = arith.constant dense<0.000000e+00> : vector<128xf32>
    %2685 = vector.multi_reduction <add>, %2684, %cst_978 [0] : vector<8x128xf32> to vector<128xf32>
    %2686 = vector.shape_cast %2685 : vector<128xf32> to vector<1x128xf32>
    %cst_979 = arith.constant dense<0.000000e+00> : vector<1xf32>
    %2687 = vector.multi_reduction <add>, %2686, %cst_979 [1] : vector<1x128xf32> to vector<1xf32>
    %2688 = vector.shape_cast %2687 : vector<1xf32> to vector<1x1xf32>
    %cst_980 = arith.constant 4.100000e+01 : f32
    %2689 = vector.broadcast %cst_980 : f32 to vector<1x1xf32>
    %2690 = arith.cmpf oge, %2688, %2689 : vector<1x1xf32>
    %2691 = arith.select %2690, %2603, %2679 : vector<1x1xi1>, vector<1x1xi32>
    %2692 = arith.select %2690, %2679, %2604 : vector<1x1xi1>, vector<1x1xi32>
    %c1_i32_981 = arith.constant 1 : i32
    %2693 = vector.broadcast %c1_i32_981 : i32 to vector<1x1xi32>
    %2694 = arith.shrsi %2625, %2693 : vector<1x1xi32>
    %c1_i32_982 = arith.constant 1 : i32
    %2695 = vector.broadcast %c1_i32_982 : i32 to vector<1x1xi32>
    %2696 = arith.shrsi %2626, %2695 : vector<1x1xi32>
    %2697 = arith.addi %2694, %2696 : vector<1x1xi32>
    %2698 = arith.andi %2625, %2626 : vector<1x1xi32>
    %c1_i32_983 = arith.constant 1 : i32
    %2699 = vector.broadcast %c1_i32_983 : i32 to vector<1x1xi32>
    %2700 = arith.andi %2698, %2699 : vector<1x1xi32>
    %2701 = arith.addi %2697, %2700 : vector<1x1xi32>
    %2702 = vector.broadcast %2701 : vector<1x1xi32> to vector<8x128xi32>
    %2703 = arith.cmpi sle, %0, %2702 : vector<8x128xi32>
    %cst_984 = arith.constant 1.000000e+00 : f32
    %cst_985 = arith.constant 0.000000e+00 : f32
    %2704 = vector.broadcast %cst_984 : f32 to vector<8x128xf32>
    %2705 = vector.broadcast %cst_985 : f32 to vector<8x128xf32>
    %2706 = arith.select %2703, %2704, %2705 : vector<8x128xi1>, vector<8x128xf32>
    %cst_986 = arith.constant dense<0.000000e+00> : vector<128xf32>
    %2707 = vector.multi_reduction <add>, %2706, %cst_986 [0] : vector<8x128xf32> to vector<128xf32>
    %2708 = vector.shape_cast %2707 : vector<128xf32> to vector<1x128xf32>
    %cst_987 = arith.constant dense<0.000000e+00> : vector<1xf32>
    %2709 = vector.multi_reduction <add>, %2708, %cst_987 [1] : vector<1x128xf32> to vector<1xf32>
    %2710 = vector.shape_cast %2709 : vector<1xf32> to vector<1x1xf32>
    %cst_988 = arith.constant 7.440000e+02 : f32
    %2711 = vector.broadcast %cst_988 : f32 to vector<1x1xf32>
    %2712 = arith.cmpf oge, %2710, %2711 : vector<1x1xf32>
    %2713 = arith.select %2712, %2625, %2701 : vector<1x1xi1>, vector<1x1xi32>
    %2714 = arith.select %2712, %2701, %2626 : vector<1x1xi1>, vector<1x1xi32>
    %c1_i32_989 = arith.constant 1 : i32
    %2715 = vector.broadcast %c1_i32_989 : i32 to vector<1x1xi32>
    %2716 = arith.shrsi %2647, %2715 : vector<1x1xi32>
    %c1_i32_990 = arith.constant 1 : i32
    %2717 = vector.broadcast %c1_i32_990 : i32 to vector<1x1xi32>
    %2718 = arith.shrsi %2648, %2717 : vector<1x1xi32>
    %2719 = arith.addi %2716, %2718 : vector<1x1xi32>
    %2720 = arith.andi %2647, %2648 : vector<1x1xi32>
    %c1_i32_991 = arith.constant 1 : i32
    %2721 = vector.broadcast %c1_i32_991 : i32 to vector<1x1xi32>
    %2722 = arith.andi %2720, %2721 : vector<1x1xi32>
    %2723 = arith.addi %2719, %2722 : vector<1x1xi32>
    %2724 = vector.broadcast %2723 : vector<1x1xi32> to vector<8x128xi32>
    %2725 = arith.cmpi sle, %0, %2724 : vector<8x128xi32>
    %cst_992 = arith.constant 1.000000e+00 : f32
    %cst_993 = arith.constant 0.000000e+00 : f32
    %2726 = vector.broadcast %cst_992 : f32 to vector<8x128xf32>
    %2727 = vector.broadcast %cst_993 : f32 to vector<8x128xf32>
    %2728 = arith.select %2725, %2726, %2727 : vector<8x128xi1>, vector<8x128xf32>
    %cst_994 = arith.constant dense<0.000000e+00> : vector<128xf32>
    %2729 = vector.multi_reduction <add>, %2728, %cst_994 [0] : vector<8x128xf32> to vector<128xf32>
    %2730 = vector.shape_cast %2729 : vector<128xf32> to vector<1x128xf32>
    %cst_995 = arith.constant dense<0.000000e+00> : vector<1xf32>
    %2731 = vector.multi_reduction <add>, %2730, %cst_995 [1] : vector<1x128xf32> to vector<1xf32>
    %2732 = vector.shape_cast %2731 : vector<1xf32> to vector<1x1xf32>
    %cst_996 = arith.constant 7.450000e+02 : f32
    %2733 = vector.broadcast %cst_996 : f32 to vector<1x1xf32>
    %2734 = arith.cmpf oge, %2732, %2733 : vector<1x1xf32>
    %2735 = arith.select %2734, %2647, %2723 : vector<1x1xi1>, vector<1x1xi32>
    %2736 = arith.select %2734, %2723, %2648 : vector<1x1xi1>, vector<1x1xi32>
    %c1_i32_997 = arith.constant 1 : i32
    %2737 = vector.broadcast %c1_i32_997 : i32 to vector<1x1xi32>
    %2738 = arith.shrsi %2669, %2737 : vector<1x1xi32>
    %c1_i32_998 = arith.constant 1 : i32
    %2739 = vector.broadcast %c1_i32_998 : i32 to vector<1x1xi32>
    %2740 = arith.shrsi %2670, %2739 : vector<1x1xi32>
    %2741 = arith.addi %2738, %2740 : vector<1x1xi32>
    %2742 = arith.andi %2669, %2670 : vector<1x1xi32>
    %c1_i32_999 = arith.constant 1 : i32
    %2743 = vector.broadcast %c1_i32_999 : i32 to vector<1x1xi32>
    %2744 = arith.andi %2742, %2743 : vector<1x1xi32>
    %2745 = arith.addi %2741, %2744 : vector<1x1xi32>
    %2746 = vector.broadcast %2745 : vector<1x1xi32> to vector<8x128xi32>
    %2747 = arith.cmpi sle, %0, %2746 : vector<8x128xi32>
    %cst_1000 = arith.constant 1.000000e+00 : f32
    %cst_1001 = arith.constant 0.000000e+00 : f32
    %2748 = vector.broadcast %cst_1000 : f32 to vector<8x128xf32>
    %2749 = vector.broadcast %cst_1001 : f32 to vector<8x128xf32>
    %2750 = arith.select %2747, %2748, %2749 : vector<8x128xi1>, vector<8x128xf32>
    %cst_1002 = arith.constant dense<0.000000e+00> : vector<128xf32>
    %2751 = vector.multi_reduction <add>, %2750, %cst_1002 [0] : vector<8x128xf32> to vector<128xf32>
    %2752 = vector.shape_cast %2751 : vector<128xf32> to vector<1x128xf32>
    %cst_1003 = arith.constant dense<0.000000e+00> : vector<1xf32>
    %2753 = vector.multi_reduction <add>, %2752, %cst_1003 [1] : vector<1x128xf32> to vector<1xf32>
    %2754 = vector.shape_cast %2753 : vector<1xf32> to vector<1x1xf32>
    %cst_1004 = arith.constant 4.000000e+01 : f32
    %2755 = vector.broadcast %cst_1004 : f32 to vector<1x1xf32>
    %2756 = arith.cmpf oge, %2754, %2755 : vector<1x1xf32>
    %2757 = arith.select %2756, %2745, %2670 : vector<1x1xi1>, vector<1x1xi32>
    %c1_i32_1005 = arith.constant 1 : i32
    %2758 = vector.broadcast %c1_i32_1005 : i32 to vector<1x1xi32>
    %2759 = arith.shrsi %2691, %2758 : vector<1x1xi32>
    %c1_i32_1006 = arith.constant 1 : i32
    %2760 = vector.broadcast %c1_i32_1006 : i32 to vector<1x1xi32>
    %2761 = arith.shrsi %2692, %2760 : vector<1x1xi32>
    %2762 = arith.addi %2759, %2761 : vector<1x1xi32>
    %2763 = arith.andi %2691, %2692 : vector<1x1xi32>
    %c1_i32_1007 = arith.constant 1 : i32
    %2764 = vector.broadcast %c1_i32_1007 : i32 to vector<1x1xi32>
    %2765 = arith.andi %2763, %2764 : vector<1x1xi32>
    %2766 = arith.addi %2762, %2765 : vector<1x1xi32>
    %2767 = vector.broadcast %2766 : vector<1x1xi32> to vector<8x128xi32>
    %2768 = arith.cmpi sle, %0, %2767 : vector<8x128xi32>
    %cst_1008 = arith.constant 1.000000e+00 : f32
    %cst_1009 = arith.constant 0.000000e+00 : f32
    %2769 = vector.broadcast %cst_1008 : f32 to vector<8x128xf32>
    %2770 = vector.broadcast %cst_1009 : f32 to vector<8x128xf32>
    %2771 = arith.select %2768, %2769, %2770 : vector<8x128xi1>, vector<8x128xf32>
    %cst_1010 = arith.constant dense<0.000000e+00> : vector<128xf32>
    %2772 = vector.multi_reduction <add>, %2771, %cst_1010 [0] : vector<8x128xf32> to vector<128xf32>
    %2773 = vector.shape_cast %2772 : vector<128xf32> to vector<1x128xf32>
    %cst_1011 = arith.constant dense<0.000000e+00> : vector<1xf32>
    %2774 = vector.multi_reduction <add>, %2773, %cst_1011 [1] : vector<1x128xf32> to vector<1xf32>
    %2775 = vector.shape_cast %2774 : vector<1xf32> to vector<1x1xf32>
    %cst_1012 = arith.constant 4.100000e+01 : f32
    %2776 = vector.broadcast %cst_1012 : f32 to vector<1x1xf32>
    %2777 = arith.cmpf oge, %2775, %2776 : vector<1x1xf32>
    %2778 = arith.select %2777, %2766, %2692 : vector<1x1xi1>, vector<1x1xi32>
    %c1_i32_1013 = arith.constant 1 : i32
    %2779 = vector.broadcast %c1_i32_1013 : i32 to vector<1x1xi32>
    %2780 = arith.shrsi %2713, %2779 : vector<1x1xi32>
    %c1_i32_1014 = arith.constant 1 : i32
    %2781 = vector.broadcast %c1_i32_1014 : i32 to vector<1x1xi32>
    %2782 = arith.shrsi %2714, %2781 : vector<1x1xi32>
    %2783 = arith.addi %2780, %2782 : vector<1x1xi32>
    %2784 = arith.andi %2713, %2714 : vector<1x1xi32>
    %c1_i32_1015 = arith.constant 1 : i32
    %2785 = vector.broadcast %c1_i32_1015 : i32 to vector<1x1xi32>
    %2786 = arith.andi %2784, %2785 : vector<1x1xi32>
    %2787 = arith.addi %2783, %2786 : vector<1x1xi32>
    %2788 = vector.broadcast %2787 : vector<1x1xi32> to vector<8x128xi32>
    %2789 = arith.cmpi sle, %0, %2788 : vector<8x128xi32>
    %cst_1016 = arith.constant 1.000000e+00 : f32
    %cst_1017 = arith.constant 0.000000e+00 : f32
    %2790 = vector.broadcast %cst_1016 : f32 to vector<8x128xf32>
    %2791 = vector.broadcast %cst_1017 : f32 to vector<8x128xf32>
    %2792 = arith.select %2789, %2790, %2791 : vector<8x128xi1>, vector<8x128xf32>
    %cst_1018 = arith.constant dense<0.000000e+00> : vector<128xf32>
    %2793 = vector.multi_reduction <add>, %2792, %cst_1018 [0] : vector<8x128xf32> to vector<128xf32>
    %2794 = vector.shape_cast %2793 : vector<128xf32> to vector<1x128xf32>
    %cst_1019 = arith.constant dense<0.000000e+00> : vector<1xf32>
    %2795 = vector.multi_reduction <add>, %2794, %cst_1019 [1] : vector<1x128xf32> to vector<1xf32>
    %2796 = vector.shape_cast %2795 : vector<1xf32> to vector<1x1xf32>
    %cst_1020 = arith.constant 7.440000e+02 : f32
    %2797 = vector.broadcast %cst_1020 : f32 to vector<1x1xf32>
    %2798 = arith.cmpf oge, %2796, %2797 : vector<1x1xf32>
    %2799 = arith.select %2798, %2787, %2714 : vector<1x1xi1>, vector<1x1xi32>
    %c1_i32_1021 = arith.constant 1 : i32
    %2800 = vector.broadcast %c1_i32_1021 : i32 to vector<1x1xi32>
    %2801 = arith.shrsi %2735, %2800 : vector<1x1xi32>
    %c1_i32_1022 = arith.constant 1 : i32
    %2802 = vector.broadcast %c1_i32_1022 : i32 to vector<1x1xi32>
    %2803 = arith.shrsi %2736, %2802 : vector<1x1xi32>
    %2804 = arith.addi %2801, %2803 : vector<1x1xi32>
    %2805 = arith.andi %2735, %2736 : vector<1x1xi32>
    %c1_i32_1023 = arith.constant 1 : i32
    %2806 = vector.broadcast %c1_i32_1023 : i32 to vector<1x1xi32>
    %2807 = arith.andi %2805, %2806 : vector<1x1xi32>
    %2808 = arith.addi %2804, %2807 : vector<1x1xi32>
    %2809 = vector.broadcast %2808 : vector<1x1xi32> to vector<8x128xi32>
    %2810 = arith.cmpi sle, %0, %2809 : vector<8x128xi32>
    %cst_1024 = arith.constant 1.000000e+00 : f32
    %cst_1025 = arith.constant 0.000000e+00 : f32
    %2811 = vector.broadcast %cst_1024 : f32 to vector<8x128xf32>
    %2812 = vector.broadcast %cst_1025 : f32 to vector<8x128xf32>
    %2813 = arith.select %2810, %2811, %2812 : vector<8x128xi1>, vector<8x128xf32>
    %cst_1026 = arith.constant dense<0.000000e+00> : vector<128xf32>
    %2814 = vector.multi_reduction <add>, %2813, %cst_1026 [0] : vector<8x128xf32> to vector<128xf32>
    %2815 = vector.shape_cast %2814 : vector<128xf32> to vector<1x128xf32>
    %cst_1027 = arith.constant dense<0.000000e+00> : vector<1xf32>
    %2816 = vector.multi_reduction <add>, %2815, %cst_1027 [1] : vector<1x128xf32> to vector<1xf32>
    %2817 = vector.shape_cast %2816 : vector<1xf32> to vector<1x1xf32>
    %cst_1028 = arith.constant 7.450000e+02 : f32
    %2818 = vector.broadcast %cst_1028 : f32 to vector<1x1xf32>
    %2819 = arith.cmpf oge, %2817, %2818 : vector<1x1xf32>
    %2820 = arith.select %2819, %2808, %2736 : vector<1x1xi1>, vector<1x1xi32>
    %c0_1029 = arith.constant 0 : index
    %c0_1030 = arith.constant 0 : index
    %2821 = vector.load %arg1[%c0_1029, %c0_1030] : memref<1x1xi32, #tpu.memory_space<vmem>>, vector<1x1xi32>
    tpu.vector_store %arg1[%c0_1029, %c0_1030], %2757 {strides = array<i32>} : memref<1x1xi32, #tpu.memory_space<vmem>>, vector<1x1xi32>,
    %c0_1031 = arith.constant 0 : index
    %c0_1032 = arith.constant 0 : index
    %2822 = vector.load %arg2[%c0_1031, %c0_1032] : memref<1x1xi32, #tpu.memory_space<vmem>>, vector<1x1xi32>
    tpu.vector_store %arg2[%c0_1031, %c0_1032], %2778 {strides = array<i32>} : memref<1x1xi32, #tpu.memory_space<vmem>>, vector<1x1xi32>,
    %c0_1033 = arith.constant 0 : index
    %c0_1034 = arith.constant 0 : index
    %2823 = vector.load %arg3[%c0_1033, %c0_1034] : memref<1x1xi32, #tpu.memory_space<vmem>>, vector<1x1xi32>
    tpu.vector_store %arg3[%c0_1033, %c0_1034], %2799 {strides = array<i32>} : memref<1x1xi32, #tpu.memory_space<vmem>>, vector<1x1xi32>,
    %c0_1035 = arith.constant 0 : index
    %c0_1036 = arith.constant 0 : index
    %2824 = vector.load %arg4[%c0_1035, %c0_1036] : memref<1x1xi32, #tpu.memory_space<vmem>>, vector<1x1xi32>
    tpu.vector_store %arg4[%c0_1035, %c0_1036], %2820 {strides = array<i32>} : memref<1x1xi32, #tpu.memory_space<vmem>>, vector<1x1xi32>,
    return
  }
}

</mosaic_0001>

<llo_original>
// kernel: tpu_custom_call.1
$region0: #{tpu_custom_call.1}
  #allocation0 [shape = 'u32[]', space=smem, size = 0x4, offset = 0x4, fixed_abs, tag = 'smem constant byte address 0x4 - core index']
  #allocation1 [shape = 'u32[72,128]{1,0:T(1,128)}', space=vmem, size = 0x9000, scoped, tag = 'internal scratch']
  %s0 = inlined_call_operand.hbm [shape: s32[8,128], index: 0, kind: input, shape index: {}]
  %s1 = inlined_call_operand.hbm [shape: s32[1,1], index: 1, kind: output, shape index: {0}]
  %s2 = inlined_call_operand.hbm [shape: s32[1,1], index: 2, kind: output, shape index: {1}]
  %s3 = inlined_call_operand.hbm [shape: s32[1,1], index: 3, kind: output, shape index: {2}]
  %s4 = inlined_call_operand.hbm [shape: s32[1,1], index: 4, kind: output, shape index: {3}]
  %5 = xla_tuple %s1, %s2, %s3, %s4
  %s6 = sld [smem:[#allocation0]]
  $region42: #{tpu_custom_call.1} parent=0
    _
  %s8 = ssub.s32 1, %s6
  %s9 = scalar_select 0, %s8, %s6
  $region1: #{tpu_custom_call.1} parent=0
    #allocation2 [shape = 'u8[4096]{0}', space=vmem, size = 0x1000, scoped, tag = 'input window, operand 0, single buffered']
    #allocation3 [shape = 's32[1]{0}', space=sflag, size = 0x4, scoped, tag = 'scoped memory for tpu_custom_call.1']
    #allocation4 [shape = 's32[1]{0}', space=sflag, size = 0x4, scoped, tag = 'scoped memory for tpu_custom_call.1']
    #allocation5 [shape = 'u8[512]{0}', space=vmem, size = 0x400, scoped, tag = 'output window, operand 0, single buffered']
    #allocation6 [shape = 'u8[512]{0}', space=vmem, size = 0x400, scoped, tag = 'output window, operand 1, single buffered']
    #allocation7 [shape = 's32[1]{0}', space=sflag, size = 0x4, scoped, tag = 'scoped memory for tpu_custom_call.1']
    #allocation8 [shape = 'u8[512]{0}', space=vmem, size = 0x400, scoped, tag = 'output window, operand 2, single buffered']
    #allocation9 [shape = 'u8[512]{0}', space=vmem, size = 0x400, scoped, tag = 'output window, operand 3, single buffered']
    #allocation10 [shape = 's32[1]{0}', space=sflag, size = 0x4, scoped, tag = 'scoped memory for tpu_custom_call.1']
    %10 = vsyncpa [#allocation3], 0
    %11 = vsyncpa [#allocation4], 0
    %12 = vsyncpa [#allocation7], 0
    %13 = vsyncpa [#allocation10], 0
    // Predicated region
    $region2: #{tpu_custom_call.1} parent=1 // pred_check
      _
    $region3: #{tpu_custom_call.1} parent=1 // pred_check_branch
      %15 = sbr.rel (0) target = $region5
    $region4: #{tpu_custom_call.1} parent=1 // pred_region
      %17 = vsyncadd [#allocation3], 0
      %s19 = sshll.u32 %s0, 4
      %s20 = int_to_ptr.hbm [resolvable:$true] %s19
      %s21 = sshll.u32 [#allocation2], 4
      %s22 = int_to_ptr.vmem [resolvable:$true] %s21
      %24 = dma.hbm_to_vmem [thread:$0]  %s20, 128, %s22, [#allocation3]
    $region5: #{tpu_custom_call.1} parent=1 // pred_fallthru
      _
    // Predicated region
    $region6: #{tpu_custom_call.1} parent=1 // pred_check
      _
    $region7: #{tpu_custom_call.1} parent=1 // pred_check_branch
      %26 = sbr.rel (0) target = $region9
    $region8: #{tpu_custom_call.1} parent=1 // pred_region
      %28 = dma.done [#allocation3], 128
    $region9: #{tpu_custom_call.1} parent=1 // pred_fallthru
      _
    %v29 = vld [vmem:[#allocation2] sm:$0xff]
    %vm30 = vcmp.le.s32.totalorder %v29, 4194302
    %v31 = vsel %vm30, 1.0, 0.0
    %v32 = vrot.slane %v31, 4
    %v33 = vadd.f32 %v31, %v32
    %v34 = vrot.slane %v33, 2
    %v35 = vadd.f32 %v33, %v34
    %v36 = vrot.slane %v35, 1
    %v37 = vadd.f32 %v35, %v36
    %38 = vadd.xlane.f32.xlu0 %v37
    %v39 = vpop.xlane.xlu0 %38
    %vm40 = vcmp.ge.f32.partialorder %v39, 40.0
    %v41 = vsel %vm40, 2155872254, 4194302
    %v42 = vsel %vm40, 4194302, 2147483647
    %vm43 = vcmp.ge.f32.partialorder %v39, 41.0
    %v44 = vsel %vm43, 2155872254, 4194302
    %v45 = vsel %vm43, 4194302, 2147483647
    %vm46 = vcmp.ge.f32.partialorder %v39, 744.0
    %v47 = vsel %vm46, 2155872254, 4194302
    %v48 = vsel %vm46, 4194302, 2147483647
    %vm49 = vcmp.ge.f32.partialorder %v39, 745.0
    %v50 = vsel %vm49, 2155872254, 4194302
    %v51 = vsel %vm49, 4194302, 2147483647
    %v52 = vshra.s32 %v41, 1
    %v53 = vshra.s32 %v42, 1
    %v54 = vadd.s32 %v52, %v53
    %v55 = vand.u32 %v41, %v42
    %v56 = vand.u32 %v55, 1
    %v57 = vadd.s32 %v54, %v56
    %vm58 = vcmp.le.s32.totalorder %v29, %v57
    %v59 = vsel %vm58, 1.0, 0.0
    %v60 = vrot.slane %v59, 4
    %v61 = vadd.f32 %v59, %v60
    %v62 = vrot.slane %v61, 2
    %v63 = vadd.f32 %v61, %v62
    %v64 = vrot.slane %v63, 1
    %v65 = vadd.f32 %v63, %v64
    %66 = vadd.xlane.f32.xlu0 %v65
    %v67 = vpop.xlane.xlu0 %66
    %vm68 = vcmp.ge.f32.partialorder %v67, 40.0
    %v69 = vsel %vm68, %v41, %v57
    %v70 = vsel %vm68, %v57, %v42
    %v71 = vshra.s32 %v44, 1
    %v72 = vshra.s32 %v45, 1
    %v73 = vadd.s32 %v71, %v72
    %v74 = vand.u32 %v44, %v45
    %v75 = vand.u32 %v74, 1
    %v76 = vadd.s32 %v73, %v75
    %vm77 = vcmp.le.s32.totalorder %v29, %v76
    %v78 = vsel %vm77, 1.0, 0.0
    %v79 = vrot.slane %v78, 4
    %v80 = vadd.f32 %v78, %v79
    %v81 = vrot.slane %v80, 2
    %v82 = vadd.f32 %v80, %v81
    %v83 = vrot.slane %v82, 1
    %v84 = vadd.f32 %v82, %v83
    %85 = vadd.xlane.f32.xlu0 %v84
    %v86 = vpop.xlane.xlu0 %85
    %vm87 = vcmp.ge.f32.partialorder %v86, 41.0
    %v88 = vsel %vm87, %v44, %v76
    %v89 = vsel %vm87, %v76, %v45
    %v90 = vshra.s32 %v47, 1
    %v91 = vshra.s32 %v48, 1
    %v92 = vadd.s32 %v90, %v91
    %v93 = vand.u32 %v47, %v48
    %v94 = vand.u32 %v93, 1
    %v95 = vadd.s32 %v92, %v94
    %vm96 = vcmp.le.s32.totalorder %v29, %v95
    %v97 = vsel %vm96, 1.0, 0.0
    %v98 = vrot.slane %v97, 4
    %v99 = vadd.f32 %v97, %v98
    %v100 = vrot.slane %v99, 2
    %v101 = vadd.f32 %v99, %v100
    %v102 = vrot.slane %v101, 1
    %v103 = vadd.f32 %v101, %v102
    %104 = vadd.xlane.f32.xlu0 %v103
    %v105 = vpop.xlane.xlu0 %104
    %vm106 = vcmp.ge.f32.partialorder %v105, 744.0
    %v107 = vsel %vm106, %v47, %v95
    %v108 = vsel %vm106, %v95, %v48
    %v109 = vshra.s32 %v50, 1
    %v110 = vshra.s32 %v51, 1
    %v111 = vadd.s32 %v109, %v110
    %v112 = vand.u32 %v50, %v51
    %v113 = vand.u32 %v112, 1
    %v114 = vadd.s32 %v111, %v113
    %vm115 = vcmp.le.s32.totalorder %v29, %v114
    %v116 = vsel %vm115, 1.0, 0.0
    %v117 = vrot.slane %v116, 4
    %v118 = vadd.f32 %v116, %v117
    %v119 = vrot.slane %v118, 2
    %v120 = vadd.f32 %v118, %v119
    %v121 = vrot.slane %v120, 1
    %v122 = vadd.f32 %v120, %v121
    %123 = vadd.xlane.f32.xlu0 %v122
    %v124 = vpop.xlane.xlu0 %123
    %vm125 = vcmp.ge.f32.partialorder %v124, 745.0
    %v126 = vsel %vm125, %v50, %v114
    %v127 = vsel %vm125, %v114, %v51
    %v128 = vshra.s32 %v69, 1
    %v129 = vshra.s32 %v70, 1
    %v130 = vadd.s32 %v128, %v129
    %v131 = vand.u32 %v69, %v70
    %v132 = vand.u32 %v131, 1
    %v133 = vadd.s32 %v130, %v132
    %vm134 = vcmp.le.s32.totalorder %v29, %v133
    %v135 = vsel %vm134, 1.0, 0.0
    %v136 = vrot.slane %v135, 4
    %v137 = vadd.f32 %v135, %v136
    %v138 = vrot.slane %v137, 2
    %v139 = vadd.f32 %v137, %v138
    %v140 = vrot.slane %v139, 1
    %v141 = vadd.f32 %v139, %v140
    %142 = vadd.xlane.f32.xlu0 %v141
    %v143 = vpop.xlane.xlu0 %142
    %vm144 = vcmp.ge.f32.partialorder %v143, 40.0
    %v145 = vsel %vm144, %v69, %v133
    %v146 = vsel %vm144, %v133, %v70
    %v147 = vshra.s32 %v88, 1
    %v148 = vshra.s32 %v89, 1
    %v149 = vadd.s32 %v147, %v148
    %v150 = vand.u32 %v88, %v89
    %v151 = vand.u32 %v150, 1
    %v152 = vadd.s32 %v149, %v151
    %vm153 = vcmp.le.s32.totalorder %v29, %v152
    %v154 = vsel %vm153, 1.0, 0.0
    %v155 = vrot.slane %v154, 4
    %v156 = vadd.f32 %v154, %v155
    %v157 = vrot.slane %v156, 2
    %v158 = vadd.f32 %v156, %v157
    %v159 = vrot.slane %v158, 1
    %v160 = vadd.f32 %v158, %v159
    %161 = vadd.xlane.f32.xlu0 %v160
    %v162 = vpop.xlane.xlu0 %161
    %vm163 = vcmp.ge.f32.partialorder %v162, 41.0
    %v164 = vsel %vm163, %v88, %v152
    %v165 = vsel %vm163, %v152, %v89
    %v166 = vshra.s32 %v107, 1
    %v167 = vshra.s32 %v108, 1
    %v168 = vadd.s32 %v166, %v167
    %v169 = vand.u32 %v107, %v108
    %v170 = vand.u32 %v169, 1
    %v171 = vadd.s32 %v168, %v170
    %vm172 = vcmp.le.s32.totalorder %v29, %v171
    %v173 = vsel %vm172, 1.0, 0.0
    %v174 = vrot.slane %v173, 4
    %v175 = vadd.f32 %v173, %v174
    %v176 = vrot.slane %v175, 2
    %v177 = vadd.f32 %v175, %v176
    %v178 = vrot.slane %v177, 1
    %v179 = vadd.f32 %v177, %v178
    %180 = vadd.xlane.f32.xlu0 %v179
    %v181 = vpop.xlane.xlu0 %180
    %vm182 = vcmp.ge.f32.partialorder %v181, 744.0
    %v183 = vsel %vm182, %v107, %v171
    %v184 = vsel %vm182, %v171, %v108
    %v185 = vshra.s32 %v126, 1
    %v186 = vshra.s32 %v127, 1
    %v187 = vadd.s32 %v185, %v186
    %v188 = vand.u32 %v126, %v127
    %v189 = vand.u32 %v188, 1
    %v190 = vadd.s32 %v187, %v189
    %vm191 = vcmp.le.s32.totalorder %v29, %v190
    %v192 = vsel %vm191, 1.0, 0.0
    %v193 = vrot.slane %v192, 4
    %v194 = vadd.f32 %v192, %v193
    %v195 = vrot.slane %v194, 2
    %v196 = vadd.f32 %v194, %v195
    %v197 = vrot.slane %v196, 1
    %v198 = vadd.f32 %v196, %v197
    %199 = vadd.xlane.f32.xlu0 %v198
    %v200 = vpop.xlane.xlu0 %199
    %vm201 = vcmp.ge.f32.partialorder %v200, 745.0
    %v202 = vsel %vm201, %v126, %v190
    %v203 = vsel %vm201, %v190, %v127
    %v204 = vshra.s32 %v145, 1
    %v205 = vshra.s32 %v146, 1
    %v206 = vadd.s32 %v204, %v205
    %v207 = vand.u32 %v145, %v146
    %v208 = vand.u32 %v207, 1
    %v209 = vadd.s32 %v206, %v208
    %vm210 = vcmp.le.s32.totalorder %v29, %v209
    %v211 = vsel %vm210, 1.0, 0.0
    %v212 = vrot.slane %v211, 4
    %v213 = vadd.f32 %v211, %v212
    %v214 = vrot.slane %v213, 2
    %v215 = vadd.f32 %v213, %v214
    %v216 = vrot.slane %v215, 1
    %v217 = vadd.f32 %v215, %v216
    %218 = vadd.xlane.f32.xlu0 %v217
    %v219 = vpop.xlane.xlu0 %218
    %vm220 = vcmp.ge.f32.partialorder %v219, 40.0
    %v221 = vsel %vm220, %v145, %v209
    %v222 = vsel %vm220, %v209, %v146
    %v223 = vshra.s32 %v164, 1
    %v224 = vshra.s32 %v165, 1
    %v225 = vadd.s32 %v223, %v224
    %v226 = vand.u32 %v164, %v165
    %v227 = vand.u32 %v226, 1
    %v228 = vadd.s32 %v225, %v227
    %vm229 = vcmp.le.s32.totalorder %v29, %v228
    %v230 = vsel %vm229, 1.0, 0.0
    %v231 = vrot.slane %v230, 4
    %v232 = vadd.f32 %v230, %v231
    %v233 = vrot.slane %v232, 2
    %v234 = vadd.f32 %v232, %v233
    %v235 = vrot.slane %v234, 1
    %v236 = vadd.f32 %v234, %v235
    %237 = vadd.xlane.f32.xlu0 %v236
    %v238 = vpop.xlane.xlu0 %237
    %vm239 = vcmp.ge.f32.partialorder %v238, 41.0
    %v240 = vsel %vm239, %v164, %v228
    %v241 = vsel %vm239, %v228, %v165
    %v242 = vshra.s32 %v183, 1
    %v243 = vshra.s32 %v184, 1
    %v244 = vadd.s32 %v242, %v243
    %v245 = vand.u32 %v183, %v184
    %v246 = vand.u32 %v245, 1
    %v247 = vadd.s32 %v244, %v246
    %vm248 = vcmp.le.s32.totalorder %v29, %v247
    %v249 = vsel %vm248, 1.0, 0.0
    %v250 = vrot.slane %v249, 4
    %v251 = vadd.f32 %v249, %v250
    %v252 = vrot.slane %v251, 2
    %v253 = vadd.f32 %v251, %v252
    %v254 = vrot.slane %v253, 1
    %v255 = vadd.f32 %v253, %v254
    %256 = vadd.xlane.f32.xlu0 %v255
    %v257 = vpop.xlane.xlu0 %256
    %vm258 = vcmp.ge.f32.partialorder %v257, 744.0
    %v259 = vsel %vm258, %v183, %v247
    %v260 = vsel %vm258, %v247, %v184
    %v261 = vshra.s32 %v202, 1
    %v262 = vshra.s32 %v203, 1
    %v263 = vadd.s32 %v261, %v262
    %v264 = vand.u32 %v202, %v203
    %v265 = vand.u32 %v264, 1
    %v266 = vadd.s32 %v263, %v265
    %vm267 = vcmp.le.s32.totalorder %v29, %v266
    %v268 = vsel %vm267, 1.0, 0.0
    %v269 = vrot.slane %v268, 4
    %v270 = vadd.f32 %v268, %v269
    %v271 = vrot.slane %v270, 2
    %v272 = vadd.f32 %v270, %v271
    %v273 = vrot.slane %v272, 1
    %v274 = vadd.f32 %v272, %v273
    %275 = vadd.xlane.f32.xlu0 %v274
    %v276 = vpop.xlane.xlu0 %275
    %vm277 = vcmp.ge.f32.partialorder %v276, 745.0
    %v278 = vsel %vm277, %v202, %v266
    %v279 = vsel %vm277, %v266, %v203
    %v280 = vshra.s32 %v221, 1
    %v281 = vshra.s32 %v222, 1
    %v282 = vadd.s32 %v280, %v281
    %v283 = vand.u32 %v221, %v222
    %v284 = vand.u32 %v283, 1
    %v285 = vadd.s32 %v282, %v284
    %vm286 = vcmp.le.s32.totalorder %v29, %v285
    %v287 = vsel %vm286, 1.0, 0.0
    %v288 = vrot.slane %v287, 4
    %v289 = vadd.f32 %v287, %v288
    %v290 = vrot.slane %v289, 2
    %v291 = vadd.f32 %v289, %v290
    %v292 = vrot.slane %v291, 1
    %v293 = vadd.f32 %v291, %v292
    %294 = vadd.xlane.f32.xlu0 %v293
    %v295 = vpop.xlane.xlu0 %294
    %vm296 = vcmp.ge.f32.partialorder %v295, 40.0
    %v297 = vsel %vm296, %v221, %v285
    %v298 = vsel %vm296, %v285, %v222
    %v299 = vshra.s32 %v240, 1
    %v300 = vshra.s32 %v241, 1
    %v301 = vadd.s32 %v299, %v300
    %v302 = vand.u32 %v240, %v241
    %v303 = vand.u32 %v302, 1
    %v304 = vadd.s32 %v301, %v303
    %vm305 = vcmp.le.s32.totalorder %v29, %v304
    %v306 = vsel %vm305, 1.0, 0.0
    %v307 = vrot.slane %v306, 4
    %v308 = vadd.f32 %v306, %v307
    %v309 = vrot.slane %v308, 2
    %v310 = vadd.f32 %v308, %v309
    %v311 = vrot.slane %v310, 1
    %v312 = vadd.f32 %v310, %v311
    %313 = vadd.xlane.f32.xlu0 %v312
    %v314 = vpop.xlane.xlu0 %313
    %vm315 = vcmp.ge.f32.partialorder %v314, 41.0
    %v316 = vsel %vm315, %v240, %v304
    %v317 = vsel %vm315, %v304, %v241
    %v318 = vshra.s32 %v259, 1
    %v319 = vshra.s32 %v260, 1
    %v320 = vadd.s32 %v318, %v319
    %v321 = vand.u32 %v259, %v260
    %v322 = vand.u32 %v321, 1
    %v323 = vadd.s32 %v320, %v322
    %vm324 = vcmp.le.s32.totalorder %v29, %v323
    %v325 = vsel %vm324, 1.0, 0.0
    %v326 = vrot.slane %v325, 4
    %v327 = vadd.f32 %v325, %v326
    %v328 = vrot.slane %v327, 2
    %v329 = vadd.f32 %v327, %v328
    %v330 = vrot.slane %v329, 1
    %v331 = vadd.f32 %v329, %v330
    %332 = vadd.xlane.f32.xlu0 %v331
    %v333 = vpop.xlane.xlu0 %332
    %vm334 = vcmp.ge.f32.partialorder %v333, 744.0
    %v335 = vsel %vm334, %v259, %v323
    %v336 = vsel %vm334, %v323, %v260
    %v337 = vshra.s32 %v278, 1
    %v338 = vshra.s32 %v279, 1
    %v339 = vadd.s32 %v337, %v338
    %v340 = vand.u32 %v278, %v279
    %v341 = vand.u32 %v340, 1
    %v342 = vadd.s32 %v339, %v341
    %vm343 = vcmp.le.s32.totalorder %v29, %v342
    %v344 = vsel %vm343, 1.0, 0.0
    %v345 = vrot.slane %v344, 4
    %v346 = vadd.f32 %v344, %v345
    %v347 = vrot.slane %v346, 2
    %v348 = vadd.f32 %v346, %v347
    %v349 = vrot.slane %v348, 1
    %v350 = vadd.f32 %v348, %v349
    %351 = vadd.xlane.f32.xlu0 %v350
    %v352 = vpop.xlane.xlu0 %351
    %vm353 = vcmp.ge.f32.partialorder %v352, 745.0
    %v354 = vsel %vm353, %v278, %v342
    %v355 = vsel %vm353, %v342, %v279
    %v356 = vshra.s32 %v297, 1
    %v357 = vshra.s32 %v298, 1
    %v358 = vadd.s32 %v356, %v357
    %v359 = vand.u32 %v297, %v298
    %v360 = vand.u32 %v359, 1
    %v361 = vadd.s32 %v358, %v360
    %vm362 = vcmp.le.s32.totalorder %v29, %v361
    %v363 = vsel %vm362, 1.0, 0.0
    %v364 = vrot.slane %v363, 4
    %v365 = vadd.f32 %v363, %v364
    %v366 = vrot.slane %v365, 2
    %v367 = vadd.f32 %v365, %v366
    %v368 = vrot.slane %v367, 1
    %v369 = vadd.f32 %v367, %v368
    %370 = vadd.xlane.f32.xlu0 %v369
    %v371 = vpop.xlane.xlu0 %370
    %vm372 = vcmp.ge.f32.partialorder %v371, 40.0
    %v373 = vsel %vm372, %v297, %v361
    %v374 = vsel %vm372, %v361, %v298
    %v375 = vshra.s32 %v316, 1
    %v376 = vshra.s32 %v317, 1
    %v377 = vadd.s32 %v375, %v376
    %v378 = vand.u32 %v316, %v317
    %v379 = vand.u32 %v378, 1
    %v380 = vadd.s32 %v377, %v379
    %vm381 = vcmp.le.s32.totalorder %v29, %v380
    %v382 = vsel %vm381, 1.0, 0.0
    %v383 = vrot.slane %v382, 4
    %v384 = vadd.f32 %v382, %v383
    %v385 = vrot.slane %v384, 2
    %v386 = vadd.f32 %v384, %v385
    %v387 = vrot.slane %v386, 1
    %v388 = vadd.f32 %v386, %v387
    %389 = vadd.xlane.f32.xlu0 %v388
    %v390 = vpop.xlane.xlu0 %389
    %vm391 = vcmp.ge.f32.partialorder %v390, 41.0
    %v392 = vsel %vm391, %v316, %v380
    %v393 = vsel %vm391, %v380, %v317
    %v394 = vshra.s32 %v335, 1
    %v395 = vshra.s32 %v336, 1
    %v396 = vadd.s32 %v394, %v395
    %v397 = vand.u32 %v335, %v336
    %v398 = vand.u32 %v397, 1
    %v399 = vadd.s32 %v396, %v398
    %vm400 = vcmp.le.s32.totalorder %v29, %v399
    %v401 = vsel %vm400, 1.0, 0.0
    %v402 = vrot.slane %v401, 4
    %v403 = vadd.f32 %v401, %v402
    %v404 = vrot.slane %v403, 2
    %v405 = vadd.f32 %v403, %v404
    %v406 = vrot.slane %v405, 1
    %v407 = vadd.f32 %v405, %v406
    %408 = vadd.xlane.f32.xlu0 %v407
    %v409 = vpop.xlane.xlu0 %408
    %vm410 = vcmp.ge.f32.partialorder %v409, 744.0
    %v411 = vsel %vm410, %v335, %v399
    %v412 = vsel %vm410, %v399, %v336
    %v413 = vshra.s32 %v354, 1
    %v414 = vshra.s32 %v355, 1
    %v415 = vadd.s32 %v413, %v414
    %v416 = vand.u32 %v354, %v355
    %v417 = vand.u32 %v416, 1
    %v418 = vadd.s32 %v415, %v417
    %vm419 = vcmp.le.s32.totalorder %v29, %v418
    %v420 = vsel %vm419, 1.0, 0.0
    %v421 = vrot.slane %v420, 4
    %v422 = vadd.f32 %v420, %v421
    %v423 = vrot.slane %v422, 2
    %v424 = vadd.f32 %v422, %v423
    %v425 = vrot.slane %v424, 1
    %v426 = vadd.f32 %v424, %v425
    %427 = vadd.xlane.f32.xlu0 %v426
    %v428 = vpop.xlane.xlu0 %427
    %vm429 = vcmp.ge.f32.partialorder %v428, 745.0
    %v430 = vsel %vm429, %v354, %v418
    %v431 = vsel %vm429, %v418, %v355
    %v432 = vshra.s32 %v373, 1
    %v433 = vshra.s32 %v374, 1
    %v434 = vadd.s32 %v432, %v433
    %v435 = vand.u32 %v373, %v374
    %v436 = vand.u32 %v435, 1
    %v437 = vadd.s32 %v434, %v436
    %vm438 = vcmp.le.s32.totalorder %v29, %v437
    %v439 = vsel %vm438, 1.0, 0.0
    %v440 = vrot.slane %v439, 4
    %v441 = vadd.f32 %v439, %v440
    %v442 = vrot.slane %v441, 2
    %v443 = vadd.f32 %v441, %v442
    %v444 = vrot.slane %v443, 1
    %v445 = vadd.f32 %v443, %v444
    %446 = vadd.xlane.f32.xlu0 %v445
    %v447 = vpop.xlane.xlu0 %446
    %vm448 = vcmp.ge.f32.partialorder %v447, 40.0
    %v449 = vsel %vm448, %v373, %v437
    %v450 = vsel %vm448, %v437, %v374
    %v451 = vshra.s32 %v392, 1
    %v452 = vshra.s32 %v393, 1
    %v453 = vadd.s32 %v451, %v452
    %v454 = vand.u32 %v392, %v393
    %v455 = vand.u32 %v454, 1
    %v456 = vadd.s32 %v453, %v455
    %vm457 = vcmp.le.s32.totalorder %v29, %v456
    %v458 = vsel %vm457, 1.0, 0.0
    %v459 = vrot.slane %v458, 4
    %v460 = vadd.f32 %v458, %v459
    %v461 = vrot.slane %v460, 2
    %v462 = vadd.f32 %v460, %v461
    %v463 = vrot.slane %v462, 1
    %v464 = vadd.f32 %v462, %v463
    %465 = vadd.xlane.f32.xlu0 %v464
    %v466 = vpop.xlane.xlu0 %465
    %vm467 = vcmp.ge.f32.partialorder %v466, 41.0
    %v468 = vsel %vm467, %v392, %v456
    %v469 = vsel %vm467, %v456, %v393
    %v470 = vshra.s32 %v411, 1
    %v471 = vshra.s32 %v412, 1
    %v472 = vadd.s32 %v470, %v471
    %v473 = vand.u32 %v411, %v412
    %v474 = vand.u32 %v473, 1
    %v475 = vadd.s32 %v472, %v474
    %vm476 = vcmp.le.s32.totalorder %v29, %v475
    %v477 = vsel %vm476, 1.0, 0.0
    %v478 = vrot.slane %v477, 4
    %v479 = vadd.f32 %v477, %v478
    %v480 = vrot.slane %v479, 2
    %v481 = vadd.f32 %v479, %v480
    %v482 = vrot.slane %v481, 1
    %v483 = vadd.f32 %v481, %v482
    %484 = vadd.xlane.f32.xlu0 %v483
    %v485 = vpop.xlane.xlu0 %484
    %vm486 = vcmp.ge.f32.partialorder %v485, 744.0
    %v487 = vsel %vm486, %v411, %v475
    %v488 = vsel %vm486, %v475, %v412
    %v489 = vshra.s32 %v430, 1
    %v490 = vshra.s32 %v431, 1
    %v491 = vadd.s32 %v489, %v490
    %v492 = vand.u32 %v430, %v431
    %v493 = vand.u32 %v492, 1
    %v494 = vadd.s32 %v491, %v493
    %vm495 = vcmp.le.s32.totalorder %v29, %v494
    %v496 = vsel %vm495, 1.0, 0.0
    %v497 = vrot.slane %v496, 4
    %v498 = vadd.f32 %v496, %v497
    %v499 = vrot.slane %v498, 2
    %v500 = vadd.f32 %v498, %v499
    %v501 = vrot.slane %v500, 1
    %v502 = vadd.f32 %v500, %v501
    %503 = vadd.xlane.f32.xlu0 %v502
    %v504 = vpop.xlane.xlu0 %503
    %vm505 = vcmp.ge.f32.partialorder %v504, 745.0
    %v506 = vsel %vm505, %v430, %v494
    %v507 = vsel %vm505, %v494, %v431
    %v508 = vshra.s32 %v449, 1
    %v509 = vshra.s32 %v450, 1
    %v510 = vadd.s32 %v508, %v509
    %v511 = vand.u32 %v449, %v450
    %v512 = vand.u32 %v511, 1
    %v513 = vadd.s32 %v510, %v512
    %vm514 = vcmp.le.s32.totalorder %v29, %v513
    %v515 = vsel %vm514, 1.0, 0.0
    %v516 = vrot.slane %v515, 4
    %v517 = vadd.f32 %v515, %v516
    %v518 = vrot.slane %v517, 2
    %v519 = vadd.f32 %v517, %v518
    %v520 = vrot.slane %v519, 1
    %v521 = vadd.f32 %v519, %v520
    %522 = vadd.xlane.f32.xlu0 %v521
    %v523 = vpop.xlane.xlu0 %522
    %vm524 = vcmp.ge.f32.partialorder %v523, 40.0
    %v525 = vsel %vm524, %v449, %v513
    %v526 = vsel %vm524, %v513, %v450
    %v527 = vshra.s32 %v468, 1
    %v528 = vshra.s32 %v469, 1
    %v529 = vadd.s32 %v527, %v528
    %v530 = vand.u32 %v468, %v469
    %v531 = vand.u32 %v530, 1
    %v532 = vadd.s32 %v529, %v531
    %vm533 = vcmp.le.s32.totalorder %v29, %v532
    %v534 = vsel %vm533, 1.0, 0.0
    %v535 = vrot.slane %v534, 4
    %v536 = vadd.f32 %v534, %v535
    %v537 = vrot.slane %v536, 2
    %v538 = vadd.f32 %v536, %v537
    %v539 = vrot.slane %v538, 1
    %v540 = vadd.f32 %v538, %v539
    %541 = vadd.xlane.f32.xlu0 %v540
    %v542 = vpop.xlane.xlu0 %541
    %vm543 = vcmp.ge.f32.partialorder %v542, 41.0
    %v544 = vsel %vm543, %v468, %v532
    %v545 = vsel %vm543, %v532, %v469
    %v546 = vshra.s32 %v487, 1
    %v547 = vshra.s32 %v488, 1
    %v548 = vadd.s32 %v546, %v547
    %v549 = vand.u32 %v487, %v488
    %v550 = vand.u32 %v549, 1
    %v551 = vadd.s32 %v548, %v550
    %vm552 = vcmp.le.s32.totalorder %v29, %v551
    %v553 = vsel %vm552, 1.0, 0.0
    %v554 = vrot.slane %v553, 4
    %v555 = vadd.f32 %v553, %v554
    %v556 = vrot.slane %v555, 2
    %v557 = vadd.f32 %v555, %v556
    %v558 = vrot.slane %v557, 1
    %v559 = vadd.f32 %v557, %v558
    %560 = vadd.xlane.f32.xlu0 %v559
    %v561 = vpop.xlane.xlu0 %560
    %vm562 = vcmp.ge.f32.partialorder %v561, 744.0
    %v563 = vsel %vm562, %v487, %v551
    %v564 = vsel %vm562, %v551, %v488
    %v565 = vshra.s32 %v506, 1
    %v566 = vshra.s32 %v507, 1
    %v567 = vadd.s32 %v565, %v566
    %v568 = vand.u32 %v506, %v507
    %v569 = vand.u32 %v568, 1
    %v570 = vadd.s32 %v567, %v569
    %vm571 = vcmp.le.s32.totalorder %v29, %v570
    %v572 = vsel %vm571, 1.0, 0.0
    %v573 = vrot.slane %v572, 4
    %v574 = vadd.f32 %v572, %v573
    %v575 = vrot.slane %v574, 2
    %v576 = vadd.f32 %v574, %v575
    %v577 = vrot.slane %v576, 1
    %v578 = vadd.f32 %v576, %v577
    %579 = vadd.xlane.f32.xlu0 %v578
    %v580 = vpop.xlane.xlu0 %579
    %vm581 = vcmp.ge.f32.partialorder %v580, 745.0
    %v582 = vsel %vm581, %v506, %v570
    %v583 = vsel %vm581, %v570, %v507
    %v584 = vshra.s32 %v525, 1
    %v585 = vshra.s32 %v526, 1
    %v586 = vadd.s32 %v584, %v585
    %v587 = vand.u32 %v525, %v526
    %v588 = vand.u32 %v587, 1
    %v589 = vadd.s32 %v586, %v588
    %vm590 = vcmp.le.s32.totalorder %v29, %v589
    %v591 = vsel %vm590, 1.0, 0.0
    %v592 = vrot.slane %v591, 4
    %v593 = vadd.f32 %v591, %v592
    %v594 = vrot.slane %v593, 2
    %v595 = vadd.f32 %v593, %v594
    %v596 = vrot.slane %v595, 1
    %v597 = vadd.f32 %v595, %v596
    %598 = vadd.xlane.f32.xlu0 %v597
    %v599 = vpop.xlane.xlu0 %598
    %vm600 = vcmp.ge.f32.partialorder %v599, 40.0
    %v601 = vsel %vm600, %v525, %v589
    %v602 = vsel %vm600, %v589, %v526
    %v603 = vshra.s32 %v544, 1
    %v604 = vshra.s32 %v545, 1
    %v605 = vadd.s32 %v603, %v604
    %v606 = vand.u32 %v544, %v545
    %v607 = vand.u32 %v606, 1
    %v608 = vadd.s32 %v605, %v607
    %vm609 = vcmp.le.s32.totalorder %v29, %v608
    %v610 = vsel %vm609, 1.0, 0.0
    %v611 = vrot.slane %v610, 4
    %v612 = vadd.f32 %v610, %v611
    %v613 = vrot.slane %v612, 2
    %v614 = vadd.f32 %v612, %v613
    %v615 = vrot.slane %v614, 1
    %v616 = vadd.f32 %v614, %v615
    %617 = vadd.xlane.f32.xlu0 %v616
    %v618 = vpop.xlane.xlu0 %617
    %vm619 = vcmp.ge.f32.partialorder %v618, 41.0
    %v620 = vsel %vm619, %v544, %v608
    %v621 = vsel %vm619, %v608, %v545
    %v622 = vshra.s32 %v563, 1
    %v623 = vshra.s32 %v564, 1
    %v624 = vadd.s32 %v622, %v623
    %v625 = vand.u32 %v563, %v564
    %v626 = vand.u32 %v625, 1
    %v627 = vadd.s32 %v624, %v626
    %vm628 = vcmp.le.s32.totalorder %v29, %v627
    %v629 = vsel %vm628, 1.0, 0.0
    %v630 = vrot.slane %v629, 4
    %v631 = vadd.f32 %v629, %v630
    %v632 = vrot.slane %v631, 2
    %v633 = vadd.f32 %v631, %v632
    %v634 = vrot.slane %v633, 1
    %v635 = vadd.f32 %v633, %v634
    %636 = vadd.xlane.f32.xlu0 %v635
    %v637 = vpop.xlane.xlu0 %636
    %vm638 = vcmp.ge.f32.partialorder %v637, 744.0
    %v639 = vsel %vm638, %v563, %v627
    %v640 = vsel %vm638, %v627, %v564
    %v641 = vshra.s32 %v582, 1
    %v642 = vshra.s32 %v583, 1
    %v643 = vadd.s32 %v641, %v642
    %v644 = vand.u32 %v582, %v583
    %v645 = vand.u32 %v644, 1
    %v646 = vadd.s32 %v643, %v645
    %vm647 = vcmp.le.s32.totalorder %v29, %v646
    %v648 = vsel %vm647, 1.0, 0.0
    %v649 = vrot.slane %v648, 4
    %v650 = vadd.f32 %v648, %v649
    %v651 = vrot.slane %v650, 2
    %v652 = vadd.f32 %v650, %v651
    %v653 = vrot.slane %v652, 1
    %v654 = vadd.f32 %v652, %v653
    %655 = vadd.xlane.f32.xlu0 %v654
    %v656 = vpop.xlane.xlu0 %655
    %vm657 = vcmp.ge.f32.partialorder %v656, 745.0
    %v658 = vsel %vm657, %v582, %v646
    %v659 = vsel %vm657, %v646, %v583
    %v660 = vshra.s32 %v601, 1
    %v661 = vshra.s32 %v602, 1
    %v662 = vadd.s32 %v660, %v661
    %v663 = vand.u32 %v601, %v602
    %v664 = vand.u32 %v663, 1
    %v665 = vadd.s32 %v662, %v664
    %vm666 = vcmp.le.s32.totalorder %v29, %v665
    %v667 = vsel %vm666, 1.0, 0.0
    %v668 = vrot.slane %v667, 4
    %v669 = vadd.f32 %v667, %v668
    %v670 = vrot.slane %v669, 2
    %v671 = vadd.f32 %v669, %v670
    %v672 = vrot.slane %v671, 1
    %v673 = vadd.f32 %v671, %v672
    %674 = vadd.xlane.f32.xlu0 %v673
    %v675 = vpop.xlane.xlu0 %674
    %vm676 = vcmp.ge.f32.partialorder %v675, 40.0
    %v677 = vsel %vm676, %v601, %v665
    %v678 = vsel %vm676, %v665, %v602
    %v679 = vshra.s32 %v620, 1
    %v680 = vshra.s32 %v621, 1
    %v681 = vadd.s32 %v679, %v680
    %v682 = vand.u32 %v620, %v621
    %v683 = vand.u32 %v682, 1
    %v684 = vadd.s32 %v681, %v683
    %vm685 = vcmp.le.s32.totalorder %v29, %v684
    %v686 = vsel %vm685, 1.0, 0.0
    %v687 = vrot.slane %v686, 4
    %v688 = vadd.f32 %v686, %v687
    %v689 = vrot.slane %v688, 2
    %v690 = vadd.f32 %v688, %v689
    %v691 = vrot.slane %v690, 1
    %v692 = vadd.f32 %v690, %v691
    %693 = vadd.xlane.f32.xlu0 %v692
    %v694 = vpop.xlane.xlu0 %693
    %vm695 = vcmp.ge.f32.partialorder %v694, 41.0
    %v696 = vsel %vm695, %v620, %v684
    %v697 = vsel %vm695, %v684, %v621
    %v698 = vshra.s32 %v639, 1
    %v699 = vshra.s32 %v640, 1
    %v700 = vadd.s32 %v698, %v699
    %v701 = vand.u32 %v639, %v640
    %v702 = vand.u32 %v701, 1
    %v703 = vadd.s32 %v700, %v702
    %vm704 = vcmp.le.s32.totalorder %v29, %v703
    %v705 = vsel %vm704, 1.0, 0.0
    %v706 = vrot.slane %v705, 4
    %v707 = vadd.f32 %v705, %v706
    %v708 = vrot.slane %v707, 2
    %v709 = vadd.f32 %v707, %v708
    %v710 = vrot.slane %v709, 1
    %v711 = vadd.f32 %v709, %v710
    %712 = vadd.xlane.f32.xlu0 %v711
    %v713 = vpop.xlane.xlu0 %712
    %vm714 = vcmp.ge.f32.partialorder %v713, 744.0
    %v715 = vsel %vm714, %v639, %v703
    %v716 = vsel %vm714, %v703, %v640
    %v717 = vshra.s32 %v658, 1
    %v718 = vshra.s32 %v659, 1
    %v719 = vadd.s32 %v717, %v718
    %v720 = vand.u32 %v658, %v659
    %v721 = vand.u32 %v720, 1
    %v722 = vadd.s32 %v719, %v721
    %vm723 = vcmp.le.s32.totalorder %v29, %v722
    %v724 = vsel %vm723, 1.0, 0.0
    %v725 = vrot.slane %v724, 4
    %v726 = vadd.f32 %v724, %v725
    %v727 = vrot.slane %v726, 2
    %v728 = vadd.f32 %v726, %v727
    %v729 = vrot.slane %v728, 1
    %v730 = vadd.f32 %v728, %v729
    %731 = vadd.xlane.f32.xlu0 %v730
    %v732 = vpop.xlane.xlu0 %731
    %vm733 = vcmp.ge.f32.partialorder %v732, 745.0
    %v734 = vsel %vm733, %v658, %v722
    %v735 = vsel %vm733, %v722, %v659
    %v736 = vshra.s32 %v677, 1
    %v737 = vshra.s32 %v678, 1
    %v738 = vadd.s32 %v736, %v737
    %v739 = vand.u32 %v677, %v678
    %v740 = vand.u32 %v739, 1
    %v741 = vadd.s32 %v738, %v740
    %vm742 = vcmp.le.s32.totalorder %v29, %v741
    %v743 = vsel %vm742, 1.0, 0.0
    %v744 = vrot.slane %v743, 4
    %v745 = vadd.f32 %v743, %v744
    %v746 = vrot.slane %v745, 2
    %v747 = vadd.f32 %v745, %v746
    %v748 = vrot.slane %v747, 1
    %v749 = vadd.f32 %v747, %v748
    %750 = vadd.xlane.f32.xlu0 %v749
    %v751 = vpop.xlane.xlu0 %750
    %vm752 = vcmp.ge.f32.partialorder %v751, 40.0
    %v753 = vsel %vm752, %v677, %v741
    %v754 = vsel %vm752, %v741, %v678
    %v755 = vshra.s32 %v696, 1
    %v756 = vshra.s32 %v697, 1
    %v757 = vadd.s32 %v755, %v756
    %v758 = vand.u32 %v696, %v697
    %v759 = vand.u32 %v758, 1
    %v760 = vadd.s32 %v757, %v759
    %vm761 = vcmp.le.s32.totalorder %v29, %v760
    %v762 = vsel %vm761, 1.0, 0.0
    %v763 = vrot.slane %v762, 4
    %v764 = vadd.f32 %v762, %v763
    %v765 = vrot.slane %v764, 2
    %v766 = vadd.f32 %v764, %v765
    %v767 = vrot.slane %v766, 1
    %v768 = vadd.f32 %v766, %v767
    %769 = vadd.xlane.f32.xlu0 %v768
    %v770 = vpop.xlane.xlu0 %769
    %vm771 = vcmp.ge.f32.partialorder %v770, 41.0
    %v772 = vsel %vm771, %v696, %v760
    %v773 = vsel %vm771, %v760, %v697
    %v774 = vshra.s32 %v715, 1
    %v775 = vshra.s32 %v716, 1
    %v776 = vadd.s32 %v774, %v775
    %v777 = vand.u32 %v715, %v716
    %v778 = vand.u32 %v777, 1
    %v779 = vadd.s32 %v776, %v778
    %vm780 = vcmp.le.s32.totalorder %v29, %v779
    %v781 = vsel %vm780, 1.0, 0.0
    %v782 = vrot.slane %v781, 4
    %v783 = vadd.f32 %v781, %v782
    %v784 = vrot.slane %v783, 2
    %v785 = vadd.f32 %v783, %v784
    %v786 = vrot.slane %v785, 1
    %v787 = vadd.f32 %v785, %v786
    %788 = vadd.xlane.f32.xlu0 %v787
    %v789 = vpop.xlane.xlu0 %788
    %vm790 = vcmp.ge.f32.partialorder %v789, 744.0
    %v791 = vsel %vm790, %v715, %v779
    %v792 = vsel %vm790, %v779, %v716
    %v793 = vshra.s32 %v734, 1
    %v794 = vshra.s32 %v735, 1
    %v795 = vadd.s32 %v793, %v794
    %v796 = vand.u32 %v734, %v735
    %v797 = vand.u32 %v796, 1
    %v798 = vadd.s32 %v795, %v797
    %vm799 = vcmp.le.s32.totalorder %v29, %v798
    %v800 = vsel %vm799, 1.0, 0.0
    %v801 = vrot.slane %v800, 4
    %v802 = vadd.f32 %v800, %v801
    %v803 = vrot.slane %v802, 2
    %v804 = vadd.f32 %v802, %v803
    %v805 = vrot.slane %v804, 1
    %v806 = vadd.f32 %v804, %v805
    %807 = vadd.xlane.f32.xlu0 %v806
    %v808 = vpop.xlane.xlu0 %807
    %vm809 = vcmp.ge.f32.partialorder %v808, 745.0
    %v810 = vsel %vm809, %v734, %v798
    %v811 = vsel %vm809, %v798, %v735
    %v812 = vshra.s32 %v753, 1
    %v813 = vshra.s32 %v754, 1
    %v814 = vadd.s32 %v812, %v813
    %v815 = vand.u32 %v753, %v754
    %v816 = vand.u32 %v815, 1
    %v817 = vadd.s32 %v814, %v816
    %vm818 = vcmp.le.s32.totalorder %v29, %v817
    %v819 = vsel %vm818, 1.0, 0.0
    %v820 = vrot.slane %v819, 4
    %v821 = vadd.f32 %v819, %v820
    %v822 = vrot.slane %v821, 2
    %v823 = vadd.f32 %v821, %v822
    %v824 = vrot.slane %v823, 1
    %v825 = vadd.f32 %v823, %v824
    %826 = vadd.xlane.f32.xlu0 %v825
    %v827 = vpop.xlane.xlu0 %826
    %vm828 = vcmp.ge.f32.partialorder %v827, 40.0
    %v829 = vsel %vm828, %v753, %v817
    %v830 = vsel %vm828, %v817, %v754
    %v831 = vshra.s32 %v772, 1
    %v832 = vshra.s32 %v773, 1
    %v833 = vadd.s32 %v831, %v832
    %v834 = vand.u32 %v772, %v773
    %v835 = vand.u32 %v834, 1
    %v836 = vadd.s32 %v833, %v835
    %vm837 = vcmp.le.s32.totalorder %v29, %v836
    %v838 = vsel %vm837, 1.0, 0.0
    %v839 = vrot.slane %v838, 4
    %v840 = vadd.f32 %v838, %v839
    %v841 = vrot.slane %v840, 2
    %v842 = vadd.f32 %v840, %v841
    %v843 = vrot.slane %v842, 1
    %v844 = vadd.f32 %v842, %v843
    %845 = vadd.xlane.f32.xlu0 %v844
    %v846 = vpop.xlane.xlu0 %845
    %vm847 = vcmp.ge.f32.partialorder %v846, 41.0
    %v848 = vsel %vm847, %v772, %v836
    %v849 = vsel %vm847, %v836, %v773
    %v850 = vshra.s32 %v791, 1
    %v851 = vshra.s32 %v792, 1
    %v852 = vadd.s32 %v850, %v851
    %v853 = vand.u32 %v791, %v792
    %v854 = vand.u32 %v853, 1
    %v855 = vadd.s32 %v852, %v854
    %vm856 = vcmp.le.s32.totalorder %v29, %v855
    %v857 = vsel %vm856, 1.0, 0.0
    %v858 = vrot.slane %v857, 4
    %v859 = vadd.f32 %v857, %v858
    %v860 = vrot.slane %v859, 2
    %v861 = vadd.f32 %v859, %v860
    %v862 = vrot.slane %v861, 1
    %v863 = vadd.f32 %v861, %v862
    %864 = vadd.xlane.f32.xlu0 %v863
    %v865 = vpop.xlane.xlu0 %864
    %vm866 = vcmp.ge.f32.partialorder %v865, 744.0
    %v867 = vsel %vm866, %v791, %v855
    %v868 = vsel %vm866, %v855, %v792
    %v869 = vshra.s32 %v810, 1
    %v870 = vshra.s32 %v811, 1
    %v871 = vadd.s32 %v869, %v870
    %v872 = vand.u32 %v810, %v811
    %v873 = vand.u32 %v872, 1
    %v874 = vadd.s32 %v871, %v873
    %vm875 = vcmp.le.s32.totalorder %v29, %v874
    %v876 = vsel %vm875, 1.0, 0.0
    %v877 = vrot.slane %v876, 4
    %v878 = vadd.f32 %v876, %v877
    %v879 = vrot.slane %v878, 2
    %v880 = vadd.f32 %v878, %v879
    %v881 = vrot.slane %v880, 1
    %v882 = vadd.f32 %v880, %v881
    %883 = vadd.xlane.f32.xlu0 %v882
    %v884 = vpop.xlane.xlu0 %883
    %vm885 = vcmp.ge.f32.partialorder %v884, 745.0
    %v886 = vsel %vm885, %v810, %v874
    %v887 = vsel %vm885, %v874, %v811
    %v888 = vshra.s32 %v829, 1
    %v889 = vshra.s32 %v830, 1
    %v890 = vadd.s32 %v888, %v889
    %v891 = vand.u32 %v829, %v830
    %v892 = vand.u32 %v891, 1
    %v893 = vadd.s32 %v890, %v892
    %vm894 = vcmp.le.s32.totalorder %v29, %v893
    %v895 = vsel %vm894, 1.0, 0.0
    %v896 = vrot.slane %v895, 4
    %v897 = vadd.f32 %v895, %v896
    %v898 = vrot.slane %v897, 2
    %v899 = vadd.f32 %v897, %v898
    %v900 = vrot.slane %v899, 1
    %v901 = vadd.f32 %v899, %v900
    %902 = vadd.xlane.f32.xlu0 %v901
    %v903 = vpop.xlane.xlu0 %902
    %vm904 = vcmp.ge.f32.partialorder %v903, 40.0
    %v905 = vsel %vm904, %v829, %v893
    %v906 = vsel %vm904, %v893, %v830
    %v907 = vshra.s32 %v848, 1
    %v908 = vshra.s32 %v849, 1
    %v909 = vadd.s32 %v907, %v908
    %v910 = vand.u32 %v848, %v849
    %v911 = vand.u32 %v910, 1
    %v912 = vadd.s32 %v909, %v911
    %vm913 = vcmp.le.s32.totalorder %v29, %v912
    %v914 = vsel %vm913, 1.0, 0.0
    %v915 = vrot.slane %v914, 4
    %v916 = vadd.f32 %v914, %v915
    %v917 = vrot.slane %v916, 2
    %v918 = vadd.f32 %v916, %v917
    %v919 = vrot.slane %v918, 1
    %v920 = vadd.f32 %v918, %v919
    %921 = vadd.xlane.f32.xlu0 %v920
    %v922 = vpop.xlane.xlu0 %921
    %vm923 = vcmp.ge.f32.partialorder %v922, 41.0
    %v924 = vsel %vm923, %v848, %v912
    %v925 = vsel %vm923, %v912, %v849
    %v926 = vshra.s32 %v867, 1
    %v927 = vshra.s32 %v868, 1
    %v928 = vadd.s32 %v926, %v927
    %v929 = vand.u32 %v867, %v868
    %v930 = vand.u32 %v929, 1
    %v931 = vadd.s32 %v928, %v930
    %vm932 = vcmp.le.s32.totalorder %v29, %v931
    %v933 = vsel %vm932, 1.0, 0.0
    %v934 = vrot.slane %v933, 4
    %v935 = vadd.f32 %v933, %v934
    %v936 = vrot.slane %v935, 2
    %v937 = vadd.f32 %v935, %v936
    %v938 = vrot.slane %v937, 1
    %v939 = vadd.f32 %v937, %v938
    %940 = vadd.xlane.f32.xlu0 %v939
    %v941 = vpop.xlane.xlu0 %940
    %vm942 = vcmp.ge.f32.partialorder %v941, 744.0
    %v943 = vsel %vm942, %v867, %v931
    %v944 = vsel %vm942, %v931, %v868
    %v945 = vshra.s32 %v886, 1
    %v946 = vshra.s32 %v887, 1
    %v947 = vadd.s32 %v945, %v946
    %v948 = vand.u32 %v886, %v887
    %v949 = vand.u32 %v948, 1
    %v950 = vadd.s32 %v947, %v949
    %vm951 = vcmp.le.s32.totalorder %v29, %v950
    %v952 = vsel %vm951, 1.0, 0.0
    %v953 = vrot.slane %v952, 4
    %v954 = vadd.f32 %v952, %v953
    %v955 = vrot.slane %v954, 2
    %v956 = vadd.f32 %v954, %v955
    %v957 = vrot.slane %v956, 1
    %v958 = vadd.f32 %v956, %v957
    %959 = vadd.xlane.f32.xlu0 %v958
    %v960 = vpop.xlane.xlu0 %959
    %vm961 = vcmp.ge.f32.partialorder %v960, 745.0
    %v962 = vsel %vm961, %v886, %v950
    %v963 = vsel %vm961, %v950, %v887
    %v964 = vshra.s32 %v905, 1
    %v965 = vshra.s32 %v906, 1
    %v966 = vadd.s32 %v964, %v965
    %v967 = vand.u32 %v905, %v906
    %v968 = vand.u32 %v967, 1
    %v969 = vadd.s32 %v966, %v968
    %vm970 = vcmp.le.s32.totalorder %v29, %v969
    %v971 = vsel %vm970, 1.0, 0.0
    %v972 = vrot.slane %v971, 4
    %v973 = vadd.f32 %v971, %v972
    %v974 = vrot.slane %v973, 2
    %v975 = vadd.f32 %v973, %v974
    %v976 = vrot.slane %v975, 1
    %v977 = vadd.f32 %v975, %v976
    %978 = vadd.xlane.f32.xlu0 %v977
    %v979 = vpop.xlane.xlu0 %978
    %vm980 = vcmp.ge.f32.partialorder %v979, 40.0
    %v981 = vsel %vm980, %v905, %v969
    %v982 = vsel %vm980, %v969, %v906
    %v983 = vshra.s32 %v924, 1
    %v984 = vshra.s32 %v925, 1
    %v985 = vadd.s32 %v983, %v984
    %v986 = vand.u32 %v924, %v925
    %v987 = vand.u32 %v986, 1
    %v988 = vadd.s32 %v985, %v987
    %vm989 = vcmp.le.s32.totalorder %v29, %v988
    %v990 = vsel %vm989, 1.0, 0.0
    %v991 = vrot.slane %v990, 4
    %v992 = vadd.f32 %v990, %v991
    %v993 = vrot.slane %v992, 2
    %v994 = vadd.f32 %v992, %v993
    %v995 = vrot.slane %v994, 1
    %v996 = vadd.f32 %v994, %v995
    %997 = vadd.xlane.f32.xlu0 %v996
    %v998 = vpop.xlane.xlu0 %997
    %vm999 = vcmp.ge.f32.partialorder %v998, 41.0
    %v1000 = vsel %vm999, %v924, %v988
    %v1001 = vsel %vm999, %v988, %v925
    %v1002 = vshra.s32 %v943, 1
    %v1003 = vshra.s32 %v944, 1
    %v1004 = vadd.s32 %v1002, %v1003
    %v1005 = vand.u32 %v943, %v944
    %v1006 = vand.u32 %v1005, 1
    %v1007 = vadd.s32 %v1004, %v1006
    %vm1008 = vcmp.le.s32.totalorder %v29, %v1007
    %v1009 = vsel %vm1008, 1.0, 0.0
    %v1010 = vrot.slane %v1009, 4
    %v1011 = vadd.f32 %v1009, %v1010
    %v1012 = vrot.slane %v1011, 2
    %v1013 = vadd.f32 %v1011, %v1012
    %v1014 = vrot.slane %v1013, 1
    %v1015 = vadd.f32 %v1013, %v1014
    %1016 = vadd.xlane.f32.xlu0 %v1015
    %v1017 = vpop.xlane.xlu0 %1016
    %vm1018 = vcmp.ge.f32.partialorder %v1017, 744.0
    %v1019 = vsel %vm1018, %v943, %v1007
    %v1020 = vsel %vm1018, %v1007, %v944
    %v1021 = vshra.s32 %v962, 1
    %v1022 = vshra.s32 %v963, 1
    %v1023 = vadd.s32 %v1021, %v1022
    %v1024 = vand.u32 %v962, %v963
    %v1025 = vand.u32 %v1024, 1
    %v1026 = vadd.s32 %v1023, %v1025
    %vm1027 = vcmp.le.s32.totalorder %v29, %v1026
    %v1028 = vsel %vm1027, 1.0, 0.0
    %v1029 = vrot.slane %v1028, 4
    %v1030 = vadd.f32 %v1028, %v1029
    %v1031 = vrot.slane %v1030, 2
    %v1032 = vadd.f32 %v1030, %v1031
    %v1033 = vrot.slane %v1032, 1
    %v1034 = vadd.f32 %v1032, %v1033
    %1035 = vadd.xlane.f32.xlu0 %v1034
    %v1036 = vpop.xlane.xlu0 %1035
    %vm1037 = vcmp.ge.f32.partialorder %v1036, 745.0
    %v1038 = vsel %vm1037, %v962, %v1026
    %v1039 = vsel %vm1037, %v1026, %v963
    %v1040 = vshra.s32 %v981, 1
    %v1041 = vshra.s32 %v982, 1
    %v1042 = vadd.s32 %v1040, %v1041
    %v1043 = vand.u32 %v981, %v982
    %v1044 = vand.u32 %v1043, 1
    %v1045 = vadd.s32 %v1042, %v1044
    %vm1046 = vcmp.le.s32.totalorder %v29, %v1045
    %v1047 = vsel %vm1046, 1.0, 0.0
    %v1048 = vrot.slane %v1047, 4
    %v1049 = vadd.f32 %v1047, %v1048
    %v1050 = vrot.slane %v1049, 2
    %v1051 = vadd.f32 %v1049, %v1050
    %v1052 = vrot.slane %v1051, 1
    %v1053 = vadd.f32 %v1051, %v1052
    %1054 = vadd.xlane.f32.xlu0 %v1053
    %v1055 = vpop.xlane.xlu0 %1054
    %vm1056 = vcmp.ge.f32.partialorder %v1055, 40.0
    %v1057 = vsel %vm1056, %v981, %v1045
    %v1058 = vsel %vm1056, %v1045, %v982
    %v1059 = vshra.s32 %v1000, 1
    %v1060 = vshra.s32 %v1001, 1
    %v1061 = vadd.s32 %v1059, %v1060
    %v1062 = vand.u32 %v1000, %v1001
    %v1063 = vand.u32 %v1062, 1
    %v1064 = vadd.s32 %v1061, %v1063
    %vm1065 = vcmp.le.s32.totalorder %v29, %v1064
    %v1066 = vsel %vm1065, 1.0, 0.0
    %v1067 = vrot.slane %v1066, 4
    %v1068 = vadd.f32 %v1066, %v1067
    %v1069 = vrot.slane %v1068, 2
    %v1070 = vadd.f32 %v1068, %v1069
    %v1071 = vrot.slane %v1070, 1
    %v1072 = vadd.f32 %v1070, %v1071
    %1073 = vadd.xlane.f32.xlu0 %v1072
    %v1074 = vpop.xlane.xlu0 %1073
    %vm1075 = vcmp.ge.f32.partialorder %v1074, 41.0
    %v1076 = vsel %vm1075, %v1000, %v1064
    %v1077 = vsel %vm1075, %v1064, %v1001
    %v1078 = vshra.s32 %v1019, 1
    %v1079 = vshra.s32 %v1020, 1
    %v1080 = vadd.s32 %v1078, %v1079
    %v1081 = vand.u32 %v1019, %v1020
    %v1082 = vand.u32 %v1081, 1
    %v1083 = vadd.s32 %v1080, %v1082
    %vm1084 = vcmp.le.s32.totalorder %v29, %v1083
    %v1085 = vsel %vm1084, 1.0, 0.0
    %v1086 = vrot.slane %v1085, 4
    %v1087 = vadd.f32 %v1085, %v1086
    %v1088 = vrot.slane %v1087, 2
    %v1089 = vadd.f32 %v1087, %v1088
    %v1090 = vrot.slane %v1089, 1
    %v1091 = vadd.f32 %v1089, %v1090
    %1092 = vadd.xlane.f32.xlu0 %v1091
    %v1093 = vpop.xlane.xlu0 %1092
    %vm1094 = vcmp.ge.f32.partialorder %v1093, 744.0
    %v1095 = vsel %vm1094, %v1019, %v1083
    %v1096 = vsel %vm1094, %v1083, %v1020
    %v1097 = vshra.s32 %v1038, 1
    %v1098 = vshra.s32 %v1039, 1
    %v1099 = vadd.s32 %v1097, %v1098
    %v1100 = vand.u32 %v1038, %v1039
    %v1101 = vand.u32 %v1100, 1
    %v1102 = vadd.s32 %v1099, %v1101
    %vm1103 = vcmp.le.s32.totalorder %v29, %v1102
    %v1104 = vsel %vm1103, 1.0, 0.0
    %v1105 = vrot.slane %v1104, 4
    %v1106 = vadd.f32 %v1104, %v1105
    %v1107 = vrot.slane %v1106, 2
    %v1108 = vadd.f32 %v1106, %v1107
    %v1109 = vrot.slane %v1108, 1
    %v1110 = vadd.f32 %v1108, %v1109
    %1111 = vadd.xlane.f32.xlu0 %v1110
    %v1112 = vpop.xlane.xlu0 %1111
    %vm1113 = vcmp.ge.f32.partialorder %v1112, 745.0
    %v1114 = vsel %vm1113, %v1038, %v1102
    %v1115 = vsel %vm1113, %v1102, %v1039
    %v1116 = vshra.s32 %v1057, 1
    %v1117 = vshra.s32 %v1058, 1
    %v1118 = vadd.s32 %v1116, %v1117
    %v1119 = vand.u32 %v1057, %v1058
    %v1120 = vand.u32 %v1119, 1
    %v1121 = vadd.s32 %v1118, %v1120
    %vm1122 = vcmp.le.s32.totalorder %v29, %v1121
    %v1123 = vsel %vm1122, 1.0, 0.0
    %v1124 = vrot.slane %v1123, 4
    %v1125 = vadd.f32 %v1123, %v1124
    %v1126 = vrot.slane %v1125, 2
    %v1127 = vadd.f32 %v1125, %v1126
    %v1128 = vrot.slane %v1127, 1
    %v1129 = vadd.f32 %v1127, %v1128
    %1130 = vadd.xlane.f32.xlu0 %v1129
    %v1131 = vpop.xlane.xlu0 %1130
    %vm1132 = vcmp.ge.f32.partialorder %v1131, 40.0
    %v1133 = vsel %vm1132, %v1057, %v1121
    %v1134 = vsel %vm1132, %v1121, %v1058
    %v1135 = vshra.s32 %v1076, 1
    %v1136 = vshra.s32 %v1077, 1
    %v1137 = vadd.s32 %v1135, %v1136
    %v1138 = vand.u32 %v1076, %v1077
    %v1139 = vand.u32 %v1138, 1
    %v1140 = vadd.s32 %v1137, %v1139
    %vm1141 = vcmp.le.s32.totalorder %v29, %v1140
    %v1142 = vsel %vm1141, 1.0, 0.0
    %v1143 = vrot.slane %v1142, 4
    %v1144 = vadd.f32 %v1142, %v1143
    %v1145 = vrot.slane %v1144, 2
    %v1146 = vadd.f32 %v1144, %v1145
    %v1147 = vrot.slane %v1146, 1
    %v1148 = vadd.f32 %v1146, %v1147
    %1149 = vadd.xlane.f32.xlu0 %v1148
    %v1150 = vpop.xlane.xlu0 %1149
    %vm1151 = vcmp.ge.f32.partialorder %v1150, 41.0
    %v1152 = vsel %vm1151, %v1076, %v1140
    %v1153 = vsel %vm1151, %v1140, %v1077
    %v1154 = vshra.s32 %v1095, 1
    %v1155 = vshra.s32 %v1096, 1
    %v1156 = vadd.s32 %v1154, %v1155
    %v1157 = vand.u32 %v1095, %v1096
    %v1158 = vand.u32 %v1157, 1
    %v1159 = vadd.s32 %v1156, %v1158
    %vm1160 = vcmp.le.s32.totalorder %v29, %v1159
    %v1161 = vsel %vm1160, 1.0, 0.0
    %v1162 = vrot.slane %v1161, 4
    %v1163 = vadd.f32 %v1161, %v1162
    %v1164 = vrot.slane %v1163, 2
    %v1165 = vadd.f32 %v1163, %v1164
    %v1166 = vrot.slane %v1165, 1
    %v1167 = vadd.f32 %v1165, %v1166
    %1168 = vadd.xlane.f32.xlu0 %v1167
    %v1169 = vpop.xlane.xlu0 %1168
    %vm1170 = vcmp.ge.f32.partialorder %v1169, 744.0
    %v1171 = vsel %vm1170, %v1095, %v1159
    %v1172 = vsel %vm1170, %v1159, %v1096
    %v1173 = vshra.s32 %v1114, 1
    %v1174 = vshra.s32 %v1115, 1
    %v1175 = vadd.s32 %v1173, %v1174
    %v1176 = vand.u32 %v1114, %v1115
    %v1177 = vand.u32 %v1176, 1
    %v1178 = vadd.s32 %v1175, %v1177
    %vm1179 = vcmp.le.s32.totalorder %v29, %v1178
    %v1180 = vsel %vm1179, 1.0, 0.0
    %v1181 = vrot.slane %v1180, 4
    %v1182 = vadd.f32 %v1180, %v1181
    %v1183 = vrot.slane %v1182, 2
    %v1184 = vadd.f32 %v1182, %v1183
    %v1185 = vrot.slane %v1184, 1
    %v1186 = vadd.f32 %v1184, %v1185
    %1187 = vadd.xlane.f32.xlu0 %v1186
    %v1188 = vpop.xlane.xlu0 %1187
    %vm1189 = vcmp.ge.f32.partialorder %v1188, 745.0
    %v1190 = vsel %vm1189, %v1114, %v1178
    %v1191 = vsel %vm1189, %v1178, %v1115
    %v1192 = vshra.s32 %v1133, 1
    %v1193 = vshra.s32 %v1134, 1
    %v1194 = vadd.s32 %v1192, %v1193
    %v1195 = vand.u32 %v1133, %v1134
    %v1196 = vand.u32 %v1195, 1
    %v1197 = vadd.s32 %v1194, %v1196
    %vm1198 = vcmp.le.s32.totalorder %v29, %v1197
    %v1199 = vsel %vm1198, 1.0, 0.0
    %v1200 = vrot.slane %v1199, 4
    %v1201 = vadd.f32 %v1199, %v1200
    %v1202 = vrot.slane %v1201, 2
    %v1203 = vadd.f32 %v1201, %v1202
    %v1204 = vrot.slane %v1203, 1
    %v1205 = vadd.f32 %v1203, %v1204
    %1206 = vadd.xlane.f32.xlu0 %v1205
    %v1207 = vpop.xlane.xlu0 %1206
    %vm1208 = vcmp.ge.f32.partialorder %v1207, 40.0
    %v1209 = vsel %vm1208, %v1133, %v1197
    %v1210 = vsel %vm1208, %v1197, %v1134
    %v1211 = vshra.s32 %v1152, 1
    %v1212 = vshra.s32 %v1153, 1
    %v1213 = vadd.s32 %v1211, %v1212
    %v1214 = vand.u32 %v1152, %v1153
    %v1215 = vand.u32 %v1214, 1
    %v1216 = vadd.s32 %v1213, %v1215
    %vm1217 = vcmp.le.s32.totalorder %v29, %v1216
    %v1218 = vsel %vm1217, 1.0, 0.0
    %v1219 = vrot.slane %v1218, 4
    %v1220 = vadd.f32 %v1218, %v1219
    %v1221 = vrot.slane %v1220, 2
    %v1222 = vadd.f32 %v1220, %v1221
    %v1223 = vrot.slane %v1222, 1
    %v1224 = vadd.f32 %v1222, %v1223
    %1225 = vadd.xlane.f32.xlu0 %v1224
    %v1226 = vpop.xlane.xlu0 %1225
    %vm1227 = vcmp.ge.f32.partialorder %v1226, 41.0
    %v1228 = vsel %vm1227, %v1152, %v1216
    %v1229 = vsel %vm1227, %v1216, %v1153
    %v1230 = vshra.s32 %v1171, 1
    %v1231 = vshra.s32 %v1172, 1
    %v1232 = vadd.s32 %v1230, %v1231
    %v1233 = vand.u32 %v1171, %v1172
    %v1234 = vand.u32 %v1233, 1
    %v1235 = vadd.s32 %v1232, %v1234
    %vm1236 = vcmp.le.s32.totalorder %v29, %v1235
    %v1237 = vsel %vm1236, 1.0, 0.0
    %v1238 = vrot.slane %v1237, 4
    %v1239 = vadd.f32 %v1237, %v1238
    %v1240 = vrot.slane %v1239, 2
    %v1241 = vadd.f32 %v1239, %v1240
    %v1242 = vrot.slane %v1241, 1
    %v1243 = vadd.f32 %v1241, %v1242
    %1244 = vadd.xlane.f32.xlu0 %v1243
    %v1245 = vpop.xlane.xlu0 %1244
    %vm1246 = vcmp.ge.f32.partialorder %v1245, 744.0
    %v1247 = vsel %vm1246, %v1171, %v1235
    %v1248 = vsel %vm1246, %v1235, %v1172
    %v1249 = vshra.s32 %v1190, 1
    %v1250 = vshra.s32 %v1191, 1
    %v1251 = vadd.s32 %v1249, %v1250
    %v1252 = vand.u32 %v1190, %v1191
    %v1253 = vand.u32 %v1252, 1
    %v1254 = vadd.s32 %v1251, %v1253
    %vm1255 = vcmp.le.s32.totalorder %v29, %v1254
    %v1256 = vsel %vm1255, 1.0, 0.0
    %v1257 = vrot.slane %v1256, 4
    %v1258 = vadd.f32 %v1256, %v1257
    %v1259 = vrot.slane %v1258, 2
    %v1260 = vadd.f32 %v1258, %v1259
    %v1261 = vrot.slane %v1260, 1
    %v1262 = vadd.f32 %v1260, %v1261
    %1263 = vadd.xlane.f32.xlu0 %v1262
    %v1264 = vpop.xlane.xlu0 %1263
    %vm1265 = vcmp.ge.f32.partialorder %v1264, 745.0
    %v1266 = vsel %vm1265, %v1190, %v1254
    %v1267 = vsel %vm1265, %v1254, %v1191
    %v1268 = vshra.s32 %v1209, 1
    %v1269 = vshra.s32 %v1210, 1
    %v1270 = vadd.s32 %v1268, %v1269
    %v1271 = vand.u32 %v1209, %v1210
    %v1272 = vand.u32 %v1271, 1
    %v1273 = vadd.s32 %v1270, %v1272
    %vm1274 = vcmp.le.s32.totalorder %v29, %v1273
    %v1275 = vsel %vm1274, 1.0, 0.0
    %v1276 = vrot.slane %v1275, 4
    %v1277 = vadd.f32 %v1275, %v1276
    %v1278 = vrot.slane %v1277, 2
    %v1279 = vadd.f32 %v1277, %v1278
    %v1280 = vrot.slane %v1279, 1
    %v1281 = vadd.f32 %v1279, %v1280
    %1282 = vadd.xlane.f32.xlu0 %v1281
    %v1283 = vpop.xlane.xlu0 %1282
    %vm1284 = vcmp.ge.f32.partialorder %v1283, 40.0
    %v1285 = vsel %vm1284, %v1209, %v1273
    %v1286 = vsel %vm1284, %v1273, %v1210
    %v1287 = vshra.s32 %v1228, 1
    %v1288 = vshra.s32 %v1229, 1
    %v1289 = vadd.s32 %v1287, %v1288
    %v1290 = vand.u32 %v1228, %v1229
    %v1291 = vand.u32 %v1290, 1
    %v1292 = vadd.s32 %v1289, %v1291
    %vm1293 = vcmp.le.s32.totalorder %v29, %v1292
    %v1294 = vsel %vm1293, 1.0, 0.0
    %v1295 = vrot.slane %v1294, 4
    %v1296 = vadd.f32 %v1294, %v1295
    %v1297 = vrot.slane %v1296, 2
    %v1298 = vadd.f32 %v1296, %v1297
    %v1299 = vrot.slane %v1298, 1
    %v1300 = vadd.f32 %v1298, %v1299
    %1301 = vadd.xlane.f32.xlu0 %v1300
    %v1302 = vpop.xlane.xlu0 %1301
    %vm1303 = vcmp.ge.f32.partialorder %v1302, 41.0
    %v1304 = vsel %vm1303, %v1228, %v1292
    %v1305 = vsel %vm1303, %v1292, %v1229
    %v1306 = vshra.s32 %v1247, 1
    %v1307 = vshra.s32 %v1248, 1
    %v1308 = vadd.s32 %v1306, %v1307
    %v1309 = vand.u32 %v1247, %v1248
    %v1310 = vand.u32 %v1309, 1
    %v1311 = vadd.s32 %v1308, %v1310
    %vm1312 = vcmp.le.s32.totalorder %v29, %v1311
    %v1313 = vsel %vm1312, 1.0, 0.0
    %v1314 = vrot.slane %v1313, 4
    %v1315 = vadd.f32 %v1313, %v1314
    %v1316 = vrot.slane %v1315, 2
    %v1317 = vadd.f32 %v1315, %v1316
    %v1318 = vrot.slane %v1317, 1
    %v1319 = vadd.f32 %v1317, %v1318
    %1320 = vadd.xlane.f32.xlu0 %v1319
    %v1321 = vpop.xlane.xlu0 %1320
    %vm1322 = vcmp.ge.f32.partialorder %v1321, 744.0
    %v1323 = vsel %vm1322, %v1247, %v1311
    %v1324 = vsel %vm1322, %v1311, %v1248
    %v1325 = vshra.s32 %v1266, 1
    %v1326 = vshra.s32 %v1267, 1
    %v1327 = vadd.s32 %v1325, %v1326
    %v1328 = vand.u32 %v1266, %v1267
    %v1329 = vand.u32 %v1328, 1
    %v1330 = vadd.s32 %v1327, %v1329
    %vm1331 = vcmp.le.s32.totalorder %v29, %v1330
    %v1332 = vsel %vm1331, 1.0, 0.0
    %v1333 = vrot.slane %v1332, 4
    %v1334 = vadd.f32 %v1332, %v1333
    %v1335 = vrot.slane %v1334, 2
    %v1336 = vadd.f32 %v1334, %v1335
    %v1337 = vrot.slane %v1336, 1
    %v1338 = vadd.f32 %v1336, %v1337
    %1339 = vadd.xlane.f32.xlu0 %v1338
    %v1340 = vpop.xlane.xlu0 %1339
    %vm1341 = vcmp.ge.f32.partialorder %v1340, 745.0
    %v1342 = vsel %vm1341, %v1266, %v1330
    %v1343 = vsel %vm1341, %v1330, %v1267
    %v1344 = vshra.s32 %v1285, 1
    %v1345 = vshra.s32 %v1286, 1
    %v1346 = vadd.s32 %v1344, %v1345
    %v1347 = vand.u32 %v1285, %v1286
    %v1348 = vand.u32 %v1347, 1
    %v1349 = vadd.s32 %v1346, %v1348
    %vm1350 = vcmp.le.s32.totalorder %v29, %v1349
    %v1351 = vsel %vm1350, 1.0, 0.0
    %v1352 = vrot.slane %v1351, 4
    %v1353 = vadd.f32 %v1351, %v1352
    %v1354 = vrot.slane %v1353, 2
    %v1355 = vadd.f32 %v1353, %v1354
    %v1356 = vrot.slane %v1355, 1
    %v1357 = vadd.f32 %v1355, %v1356
    %1358 = vadd.xlane.f32.xlu0 %v1357
    %v1359 = vpop.xlane.xlu0 %1358
    %vm1360 = vcmp.ge.f32.partialorder %v1359, 40.0
    %v1361 = vsel %vm1360, %v1285, %v1349
    %v1362 = vsel %vm1360, %v1349, %v1286
    %v1363 = vshra.s32 %v1304, 1
    %v1364 = vshra.s32 %v1305, 1
    %v1365 = vadd.s32 %v1363, %v1364
    %v1366 = vand.u32 %v1304, %v1305
    %v1367 = vand.u32 %v1366, 1
    %v1368 = vadd.s32 %v1365, %v1367
    %vm1369 = vcmp.le.s32.totalorder %v29, %v1368
    %v1370 = vsel %vm1369, 1.0, 0.0
    %v1371 = vrot.slane %v1370, 4
    %v1372 = vadd.f32 %v1370, %v1371
    %v1373 = vrot.slane %v1372, 2
    %v1374 = vadd.f32 %v1372, %v1373
    %v1375 = vrot.slane %v1374, 1
    %v1376 = vadd.f32 %v1374, %v1375
    %1377 = vadd.xlane.f32.xlu0 %v1376
    %v1378 = vpop.xlane.xlu0 %1377
    %vm1379 = vcmp.ge.f32.partialorder %v1378, 41.0
    %v1380 = vsel %vm1379, %v1304, %v1368
    %v1381 = vsel %vm1379, %v1368, %v1305
    %v1382 = vshra.s32 %v1323, 1
    %v1383 = vshra.s32 %v1324, 1
    %v1384 = vadd.s32 %v1382, %v1383
    %v1385 = vand.u32 %v1323, %v1324
    %v1386 = vand.u32 %v1385, 1
    %v1387 = vadd.s32 %v1384, %v1386
    %vm1388 = vcmp.le.s32.totalorder %v29, %v1387
    %v1389 = vsel %vm1388, 1.0, 0.0
    %v1390 = vrot.slane %v1389, 4
    %v1391 = vadd.f32 %v1389, %v1390
    %v1392 = vrot.slane %v1391, 2
    %v1393 = vadd.f32 %v1391, %v1392
    %v1394 = vrot.slane %v1393, 1
    %v1395 = vadd.f32 %v1393, %v1394
    %1396 = vadd.xlane.f32.xlu0 %v1395
    %v1397 = vpop.xlane.xlu0 %1396
    %vm1398 = vcmp.ge.f32.partialorder %v1397, 744.0
    %v1399 = vsel %vm1398, %v1323, %v1387
    %v1400 = vsel %vm1398, %v1387, %v1324
    %v1401 = vshra.s32 %v1342, 1
    %v1402 = vshra.s32 %v1343, 1
    %v1403 = vadd.s32 %v1401, %v1402
    %v1404 = vand.u32 %v1342, %v1343
    %v1405 = vand.u32 %v1404, 1
    %v1406 = vadd.s32 %v1403, %v1405
    %vm1407 = vcmp.le.s32.totalorder %v29, %v1406
    %v1408 = vsel %vm1407, 1.0, 0.0
    %v1409 = vrot.slane %v1408, 4
    %v1410 = vadd.f32 %v1408, %v1409
    %v1411 = vrot.slane %v1410, 2
    %v1412 = vadd.f32 %v1410, %v1411
    %v1413 = vrot.slane %v1412, 1
    %v1414 = vadd.f32 %v1412, %v1413
    %1415 = vadd.xlane.f32.xlu0 %v1414
    %v1416 = vpop.xlane.xlu0 %1415
    %vm1417 = vcmp.ge.f32.partialorder %v1416, 745.0
    %v1418 = vsel %vm1417, %v1342, %v1406
    %v1419 = vsel %vm1417, %v1406, %v1343
    %v1420 = vshra.s32 %v1361, 1
    %v1421 = vshra.s32 %v1362, 1
    %v1422 = vadd.s32 %v1420, %v1421
    %v1423 = vand.u32 %v1361, %v1362
    %v1424 = vand.u32 %v1423, 1
    %v1425 = vadd.s32 %v1422, %v1424
    %vm1426 = vcmp.le.s32.totalorder %v29, %v1425
    %v1427 = vsel %vm1426, 1.0, 0.0
    %v1428 = vrot.slane %v1427, 4
    %v1429 = vadd.f32 %v1427, %v1428
    %v1430 = vrot.slane %v1429, 2
    %v1431 = vadd.f32 %v1429, %v1430
    %v1432 = vrot.slane %v1431, 1
    %v1433 = vadd.f32 %v1431, %v1432
    %1434 = vadd.xlane.f32.xlu0 %v1433
    %v1435 = vpop.xlane.xlu0 %1434
    %vm1436 = vcmp.ge.f32.partialorder %v1435, 40.0
    %v1437 = vsel %vm1436, %v1361, %v1425
    %v1438 = vsel %vm1436, %v1425, %v1362
    %v1439 = vshra.s32 %v1380, 1
    %v1440 = vshra.s32 %v1381, 1
    %v1441 = vadd.s32 %v1439, %v1440
    %v1442 = vand.u32 %v1380, %v1381
    %v1443 = vand.u32 %v1442, 1
    %v1444 = vadd.s32 %v1441, %v1443
    %vm1445 = vcmp.le.s32.totalorder %v29, %v1444
    %v1446 = vsel %vm1445, 1.0, 0.0
    %v1447 = vrot.slane %v1446, 4
    %v1448 = vadd.f32 %v1446, %v1447
    %v1449 = vrot.slane %v1448, 2
    %v1450 = vadd.f32 %v1448, %v1449
    %v1451 = vrot.slane %v1450, 1
    %v1452 = vadd.f32 %v1450, %v1451
    %1453 = vadd.xlane.f32.xlu0 %v1452
    %v1454 = vpop.xlane.xlu0 %1453
    %vm1455 = vcmp.ge.f32.partialorder %v1454, 41.0
    %v1456 = vsel %vm1455, %v1380, %v1444
    %v1457 = vsel %vm1455, %v1444, %v1381
    %v1458 = vshra.s32 %v1399, 1
    %v1459 = vshra.s32 %v1400, 1
    %v1460 = vadd.s32 %v1458, %v1459
    %v1461 = vand.u32 %v1399, %v1400
    %v1462 = vand.u32 %v1461, 1
    %v1463 = vadd.s32 %v1460, %v1462
    %vm1464 = vcmp.le.s32.totalorder %v29, %v1463
    %v1465 = vsel %vm1464, 1.0, 0.0
    %v1466 = vrot.slane %v1465, 4
    %v1467 = vadd.f32 %v1465, %v1466
    %v1468 = vrot.slane %v1467, 2
    %v1469 = vadd.f32 %v1467, %v1468
    %v1470 = vrot.slane %v1469, 1
    %v1471 = vadd.f32 %v1469, %v1470
    %1472 = vadd.xlane.f32.xlu0 %v1471
    %v1473 = vpop.xlane.xlu0 %1472
    %vm1474 = vcmp.ge.f32.partialorder %v1473, 744.0
    %v1475 = vsel %vm1474, %v1399, %v1463
    %v1476 = vsel %vm1474, %v1463, %v1400
    %v1477 = vshra.s32 %v1418, 1
    %v1478 = vshra.s32 %v1419, 1
    %v1479 = vadd.s32 %v1477, %v1478
    %v1480 = vand.u32 %v1418, %v1419
    %v1481 = vand.u32 %v1480, 1
    %v1482 = vadd.s32 %v1479, %v1481
    %vm1483 = vcmp.le.s32.totalorder %v29, %v1482
    %v1484 = vsel %vm1483, 1.0, 0.0
    %v1485 = vrot.slane %v1484, 4
    %v1486 = vadd.f32 %v1484, %v1485
    %v1487 = vrot.slane %v1486, 2
    %v1488 = vadd.f32 %v1486, %v1487
    %v1489 = vrot.slane %v1488, 1
    %v1490 = vadd.f32 %v1488, %v1489
    %1491 = vadd.xlane.f32.xlu0 %v1490
    %v1492 = vpop.xlane.xlu0 %1491
    %vm1493 = vcmp.ge.f32.partialorder %v1492, 745.0
    %v1494 = vsel %vm1493, %v1418, %v1482
    %v1495 = vsel %vm1493, %v1482, %v1419
    %v1496 = vshra.s32 %v1437, 1
    %v1497 = vshra.s32 %v1438, 1
    %v1498 = vadd.s32 %v1496, %v1497
    %v1499 = vand.u32 %v1437, %v1438
    %v1500 = vand.u32 %v1499, 1
    %v1501 = vadd.s32 %v1498, %v1500
    %vm1502 = vcmp.le.s32.totalorder %v29, %v1501
    %v1503 = vsel %vm1502, 1.0, 0.0
    %v1504 = vrot.slane %v1503, 4
    %v1505 = vadd.f32 %v1503, %v1504
    %v1506 = vrot.slane %v1505, 2
    %v1507 = vadd.f32 %v1505, %v1506
    %v1508 = vrot.slane %v1507, 1
    %v1509 = vadd.f32 %v1507, %v1508
    %1510 = vadd.xlane.f32.xlu0 %v1509
    %v1511 = vpop.xlane.xlu0 %1510
    %vm1512 = vcmp.ge.f32.partialorder %v1511, 40.0
    %v1513 = vsel %vm1512, %v1437, %v1501
    %v1514 = vsel %vm1512, %v1501, %v1438
    %v1515 = vshra.s32 %v1456, 1
    %v1516 = vshra.s32 %v1457, 1
    %v1517 = vadd.s32 %v1515, %v1516
    %v1518 = vand.u32 %v1456, %v1457
    %v1519 = vand.u32 %v1518, 1
    %v1520 = vadd.s32 %v1517, %v1519
    %vm1521 = vcmp.le.s32.totalorder %v29, %v1520
    %v1522 = vsel %vm1521, 1.0, 0.0
    %v1523 = vrot.slane %v1522, 4
    %v1524 = vadd.f32 %v1522, %v1523
    %v1525 = vrot.slane %v1524, 2
    %v1526 = vadd.f32 %v1524, %v1525
    %v1527 = vrot.slane %v1526, 1
    %v1528 = vadd.f32 %v1526, %v1527
    %1529 = vadd.xlane.f32.xlu0 %v1528
    %v1530 = vpop.xlane.xlu0 %1529
    %vm1531 = vcmp.ge.f32.partialorder %v1530, 41.0
    %v1532 = vsel %vm1531, %v1456, %v1520
    %v1533 = vsel %vm1531, %v1520, %v1457
    %v1534 = vshra.s32 %v1475, 1
    %v1535 = vshra.s32 %v1476, 1
    %v1536 = vadd.s32 %v1534, %v1535
    %v1537 = vand.u32 %v1475, %v1476
    %v1538 = vand.u32 %v1537, 1
    %v1539 = vadd.s32 %v1536, %v1538
    %vm1540 = vcmp.le.s32.totalorder %v29, %v1539
    %v1541 = vsel %vm1540, 1.0, 0.0
    %v1542 = vrot.slane %v1541, 4
    %v1543 = vadd.f32 %v1541, %v1542
    %v1544 = vrot.slane %v1543, 2
    %v1545 = vadd.f32 %v1543, %v1544
    %v1546 = vrot.slane %v1545, 1
    %v1547 = vadd.f32 %v1545, %v1546
    %1548 = vadd.xlane.f32.xlu0 %v1547
    %v1549 = vpop.xlane.xlu0 %1548
    %vm1550 = vcmp.ge.f32.partialorder %v1549, 744.0
    %v1551 = vsel %vm1550, %v1475, %v1539
    %v1552 = vsel %vm1550, %v1539, %v1476
    %v1553 = vshra.s32 %v1494, 1
    %v1554 = vshra.s32 %v1495, 1
    %v1555 = vadd.s32 %v1553, %v1554
    %v1556 = vand.u32 %v1494, %v1495
    %v1557 = vand.u32 %v1556, 1
    %v1558 = vadd.s32 %v1555, %v1557
    %vm1559 = vcmp.le.s32.totalorder %v29, %v1558
    %v1560 = vsel %vm1559, 1.0, 0.0
    %v1561 = vrot.slane %v1560, 4
    %v1562 = vadd.f32 %v1560, %v1561
    %v1563 = vrot.slane %v1562, 2
    %v1564 = vadd.f32 %v1562, %v1563
    %v1565 = vrot.slane %v1564, 1
    %v1566 = vadd.f32 %v1564, %v1565
    %1567 = vadd.xlane.f32.xlu0 %v1566
    %v1568 = vpop.xlane.xlu0 %1567
    %vm1569 = vcmp.ge.f32.partialorder %v1568, 745.0
    %v1570 = vsel %vm1569, %v1494, %v1558
    %v1571 = vsel %vm1569, %v1558, %v1495
    %v1572 = vshra.s32 %v1513, 1
    %v1573 = vshra.s32 %v1514, 1
    %v1574 = vadd.s32 %v1572, %v1573
    %v1575 = vand.u32 %v1513, %v1514
    %v1576 = vand.u32 %v1575, 1
    %v1577 = vadd.s32 %v1574, %v1576
    %vm1578 = vcmp.le.s32.totalorder %v29, %v1577
    %v1579 = vsel %vm1578, 1.0, 0.0
    %v1580 = vrot.slane %v1579, 4
    %v1581 = vadd.f32 %v1579, %v1580
    %v1582 = vrot.slane %v1581, 2
    %v1583 = vadd.f32 %v1581, %v1582
    %v1584 = vrot.slane %v1583, 1
    %v1585 = vadd.f32 %v1583, %v1584
    %1586 = vadd.xlane.f32.xlu0 %v1585
    %v1587 = vpop.xlane.xlu0 %1586
    %vm1588 = vcmp.ge.f32.partialorder %v1587, 40.0
    %v1589 = vsel %vm1588, %v1513, %v1577
    %v1590 = vsel %vm1588, %v1577, %v1514
    %v1591 = vshra.s32 %v1532, 1
    %v1592 = vshra.s32 %v1533, 1
    %v1593 = vadd.s32 %v1591, %v1592
    %v1594 = vand.u32 %v1532, %v1533
    %v1595 = vand.u32 %v1594, 1
    %v1596 = vadd.s32 %v1593, %v1595
    %vm1597 = vcmp.le.s32.totalorder %v29, %v1596
    %v1598 = vsel %vm1597, 1.0, 0.0
    %v1599 = vrot.slane %v1598, 4
    %v1600 = vadd.f32 %v1598, %v1599
    %v1601 = vrot.slane %v1600, 2
    %v1602 = vadd.f32 %v1600, %v1601
    %v1603 = vrot.slane %v1602, 1
    %v1604 = vadd.f32 %v1602, %v1603
    %1605 = vadd.xlane.f32.xlu0 %v1604
    %v1606 = vpop.xlane.xlu0 %1605
    %vm1607 = vcmp.ge.f32.partialorder %v1606, 41.0
    %v1608 = vsel %vm1607, %v1532, %v1596
    %v1609 = vsel %vm1607, %v1596, %v1533
    %v1610 = vshra.s32 %v1551, 1
    %v1611 = vshra.s32 %v1552, 1
    %v1612 = vadd.s32 %v1610, %v1611
    %v1613 = vand.u32 %v1551, %v1552
    %v1614 = vand.u32 %v1613, 1
    %v1615 = vadd.s32 %v1612, %v1614
    %vm1616 = vcmp.le.s32.totalorder %v29, %v1615
    %v1617 = vsel %vm1616, 1.0, 0.0
    %v1618 = vrot.slane %v1617, 4
    %v1619 = vadd.f32 %v1617, %v1618
    %v1620 = vrot.slane %v1619, 2
    %v1621 = vadd.f32 %v1619, %v1620
    %v1622 = vrot.slane %v1621, 1
    %v1623 = vadd.f32 %v1621, %v1622
    %1624 = vadd.xlane.f32.xlu0 %v1623
    %v1625 = vpop.xlane.xlu0 %1624
    %vm1626 = vcmp.ge.f32.partialorder %v1625, 744.0
    %v1627 = vsel %vm1626, %v1551, %v1615
    %v1628 = vsel %vm1626, %v1615, %v1552
    %v1629 = vshra.s32 %v1570, 1
    %v1630 = vshra.s32 %v1571, 1
    %v1631 = vadd.s32 %v1629, %v1630
    %v1632 = vand.u32 %v1570, %v1571
    %v1633 = vand.u32 %v1632, 1
    %v1634 = vadd.s32 %v1631, %v1633
    %vm1635 = vcmp.le.s32.totalorder %v29, %v1634
    %v1636 = vsel %vm1635, 1.0, 0.0
    %v1637 = vrot.slane %v1636, 4
    %v1638 = vadd.f32 %v1636, %v1637
    %v1639 = vrot.slane %v1638, 2
    %v1640 = vadd.f32 %v1638, %v1639
    %v1641 = vrot.slane %v1640, 1
    %v1642 = vadd.f32 %v1640, %v1641
    %1643 = vadd.xlane.f32.xlu0 %v1642
    %v1644 = vpop.xlane.xlu0 %1643
    %vm1645 = vcmp.ge.f32.partialorder %v1644, 745.0
    %v1646 = vsel %vm1645, %v1570, %v1634
    %v1647 = vsel %vm1645, %v1634, %v1571
    %v1648 = vshra.s32 %v1589, 1
    %v1649 = vshra.s32 %v1590, 1
    %v1650 = vadd.s32 %v1648, %v1649
    %v1651 = vand.u32 %v1589, %v1590
    %v1652 = vand.u32 %v1651, 1
    %v1653 = vadd.s32 %v1650, %v1652
    %vm1654 = vcmp.le.s32.totalorder %v29, %v1653
    %v1655 = vsel %vm1654, 1.0, 0.0
    %v1656 = vrot.slane %v1655, 4
    %v1657 = vadd.f32 %v1655, %v1656
    %v1658 = vrot.slane %v1657, 2
    %v1659 = vadd.f32 %v1657, %v1658
    %v1660 = vrot.slane %v1659, 1
    %v1661 = vadd.f32 %v1659, %v1660
    %1662 = vadd.xlane.f32.xlu0 %v1661
    %v1663 = vpop.xlane.xlu0 %1662
    %vm1664 = vcmp.ge.f32.partialorder %v1663, 40.0
    %v1665 = vsel %vm1664, %v1589, %v1653
    %v1666 = vsel %vm1664, %v1653, %v1590
    %v1667 = vshra.s32 %v1608, 1
    %v1668 = vshra.s32 %v1609, 1
    %v1669 = vadd.s32 %v1667, %v1668
    %v1670 = vand.u32 %v1608, %v1609
    %v1671 = vand.u32 %v1670, 1
    %v1672 = vadd.s32 %v1669, %v1671
    %vm1673 = vcmp.le.s32.totalorder %v29, %v1672
    %v1674 = vsel %vm1673, 1.0, 0.0
    %v1675 = vrot.slane %v1674, 4
    %v1676 = vadd.f32 %v1674, %v1675
    %v1677 = vrot.slane %v1676, 2
    %v1678 = vadd.f32 %v1676, %v1677
    %v1679 = vrot.slane %v1678, 1
    %v1680 = vadd.f32 %v1678, %v1679
    %1681 = vadd.xlane.f32.xlu0 %v1680
    %v1682 = vpop.xlane.xlu0 %1681
    %vm1683 = vcmp.ge.f32.partialorder %v1682, 41.0
    %v1684 = vsel %vm1683, %v1608, %v1672
    %v1685 = vsel %vm1683, %v1672, %v1609
    %v1686 = vshra.s32 %v1627, 1
    %v1687 = vshra.s32 %v1628, 1
    %v1688 = vadd.s32 %v1686, %v1687
    %v1689 = vand.u32 %v1627, %v1628
    %v1690 = vand.u32 %v1689, 1
    %v1691 = vadd.s32 %v1688, %v1690
    %vm1692 = vcmp.le.s32.totalorder %v29, %v1691
    %v1693 = vsel %vm1692, 1.0, 0.0
    %v1694 = vrot.slane %v1693, 4
    %v1695 = vadd.f32 %v1693, %v1694
    %v1696 = vrot.slane %v1695, 2
    %v1697 = vadd.f32 %v1695, %v1696
    %v1698 = vrot.slane %v1697, 1
    %v1699 = vadd.f32 %v1697, %v1698
    %1700 = vadd.xlane.f32.xlu0 %v1699
    %v1701 = vpop.xlane.xlu0 %1700
    %vm1702 = vcmp.ge.f32.partialorder %v1701, 744.0
    %v1703 = vsel %vm1702, %v1627, %v1691
    %v1704 = vsel %vm1702, %v1691, %v1628
    %v1705 = vshra.s32 %v1646, 1
    %v1706 = vshra.s32 %v1647, 1
    %v1707 = vadd.s32 %v1705, %v1706
    %v1708 = vand.u32 %v1646, %v1647
    %v1709 = vand.u32 %v1708, 1
    %v1710 = vadd.s32 %v1707, %v1709
    %vm1711 = vcmp.le.s32.totalorder %v29, %v1710
    %v1712 = vsel %vm1711, 1.0, 0.0
    %v1713 = vrot.slane %v1712, 4
    %v1714 = vadd.f32 %v1712, %v1713
    %v1715 = vrot.slane %v1714, 2
    %v1716 = vadd.f32 %v1714, %v1715
    %v1717 = vrot.slane %v1716, 1
    %v1718 = vadd.f32 %v1716, %v1717
    %1719 = vadd.xlane.f32.xlu0 %v1718
    %v1720 = vpop.xlane.xlu0 %1719
    %vm1721 = vcmp.ge.f32.partialorder %v1720, 745.0
    %v1722 = vsel %vm1721, %v1646, %v1710
    %v1723 = vsel %vm1721, %v1710, %v1647
    %v1724 = vshra.s32 %v1665, 1
    %v1725 = vshra.s32 %v1666, 1
    %v1726 = vadd.s32 %v1724, %v1725
    %v1727 = vand.u32 %v1665, %v1666
    %v1728 = vand.u32 %v1727, 1
    %v1729 = vadd.s32 %v1726, %v1728
    %vm1730 = vcmp.le.s32.totalorder %v29, %v1729
    %v1731 = vsel %vm1730, 1.0, 0.0
    %v1732 = vrot.slane %v1731, 4
    %v1733 = vadd.f32 %v1731, %v1732
    %v1734 = vrot.slane %v1733, 2
    %v1735 = vadd.f32 %v1733, %v1734
    %v1736 = vrot.slane %v1735, 1
    %v1737 = vadd.f32 %v1735, %v1736
    %1738 = vadd.xlane.f32.xlu0 %v1737
    %v1739 = vpop.xlane.xlu0 %1738
    %vm1740 = vcmp.ge.f32.partialorder %v1739, 40.0
    %v1741 = vsel %vm1740, %v1665, %v1729
    %v1742 = vsel %vm1740, %v1729, %v1666
    %v1743 = vshra.s32 %v1684, 1
    %v1744 = vshra.s32 %v1685, 1
    %v1745 = vadd.s32 %v1743, %v1744
    %v1746 = vand.u32 %v1684, %v1685
    %v1747 = vand.u32 %v1746, 1
    %v1748 = vadd.s32 %v1745, %v1747
    %vm1749 = vcmp.le.s32.totalorder %v29, %v1748
    %v1750 = vsel %vm1749, 1.0, 0.0
    %v1751 = vrot.slane %v1750, 4
    %v1752 = vadd.f32 %v1750, %v1751
    %v1753 = vrot.slane %v1752, 2
    %v1754 = vadd.f32 %v1752, %v1753
    %v1755 = vrot.slane %v1754, 1
    %v1756 = vadd.f32 %v1754, %v1755
    %1757 = vadd.xlane.f32.xlu0 %v1756
    %v1758 = vpop.xlane.xlu0 %1757
    %vm1759 = vcmp.ge.f32.partialorder %v1758, 41.0
    %v1760 = vsel %vm1759, %v1684, %v1748
    %v1761 = vsel %vm1759, %v1748, %v1685
    %v1762 = vshra.s32 %v1703, 1
    %v1763 = vshra.s32 %v1704, 1
    %v1764 = vadd.s32 %v1762, %v1763
    %v1765 = vand.u32 %v1703, %v1704
    %v1766 = vand.u32 %v1765, 1
    %v1767 = vadd.s32 %v1764, %v1766
    %vm1768 = vcmp.le.s32.totalorder %v29, %v1767
    %v1769 = vsel %vm1768, 1.0, 0.0
    %v1770 = vrot.slane %v1769, 4
    %v1771 = vadd.f32 %v1769, %v1770
    %v1772 = vrot.slane %v1771, 2
    %v1773 = vadd.f32 %v1771, %v1772
    %v1774 = vrot.slane %v1773, 1
    %v1775 = vadd.f32 %v1773, %v1774
    %1776 = vadd.xlane.f32.xlu0 %v1775
    %v1777 = vpop.xlane.xlu0 %1776
    %vm1778 = vcmp.ge.f32.partialorder %v1777, 744.0
    %v1779 = vsel %vm1778, %v1703, %v1767
    %v1780 = vsel %vm1778, %v1767, %v1704
    %v1781 = vshra.s32 %v1722, 1
    %v1782 = vshra.s32 %v1723, 1
    %v1783 = vadd.s32 %v1781, %v1782
    %v1784 = vand.u32 %v1722, %v1723
    %v1785 = vand.u32 %v1784, 1
    %v1786 = vadd.s32 %v1783, %v1785
    %vm1787 = vcmp.le.s32.totalorder %v29, %v1786
    %v1788 = vsel %vm1787, 1.0, 0.0
    %v1789 = vrot.slane %v1788, 4
    %v1790 = vadd.f32 %v1788, %v1789
    %v1791 = vrot.slane %v1790, 2
    %v1792 = vadd.f32 %v1790, %v1791
    %v1793 = vrot.slane %v1792, 1
    %v1794 = vadd.f32 %v1792, %v1793
    %1795 = vadd.xlane.f32.xlu0 %v1794
    %v1796 = vpop.xlane.xlu0 %1795
    %vm1797 = vcmp.ge.f32.partialorder %v1796, 745.0
    %v1798 = vsel %vm1797, %v1722, %v1786
    %v1799 = vsel %vm1797, %v1786, %v1723
    %v1800 = vshra.s32 %v1741, 1
    %v1801 = vshra.s32 %v1742, 1
    %v1802 = vadd.s32 %v1800, %v1801
    %v1803 = vand.u32 %v1741, %v1742
    %v1804 = vand.u32 %v1803, 1
    %v1805 = vadd.s32 %v1802, %v1804
    %vm1806 = vcmp.le.s32.totalorder %v29, %v1805
    %v1807 = vsel %vm1806, 1.0, 0.0
    %v1808 = vrot.slane %v1807, 4
    %v1809 = vadd.f32 %v1807, %v1808
    %v1810 = vrot.slane %v1809, 2
    %v1811 = vadd.f32 %v1809, %v1810
    %v1812 = vrot.slane %v1811, 1
    %v1813 = vadd.f32 %v1811, %v1812
    %1814 = vadd.xlane.f32.xlu0 %v1813
    %v1815 = vpop.xlane.xlu0 %1814
    %vm1816 = vcmp.ge.f32.partialorder %v1815, 40.0
    %v1817 = vsel %vm1816, %v1741, %v1805
    %v1818 = vsel %vm1816, %v1805, %v1742
    %v1819 = vshra.s32 %v1760, 1
    %v1820 = vshra.s32 %v1761, 1
    %v1821 = vadd.s32 %v1819, %v1820
    %v1822 = vand.u32 %v1760, %v1761
    %v1823 = vand.u32 %v1822, 1
    %v1824 = vadd.s32 %v1821, %v1823
    %vm1825 = vcmp.le.s32.totalorder %v29, %v1824
    %v1826 = vsel %vm1825, 1.0, 0.0
    %v1827 = vrot.slane %v1826, 4
    %v1828 = vadd.f32 %v1826, %v1827
    %v1829 = vrot.slane %v1828, 2
    %v1830 = vadd.f32 %v1828, %v1829
    %v1831 = vrot.slane %v1830, 1
    %v1832 = vadd.f32 %v1830, %v1831
    %1833 = vadd.xlane.f32.xlu0 %v1832
    %v1834 = vpop.xlane.xlu0 %1833
    %vm1835 = vcmp.ge.f32.partialorder %v1834, 41.0
    %v1836 = vsel %vm1835, %v1760, %v1824
    %v1837 = vsel %vm1835, %v1824, %v1761
    %v1838 = vshra.s32 %v1779, 1
    %v1839 = vshra.s32 %v1780, 1
    %v1840 = vadd.s32 %v1838, %v1839
    %v1841 = vand.u32 %v1779, %v1780
    %v1842 = vand.u32 %v1841, 1
    %v1843 = vadd.s32 %v1840, %v1842
    %vm1844 = vcmp.le.s32.totalorder %v29, %v1843
    %v1845 = vsel %vm1844, 1.0, 0.0
    %v1846 = vrot.slane %v1845, 4
    %v1847 = vadd.f32 %v1845, %v1846
    %v1848 = vrot.slane %v1847, 2
    %v1849 = vadd.f32 %v1847, %v1848
    %v1850 = vrot.slane %v1849, 1
    %v1851 = vadd.f32 %v1849, %v1850
    %1852 = vadd.xlane.f32.xlu0 %v1851
    %v1853 = vpop.xlane.xlu0 %1852
    %vm1854 = vcmp.ge.f32.partialorder %v1853, 744.0
    %v1855 = vsel %vm1854, %v1779, %v1843
    %v1856 = vsel %vm1854, %v1843, %v1780
    %v1857 = vshra.s32 %v1798, 1
    %v1858 = vshra.s32 %v1799, 1
    %v1859 = vadd.s32 %v1857, %v1858
    %v1860 = vand.u32 %v1798, %v1799
    %v1861 = vand.u32 %v1860, 1
    %v1862 = vadd.s32 %v1859, %v1861
    %vm1863 = vcmp.le.s32.totalorder %v29, %v1862
    %v1864 = vsel %vm1863, 1.0, 0.0
    %v1865 = vrot.slane %v1864, 4
    %v1866 = vadd.f32 %v1864, %v1865
    %v1867 = vrot.slane %v1866, 2
    %v1868 = vadd.f32 %v1866, %v1867
    %v1869 = vrot.slane %v1868, 1
    %v1870 = vadd.f32 %v1868, %v1869
    %1871 = vadd.xlane.f32.xlu0 %v1870
    %v1872 = vpop.xlane.xlu0 %1871
    %vm1873 = vcmp.ge.f32.partialorder %v1872, 745.0
    %v1874 = vsel %vm1873, %v1798, %v1862
    %v1875 = vsel %vm1873, %v1862, %v1799
    %v1876 = vshra.s32 %v1817, 1
    %v1877 = vshra.s32 %v1818, 1
    %v1878 = vadd.s32 %v1876, %v1877
    %v1879 = vand.u32 %v1817, %v1818
    %v1880 = vand.u32 %v1879, 1
    %v1881 = vadd.s32 %v1878, %v1880
    %vm1882 = vcmp.le.s32.totalorder %v29, %v1881
    %v1883 = vsel %vm1882, 1.0, 0.0
    %v1884 = vrot.slane %v1883, 4
    %v1885 = vadd.f32 %v1883, %v1884
    %v1886 = vrot.slane %v1885, 2
    %v1887 = vadd.f32 %v1885, %v1886
    %v1888 = vrot.slane %v1887, 1
    %v1889 = vadd.f32 %v1887, %v1888
    %1890 = vadd.xlane.f32.xlu0 %v1889
    %v1891 = vpop.xlane.xlu0 %1890
    %vm1892 = vcmp.ge.f32.partialorder %v1891, 40.0
    %v1893 = vsel %vm1892, %v1817, %v1881
    %v1894 = vsel %vm1892, %v1881, %v1818
    %v1895 = vshra.s32 %v1836, 1
    %v1896 = vshra.s32 %v1837, 1
    %v1897 = vadd.s32 %v1895, %v1896
    %v1898 = vand.u32 %v1836, %v1837
    %v1899 = vand.u32 %v1898, 1
    %v1900 = vadd.s32 %v1897, %v1899
    %vm1901 = vcmp.le.s32.totalorder %v29, %v1900
    %v1902 = vsel %vm1901, 1.0, 0.0
    %v1903 = vrot.slane %v1902, 4
    %v1904 = vadd.f32 %v1902, %v1903
    %v1905 = vrot.slane %v1904, 2
    %v1906 = vadd.f32 %v1904, %v1905
    %v1907 = vrot.slane %v1906, 1
    %v1908 = vadd.f32 %v1906, %v1907
    %1909 = vadd.xlane.f32.xlu0 %v1908
    %v1910 = vpop.xlane.xlu0 %1909
    %vm1911 = vcmp.ge.f32.partialorder %v1910, 41.0
    %v1912 = vsel %vm1911, %v1836, %v1900
    %v1913 = vsel %vm1911, %v1900, %v1837
    %v1914 = vshra.s32 %v1855, 1
    %v1915 = vshra.s32 %v1856, 1
    %v1916 = vadd.s32 %v1914, %v1915
    %v1917 = vand.u32 %v1855, %v1856
    %v1918 = vand.u32 %v1917, 1
    %v1919 = vadd.s32 %v1916, %v1918
    %vm1920 = vcmp.le.s32.totalorder %v29, %v1919
    %v1921 = vsel %vm1920, 1.0, 0.0
    %v1922 = vrot.slane %v1921, 4
    %v1923 = vadd.f32 %v1921, %v1922
    %v1924 = vrot.slane %v1923, 2
    %v1925 = vadd.f32 %v1923, %v1924
    %v1926 = vrot.slane %v1925, 1
    %v1927 = vadd.f32 %v1925, %v1926
    %1928 = vadd.xlane.f32.xlu0 %v1927
    %v1929 = vpop.xlane.xlu0 %1928
    %vm1930 = vcmp.ge.f32.partialorder %v1929, 744.0
    %v1931 = vsel %vm1930, %v1855, %v1919
    %v1932 = vsel %vm1930, %v1919, %v1856
    %v1933 = vshra.s32 %v1874, 1
    %v1934 = vshra.s32 %v1875, 1
    %v1935 = vadd.s32 %v1933, %v1934
    %v1936 = vand.u32 %v1874, %v1875
    %v1937 = vand.u32 %v1936, 1
    %v1938 = vadd.s32 %v1935, %v1937
    %vm1939 = vcmp.le.s32.totalorder %v29, %v1938
    %v1940 = vsel %vm1939, 1.0, 0.0
    %v1941 = vrot.slane %v1940, 4
    %v1942 = vadd.f32 %v1940, %v1941
    %v1943 = vrot.slane %v1942, 2
    %v1944 = vadd.f32 %v1942, %v1943
    %v1945 = vrot.slane %v1944, 1
    %v1946 = vadd.f32 %v1944, %v1945
    %1947 = vadd.xlane.f32.xlu0 %v1946
    %v1948 = vpop.xlane.xlu0 %1947
    %vm1949 = vcmp.ge.f32.partialorder %v1948, 745.0
    %v1950 = vsel %vm1949, %v1874, %v1938
    %v1951 = vsel %vm1949, %v1938, %v1875
    %v1952 = vshra.s32 %v1893, 1
    %v1953 = vshra.s32 %v1894, 1
    %v1954 = vadd.s32 %v1952, %v1953
    %v1955 = vand.u32 %v1893, %v1894
    %v1956 = vand.u32 %v1955, 1
    %v1957 = vadd.s32 %v1954, %v1956
    %vm1958 = vcmp.le.s32.totalorder %v29, %v1957
    %v1959 = vsel %vm1958, 1.0, 0.0
    %v1960 = vrot.slane %v1959, 4
    %v1961 = vadd.f32 %v1959, %v1960
    %v1962 = vrot.slane %v1961, 2
    %v1963 = vadd.f32 %v1961, %v1962
    %v1964 = vrot.slane %v1963, 1
    %v1965 = vadd.f32 %v1963, %v1964
    %1966 = vadd.xlane.f32.xlu0 %v1965
    %v1967 = vpop.xlane.xlu0 %1966
    %vm1968 = vcmp.ge.f32.partialorder %v1967, 40.0
    %v1969 = vsel %vm1968, %v1893, %v1957
    %v1970 = vsel %vm1968, %v1957, %v1894
    %v1971 = vshra.s32 %v1912, 1
    %v1972 = vshra.s32 %v1913, 1
    %v1973 = vadd.s32 %v1971, %v1972
    %v1974 = vand.u32 %v1912, %v1913
    %v1975 = vand.u32 %v1974, 1
    %v1976 = vadd.s32 %v1973, %v1975
    %vm1977 = vcmp.le.s32.totalorder %v29, %v1976
    %v1978 = vsel %vm1977, 1.0, 0.0
    %v1979 = vrot.slane %v1978, 4
    %v1980 = vadd.f32 %v1978, %v1979
    %v1981 = vrot.slane %v1980, 2
    %v1982 = vadd.f32 %v1980, %v1981
    %v1983 = vrot.slane %v1982, 1
    %v1984 = vadd.f32 %v1982, %v1983
    %1985 = vadd.xlane.f32.xlu0 %v1984
    %v1986 = vpop.xlane.xlu0 %1985
    %vm1987 = vcmp.ge.f32.partialorder %v1986, 41.0
    %v1988 = vsel %vm1987, %v1912, %v1976
    %v1989 = vsel %vm1987, %v1976, %v1913
    %v1990 = vshra.s32 %v1931, 1
    %v1991 = vshra.s32 %v1932, 1
    %v1992 = vadd.s32 %v1990, %v1991
    %v1993 = vand.u32 %v1931, %v1932
    %v1994 = vand.u32 %v1993, 1
    %v1995 = vadd.s32 %v1992, %v1994
    %vm1996 = vcmp.le.s32.totalorder %v29, %v1995
    %v1997 = vsel %vm1996, 1.0, 0.0
    %v1998 = vrot.slane %v1997, 4
    %v1999 = vadd.f32 %v1997, %v1998
    %v2000 = vrot.slane %v1999, 2
    %v2001 = vadd.f32 %v1999, %v2000
    %v2002 = vrot.slane %v2001, 1
    %v2003 = vadd.f32 %v2001, %v2002
    %2004 = vadd.xlane.f32.xlu0 %v2003
    %v2005 = vpop.xlane.xlu0 %2004
    %vm2006 = vcmp.ge.f32.partialorder %v2005, 744.0
    %v2007 = vsel %vm2006, %v1931, %v1995
    %v2008 = vsel %vm2006, %v1995, %v1932
    %v2009 = vshra.s32 %v1950, 1
    %v2010 = vshra.s32 %v1951, 1
    %v2011 = vadd.s32 %v2009, %v2010
    %v2012 = vand.u32 %v1950, %v1951
    %v2013 = vand.u32 %v2012, 1
    %v2014 = vadd.s32 %v2011, %v2013
    %vm2015 = vcmp.le.s32.totalorder %v29, %v2014
    %v2016 = vsel %vm2015, 1.0, 0.0
    %v2017 = vrot.slane %v2016, 4
    %v2018 = vadd.f32 %v2016, %v2017
    %v2019 = vrot.slane %v2018, 2
    %v2020 = vadd.f32 %v2018, %v2019
    %v2021 = vrot.slane %v2020, 1
    %v2022 = vadd.f32 %v2020, %v2021
    %2023 = vadd.xlane.f32.xlu0 %v2022
    %v2024 = vpop.xlane.xlu0 %2023
    %vm2025 = vcmp.ge.f32.partialorder %v2024, 745.0
    %v2026 = vsel %vm2025, %v1950, %v2014
    %v2027 = vsel %vm2025, %v2014, %v1951
    %v2028 = vshra.s32 %v1969, 1
    %v2029 = vshra.s32 %v1970, 1
    %v2030 = vadd.s32 %v2028, %v2029
    %v2031 = vand.u32 %v1969, %v1970
    %v2032 = vand.u32 %v2031, 1
    %v2033 = vadd.s32 %v2030, %v2032
    %vm2034 = vcmp.le.s32.totalorder %v29, %v2033
    %v2035 = vsel %vm2034, 1.0, 0.0
    %v2036 = vrot.slane %v2035, 4
    %v2037 = vadd.f32 %v2035, %v2036
    %v2038 = vrot.slane %v2037, 2
    %v2039 = vadd.f32 %v2037, %v2038
    %v2040 = vrot.slane %v2039, 1
    %v2041 = vadd.f32 %v2039, %v2040
    %2042 = vadd.xlane.f32.xlu0 %v2041
    %v2043 = vpop.xlane.xlu0 %2042
    %vm2044 = vcmp.ge.f32.partialorder %v2043, 40.0
    %v2045 = vsel %vm2044, %v1969, %v2033
    %v2046 = vsel %vm2044, %v2033, %v1970
    %v2047 = vshra.s32 %v1988, 1
    %v2048 = vshra.s32 %v1989, 1
    %v2049 = vadd.s32 %v2047, %v2048
    %v2050 = vand.u32 %v1988, %v1989
    %v2051 = vand.u32 %v2050, 1
    %v2052 = vadd.s32 %v2049, %v2051
    %vm2053 = vcmp.le.s32.totalorder %v29, %v2052
    %v2054 = vsel %vm2053, 1.0, 0.0
    %v2055 = vrot.slane %v2054, 4
    %v2056 = vadd.f32 %v2054, %v2055
    %v2057 = vrot.slane %v2056, 2
    %v2058 = vadd.f32 %v2056, %v2057
    %v2059 = vrot.slane %v2058, 1
    %v2060 = vadd.f32 %v2058, %v2059
    %2061 = vadd.xlane.f32.xlu0 %v2060
    %v2062 = vpop.xlane.xlu0 %2061
    %vm2063 = vcmp.ge.f32.partialorder %v2062, 41.0
    %v2064 = vsel %vm2063, %v1988, %v2052
    %v2065 = vsel %vm2063, %v2052, %v1989
    %v2066 = vshra.s32 %v2007, 1
    %v2067 = vshra.s32 %v2008, 1
    %v2068 = vadd.s32 %v2066, %v2067
    %v2069 = vand.u32 %v2007, %v2008
    %v2070 = vand.u32 %v2069, 1
    %v2071 = vadd.s32 %v2068, %v2070
    %vm2072 = vcmp.le.s32.totalorder %v29, %v2071
    %v2073 = vsel %vm2072, 1.0, 0.0
    %v2074 = vrot.slane %v2073, 4
    %v2075 = vadd.f32 %v2073, %v2074
    %v2076 = vrot.slane %v2075, 2
    %v2077 = vadd.f32 %v2075, %v2076
    %v2078 = vrot.slane %v2077, 1
    %v2079 = vadd.f32 %v2077, %v2078
    %2080 = vadd.xlane.f32.xlu0 %v2079
    %v2081 = vpop.xlane.xlu0 %2080
    %vm2082 = vcmp.ge.f32.partialorder %v2081, 744.0
    %v2083 = vsel %vm2082, %v2007, %v2071
    %v2084 = vsel %vm2082, %v2071, %v2008
    %v2085 = vshra.s32 %v2026, 1
    %v2086 = vshra.s32 %v2027, 1
    %v2087 = vadd.s32 %v2085, %v2086
    %v2088 = vand.u32 %v2026, %v2027
    %v2089 = vand.u32 %v2088, 1
    %v2090 = vadd.s32 %v2087, %v2089
    %vm2091 = vcmp.le.s32.totalorder %v29, %v2090
    %v2092 = vsel %vm2091, 1.0, 0.0
    %v2093 = vrot.slane %v2092, 4
    %v2094 = vadd.f32 %v2092, %v2093
    %v2095 = vrot.slane %v2094, 2
    %v2096 = vadd.f32 %v2094, %v2095
    %v2097 = vrot.slane %v2096, 1
    %v2098 = vadd.f32 %v2096, %v2097
    %2099 = vadd.xlane.f32.xlu0 %v2098
    %v2100 = vpop.xlane.xlu0 %2099
    %vm2101 = vcmp.ge.f32.partialorder %v2100, 745.0
    %v2102 = vsel %vm2101, %v2026, %v2090
    %v2103 = vsel %vm2101, %v2090, %v2027
    %v2104 = vshra.s32 %v2045, 1
    %v2105 = vshra.s32 %v2046, 1
    %v2106 = vadd.s32 %v2104, %v2105
    %v2107 = vand.u32 %v2045, %v2046
    %v2108 = vand.u32 %v2107, 1
    %v2109 = vadd.s32 %v2106, %v2108
    %vm2110 = vcmp.le.s32.totalorder %v29, %v2109
    %v2111 = vsel %vm2110, 1.0, 0.0
    %v2112 = vrot.slane %v2111, 4
    %v2113 = vadd.f32 %v2111, %v2112
    %v2114 = vrot.slane %v2113, 2
    %v2115 = vadd.f32 %v2113, %v2114
    %v2116 = vrot.slane %v2115, 1
    %v2117 = vadd.f32 %v2115, %v2116
    %2118 = vadd.xlane.f32.xlu0 %v2117
    %v2119 = vpop.xlane.xlu0 %2118
    %vm2120 = vcmp.ge.f32.partialorder %v2119, 40.0
    %v2121 = vsel %vm2120, %v2045, %v2109
    %v2122 = vsel %vm2120, %v2109, %v2046
    %v2123 = vshra.s32 %v2064, 1
    %v2124 = vshra.s32 %v2065, 1
    %v2125 = vadd.s32 %v2123, %v2124
    %v2126 = vand.u32 %v2064, %v2065
    %v2127 = vand.u32 %v2126, 1
    %v2128 = vadd.s32 %v2125, %v2127
    %vm2129 = vcmp.le.s32.totalorder %v29, %v2128
    %v2130 = vsel %vm2129, 1.0, 0.0
    %v2131 = vrot.slane %v2130, 4
    %v2132 = vadd.f32 %v2130, %v2131
    %v2133 = vrot.slane %v2132, 2
    %v2134 = vadd.f32 %v2132, %v2133
    %v2135 = vrot.slane %v2134, 1
    %v2136 = vadd.f32 %v2134, %v2135
    %2137 = vadd.xlane.f32.xlu0 %v2136
    %v2138 = vpop.xlane.xlu0 %2137
    %vm2139 = vcmp.ge.f32.partialorder %v2138, 41.0
    %v2140 = vsel %vm2139, %v2064, %v2128
    %v2141 = vsel %vm2139, %v2128, %v2065
    %v2142 = vshra.s32 %v2083, 1
    %v2143 = vshra.s32 %v2084, 1
    %v2144 = vadd.s32 %v2142, %v2143
    %v2145 = vand.u32 %v2083, %v2084
    %v2146 = vand.u32 %v2145, 1
    %v2147 = vadd.s32 %v2144, %v2146
    %vm2148 = vcmp.le.s32.totalorder %v29, %v2147
    %v2149 = vsel %vm2148, 1.0, 0.0
    %v2150 = vrot.slane %v2149, 4
    %v2151 = vadd.f32 %v2149, %v2150
    %v2152 = vrot.slane %v2151, 2
    %v2153 = vadd.f32 %v2151, %v2152
    %v2154 = vrot.slane %v2153, 1
    %v2155 = vadd.f32 %v2153, %v2154
    %2156 = vadd.xlane.f32.xlu0 %v2155
    %v2157 = vpop.xlane.xlu0 %2156
    %vm2158 = vcmp.ge.f32.partialorder %v2157, 744.0
    %v2159 = vsel %vm2158, %v2083, %v2147
    %v2160 = vsel %vm2158, %v2147, %v2084
    %v2161 = vshra.s32 %v2102, 1
    %v2162 = vshra.s32 %v2103, 1
    %v2163 = vadd.s32 %v2161, %v2162
    %v2164 = vand.u32 %v2102, %v2103
    %v2165 = vand.u32 %v2164, 1
    %v2166 = vadd.s32 %v2163, %v2165
    %vm2167 = vcmp.le.s32.totalorder %v29, %v2166
    %v2168 = vsel %vm2167, 1.0, 0.0
    %v2169 = vrot.slane %v2168, 4
    %v2170 = vadd.f32 %v2168, %v2169
    %v2171 = vrot.slane %v2170, 2
    %v2172 = vadd.f32 %v2170, %v2171
    %v2173 = vrot.slane %v2172, 1
    %v2174 = vadd.f32 %v2172, %v2173
    %2175 = vadd.xlane.f32.xlu0 %v2174
    %v2176 = vpop.xlane.xlu0 %2175
    %vm2177 = vcmp.ge.f32.partialorder %v2176, 745.0
    %v2178 = vsel %vm2177, %v2102, %v2166
    %v2179 = vsel %vm2177, %v2166, %v2103
    %v2180 = vshra.s32 %v2121, 1
    %v2181 = vshra.s32 %v2122, 1
    %v2182 = vadd.s32 %v2180, %v2181
    %v2183 = vand.u32 %v2121, %v2122
    %v2184 = vand.u32 %v2183, 1
    %v2185 = vadd.s32 %v2182, %v2184
    %vm2186 = vcmp.le.s32.totalorder %v29, %v2185
    %v2187 = vsel %vm2186, 1.0, 0.0
    %v2188 = vrot.slane %v2187, 4
    %v2189 = vadd.f32 %v2187, %v2188
    %v2190 = vrot.slane %v2189, 2
    %v2191 = vadd.f32 %v2189, %v2190
    %v2192 = vrot.slane %v2191, 1
    %v2193 = vadd.f32 %v2191, %v2192
    %2194 = vadd.xlane.f32.xlu0 %v2193
    %v2195 = vpop.xlane.xlu0 %2194
    %vm2196 = vcmp.ge.f32.partialorder %v2195, 40.0
    %v2197 = vsel %vm2196, %v2121, %v2185
    %v2198 = vsel %vm2196, %v2185, %v2122
    %v2199 = vshra.s32 %v2140, 1
    %v2200 = vshra.s32 %v2141, 1
    %v2201 = vadd.s32 %v2199, %v2200
    %v2202 = vand.u32 %v2140, %v2141
    %v2203 = vand.u32 %v2202, 1
    %v2204 = vadd.s32 %v2201, %v2203
    %vm2205 = vcmp.le.s32.totalorder %v29, %v2204
    %v2206 = vsel %vm2205, 1.0, 0.0
    %v2207 = vrot.slane %v2206, 4
    %v2208 = vadd.f32 %v2206, %v2207
    %v2209 = vrot.slane %v2208, 2
    %v2210 = vadd.f32 %v2208, %v2209
    %v2211 = vrot.slane %v2210, 1
    %v2212 = vadd.f32 %v2210, %v2211
    %2213 = vadd.xlane.f32.xlu0 %v2212
    %v2214 = vpop.xlane.xlu0 %2213
    %vm2215 = vcmp.ge.f32.partialorder %v2214, 41.0
    %v2216 = vsel %vm2215, %v2140, %v2204
    %v2217 = vsel %vm2215, %v2204, %v2141
    %v2218 = vshra.s32 %v2159, 1
    %v2219 = vshra.s32 %v2160, 1
    %v2220 = vadd.s32 %v2218, %v2219
    %v2221 = vand.u32 %v2159, %v2160
    %v2222 = vand.u32 %v2221, 1
    %v2223 = vadd.s32 %v2220, %v2222
    %vm2224 = vcmp.le.s32.totalorder %v29, %v2223
    %v2225 = vsel %vm2224, 1.0, 0.0
    %v2226 = vrot.slane %v2225, 4
    %v2227 = vadd.f32 %v2225, %v2226
    %v2228 = vrot.slane %v2227, 2
    %v2229 = vadd.f32 %v2227, %v2228
    %v2230 = vrot.slane %v2229, 1
    %v2231 = vadd.f32 %v2229, %v2230
    %2232 = vadd.xlane.f32.xlu0 %v2231
    %v2233 = vpop.xlane.xlu0 %2232
    %vm2234 = vcmp.ge.f32.partialorder %v2233, 744.0
    %v2235 = vsel %vm2234, %v2159, %v2223
    %v2236 = vsel %vm2234, %v2223, %v2160
    %v2237 = vshra.s32 %v2178, 1
    %v2238 = vshra.s32 %v2179, 1
    %v2239 = vadd.s32 %v2237, %v2238
    %v2240 = vand.u32 %v2178, %v2179
    %v2241 = vand.u32 %v2240, 1
    %v2242 = vadd.s32 %v2239, %v2241
    %vm2243 = vcmp.le.s32.totalorder %v29, %v2242
    %v2244 = vsel %vm2243, 1.0, 0.0
    %v2245 = vrot.slane %v2244, 4
    %v2246 = vadd.f32 %v2244, %v2245
    %v2247 = vrot.slane %v2246, 2
    %v2248 = vadd.f32 %v2246, %v2247
    %v2249 = vrot.slane %v2248, 1
    %v2250 = vadd.f32 %v2248, %v2249
    %2251 = vadd.xlane.f32.xlu0 %v2250
    %v2252 = vpop.xlane.xlu0 %2251
    %vm2253 = vcmp.ge.f32.partialorder %v2252, 745.0
    %v2254 = vsel %vm2253, %v2178, %v2242
    %v2255 = vsel %vm2253, %v2242, %v2179
    %v2256 = vshra.s32 %v2197, 1
    %v2257 = vshra.s32 %v2198, 1
    %v2258 = vadd.s32 %v2256, %v2257
    %v2259 = vand.u32 %v2197, %v2198
    %v2260 = vand.u32 %v2259, 1
    %v2261 = vadd.s32 %v2258, %v2260
    %vm2262 = vcmp.le.s32.totalorder %v29, %v2261
    %v2263 = vsel %vm2262, 1.0, 0.0
    %v2264 = vrot.slane %v2263, 4
    %v2265 = vadd.f32 %v2263, %v2264
    %v2266 = vrot.slane %v2265, 2
    %v2267 = vadd.f32 %v2265, %v2266
    %v2268 = vrot.slane %v2267, 1
    %v2269 = vadd.f32 %v2267, %v2268
    %2270 = vadd.xlane.f32.xlu0 %v2269
    %v2271 = vpop.xlane.xlu0 %2270
    %vm2272 = vcmp.ge.f32.partialorder %v2271, 40.0
    %v2273 = vsel %vm2272, %v2197, %v2261
    %v2274 = vsel %vm2272, %v2261, %v2198
    %v2275 = vshra.s32 %v2216, 1
    %v2276 = vshra.s32 %v2217, 1
    %v2277 = vadd.s32 %v2275, %v2276
    %v2278 = vand.u32 %v2216, %v2217
    %v2279 = vand.u32 %v2278, 1
    %v2280 = vadd.s32 %v2277, %v2279
    %vm2281 = vcmp.le.s32.totalorder %v29, %v2280
    %v2282 = vsel %vm2281, 1.0, 0.0
    %v2283 = vrot.slane %v2282, 4
    %v2284 = vadd.f32 %v2282, %v2283
    %v2285 = vrot.slane %v2284, 2
    %v2286 = vadd.f32 %v2284, %v2285
    %v2287 = vrot.slane %v2286, 1
    %v2288 = vadd.f32 %v2286, %v2287
    %2289 = vadd.xlane.f32.xlu0 %v2288
    %v2290 = vpop.xlane.xlu0 %2289
    %vm2291 = vcmp.ge.f32.partialorder %v2290, 41.0
    %v2292 = vsel %vm2291, %v2216, %v2280
    %v2293 = vsel %vm2291, %v2280, %v2217
    %v2294 = vshra.s32 %v2235, 1
    %v2295 = vshra.s32 %v2236, 1
    %v2296 = vadd.s32 %v2294, %v2295
    %v2297 = vand.u32 %v2235, %v2236
    %v2298 = vand.u32 %v2297, 1
    %v2299 = vadd.s32 %v2296, %v2298
    %vm2300 = vcmp.le.s32.totalorder %v29, %v2299
    %v2301 = vsel %vm2300, 1.0, 0.0
    %v2302 = vrot.slane %v2301, 4
    %v2303 = vadd.f32 %v2301, %v2302
    %v2304 = vrot.slane %v2303, 2
    %v2305 = vadd.f32 %v2303, %v2304
    %v2306 = vrot.slane %v2305, 1
    %v2307 = vadd.f32 %v2305, %v2306
    %2308 = vadd.xlane.f32.xlu0 %v2307
    %v2309 = vpop.xlane.xlu0 %2308
    %vm2310 = vcmp.ge.f32.partialorder %v2309, 744.0
    %v2311 = vsel %vm2310, %v2235, %v2299
    %v2312 = vsel %vm2310, %v2299, %v2236
    %v2313 = vshra.s32 %v2254, 1
    %v2314 = vshra.s32 %v2255, 1
    %v2315 = vadd.s32 %v2313, %v2314
    %v2316 = vand.u32 %v2254, %v2255
    %v2317 = vand.u32 %v2316, 1
    %v2318 = vadd.s32 %v2315, %v2317
    %vm2319 = vcmp.le.s32.totalorder %v29, %v2318
    %v2320 = vsel %vm2319, 1.0, 0.0
    %v2321 = vrot.slane %v2320, 4
    %v2322 = vadd.f32 %v2320, %v2321
    %v2323 = vrot.slane %v2322, 2
    %v2324 = vadd.f32 %v2322, %v2323
    %v2325 = vrot.slane %v2324, 1
    %v2326 = vadd.f32 %v2324, %v2325
    %2327 = vadd.xlane.f32.xlu0 %v2326
    %v2328 = vpop.xlane.xlu0 %2327
    %vm2329 = vcmp.ge.f32.partialorder %v2328, 745.0
    %v2330 = vsel %vm2329, %v2254, %v2318
    %v2331 = vsel %vm2329, %v2318, %v2255
    %v2332 = vshra.s32 %v2273, 1
    %v2333 = vshra.s32 %v2274, 1
    %v2334 = vadd.s32 %v2332, %v2333
    %v2335 = vand.u32 %v2273, %v2274
    %v2336 = vand.u32 %v2335, 1
    %v2337 = vadd.s32 %v2334, %v2336
    %vm2338 = vcmp.le.s32.totalorder %v29, %v2337
    %v2339 = vsel %vm2338, 1.0, 0.0
    %v2340 = vrot.slane %v2339, 4
    %v2341 = vadd.f32 %v2339, %v2340
    %v2342 = vrot.slane %v2341, 2
    %v2343 = vadd.f32 %v2341, %v2342
    %v2344 = vrot.slane %v2343, 1
    %v2345 = vadd.f32 %v2343, %v2344
    %2346 = vadd.xlane.f32.xlu0 %v2345
    %v2347 = vpop.xlane.xlu0 %2346
    %vm2348 = vcmp.ge.f32.partialorder %v2347, 40.0
    %v2349 = vsel %vm2348, %v2337, %v2274
    %v2350 = vshra.s32 %v2292, 1
    %v2351 = vshra.s32 %v2293, 1
    %v2352 = vadd.s32 %v2350, %v2351
    %v2353 = vand.u32 %v2292, %v2293
    %v2354 = vand.u32 %v2353, 1
    %v2355 = vadd.s32 %v2352, %v2354
    %vm2356 = vcmp.le.s32.totalorder %v29, %v2355
    %v2357 = vsel %vm2356, 1.0, 0.0
    %v2358 = vrot.slane %v2357, 4
    %v2359 = vadd.f32 %v2357, %v2358
    %v2360 = vrot.slane %v2359, 2
    %v2361 = vadd.f32 %v2359, %v2360
    %v2362 = vrot.slane %v2361, 1
    %v2363 = vadd.f32 %v2361, %v2362
    %2364 = vadd.xlane.f32.xlu0 %v2363
    %v2365 = vpop.xlane.xlu0 %2364
    %vm2366 = vcmp.ge.f32.partialorder %v2365, 41.0
    %v2367 = vsel %vm2366, %v2355, %v2293
    %v2368 = vshra.s32 %v2311, 1
    %v2369 = vshra.s32 %v2312, 1
    %v2370 = vadd.s32 %v2368, %v2369
    %v2371 = vand.u32 %v2311, %v2312
    %v2372 = vand.u32 %v2371, 1
    %v2373 = vadd.s32 %v2370, %v2372
    %vm2374 = vcmp.le.s32.totalorder %v29, %v2373
    %v2375 = vsel %vm2374, 1.0, 0.0
    %v2376 = vrot.slane %v2375, 4
    %v2377 = vadd.f32 %v2375, %v2376
    %v2378 = vrot.slane %v2377, 2
    %v2379 = vadd.f32 %v2377, %v2378
    %v2380 = vrot.slane %v2379, 1
    %v2381 = vadd.f32 %v2379, %v2380
    %2382 = vadd.xlane.f32.xlu0 %v2381
    %v2383 = vpop.xlane.xlu0 %2382
    %vm2384 = vcmp.ge.f32.partialorder %v2383, 744.0
    %v2385 = vsel %vm2384, %v2373, %v2312
    %v2386 = vshra.s32 %v2330, 1
    %v2387 = vshra.s32 %v2331, 1
    %v2388 = vadd.s32 %v2386, %v2387
    %v2389 = vand.u32 %v2330, %v2331
    %v2390 = vand.u32 %v2389, 1
    %v2391 = vadd.s32 %v2388, %v2390
    %vm2392 = vcmp.le.s32.totalorder %v29, %v2391
    %v2393 = vsel %vm2392, 1.0, 0.0
    %v2394 = vrot.slane %v2393, 4
    %v2395 = vadd.f32 %v2393, %v2394
    %v2396 = vrot.slane %v2395, 2
    %v2397 = vadd.f32 %v2395, %v2396
    %v2398 = vrot.slane %v2397, 1
    %v2399 = vadd.f32 %v2397, %v2398
    %2400 = vadd.xlane.f32.xlu0 %v2399
    %v2401 = vpop.xlane.xlu0 %2400
    %vm2402 = vcmp.ge.f32.partialorder %v2401, 745.0
    %v2403 = vsel %vm2402, %v2391, %v2331
    %vm2404 = vcmask 0
    %2405 = vst.msk [vmem:[#allocation5] sm:$0x1] %vm2404, %v2349
    %2406 = vst.msk [vmem:[#allocation6] sm:$0x1] %vm2404, %v2367
    %2407 = vst.msk [vmem:[#allocation8] sm:$0x1] %vm2404, %v2385
    %2408 = vst.msk [vmem:[#allocation9] sm:$0x1] %vm2404, %v2403
    // Predicated region
    $region10: #{tpu_custom_call.1} parent=1 // pred_check
      _
    $region11: #{tpu_custom_call.1} parent=1 // pred_check_branch
      %2410 = sbr.rel (0) target = $region13
    $region12: #{tpu_custom_call.1} parent=1 // pred_region
      %2412 = vsyncadd [#allocation4], 0
      %s2414 = sshll.u32 [#allocation5], 4
      %s2415 = int_to_ptr.vmem [resolvable:$true] %s2414
      %s2416 = sshll.u32 %s1, 4
      %s2417 = int_to_ptr.hbm [resolvable:$true] %s2416
      %2419 = dma.vmem_to_hbm [thread:$0]  %s2415, 16, %s2417, [#allocation4]
    $region13: #{tpu_custom_call.1} parent=1 // pred_fallthru
      _
    // Predicated region
    $region14: #{tpu_custom_call.1} parent=1 // pred_check
      _
    $region15: #{tpu_custom_call.1} parent=1 // pred_check_branch
      %2421 = sbr.rel (0) target = $region17
    $region16: #{tpu_custom_call.1} parent=1 // pred_region
      %2423 = vsyncadd [#allocation7], 0
      %s2425 = sshll.u32 [#allocation6], 4
      %s2426 = int_to_ptr.vmem [resolvable:$true] %s2425
      %s2427 = sshll.u32 %s2, 4
      %s2428 = int_to_ptr.hbm [resolvable:$true] %s2427
      %2430 = dma.vmem_to_hbm [thread:$0]  %s2426, 16, %s2428, [#allocation7]
    $region17: #{tpu_custom_call.1} parent=1 // pred_fallthru
      _
    // Predicated region
    $region18: #{tpu_custom_call.1} parent=1 // pred_check
      _
    $region19: #{tpu_custom_call.1} parent=1 // pred_check_branch
      %2432 = sbr.rel (0) target = $region21
    $region20: #{tpu_custom_call.1} parent=1 // pred_region
      %2434 = vsyncadd [#allocation7], 0
      %s2436 = sshll.u32 [#allocation8], 4
      %s2437 = int_to_ptr.vmem [resolvable:$true] %s2436
      %s2438 = sshll.u32 %s3, 4
      %s2439 = int_to_ptr.hbm [resolvable:$true] %s2438
      %2441 = dma.vmem_to_hbm [thread:$0]  %s2437, 16, %s2439, [#allocation7]
    $region21: #{tpu_custom_call.1} parent=1 // pred_fallthru
      _
    // Predicated region
    $region22: #{tpu_custom_call.1} parent=1 // pred_check
      _
    $region23: #{tpu_custom_call.1} parent=1 // pred_check_branch
      %2443 = sbr.rel (0) target = $region25
    $region24: #{tpu_custom_call.1} parent=1 // pred_region
      %2445 = vsyncadd [#allocation10], 0
      %s2447 = sshll.u32 [#allocation9], 4
      %s2448 = int_to_ptr.vmem [resolvable:$true] %s2447
      %s2449 = sshll.u32 %s4, 4
      %s2450 = int_to_ptr.hbm [resolvable:$true] %s2449
      %2452 = dma.vmem_to_hbm [thread:$0]  %s2448, 16, %s2450, [#allocation10]
    $region25: #{tpu_custom_call.1} parent=1 // pred_fallthru
      _
    // Predicated region
    $region26: #{tpu_custom_call.1} parent=1 // pred_check
      _
    $region27: #{tpu_custom_call.1} parent=1 // pred_check_branch
      %2454 = sbr.rel (0) target = $region29
    $region28: #{tpu_custom_call.1} parent=1 // pred_region
      %2456 = dma.done [#allocation4], 16
    $region29: #{tpu_custom_call.1} parent=1 // pred_fallthru
      _
    // Predicated region
    $region30: #{tpu_custom_call.1} parent=1 // pred_check
      _
    $region31: #{tpu_custom_call.1} parent=1 // pred_check_branch
      %2458 = sbr.rel (0) target = $region33
    $region32: #{tpu_custom_call.1} parent=1 // pred_region
      %2460 = dma.done [#allocation7], 16
    $region33: #{tpu_custom_call.1} parent=1 // pred_fallthru
      _
    // Predicated region
    $region34: #{tpu_custom_call.1} parent=1 // pred_check
      _
    $region35: #{tpu_custom_call.1} parent=1 // pred_check_branch
      %2462 = sbr.rel (0) target = $region37
    $region36: #{tpu_custom_call.1} parent=1 // pred_region
      %2464 = dma.done [#allocation7], 16
    $region37: #{tpu_custom_call.1} parent=1 // pred_fallthru
      _
    // Predicated region
    $region38: #{tpu_custom_call.1} parent=1 // pred_check
      _
    $region39: #{tpu_custom_call.1} parent=1 // pred_check_branch
      %2466 = sbr.rel (0) target = $region41
    $region40: #{tpu_custom_call.1} parent=1 // pred_region
      %2468 = dma.done [#allocation10], 16
    $region41: #{tpu_custom_call.1} parent=1 // pred_fallthru
      _
    %2469 = vsyncpa [#allocation3], 1
    %2470 = vsyncpa [#allocation4], 1
    %2471 = vsyncpa [#allocation7], 1
    %2472 = vsyncpa [#allocation10], 1

</llo_original>
